<compile_context>
chip_gen: v7x
topology: tpu7x:2x2x1
jax: 0.10.0
libtpu: 0.0.40
codegen_flags: <defaults>
</compile_context>

<pallas_src>
from functools import partial

import jax
import jax.numpy as jnp
from jax.experimental import pallas as pl
from jax.experimental.pallas import tpu as pltpu


# ----------------------------------------------------------------------------
# Fused branch kernel: conv1..conv4 (3x3+BN+ReLU) -> conv5 (1x1) -> soft-argmax
# ----------------------------------------------------------------------------
def corner_branch_kernel(mask_ref, cx_ref, cy_ref, x_ref,
                         w1_ref, s1_ref, t1_ref,
                         w2_ref, s2_ref, t2_ref,
                         w3_ref, s3_ref, t3_ref,
                         w4_ref, s4_ref, t4_ref,
                         w5_ref, b5_ref,
                         o_ref, *, B, Hp, Wp):
    """One {tl|br} branch per grid step (grid=(2,), "parallel")."""
    HpWp = Hp * Wp
    mask = mask_ref[...]                                   # (N, 1), 1 = interior

    def shift_rows(a, off):
        # out[r] = a[r + off]; out-of-range rows become zero (they only ever
        # feed halo output rows, which are re-masked to zero below).
        if off == 0:
            return a
        n, c = a.shape
        if off > 0:
            return jnp.concatenate(
                [a[off:, :], jnp.zeros((off, c), a.dtype)], axis=0)
        return jnp.concatenate(
            [jnp.zeros((-off, c), a.dtype), a[:n + off, :]], axis=0)

    def conv3x3_bn_relu(a, w_ref, s_ref, t_ref):
        taps = []
        for dy in (-1, 0, 1):                              # tap order matches the
            for dx in (-1, 0, 1):                          # HWIO weight reshape
                taps.append(shift_rows(a, dy * Wp + dx))
        patch = jnp.concatenate(taps, axis=1)              # (N, 9*Cin) f32
        y = jnp.dot(patch.astype(jnp.bfloat16), w_ref[...],   # bf16 MXU, f32 acc
                    preferred_element_type=jnp.float32)
        y = jnp.maximum(y * s_ref[...] + t_ref[...], 0.0)  # folded BN + ReLU
        return y * mask                                    # re-zero the halo

    h = x_ref[...]                                         # (N, C0) f32, padded
    h = conv3x3_bn_relu(h, w1_ref, s1_ref, t1_ref)
    h = conv3x3_bn_relu(h, w2_ref, s2_ref, t2_ref)
    h = conv3x3_bn_relu(h, w3_ref, s3_ref, t3_ref)
    h = conv3x3_bn_relu(h, w4_ref, s4_ref, t4_ref)         # (N, C4) f32

    # conv5 (1x1, Cout=1): VPU lane reduction instead of a width-1 MXU matmul.
    score = jnp.sum(h * w5_ref[...], axis=1, keepdims=True) + b5_ref[...]  # (N,1)

    # Masked soft-argmax over the interior of each image.
    cx = cx_ref[...]                                       # (HpWp, 1)
    cy = cy_ref[...]
    valid = mask[:HpWp, :]                                 # same for every image
    neg = (valid - 1.0) * 1e9                              # -1e9 on halo rows

    rows = []
    for b in range(B):                                     # B is small & static
        sb = score[b * HpWp:(b + 1) * HpWp, :] + neg       # (HpWp, 1)
        m = jnp.max(sb, axis=0, keepdims=True)
        e = jnp.exp(sb - m) * valid
        z = jnp.sum(e, axis=0, keepdims=True)
        inv = pl.reciprocal(z, approx=True)                # EUP slot, ~free
        ex = jnp.sum(cx * e, axis=0, keepdims=True) * inv
        ey = jnp.sum(cy * e, axis=0, keepdims=True) * inv
        rows.append(jnp.concatenate([ex, ey], axis=1))     # (1, 2)
    o_ref[...] = jnp.concatenate(rows, axis=0)             # (B, 2)


# ----------------------------------------------------------------------------
# Wrapper: one pallas_call for the whole Corner_Predictor forward
# ----------------------------------------------------------------------------
def corner_predictor_forward(x_nchw, params_tl, params_br, feat_sz, stride):
    img_sz = float(feat_sz * stride)
    B, C0, H, W = x_nchw.shape
    assert H == feat_sz and W == feat_sz
    Hp, Wp = H + 2, W + 2
    HpWp = Hp * Wp
    N = B * HpWp

    # NCHW -> NHWC, zero-pad once, flatten to (B*Hp*Wp, C0).
    x = jnp.transpose(x_nchw, (0, 2, 3, 1)).astype(jnp.float32)
    xp = jnp.pad(x, ((0, 0), (1, 1), (1, 1), (0, 0)))
    x_flat = xp.reshape(N, C0)

    # Interior mask and coordinate maps in the padded layout.
    h_idx = jnp.arange(Hp, dtype=jnp.float32)[:, None]
    w_idx = jnp.arange(Wp, dtype=jnp.float32)[None, :]
    interior = ((h_idx >= 1) & (h_idx <= H) &
                (w_idx >= 1) & (w_idx <= W)).astype(jnp.float32)     # (Hp, Wp)
    cx_col = ((w_idx - 1.0) * float(stride) * interior).reshape(HpWp, 1)
    cy_col = ((h_idx - 1.0) * float(stride) * interior).reshape(HpWp, 1)
    mask_flat = jnp.tile(interior.reshape(HpWp, 1), (B, 1))          # (N, 1)

    # Stack tl/br weights so a size-2 grid axis selects the branch.
    inputs = [mask_flat, cx_col, cy_col, x_flat]
    in_specs = [
        pl.BlockSpec((N, 1), lambda br: (0, 0)),
        pl.BlockSpec((HpWp, 1), lambda br: (0, 0)),
        pl.BlockSpec((HpWp, 1), lambda br: (0, 0)),
        pl.BlockSpec((N, C0), lambda br: (0, 0)),
    ]
    for (w_tl, sc_tl, sh_tl), (w_br, sc_br, sh_br) in zip(params_tl[:4],
                                                          params_br[:4]):
        cin, cout = w_tl.shape[2], w_tl.shape[3]
        wf = jnp.stack([w_tl.reshape(9 * cin, cout),
                        w_br.reshape(9 * cin, cout)]).astype(jnp.bfloat16)
        sc = jnp.stack([sc_tl, sc_br]).reshape(2, 1, cout).astype(jnp.float32)
        sh = jnp.stack([sh_tl, sh_br]).reshape(2, 1, cout).astype(jnp.float32)
        inputs += [wf, sc, sh]
        in_specs += [
            pl.BlockSpec((None, 9 * cin, cout), lambda br: (br, 0, 0)),
            pl.BlockSpec((None, 1, cout), lambda br: (br, 0, 0)),
            pl.BlockSpec((None, 1, cout), lambda br: (br, 0, 0)),
        ]
    (w5_tl, b5_tl), (w5_br, b5_br) = params_tl[4], params_br[4]
    c4 = w5_tl.shape[2]
    w5 = jnp.stack([w5_tl.reshape(c4), w5_br.reshape(c4)]
                   ).reshape(2, 1, c4).astype(jnp.float32)
    b5 = jnp.stack([b5_tl, b5_br]).reshape(2, 1, 1).astype(jnp.float32)
    inputs += [w5, b5]
    in_specs += [
        pl.BlockSpec((None, 1, c4), lambda br: (br, 0, 0)),
        pl.BlockSpec((None, 1, 1), lambda br: (br, 0, 0)),
    ]

    out = pl.pallas_call(
        partial(corner_branch_kernel, B=B, Hp=Hp, Wp=Wp),
        out_shape=jax.ShapeDtypeStruct((2, B, 2), jnp.float32),
        grid=(2,),                                       # {tl, br}
        in_specs=in_specs,
        out_specs=pl.BlockSpec((None, B, 2), lambda br: (br, 0, 0)),
        compiler_params=pltpu.CompilerParams(
            dimension_semantics=("parallel",),           # 2 TCs on v7x
            vmem_limit_bytes=32 * 1024 * 1024,
        ),
    )(*inputs)

    # (x_tl, y_tl, x_br, y_br) / img_sz  ==  torch.stack((...), dim=1) / img_sz
    return jnp.concatenate([out[0], out[1]], axis=1) / img_sz


# ----------------------------------------------------------------------------
# Deterministic parameter construction (synthetic; eval-mode BN folded)
# ----------------------------------------------------------------------------
def make_branch_params(key, inplanes, channel, eps=1e-5):
    chans = [inplanes, channel, channel // 2, channel // 4, channel // 8]
    params = []
    for i in range(4):
        cin, cout = chans[i], chans[i + 1]
        key, k1, k2, k3, k4, k5, k6 = jax.random.split(key, 7)
        w = jax.random.normal(k1, (3, 3, cin, cout), jnp.float32) / jnp.sqrt(9.0 * cin)
        b = 0.1 * jax.random.normal(k2, (cout,), jnp.float32)
        gamma = 1.0 + 0.1 * jax.random.normal(k3, (cout,), jnp.float32)
        beta = 0.1 * jax.random.normal(k4, (cout,), jnp.float32)
        mean = 0.1 * jax.random.normal(k5, (cout,), jnp.float32)
        var = 1.0 + 0.1 * jnp.abs(jax.random.normal(k6, (cout,), jnp.float32))
        scale = gamma / jnp.sqrt(var + eps)              # fold eval-mode BN
        shift = beta + scale * (b - mean)
        params.append((w, scale, shift))
    key, k1, k2 = jax.random.split(key, 3)
    w5 = jax.random.normal(k1, (1, 1, chans[-1], 1), jnp.float32) / jnp.sqrt(float(chans[-1]))
    b5 = 0.1 * jax.random.normal(k2, (1,), jnp.float32)
    params.append((w5, b5))
    return params


# ----------------------------------------------------------------------------
# Pure-JAX reference (same bf16 matmul precision as the kernel)
# ----------------------------------------------------------------------------
def ref_forward(x_nchw, params_tl, params_br, feat_sz, stride):
    img_sz = float(feat_sz * stride)
    x = jnp.transpose(x_nchw, (0, 2, 3, 1)).astype(jnp.float32)
    B = x.shape[0]

    def branch(h, ps):
        for w, sc, sh in ps[:4]:
            y = jax.lax.conv_general_dilated(
                h.astype(jnp.bfloat16), w.astype(jnp.bfloat16), (1, 1), "SAME",
                dimension_numbers=("NHWC", "HWIO", "NHWC"),
                preferred_element_type=jnp.float32)
            h = jnp.maximum(y * sc + sh, 0.0)
        w5, b5 = ps[4]
        return jnp.einsum("bhwc,c->bhw", h, w5.reshape(-1)) + b5[0]   # (B,H,W)

    base = jnp.arange(feat_sz, dtype=jnp.float32) * stride
    cx, cy = jnp.tile(base, feat_sz), jnp.repeat(base, feat_sz)

    def sargmax(score):
        p = jax.nn.softmax(score.reshape(B, -1), axis=1)
        return jnp.stack([jnp.sum(cx * p, axis=1), jnp.sum(cy * p, axis=1)], axis=1)

    tl = sargmax(branch(x, params_tl))
    br = sargmax(branch(x, params_br))
    return jnp.concatenate([tl, br], axis=1) / img_sz


# ----------------------------------------------------------------------------
if __name__ == "__main__":
    B, inplanes, channel, feat_sz, stride = 2, 16, 16, 8, 4   # small synthetic config

    key = jax.random.PRNGKey(0)
    kx, ktl, kbr = jax.random.split(key, 3)
    x = jax.random.normal(kx, (B, inplanes, feat_sz, feat_sz), jnp.float32)  # NCHW

    params_tl = make_branch_params(ktl, inplanes, channel)
    params_br = make_branch_params(kbr, inplanes, channel)

    fwd = jax.jit(corner_predictor_forward, static_argnums=(3, 4))
    out = jax.block_until_ready(fwd(x, params_tl, params_br, feat_sz, stride))
    ref = jax.block_until_ready(ref_forward(x, params_tl, params_br, feat_sz, stride))

    assert out.shape == (B, 4), out.shape
    assert bool(jnp.all(jnp.isfinite(out)))
    assert jnp.allclose(out, ref, atol=1e-2, rtol=1e-2), (out, ref)

    print("KERNEL_OK")
</pallas_src>

<mosaic_0001>
module attributes {stable_mosaic.version = 11 : i64} {
  func.func @corner_branch_kernel(%arg0: i32, %arg1: memref<200x1xf32, #tpu.memory_space<vmem>>, %arg2: memref<100x1xf32, #tpu.memory_space<vmem>>, %arg3: memref<100x1xf32, #tpu.memory_space<vmem>>, %arg4: memref<200x16xf32, #tpu.memory_space<vmem>>, %arg5: memref<1x144x16xbf16, #tpu.memory_space<vmem>>, %arg6: memref<1x1x16xf32, #tpu.memory_space<vmem>>, %arg7: memref<1x1x16xf32, #tpu.memory_space<vmem>>, %arg8: memref<1x144x8xbf16, #tpu.memory_space<vmem>>, %arg9: memref<1x1x8xf32, #tpu.memory_space<vmem>>, %arg10: memref<1x1x8xf32, #tpu.memory_space<vmem>>, %arg11: memref<1x72x4xbf16, #tpu.memory_space<vmem>>, %arg12: memref<1x1x4xf32, #tpu.memory_space<vmem>>, %arg13: memref<1x1x4xf32, #tpu.memory_space<vmem>>, %arg14: memref<1x36x2xbf16, #tpu.memory_space<vmem>>, %arg15: memref<1x1x2xf32, #tpu.memory_space<vmem>>, %arg16: memref<1x1x2xf32, #tpu.memory_space<vmem>>, %arg17: memref<1x1x2xf32, #tpu.memory_space<vmem>>, %arg18: memref<1x1x1xf32, #tpu.memory_space<vmem>>, %arg19: memref<1x2x2xf32, #tpu.memory_space<vmem>>) attributes {dimension_semantics = [#tpu.dimension_semantics<parallel>], iteration_bounds = array<i64: 2>, scalar_prefetch = 0 : i64, scratch_operands = 0 : i64, tpu.core_type = #tpu.core_type<tc>, window_params = [{pipeline_mode = #tpu.pipeline_mode<synchronous>, transform_indices = @transform_0, window_bounds = array<i64: 200, 1>}, {pipeline_mode = #tpu.pipeline_mode<synchronous>, transform_indices = @transform_1, window_bounds = array<i64: 100, 1>}, {pipeline_mode = #tpu.pipeline_mode<synchronous>, transform_indices = @transform_2, window_bounds = array<i64: 100, 1>}, {pipeline_mode = #tpu.pipeline_mode<synchronous>, transform_indices = @transform_3, window_bounds = array<i64: 200, 16>}, {transform_indices = @transform_4, window_bounds = array<i64: 1, 144, 16>}, {transform_indices = @transform_5, window_bounds = array<i64: 1, 1, 16>}, {transform_indices = @transform_6, window_bounds = array<i64: 1, 1, 16>}, {transform_indices = @transform_7, window_bounds = array<i64: 1, 144, 8>}, {transform_indices = @transform_8, window_bounds = array<i64: 1, 1, 8>}, {transform_indices = @transform_9, window_bounds = array<i64: 1, 1, 8>}, {transform_indices = @transform_10, window_bounds = array<i64: 1, 72, 4>}, {transform_indices = @transform_11, window_bounds = array<i64: 1, 1, 4>}, {transform_indices = @transform_12, window_bounds = array<i64: 1, 1, 4>}, {transform_indices = @transform_13, window_bounds = array<i64: 1, 36, 2>}, {transform_indices = @transform_14, window_bounds = array<i64: 1, 1, 2>}, {transform_indices = @transform_15, window_bounds = array<i64: 1, 1, 2>}, {transform_indices = @transform_16, window_bounds = array<i64: 1, 1, 2>}, {transform_indices = @transform_17, window_bounds = array<i64: 1, 1, 1>}, {transform_indices = @transform_18, window_bounds = array<i64: 1, 2, 2>}]} {
    %c0 = arith.constant 0 : index
    %c0_0 = arith.constant 0 : index
    %0 = vector.load %arg1[%c0, %c0_0] : memref<200x1xf32, #tpu.memory_space<vmem>>, vector<200x1xf32>
    %c0_1 = arith.constant 0 : index
    %c0_2 = arith.constant 0 : index
    %1 = vector.load %arg4[%c0_1, %c0_2] : memref<200x16xf32, #tpu.memory_space<vmem>>, vector<200x16xf32>
    %cst = arith.constant 0.000000e+00 : f32
    %2 = vector.broadcast %cst : f32 to vector<11x16xf32>
    %3 = vector.extract_strided_slice %1 {offsets = [0, 0], sizes = [189, 16], strides = [1, 1]} : vector<200x16xf32> to vector<189x16xf32>
    %4 = tpu.concatenate %2, %3 in 0 : vector<11x16xf32>, vector<189x16xf32> -> vector<200x16xf32>
    %cst_3 = arith.constant 0.000000e+00 : f32
    %5 = vector.broadcast %cst_3 : f32 to vector<10x16xf32>
    %6 = vector.extract_strided_slice %1 {offsets = [0, 0], sizes = [190, 16], strides = [1, 1]} : vector<200x16xf32> to vector<190x16xf32>
    %7 = tpu.concatenate %5, %6 in 0 : vector<10x16xf32>, vector<190x16xf32> -> vector<200x16xf32>
    %cst_4 = arith.constant 0.000000e+00 : f32
    %8 = vector.broadcast %cst_4 : f32 to vector<9x16xf32>
    %9 = vector.extract_strided_slice %1 {offsets = [0, 0], sizes = [191, 16], strides = [1, 1]} : vector<200x16xf32> to vector<191x16xf32>
    %10 = tpu.concatenate %8, %9 in 0 : vector<9x16xf32>, vector<191x16xf32> -> vector<200x16xf32>
    %cst_5 = arith.constant 0.000000e+00 : f32
    %11 = vector.broadcast %cst_5 : f32 to vector<1x16xf32>
    %12 = vector.extract_strided_slice %1 {offsets = [0, 0], sizes = [199, 16], strides = [1, 1]} : vector<200x16xf32> to vector<199x16xf32>
    %13 = tpu.concatenate %11, %12 in 0 : vector<1x16xf32>, vector<199x16xf32> -> vector<200x16xf32>
    %14 = vector.extract_strided_slice %1 {offsets = [1, 0], sizes = [199, 16], strides = [1, 1]} : vector<200x16xf32> to vector<199x16xf32>
    %cst_6 = arith.constant 0.000000e+00 : f32
    %15 = vector.broadcast %cst_6 : f32 to vector<1x16xf32>
    %16 = tpu.concatenate %14, %15 in 0 : vector<199x16xf32>, vector<1x16xf32> -> vector<200x16xf32>
    %17 = vector.extract_strided_slice %1 {offsets = [9, 0], sizes = [191, 16], strides = [1, 1]} : vector<200x16xf32> to vector<191x16xf32>
    %cst_7 = arith.constant 0.000000e+00 : f32
    %18 = vector.broadcast %cst_7 : f32 to vector<9x16xf32>
    %19 = tpu.concatenate %17, %18 in 0 : vector<191x16xf32>, vector<9x16xf32> -> vector<200x16xf32>
    %20 = vector.extract_strided_slice %1 {offsets = [10, 0], sizes = [190, 16], strides = [1, 1]} : vector<200x16xf32> to vector<190x16xf32>
    %cst_8 = arith.constant 0.000000e+00 : f32
    %21 = vector.broadcast %cst_8 : f32 to vector<10x16xf32>
    %22 = tpu.concatenate %20, %21 in 0 : vector<190x16xf32>, vector<10x16xf32> -> vector<200x16xf32>
    %23 = vector.extract_strided_slice %1 {offsets = [11, 0], sizes = [189, 16], strides = [1, 1]} : vector<200x16xf32> to vector<189x16xf32>
    %cst_9 = arith.constant 0.000000e+00 : f32
    %24 = vector.broadcast %cst_9 : f32 to vector<11x16xf32>
    %25 = tpu.concatenate %23, %24 in 0 : vector<189x16xf32>, vector<11x16xf32> -> vector<200x16xf32>
    %26 = tpu.concatenate %4, %7, %10, %13, %1, %16, %19, %22, %25 in 1 : vector<200x16xf32>, vector<200x16xf32>, vector<200x16xf32>, vector<200x16xf32>, vector<200x16xf32>, vector<200x16xf32>, vector<200x16xf32>, vector<200x16xf32>, vector<200x16xf32> -> vector<200x144xf32>
    %27 = arith.truncf %26 : vector<200x144xf32> to vector<200x144xbf16>
    %c0_10 = arith.constant 0 : index
    %c0_11 = arith.constant 0 : index
    %c0_12 = arith.constant 0 : index
    %28 = vector.load %arg5[%c0_10, %c0_11, %c0_12] : memref<1x144x16xbf16, #tpu.memory_space<vmem>>, vector<1x144x16xbf16>
    %29 = vector.shape_cast %28 : vector<1x144x16xbf16> to vector<144x16xbf16>
    %cst_13 = arith.constant dense<0.000000e+00> : vector<200x16xf32>
    %30 = tpu.matmul %27, %29, %cst_13 {dimension_numbers = #tpu.dot_dimension_numbers<[1], [0], [0], [1], [0, 0, 1, 1], [], []>} : vector<200x144xbf16>, vector<144x16xbf16>, vector<200x16xf32> -> vector<200x16xf32>
    %c0_14 = arith.constant 0 : index
    %c0_15 = arith.constant 0 : index
    %c0_16 = arith.constant 0 : index
    %31 = vector.load %arg6[%c0_14, %c0_15, %c0_16] : memref<1x1x16xf32, #tpu.memory_space<vmem>>, vector<1x1x16xf32>
    %32 = vector.shape_cast %31 : vector<1x1x16xf32> to vector<1x16xf32>
    %33 = vector.broadcast %32 : vector<1x16xf32> to vector<200x16xf32>
    %34 = arith.mulf %30, %33 : vector<200x16xf32>
    %c0_17 = arith.constant 0 : index
    %c0_18 = arith.constant 0 : index
    %c0_19 = arith.constant 0 : index
    %35 = vector.load %arg7[%c0_17, %c0_18, %c0_19] : memref<1x1x16xf32, #tpu.memory_space<vmem>>, vector<1x1x16xf32>
    %36 = vector.shape_cast %35 : vector<1x1x16xf32> to vector<1x16xf32>
    %37 = vector.broadcast %36 : vector<1x16xf32> to vector<200x16xf32>
    %38 = arith.addf %34, %37 : vector<200x16xf32>
    %cst_20 = arith.constant 0.000000e+00 : f32
    %39 = vector.broadcast %cst_20 : f32 to vector<200x16xf32>
    %40 = arith.maximumf %38, %39 : vector<200x16xf32>
    %41 = vector.broadcast %0 : vector<200x1xf32> to vector<200x16xf32>
    %42 = arith.mulf %40, %41 : vector<200x16xf32>
    %cst_21 = arith.constant 0.000000e+00 : f32
    %43 = vector.broadcast %cst_21 : f32 to vector<11x16xf32>
    %44 = vector.extract_strided_slice %42 {offsets = [0, 0], sizes = [189, 16], strides = [1, 1]} : vector<200x16xf32> to vector<189x16xf32>
    %45 = tpu.concatenate %43, %44 in 0 : vector<11x16xf32>, vector<189x16xf32> -> vector<200x16xf32>
    %cst_22 = arith.constant 0.000000e+00 : f32
    %46 = vector.broadcast %cst_22 : f32 to vector<10x16xf32>
    %47 = vector.extract_strided_slice %42 {offsets = [0, 0], sizes = [190, 16], strides = [1, 1]} : vector<200x16xf32> to vector<190x16xf32>
    %48 = tpu.concatenate %46, %47 in 0 : vector<10x16xf32>, vector<190x16xf32> -> vector<200x16xf32>
    %cst_23 = arith.constant 0.000000e+00 : f32
    %49 = vector.broadcast %cst_23 : f32 to vector<9x16xf32>
    %50 = vector.extract_strided_slice %42 {offsets = [0, 0], sizes = [191, 16], strides = [1, 1]} : vector<200x16xf32> to vector<191x16xf32>
    %51 = tpu.concatenate %49, %50 in 0 : vector<9x16xf32>, vector<191x16xf32> -> vector<200x16xf32>
    %cst_24 = arith.constant 0.000000e+00 : f32
    %52 = vector.broadcast %cst_24 : f32 to vector<1x16xf32>
    %53 = vector.extract_strided_slice %42 {offsets = [0, 0], sizes = [199, 16], strides = [1, 1]} : vector<200x16xf32> to vector<199x16xf32>
    %54 = tpu.concatenate %52, %53 in 0 : vector<1x16xf32>, vector<199x16xf32> -> vector<200x16xf32>
    %55 = vector.extract_strided_slice %42 {offsets = [1, 0], sizes = [199, 16], strides = [1, 1]} : vector<200x16xf32> to vector<199x16xf32>
    %cst_25 = arith.constant 0.000000e+00 : f32
    %56 = vector.broadcast %cst_25 : f32 to vector<1x16xf32>
    %57 = tpu.concatenate %55, %56 in 0 : vector<199x16xf32>, vector<1x16xf32> -> vector<200x16xf32>
    %58 = vector.extract_strided_slice %42 {offsets = [9, 0], sizes = [191, 16], strides = [1, 1]} : vector<200x16xf32> to vector<191x16xf32>
    %cst_26 = arith.constant 0.000000e+00 : f32
    %59 = vector.broadcast %cst_26 : f32 to vector<9x16xf32>
    %60 = tpu.concatenate %58, %59 in 0 : vector<191x16xf32>, vector<9x16xf32> -> vector<200x16xf32>
    %61 = vector.extract_strided_slice %42 {offsets = [10, 0], sizes = [190, 16], strides = [1, 1]} : vector<200x16xf32> to vector<190x16xf32>
    %cst_27 = arith.constant 0.000000e+00 : f32
    %62 = vector.broadcast %cst_27 : f32 to vector<10x16xf32>
    %63 = tpu.concatenate %61, %62 in 0 : vector<190x16xf32>, vector<10x16xf32> -> vector<200x16xf32>
    %64 = vector.extract_strided_slice %42 {offsets = [11, 0], sizes = [189, 16], strides = [1, 1]} : vector<200x16xf32> to vector<189x16xf32>
    %cst_28 = arith.constant 0.000000e+00 : f32
    %65 = vector.broadcast %cst_28 : f32 to vector<11x16xf32>
    %66 = tpu.concatenate %64, %65 in 0 : vector<189x16xf32>, vector<11x16xf32> -> vector<200x16xf32>
    %67 = tpu.concatenate %45, %48, %51, %54, %42, %57, %60, %63, %66 in 1 : vector<200x16xf32>, vector<200x16xf32>, vector<200x16xf32>, vector<200x16xf32>, vector<200x16xf32>, vector<200x16xf32>, vector<200x16xf32>, vector<200x16xf32>, vector<200x16xf32> -> vector<200x144xf32>
    %68 = arith.truncf %67 : vector<200x144xf32> to vector<200x144xbf16>
    %c0_29 = arith.constant 0 : index
    %c0_30 = arith.constant 0 : index
    %c0_31 = arith.constant 0 : index
    %69 = vector.load %arg8[%c0_29, %c0_30, %c0_31] : memref<1x144x8xbf16, #tpu.memory_space<vmem>>, vector<1x144x8xbf16>
    %70 = vector.shape_cast %69 : vector<1x144x8xbf16> to vector<144x8xbf16>
    %cst_32 = arith.constant dense<0.000000e+00> : vector<200x8xf32>
    %71 = tpu.matmul %68, %70, %cst_32 {dimension_numbers = #tpu.dot_dimension_numbers<[1], [0], [0], [1], [0, 0, 1, 1], [], []>} : vector<200x144xbf16>, vector<144x8xbf16>, vector<200x8xf32> -> vector<200x8xf32>
    %c0_33 = arith.constant 0 : index
    %c0_34 = arith.constant 0 : index
    %c0_35 = arith.constant 0 : index
    %72 = vector.load %arg9[%c0_33, %c0_34, %c0_35] : memref<1x1x8xf32, #tpu.memory_space<vmem>>, vector<1x1x8xf32>
    %73 = vector.shape_cast %72 : vector<1x1x8xf32> to vector<1x8xf32>
    %74 = vector.broadcast %73 : vector<1x8xf32> to vector<200x8xf32>
    %75 = arith.mulf %71, %74 : vector<200x8xf32>
    %c0_36 = arith.constant 0 : index
    %c0_37 = arith.constant 0 : index
    %c0_38 = arith.constant 0 : index
    %76 = vector.load %arg10[%c0_36, %c0_37, %c0_38] : memref<1x1x8xf32, #tpu.memory_space<vmem>>, vector<1x1x8xf32>
    %77 = vector.shape_cast %76 : vector<1x1x8xf32> to vector<1x8xf32>
    %78 = vector.broadcast %77 : vector<1x8xf32> to vector<200x8xf32>
    %79 = arith.addf %75, %78 : vector<200x8xf32>
    %cst_39 = arith.constant 0.000000e+00 : f32
    %80 = vector.broadcast %cst_39 : f32 to vector<200x8xf32>
    %81 = arith.maximumf %79, %80 : vector<200x8xf32>
    %82 = vector.broadcast %0 : vector<200x1xf32> to vector<200x8xf32>
    %83 = arith.mulf %81, %82 : vector<200x8xf32>
    %cst_40 = arith.constant 0.000000e+00 : f32
    %84 = vector.broadcast %cst_40 : f32 to vector<11x8xf32>
    %85 = vector.extract_strided_slice %83 {offsets = [0, 0], sizes = [189, 8], strides = [1, 1]} : vector<200x8xf32> to vector<189x8xf32>
    %86 = tpu.concatenate %84, %85 in 0 : vector<11x8xf32>, vector<189x8xf32> -> vector<200x8xf32>
    %cst_41 = arith.constant 0.000000e+00 : f32
    %87 = vector.broadcast %cst_41 : f32 to vector<10x8xf32>
    %88 = vector.extract_strided_slice %83 {offsets = [0, 0], sizes = [190, 8], strides = [1, 1]} : vector<200x8xf32> to vector<190x8xf32>
    %89 = tpu.concatenate %87, %88 in 0 : vector<10x8xf32>, vector<190x8xf32> -> vector<200x8xf32>
    %cst_42 = arith.constant 0.000000e+00 : f32
    %90 = vector.broadcast %cst_42 : f32 to vector<9x8xf32>
    %91 = vector.extract_strided_slice %83 {offsets = [0, 0], sizes = [191, 8], strides = [1, 1]} : vector<200x8xf32> to vector<191x8xf32>
    %92 = tpu.concatenate %90, %91 in 0 : vector<9x8xf32>, vector<191x8xf32> -> vector<200x8xf32>
    %cst_43 = arith.constant 0.000000e+00 : f32
    %93 = vector.broadcast %cst_43 : f32 to vector<1x8xf32>
    %94 = vector.extract_strided_slice %83 {offsets = [0, 0], sizes = [199, 8], strides = [1, 1]} : vector<200x8xf32> to vector<199x8xf32>
    %95 = tpu.concatenate %93, %94 in 0 : vector<1x8xf32>, vector<199x8xf32> -> vector<200x8xf32>
    %96 = vector.extract_strided_slice %83 {offsets = [1, 0], sizes = [199, 8], strides = [1, 1]} : vector<200x8xf32> to vector<199x8xf32>
    %cst_44 = arith.constant 0.000000e+00 : f32
    %97 = vector.broadcast %cst_44 : f32 to vector<1x8xf32>
    %98 = tpu.concatenate %96, %97 in 0 : vector<199x8xf32>, vector<1x8xf32> -> vector<200x8xf32>
    %99 = vector.extract_strided_slice %83 {offsets = [9, 0], sizes = [191, 8], strides = [1, 1]} : vector<200x8xf32> to vector<191x8xf32>
    %cst_45 = arith.constant 0.000000e+00 : f32
    %100 = vector.broadcast %cst_45 : f32 to vector<9x8xf32>
    %101 = tpu.concatenate %99, %100 in 0 : vector<191x8xf32>, vector<9x8xf32> -> vector<200x8xf32>
    %102 = vector.extract_strided_slice %83 {offsets = [10, 0], sizes = [190, 8], strides = [1, 1]} : vector<200x8xf32> to vector<190x8xf32>
    %cst_46 = arith.constant 0.000000e+00 : f32
    %103 = vector.broadcast %cst_46 : f32 to vector<10x8xf32>
    %104 = tpu.concatenate %102, %103 in 0 : vector<190x8xf32>, vector<10x8xf32> -> vector<200x8xf32>
    %105 = vector.extract_strided_slice %83 {offsets = [11, 0], sizes = [189, 8], strides = [1, 1]} : vector<200x8xf32> to vector<189x8xf32>
    %cst_47 = arith.constant 0.000000e+00 : f32
    %106 = vector.broadcast %cst_47 : f32 to vector<11x8xf32>
    %107 = tpu.concatenate %105, %106 in 0 : vector<189x8xf32>, vector<11x8xf32> -> vector<200x8xf32>
    %108 = tpu.concatenate %86, %89, %92, %95, %83, %98, %101, %104, %107 in 1 : vector<200x8xf32>, vector<200x8xf32>, vector<200x8xf32>, vector<200x8xf32>, vector<200x8xf32>, vector<200x8xf32>, vector<200x8xf32>, vector<200x8xf32>, vector<200x8xf32> -> vector<200x72xf32>
    %109 = arith.truncf %108 : vector<200x72xf32> to vector<200x72xbf16>
    %c0_48 = arith.constant 0 : index
    %c0_49 = arith.constant 0 : index
    %c0_50 = arith.constant 0 : index
    %110 = vector.load %arg11[%c0_48, %c0_49, %c0_50] : memref<1x72x4xbf16, #tpu.memory_space<vmem>>, vector<1x72x4xbf16>
    %111 = vector.shape_cast %110 : vector<1x72x4xbf16> to vector<72x4xbf16>
    %cst_51 = arith.constant dense<0.000000e+00> : vector<200x4xf32>
    %112 = tpu.matmul %109, %111, %cst_51 {dimension_numbers = #tpu.dot_dimension_numbers<[1], [0], [0], [1], [0, 0, 1, 1], [], []>} : vector<200x72xbf16>, vector<72x4xbf16>, vector<200x4xf32> -> vector<200x4xf32>
    %c0_52 = arith.constant 0 : index
    %c0_53 = arith.constant 0 : index
    %c0_54 = arith.constant 0 : index
    %113 = vector.load %arg12[%c0_52, %c0_53, %c0_54] : memref<1x1x4xf32, #tpu.memory_space<vmem>>, vector<1x1x4xf32>
    %114 = vector.shape_cast %113 : vector<1x1x4xf32> to vector<1x4xf32>
    %115 = vector.broadcast %114 : vector<1x4xf32> to vector<200x4xf32>
    %116 = arith.mulf %112, %115 : vector<200x4xf32>
    %c0_55 = arith.constant 0 : index
    %c0_56 = arith.constant 0 : index
    %c0_57 = arith.constant 0 : index
    %117 = vector.load %arg13[%c0_55, %c0_56, %c0_57] : memref<1x1x4xf32, #tpu.memory_space<vmem>>, vector<1x1x4xf32>
    %118 = vector.shape_cast %117 : vector<1x1x4xf32> to vector<1x4xf32>
    %119 = vector.broadcast %118 : vector<1x4xf32> to vector<200x4xf32>
    %120 = arith.addf %116, %119 : vector<200x4xf32>
    %cst_58 = arith.constant 0.000000e+00 : f32
    %121 = vector.broadcast %cst_58 : f32 to vector<200x4xf32>
    %122 = arith.maximumf %120, %121 : vector<200x4xf32>
    %123 = vector.broadcast %0 : vector<200x1xf32> to vector<200x4xf32>
    %124 = arith.mulf %122, %123 : vector<200x4xf32>
    %cst_59 = arith.constant 0.000000e+00 : f32
    %125 = vector.broadcast %cst_59 : f32 to vector<11x4xf32>
    %126 = vector.extract_strided_slice %124 {offsets = [0, 0], sizes = [189, 4], strides = [1, 1]} : vector<200x4xf32> to vector<189x4xf32>
    %127 = tpu.concatenate %125, %126 in 0 : vector<11x4xf32>, vector<189x4xf32> -> vector<200x4xf32>
    %cst_60 = arith.constant 0.000000e+00 : f32
    %128 = vector.broadcast %cst_60 : f32 to vector<10x4xf32>
    %129 = vector.extract_strided_slice %124 {offsets = [0, 0], sizes = [190, 4], strides = [1, 1]} : vector<200x4xf32> to vector<190x4xf32>
    %130 = tpu.concatenate %128, %129 in 0 : vector<10x4xf32>, vector<190x4xf32> -> vector<200x4xf32>
    %cst_61 = arith.constant 0.000000e+00 : f32
    %131 = vector.broadcast %cst_61 : f32 to vector<9x4xf32>
    %132 = vector.extract_strided_slice %124 {offsets = [0, 0], sizes = [191, 4], strides = [1, 1]} : vector<200x4xf32> to vector<191x4xf32>
    %133 = tpu.concatenate %131, %132 in 0 : vector<9x4xf32>, vector<191x4xf32> -> vector<200x4xf32>
    %cst_62 = arith.constant 0.000000e+00 : f32
    %134 = vector.broadcast %cst_62 : f32 to vector<1x4xf32>
    %135 = vector.extract_strided_slice %124 {offsets = [0, 0], sizes = [199, 4], strides = [1, 1]} : vector<200x4xf32> to vector<199x4xf32>
    %136 = tpu.concatenate %134, %135 in 0 : vector<1x4xf32>, vector<199x4xf32> -> vector<200x4xf32>
    %137 = vector.extract_strided_slice %124 {offsets = [1, 0], sizes = [199, 4], strides = [1, 1]} : vector<200x4xf32> to vector<199x4xf32>
    %cst_63 = arith.constant 0.000000e+00 : f32
    %138 = vector.broadcast %cst_63 : f32 to vector<1x4xf32>
    %139 = tpu.concatenate %137, %138 in 0 : vector<199x4xf32>, vector<1x4xf32> -> vector<200x4xf32>
    %140 = vector.extract_strided_slice %124 {offsets = [9, 0], sizes = [191, 4], strides = [1, 1]} : vector<200x4xf32> to vector<191x4xf32>
    %cst_64 = arith.constant 0.000000e+00 : f32
    %141 = vector.broadcast %cst_64 : f32 to vector<9x4xf32>
    %142 = tpu.concatenate %140, %141 in 0 : vector<191x4xf32>, vector<9x4xf32> -> vector<200x4xf32>
    %143 = vector.extract_strided_slice %124 {offsets = [10, 0], sizes = [190, 4], strides = [1, 1]} : vector<200x4xf32> to vector<190x4xf32>
    %cst_65 = arith.constant 0.000000e+00 : f32
    %144 = vector.broadcast %cst_65 : f32 to vector<10x4xf32>
    %145 = tpu.concatenate %143, %144 in 0 : vector<190x4xf32>, vector<10x4xf32> -> vector<200x4xf32>
    %146 = vector.extract_strided_slice %124 {offsets = [11, 0], sizes = [189, 4], strides = [1, 1]} : vector<200x4xf32> to vector<189x4xf32>
    %cst_66 = arith.constant 0.000000e+00 : f32
    %147 = vector.broadcast %cst_66 : f32 to vector<11x4xf32>
    %148 = tpu.concatenate %146, %147 in 0 : vector<189x4xf32>, vector<11x4xf32> -> vector<200x4xf32>
    %149 = tpu.concatenate %127, %130, %133, %136, %124, %139, %142, %145, %148 in 1 : vector<200x4xf32>, vector<200x4xf32>, vector<200x4xf32>, vector<200x4xf32>, vector<200x4xf32>, vector<200x4xf32>, vector<200x4xf32>, vector<200x4xf32>, vector<200x4xf32> -> vector<200x36xf32>
    %150 = arith.truncf %149 : vector<200x36xf32> to vector<200x36xbf16>
    %c0_67 = arith.constant 0 : index
    %c0_68 = arith.constant 0 : index
    %c0_69 = arith.constant 0 : index
    %151 = vector.load %arg14[%c0_67, %c0_68, %c0_69] : memref<1x36x2xbf16, #tpu.memory_space<vmem>>, vector<1x36x2xbf16>
    %152 = vector.shape_cast %151 : vector<1x36x2xbf16> to vector<36x2xbf16>
    %cst_70 = arith.constant dense<0.000000e+00> : vector<200x2xf32>
    %153 = tpu.matmul %150, %152, %cst_70 {dimension_numbers = #tpu.dot_dimension_numbers<[1], [0], [0], [1], [0, 0, 1, 1], [], []>} : vector<200x36xbf16>, vector<36x2xbf16>, vector<200x2xf32> -> vector<200x2xf32>
    %c0_71 = arith.constant 0 : index
    %c0_72 = arith.constant 0 : index
    %c0_73 = arith.constant 0 : index
    %154 = vector.load %arg15[%c0_71, %c0_72, %c0_73] : memref<1x1x2xf32, #tpu.memory_space<vmem>>, vector<1x1x2xf32>
    %155 = vector.shape_cast %154 : vector<1x1x2xf32> to vector<1x2xf32>
    %156 = vector.broadcast %155 : vector<1x2xf32> to vector<200x2xf32>
    %157 = arith.mulf %153, %156 : vector<200x2xf32>
    %c0_74 = arith.constant 0 : index
    %c0_75 = arith.constant 0 : index
    %c0_76 = arith.constant 0 : index
    %158 = vector.load %arg16[%c0_74, %c0_75, %c0_76] : memref<1x1x2xf32, #tpu.memory_space<vmem>>, vector<1x1x2xf32>
    %159 = vector.shape_cast %158 : vector<1x1x2xf32> to vector<1x2xf32>
    %160 = vector.broadcast %159 : vector<1x2xf32> to vector<200x2xf32>
    %161 = arith.addf %157, %160 : vector<200x2xf32>
    %cst_77 = arith.constant 0.000000e+00 : f32
    %162 = vector.broadcast %cst_77 : f32 to vector<200x2xf32>
    %163 = arith.maximumf %161, %162 : vector<200x2xf32>
    %164 = vector.broadcast %0 : vector<200x1xf32> to vector<200x2xf32>
    %165 = arith.mulf %163, %164 : vector<200x2xf32>
    %c0_78 = arith.constant 0 : index
    %c0_79 = arith.constant 0 : index
    %c0_80 = arith.constant 0 : index
    %166 = vector.load %arg17[%c0_78, %c0_79, %c0_80] : memref<1x1x2xf32, #tpu.memory_space<vmem>>, vector<1x1x2xf32>
    %167 = vector.shape_cast %166 : vector<1x1x2xf32> to vector<1x2xf32>
    %168 = vector.broadcast %167 : vector<1x2xf32> to vector<200x2xf32>
    %169 = arith.mulf %165, %168 : vector<200x2xf32>
    %cst_81 = arith.constant dense<0.000000e+00> : vector<200xf32>
    %170 = vector.multi_reduction <add>, %169, %cst_81 [1] : vector<200x2xf32> to vector<200xf32>
    %171 = vector.shape_cast %170 : vector<200xf32> to vector<200x1xf32>
    %c0_82 = arith.constant 0 : index
    %c0_83 = arith.constant 0 : index
    %c0_84 = arith.constant 0 : index
    %172 = vector.load %arg18[%c0_82, %c0_83, %c0_84] : memref<1x1x1xf32, #tpu.memory_space<vmem>>, vector<1x1x1xf32>
    %173 = vector.shape_cast %172 : vector<1x1x1xf32> to vector<1x1xf32>
    %174 = vector.broadcast %173 : vector<1x1xf32> to vector<200x1xf32>
    %175 = arith.addf %171, %174 : vector<200x1xf32>
    %c0_85 = arith.constant 0 : index
    %c0_86 = arith.constant 0 : index
    %176 = vector.load %arg2[%c0_85, %c0_86] : memref<100x1xf32, #tpu.memory_space<vmem>>, vector<100x1xf32>
    %c0_87 = arith.constant 0 : index
    %c0_88 = arith.constant 0 : index
    %177 = vector.load %arg3[%c0_87, %c0_88] : memref<100x1xf32, #tpu.memory_space<vmem>>, vector<100x1xf32>
    %178 = vector.extract_strided_slice %0 {offsets = [0, 0], sizes = [100, 1], strides = [1, 1]} : vector<200x1xf32> to vector<100x1xf32>
    %cst_89 = arith.constant 1.000000e+00 : f32
    %179 = vector.broadcast %cst_89 : f32 to vector<100x1xf32>
    %180 = arith.subf %178, %179 : vector<100x1xf32>
    %cst_90 = arith.constant 1.000000e+09 : f32
    %181 = vector.broadcast %cst_90 : f32 to vector<100x1xf32>
    %182 = arith.mulf %180, %181 : vector<100x1xf32>
    %183 = vector.extract_strided_slice %175 {offsets = [0, 0], sizes = [100, 1], strides = [1, 1]} : vector<200x1xf32> to vector<100x1xf32>
    %184 = arith.addf %183, %182 : vector<100x1xf32>
    %cst_91 = arith.constant dense<0xFF800000> : vector<1xf32>
    %185 = vector.multi_reduction <maximumf>, %184, %cst_91 [0] : vector<100x1xf32> to vector<1xf32>
    %186 = vector.shape_cast %185 : vector<1xf32> to vector<1x1xf32>
    %187 = vector.broadcast %186 : vector<1x1xf32> to vector<100x1xf32>
    %188 = arith.subf %184, %187 : vector<100x1xf32>
    %189 = math.exp %188 : vector<100x1xf32>
    %190 = arith.mulf %189, %178 : vector<100x1xf32>
    %cst_92 = arith.constant dense<0.000000e+00> : vector<1xf32>
    %191 = vector.multi_reduction <add>, %190, %cst_92 [0] : vector<100x1xf32> to vector<1xf32>
    %192 = vector.shape_cast %191 : vector<1xf32> to vector<1x1xf32>
    %193 = tpu.reciprocal %192 {approx = true} : vector<1x1xf32> -> vector<1x1xf32>
    %194 = arith.mulf %176, %190 : vector<100x1xf32>
    %cst_93 = arith.constant dense<0.000000e+00> : vector<1xf32>
    %195 = vector.multi_reduction <add>, %194, %cst_93 [0] : vector<100x1xf32> to vector<1xf32>
    %196 = vector.shape_cast %195 : vector<1xf32> to vector<1x1xf32>
    %197 = arith.mulf %196, %193 : vector<1x1xf32>
    %198 = arith.mulf %177, %190 : vector<100x1xf32>
    %cst_94 = arith.constant dense<0.000000e+00> : vector<1xf32>
    %199 = vector.multi_reduction <add>, %198, %cst_94 [0] : vector<100x1xf32> to vector<1xf32>
    %200 = vector.shape_cast %199 : vector<1xf32> to vector<1x1xf32>
    %201 = arith.mulf %200, %193 : vector<1x1xf32>
    %202 = tpu.concatenate %197, %201 in 1 : vector<1x1xf32>, vector<1x1xf32> -> vector<1x2xf32>
    %203 = vector.extract_strided_slice %175 {offsets = [100, 0], sizes = [100, 1], strides = [1, 1]} : vector<200x1xf32> to vector<100x1xf32>
    %204 = arith.addf %203, %182 : vector<100x1xf32>
    %cst_95 = arith.constant dense<0xFF800000> : vector<1xf32>
    %205 = vector.multi_reduction <maximumf>, %204, %cst_95 [0] : vector<100x1xf32> to vector<1xf32>
    %206 = vector.shape_cast %205 : vector<1xf32> to vector<1x1xf32>
    %207 = vector.broadcast %206 : vector<1x1xf32> to vector<100x1xf32>
    %208 = arith.subf %204, %207 : vector<100x1xf32>
    %209 = math.exp %208 : vector<100x1xf32>
    %210 = arith.mulf %209, %178 : vector<100x1xf32>
    %cst_96 = arith.constant dense<0.000000e+00> : vector<1xf32>
    %211 = vector.multi_reduction <add>, %210, %cst_96 [0] : vector<100x1xf32> to vector<1xf32>
    %212 = vector.shape_cast %211 : vector<1xf32> to vector<1x1xf32>
    %213 = tpu.reciprocal %212 {approx = true} : vector<1x1xf32> -> vector<1x1xf32>
    %214 = arith.mulf %176, %210 : vector<100x1xf32>
    %cst_97 = arith.constant dense<0.000000e+00> : vector<1xf32>
    %215 = vector.multi_reduction <add>, %214, %cst_97 [0] : vector<100x1xf32> to vector<1xf32>
    %216 = vector.shape_cast %215 : vector<1xf32> to vector<1x1xf32>
    %217 = arith.mulf %216, %213 : vector<1x1xf32>
    %218 = arith.mulf %177, %210 : vector<100x1xf32>
    %cst_98 = arith.constant dense<0.000000e+00> : vector<1xf32>
    %219 = vector.multi_reduction <add>, %218, %cst_98 [0] : vector<100x1xf32> to vector<1xf32>
    %220 = vector.shape_cast %219 : vector<1xf32> to vector<1x1xf32>
    %221 = arith.mulf %220, %213 : vector<1x1xf32>
    %222 = tpu.concatenate %217, %221 in 1 : vector<1x1xf32>, vector<1x1xf32> -> vector<1x2xf32>
    %223 = tpu.concatenate %202, %222 in 0 : vector<1x2xf32>, vector<1x2xf32> -> vector<2x2xf32>
    %c0_99 = arith.constant 0 : index
    %c0_100 = arith.constant 0 : index
    %c0_101 = arith.constant 0 : index
    %224 = vector.load %arg19[%c0_99, %c0_100, %c0_101] : memref<1x2x2xf32, #tpu.memory_space<vmem>>, vector<1x2x2xf32>
    %225 = vector.shape_cast %224 : vector<1x2x2xf32> to vector<2x2xf32>
    %226 = vector.shape_cast %223 : vector<2x2xf32> to vector<1x2x2xf32>
    tpu.vector_store %arg19[%c0_99, %c0_100, %c0_101], %226 {strides = array<i32>} : memref<1x2x2xf32, #tpu.memory_space<vmem>>, vector<1x2x2xf32>,
    return
  }
  func.func @transform_0(%arg0: i32) -> (i32, i32) {
    %c0_i32 = arith.constant 0 : i32
    %c0_i32_0 = arith.constant 0 : i32
    %c0_i32_1 = arith.constant 0 : i32
    return %c0_i32, %c0_i32_0 : i32, i32
  }
  func.func @transform_1(%arg0: i32) -> (i32, i32) {
    %c0_i32 = arith.constant 0 : i32
    %c0_i32_0 = arith.constant 0 : i32
    %c0_i32_1 = arith.constant 0 : i32
    return %c0_i32, %c0_i32_0 : i32, i32
  }
  func.func @transform_2(%arg0: i32) -> (i32, i32) {
    %c0_i32 = arith.constant 0 : i32
    %c0_i32_0 = arith.constant 0 : i32
    %c0_i32_1 = arith.constant 0 : i32
    return %c0_i32, %c0_i32_0 : i32, i32
  }
  func.func @transform_3(%arg0: i32) -> (i32, i32) {
    %c0_i32 = arith.constant 0 : i32
    %c0_i32_0 = arith.constant 0 : i32
    %c0_i32_1 = arith.constant 0 : i32
    return %c0_i32, %c0_i32_0 : i32, i32
  }
  func.func @transform_4(%arg0: i32) -> (i32, i32, i32) {
    %c0_i32 = arith.constant 0 : i32
    %c0_i32_0 = arith.constant 0 : i32
    %c0_i32_1 = arith.constant 0 : i32
    return %arg0, %c0_i32, %c0_i32_0 : i32, i32, i32
  }
  func.func @transform_5(%arg0: i32) -> (i32, i32, i32) {
    %c0_i32 = arith.constant 0 : i32
    %c0_i32_0 = arith.constant 0 : i32
    %c0_i32_1 = arith.constant 0 : i32
    return %arg0, %c0_i32, %c0_i32_0 : i32, i32, i32
  }
  func.func @transform_6(%arg0: i32) -> (i32, i32, i32) {
    %c0_i32 = arith.constant 0 : i32
    %c0_i32_0 = arith.constant 0 : i32
    %c0_i32_1 = arith.constant 0 : i32
    return %arg0, %c0_i32, %c0_i32_0 : i32, i32, i32
  }
  func.func @transform_7(%arg0: i32) -> (i32, i32, i32) {
    %c0_i32 = arith.constant 0 : i32
    %c0_i32_0 = arith.constant 0 : i32
    %c0_i32_1 = arith.constant 0 : i32
    return %arg0, %c0_i32, %c0_i32_0 : i32, i32, i32
  }
  func.func @transform_8(%arg0: i32) -> (i32, i32, i32) {
    %c0_i32 = arith.constant 0 : i32
    %c0_i32_0 = arith.constant 0 : i32
    %c0_i32_1 = arith.constant 0 : i32
    return %arg0, %c0_i32, %c0_i32_0 : i32, i32, i32
  }
  func.func @transform_9(%arg0: i32) -> (i32, i32, i32) {
    %c0_i32 = arith.constant 0 : i32
    %c0_i32_0 = arith.constant 0 : i32
    %c0_i32_1 = arith.constant 0 : i32
    return %arg0, %c0_i32, %c0_i32_0 : i32, i32, i32
  }
  func.func @transform_10(%arg0: i32) -> (i32, i32, i32) {
    %c0_i32 = arith.constant 0 : i32
    %c0_i32_0 = arith.constant 0 : i32
    %c0_i32_1 = arith.constant 0 : i32
    return %arg0, %c0_i32, %c0_i32_0 : i32, i32, i32
  }
  func.func @transform_11(%arg0: i32) -> (i32, i32, i32) {
    %c0_i32 = arith.constant 0 : i32
    %c0_i32_0 = arith.constant 0 : i32
    %c0_i32_1 = arith.constant 0 : i32
    return %arg0, %c0_i32, %c0_i32_0 : i32, i32, i32
  }
  func.func @transform_12(%arg0: i32) -> (i32, i32, i32) {
    %c0_i32 = arith.constant 0 : i32
    %c0_i32_0 = arith.constant 0 : i32
    %c0_i32_1 = arith.constant 0 : i32
    return %arg0, %c0_i32, %c0_i32_0 : i32, i32, i32
  }
  func.func @transform_13(%arg0: i32) -> (i32, i32, i32) {
    %c0_i32 = arith.constant 0 : i32
    %c0_i32_0 = arith.constant 0 : i32
    %c0_i32_1 = arith.constant 0 : i32
    return %arg0, %c0_i32, %c0_i32_0 : i32, i32, i32
  }
  func.func @transform_14(%arg0: i32) -> (i32, i32, i32) {
    %c0_i32 = arith.constant 0 : i32
    %c0_i32_0 = arith.constant 0 : i32
    %c0_i32_1 = arith.constant 0 : i32
    return %arg0, %c0_i32, %c0_i32_0 : i32, i32, i32
  }
  func.func @transform_15(%arg0: i32) -> (i32, i32, i32) {
    %c0_i32 = arith.constant 0 : i32
    %c0_i32_0 = arith.constant 0 : i32
    %c0_i32_1 = arith.constant 0 : i32
    return %arg0, %c0_i32, %c0_i32_0 : i32, i32, i32
  }
  func.func @transform_16(%arg0: i32) -> (i32, i32, i32) {
    %c0_i32 = arith.constant 0 : i32
    %c0_i32_0 = arith.constant 0 : i32
    %c0_i32_1 = arith.constant 0 : i32
    return %arg0, %c0_i32, %c0_i32_0 : i32, i32, i32
  }
  func.func @transform_17(%arg0: i32) -> (i32, i32, i32) {
    %c0_i32 = arith.constant 0 : i32
    %c0_i32_0 = arith.constant 0 : i32
    %c0_i32_1 = arith.constant 0 : i32
    return %arg0, %c0_i32, %c0_i32_0 : i32, i32, i32
  }
  func.func @transform_18(%arg0: i32) -> (i32, i32, i32) {
    %c0_i32 = arith.constant 0 : i32
    %c0_i32_0 = arith.constant 0 : i32
    %c0_i32_1 = arith.constant 0 : i32
    return %arg0, %c0_i32, %c0_i32_0 : i32, i32, i32
  }
}

</mosaic_0001>

<llo_original>
// kernel: corner_predictor_forward.1
$region0: #{corner_predictor_forward.1}
  #allocation0 [shape = 'u32[]', space=smem, size = 0x4, offset = 0x4, fixed_abs, tag = 'smem constant byte address 0x4 - core index']
  #allocation1 [shape = 'u32[144,128]{1,0:T(1,128)}', space=vmem, size = 0x12000, scoped, tag = 'internal scratch']
  %s0 = inlined_call_operand.vmem [shape: f32[200,1], index: 0, kind: input, shape index: {}]
  %s1 = inlined_call_operand.vmem [shape: f32[100,1], index: 1, kind: input, shape index: {}]
  %s2 = inlined_call_operand.vmem [shape: f32[100,1], index: 2, kind: input, shape index: {}]
  %s3 = inlined_call_operand.vmem [shape: f32[200,16], index: 3, kind: input, shape index: {}]
  %s4 = inlined_call_operand.vmem [shape: bf16[2,144,16], index: 4, kind: input, shape index: {}]
  %s5 = inlined_call_operand.vmem [shape: f32[2,1,16], index: 5, kind: input, shape index: {}]
  %s6 = inlined_call_operand.vmem [shape: f32[2,1,16], index: 6, kind: input, shape index: {}]
  %s7 = inlined_call_operand.vmem [shape: bf16[2,144,8], index: 7, kind: input, shape index: {}]
  %s8 = inlined_call_operand.vmem [shape: f32[2,1,8], index: 8, kind: input, shape index: {}]
  %s9 = inlined_call_operand.vmem [shape: f32[2,1,8], index: 9, kind: input, shape index: {}]
  %s10 = inlined_call_operand.vmem [shape: bf16[2,72,4], index: 10, kind: input, shape index: {}]
  %s11 = inlined_call_operand.vmem [shape: f32[2,1,4], index: 11, kind: input, shape index: {}]
  %s12 = inlined_call_operand.vmem [shape: f32[2,1,4], index: 12, kind: input, shape index: {}]
  %s13 = inlined_call_operand.vmem [shape: bf16[2,36,2], index: 13, kind: input, shape index: {}]
  %s14 = inlined_call_operand.vmem [shape: f32[2,1,2], index: 14, kind: input, shape index: {}]
  %s15 = inlined_call_operand.vmem [shape: f32[2,1,2], index: 15, kind: input, shape index: {}]
  %s16 = inlined_call_operand.vmem [shape: f32[2,1,2], index: 16, kind: input, shape index: {}]
  %s17 = inlined_call_operand.vmem [shape: f32[2,1,1], index: 17, kind: input, shape index: {}]
  %s18 = inlined_call_operand.vmem [shape: f32[2,2,2], index: 18, kind: output, shape index: {}]
  %s19 = sld [smem:[#allocation0]]
  $region105: #{corner_predictor_forward.1} parent=0
    _
  %s21 = ssub.s32 1, %s19
  %s22 = scalar_select 0, %s21, %s19
  loop: start=0, step=1, limit=4
  $region2: #{corner_predictor_forward.1} parent=0 // loop_pre_header
    _
  $region3: #{corner_predictor_forward.1} parent=0 // loop_header
    %s24 = sphi 0, %s28
    %p25 = scmp.ge.s32.totalorder %s24, 4
    %s32 = sphi 0, %s32
    %s34 = sphi 0, %s32
    %s35 = sphi 0, %s34
    %s49 = sphi 0, %s35
    %s53 = sphi 0, %s53
    %s55 = sphi 0, %s53
    %s56 = sphi 0, %s55
    %s70 = sphi 0, %s56
    %s74 = sphi 0, %s74
    %s76 = sphi 0, %s74
    %s77 = sphi 0, %s76
    %s91 = sphi 0, %s77
    %s95 = sphi 0, %s95
    %s97 = sphi 0, %s95
    %s98 = sphi 0, %s97
    %s112 = sphi 0, %s98
    %s118 = sphi 0, %s120
    %s121 = sphi 0, %s118
    %s122 = sphi 0, %s121
    %s138 = sphi 0, %s122
    %s144 = sphi 0, %s146
    %s147 = sphi 0, %s144
    %s148 = sphi 0, %s147
    %s164 = sphi 0, %s148
    %s170 = sphi 0, %s172
    %s173 = sphi 0, %s170
    %s174 = sphi 0, %s173
    %s190 = sphi 0, %s174
    %s196 = sphi 0, %s198
    %s199 = sphi 0, %s196
    %s200 = sphi 0, %s199
    %s216 = sphi 0, %s200
    %s222 = sphi 0, %s224
    %s225 = sphi 0, %s222
    %s226 = sphi 0, %s225
    %s242 = sphi 0, %s226
    %s248 = sphi 0, %s250
    %s251 = sphi 0, %s248
    %s252 = sphi 0, %s251
    %s268 = sphi 0, %s252
    %s274 = sphi 0, %s276
    %s277 = sphi 0, %s274
    %s278 = sphi 0, %s277
    %s294 = sphi 0, %s278
    %s300 = sphi 0, %s302
    %s303 = sphi 0, %s300
    %s304 = sphi 0, %s303
    %s320 = sphi 0, %s304
    %s326 = sphi 0, %s328
    %s329 = sphi 0, %s326
    %s330 = sphi 0, %s329
    %s346 = sphi 0, %s330
    %s352 = sphi 0, %s354
    %s355 = sphi 0, %s352
    %s356 = sphi 0, %s355
    %s372 = sphi 0, %s356
    %s378 = sphi 0, %s380
    %s381 = sphi 0, %s378
    %s382 = sphi 0, %s381
    %s398 = sphi 0, %s382
    %s404 = sphi 0, %s406
    %s407 = sphi 0, %s404
    %s408 = sphi 0, %s407
    %s424 = sphi 0, %s408
    %s430 = sphi 0, %s432
    %s433 = sphi 0, %s430
    %s434 = sphi 0, %s433
    %s450 = sphi 0, %s434
    %s456 = sphi 0, %s458
    %s459 = sphi 0, %s456
    %s460 = sphi 0, %s459
    %s476 = sphi 0, %s460
    %s482 = sphi 0, %s484
    %s485 = sphi 0, %s482
    %s486 = sphi 0, %s485
    %s502 = sphi 0, %s486
  $region4: #{corner_predictor_forward.1} parent=0 // loop_header_branch
    %27 = sbr.rel (%p25) target = $region8
  $region5: #{corner_predictor_forward.1} parent=0 // loop_body
    %s29 = ssub.s32 %s24, 1
    %s30 = ssub.s32 %s24, 2
    %s31 = sadd.s32 %s24, 1
    %s33 = sadd.s32 %s32, 1
    %p36 = scmp.eq.s32.totalorder %s24, 1
    %p37 = scmp.ne.s32.totalorder %s32, %s34
    %p38 = scmp.eq.s32.totalorder %s24, 0
    %p39 = por %p37, %p38
    %p40 = scmp.ne.s32.totalorder %s32, %s34
    %p41 = scmp.eq.s32.totalorder %s29, 1
    %p42 = por %p40, %p41
    %p43 = scmp.ne.s32.totalorder %s34, %s35
    %p44 = scmp.eq.s32.totalorder %s29, 0
    %p45 = por %p43, %p44
    %p46 = scmp.ne.s32.totalorder %s34, %s35
    %p47 = scmp.eq.s32.totalorder %s30, 1
    %p48 = por %p46, %p47
    %p50 = scmp.ne.s32.totalorder %s35, %s49
    %p51 = scmp.eq.s32.totalorder %s30, 0
    %p52 = por %p50, %p51
    %s54 = sadd.s32 %s53, 1
    %p57 = scmp.eq.s32.totalorder %s24, 1
    %p58 = scmp.ne.s32.totalorder %s53, %s55
    %p59 = scmp.eq.s32.totalorder %s24, 0
    %p60 = por %p58, %p59
    %p61 = scmp.ne.s32.totalorder %s53, %s55
    %p62 = scmp.eq.s32.totalorder %s29, 1
    %p63 = por %p61, %p62
    %p64 = scmp.ne.s32.totalorder %s55, %s56
    %p65 = scmp.eq.s32.totalorder %s29, 0
    %p66 = por %p64, %p65
    %p67 = scmp.ne.s32.totalorder %s55, %s56
    %p68 = scmp.eq.s32.totalorder %s30, 1
    %p69 = por %p67, %p68
    %p71 = scmp.ne.s32.totalorder %s56, %s70
    %p72 = scmp.eq.s32.totalorder %s30, 0
    %p73 = por %p71, %p72
    %s75 = sadd.s32 %s74, 1
    %p78 = scmp.eq.s32.totalorder %s24, 1
    %p79 = scmp.ne.s32.totalorder %s74, %s76
    %p80 = scmp.eq.s32.totalorder %s24, 0
    %p81 = por %p79, %p80
    %p82 = scmp.ne.s32.totalorder %s74, %s76
    %p83 = scmp.eq.s32.totalorder %s29, 1
    %p84 = por %p82, %p83
    %p85 = scmp.ne.s32.totalorder %s76, %s77
    %p86 = scmp.eq.s32.totalorder %s29, 0
    %p87 = por %p85, %p86
    %p88 = scmp.ne.s32.totalorder %s76, %s77
    %p89 = scmp.eq.s32.totalorder %s30, 1
    %p90 = por %p88, %p89
    %p92 = scmp.ne.s32.totalorder %s77, %s91
    %p93 = scmp.eq.s32.totalorder %s30, 0
    %p94 = por %p92, %p93
    %s96 = sadd.s32 %s95, 1
    %p99 = scmp.eq.s32.totalorder %s24, 1
    %p100 = scmp.ne.s32.totalorder %s95, %s97
    %p101 = scmp.eq.s32.totalorder %s24, 0
    %p102 = por %p100, %p101
    %p103 = scmp.ne.s32.totalorder %s95, %s97
    %p104 = scmp.eq.s32.totalorder %s29, 1
    %p105 = por %p103, %p104
    %p106 = scmp.ne.s32.totalorder %s97, %s98
    %p107 = scmp.eq.s32.totalorder %s29, 0
    %p108 = por %p106, %p107
    %p109 = scmp.ne.s32.totalorder %s97, %s98
    %p110 = scmp.eq.s32.totalorder %s30, 1
    %p111 = por %p109, %p110
    %p113 = scmp.ne.s32.totalorder %s98, %s112
    %p114 = scmp.eq.s32.totalorder %s30, 0
    %p115 = por %p113, %p114
    %s116 = ssub.s32 %s24, %s31
    %p117 = scmp.eq.s32.totalorder %s116, 0
    %s119 = sadd.s32 %s118, 1
    %s120 = scalar_select %p117, %s118, %s119
    %p123 = pneg %p117
    %p124 = scmp.eq.s32.totalorder %s24, 1
    %p125 = por %p123, %p124
    %p126 = scmp.ne.s32.totalorder %s118, %s121
    %p127 = scmp.eq.s32.totalorder %s24, 0
    %p128 = por %p126, %p127
    %p129 = scmp.ne.s32.totalorder %s118, %s121
    %p130 = scmp.eq.s32.totalorder %s29, 1
    %p131 = por %p129, %p130
    %p132 = scmp.ne.s32.totalorder %s121, %s122
    %p133 = scmp.eq.s32.totalorder %s29, 0
    %p134 = por %p132, %p133
    %p135 = scmp.ne.s32.totalorder %s121, %s122
    %p136 = scmp.eq.s32.totalorder %s30, 1
    %p137 = por %p135, %p136
    %p139 = scmp.ne.s32.totalorder %s122, %s138
    %p140 = scmp.eq.s32.totalorder %s30, 0
    %p141 = por %p139, %p140
    %s142 = ssub.s32 %s24, %s31
    %p143 = scmp.eq.s32.totalorder %s142, 0
    %s145 = sadd.s32 %s144, 1
    %s146 = scalar_select %p143, %s144, %s145
    %p149 = pneg %p143
    %p150 = scmp.eq.s32.totalorder %s24, 1
    %p151 = por %p149, %p150
    %p152 = scmp.ne.s32.totalorder %s144, %s147
    %p153 = scmp.eq.s32.totalorder %s24, 0
    %p154 = por %p152, %p153
    %p155 = scmp.ne.s32.totalorder %s144, %s147
    %p156 = scmp.eq.s32.totalorder %s29, 1
    %p157 = por %p155, %p156
    %p158 = scmp.ne.s32.totalorder %s147, %s148
    %p159 = scmp.eq.s32.totalorder %s29, 0
    %p160 = por %p158, %p159
    %p161 = scmp.ne.s32.totalorder %s147, %s148
    %p162 = scmp.eq.s32.totalorder %s30, 1
    %p163 = por %p161, %p162
    %p165 = scmp.ne.s32.totalorder %s148, %s164
    %p166 = scmp.eq.s32.totalorder %s30, 0
    %p167 = por %p165, %p166
    %s168 = ssub.s32 %s24, %s31
    %p169 = scmp.eq.s32.totalorder %s168, 0
    %s171 = sadd.s32 %s170, 1
    %s172 = scalar_select %p169, %s170, %s171
    %p175 = pneg %p169
    %p176 = scmp.eq.s32.totalorder %s24, 1
    %p177 = por %p175, %p176
    %p178 = scmp.ne.s32.totalorder %s170, %s173
    %p179 = scmp.eq.s32.totalorder %s24, 0
    %p180 = por %p178, %p179
    %p181 = scmp.ne.s32.totalorder %s170, %s173
    %p182 = scmp.eq.s32.totalorder %s29, 1
    %p183 = por %p181, %p182
    %p184 = scmp.ne.s32.totalorder %s173, %s174
    %p185 = scmp.eq.s32.totalorder %s29, 0
    %p186 = por %p184, %p185
    %p187 = scmp.ne.s32.totalorder %s173, %s174
    %p188 = scmp.eq.s32.totalorder %s30, 1
    %p189 = por %p187, %p188
    %p191 = scmp.ne.s32.totalorder %s174, %s190
    %p192 = scmp.eq.s32.totalorder %s30, 0
    %p193 = por %p191, %p192
    %s194 = ssub.s32 %s24, %s31
    %p195 = scmp.eq.s32.totalorder %s194, 0
    %s197 = sadd.s32 %s196, 1
    %s198 = scalar_select %p195, %s196, %s197
    %p201 = pneg %p195
    %p202 = scmp.eq.s32.totalorder %s24, 1
    %p203 = por %p201, %p202
    %p204 = scmp.ne.s32.totalorder %s196, %s199
    %p205 = scmp.eq.s32.totalorder %s24, 0
    %p206 = por %p204, %p205
    %p207 = scmp.ne.s32.totalorder %s196, %s199
    %p208 = scmp.eq.s32.totalorder %s29, 1
    %p209 = por %p207, %p208
    %p210 = scmp.ne.s32.totalorder %s199, %s200
    %p211 = scmp.eq.s32.totalorder %s29, 0
    %p212 = por %p210, %p211
    %p213 = scmp.ne.s32.totalorder %s199, %s200
    %p214 = scmp.eq.s32.totalorder %s30, 1
    %p215 = por %p213, %p214
    %p217 = scmp.ne.s32.totalorder %s200, %s216
    %p218 = scmp.eq.s32.totalorder %s30, 0
    %p219 = por %p217, %p218
    %s220 = ssub.s32 %s24, %s31
    %p221 = scmp.eq.s32.totalorder %s220, 0
    %s223 = sadd.s32 %s222, 1
    %s224 = scalar_select %p221, %s222, %s223
    %p227 = pneg %p221
    %p228 = scmp.eq.s32.totalorder %s24, 1
    %p229 = por %p227, %p228
    %p230 = scmp.ne.s32.totalorder %s222, %s225
    %p231 = scmp.eq.s32.totalorder %s24, 0
    %p232 = por %p230, %p231
    %p233 = scmp.ne.s32.totalorder %s222, %s225
    %p234 = scmp.eq.s32.totalorder %s29, 1
    %p235 = por %p233, %p234
    %p236 = scmp.ne.s32.totalorder %s225, %s226
    %p237 = scmp.eq.s32.totalorder %s29, 0
    %p238 = por %p236, %p237
    %p239 = scmp.ne.s32.totalorder %s225, %s226
    %p240 = scmp.eq.s32.totalorder %s30, 1
    %p241 = por %p239, %p240
    %p243 = scmp.ne.s32.totalorder %s226, %s242
    %p244 = scmp.eq.s32.totalorder %s30, 0
    %p245 = por %p243, %p244
    %s246 = ssub.s32 %s24, %s31
    %p247 = scmp.eq.s32.totalorder %s246, 0
    %s249 = sadd.s32 %s248, 1
    %s250 = scalar_select %p247, %s248, %s249
    %p253 = pneg %p247
    %p254 = scmp.eq.s32.totalorder %s24, 1
    %p255 = por %p253, %p254
    %p256 = scmp.ne.s32.totalorder %s248, %s251
    %p257 = scmp.eq.s32.totalorder %s24, 0
    %p258 = por %p256, %p257
    %p259 = scmp.ne.s32.totalorder %s248, %s251
    %p260 = scmp.eq.s32.totalorder %s29, 1
    %p261 = por %p259, %p260
    %p262 = scmp.ne.s32.totalorder %s251, %s252
    %p263 = scmp.eq.s32.totalorder %s29, 0
    %p264 = por %p262, %p263
    %p265 = scmp.ne.s32.totalorder %s251, %s252
    %p266 = scmp.eq.s32.totalorder %s30, 1
    %p267 = por %p265, %p266
    %p269 = scmp.ne.s32.totalorder %s252, %s268
    %p270 = scmp.eq.s32.totalorder %s30, 0
    %p271 = por %p269, %p270
    %s272 = ssub.s32 %s24, %s31
    %p273 = scmp.eq.s32.totalorder %s272, 0
    %s275 = sadd.s32 %s274, 1
    %s276 = scalar_select %p273, %s274, %s275
    %p279 = pneg %p273
    %p280 = scmp.eq.s32.totalorder %s24, 1
    %p281 = por %p279, %p280
    %p282 = scmp.ne.s32.totalorder %s274, %s277
    %p283 = scmp.eq.s32.totalorder %s24, 0
    %p284 = por %p282, %p283
    %p285 = scmp.ne.s32.totalorder %s274, %s277
    %p286 = scmp.eq.s32.totalorder %s29, 1
    %p287 = por %p285, %p286
    %p288 = scmp.ne.s32.totalorder %s277, %s278
    %p289 = scmp.eq.s32.totalorder %s29, 0
    %p290 = por %p288, %p289
    %p291 = scmp.ne.s32.totalorder %s277, %s278
    %p292 = scmp.eq.s32.totalorder %s30, 1
    %p293 = por %p291, %p292
    %p295 = scmp.ne.s32.totalorder %s278, %s294
    %p296 = scmp.eq.s32.totalorder %s30, 0
    %p297 = por %p295, %p296
    %s298 = ssub.s32 %s24, %s31
    %p299 = scmp.eq.s32.totalorder %s298, 0
    %s301 = sadd.s32 %s300, 1
    %s302 = scalar_select %p299, %s300, %s301
    %p305 = pneg %p299
    %p306 = scmp.eq.s32.totalorder %s24, 1
    %p307 = por %p305, %p306
    %p308 = scmp.ne.s32.totalorder %s300, %s303
    %p309 = scmp.eq.s32.totalorder %s24, 0
    %p310 = por %p308, %p309
    %p311 = scmp.ne.s32.totalorder %s300, %s303
    %p312 = scmp.eq.s32.totalorder %s29, 1
    %p313 = por %p311, %p312
    %p314 = scmp.ne.s32.totalorder %s303, %s304
    %p315 = scmp.eq.s32.totalorder %s29, 0
    %p316 = por %p314, %p315
    %p317 = scmp.ne.s32.totalorder %s303, %s304
    %p318 = scmp.eq.s32.totalorder %s30, 1
    %p319 = por %p317, %p318
    %p321 = scmp.ne.s32.totalorder %s304, %s320
    %p322 = scmp.eq.s32.totalorder %s30, 0
    %p323 = por %p321, %p322
    %s324 = ssub.s32 %s24, %s31
    %p325 = scmp.eq.s32.totalorder %s324, 0
    %s327 = sadd.s32 %s326, 1
    %s328 = scalar_select %p325, %s326, %s327
    %p331 = pneg %p325
    %p332 = scmp.eq.s32.totalorder %s24, 1
    %p333 = por %p331, %p332
    %p334 = scmp.ne.s32.totalorder %s326, %s329
    %p335 = scmp.eq.s32.totalorder %s24, 0
    %p336 = por %p334, %p335
    %p337 = scmp.ne.s32.totalorder %s326, %s329
    %p338 = scmp.eq.s32.totalorder %s29, 1
    %p339 = por %p337, %p338
    %p340 = scmp.ne.s32.totalorder %s329, %s330
    %p341 = scmp.eq.s32.totalorder %s29, 0
    %p342 = por %p340, %p341
    %p343 = scmp.ne.s32.totalorder %s329, %s330
    %p344 = scmp.eq.s32.totalorder %s30, 1
    %p345 = por %p343, %p344
    %p347 = scmp.ne.s32.totalorder %s330, %s346
    %p348 = scmp.eq.s32.totalorder %s30, 0
    %p349 = por %p347, %p348
    %s350 = ssub.s32 %s24, %s31
    %p351 = scmp.eq.s32.totalorder %s350, 0
    %s353 = sadd.s32 %s352, 1
    %s354 = scalar_select %p351, %s352, %s353
    %p357 = pneg %p351
    %p358 = scmp.eq.s32.totalorder %s24, 1
    %p359 = por %p357, %p358
    %p360 = scmp.ne.s32.totalorder %s352, %s355
    %p361 = scmp.eq.s32.totalorder %s24, 0
    %p362 = por %p360, %p361
    %p363 = scmp.ne.s32.totalorder %s352, %s355
    %p364 = scmp.eq.s32.totalorder %s29, 1
    %p365 = por %p363, %p364
    %p366 = scmp.ne.s32.totalorder %s355, %s356
    %p367 = scmp.eq.s32.totalorder %s29, 0
    %p368 = por %p366, %p367
    %p369 = scmp.ne.s32.totalorder %s355, %s356
    %p370 = scmp.eq.s32.totalorder %s30, 1
    %p371 = por %p369, %p370
    %p373 = scmp.ne.s32.totalorder %s356, %s372
    %p374 = scmp.eq.s32.totalorder %s30, 0
    %p375 = por %p373, %p374
    %s376 = ssub.s32 %s24, %s31
    %p377 = scmp.eq.s32.totalorder %s376, 0
    %s379 = sadd.s32 %s378, 1
    %s380 = scalar_select %p377, %s378, %s379
    %p383 = pneg %p377
    %p384 = scmp.eq.s32.totalorder %s24, 1
    %p385 = por %p383, %p384
    %p386 = scmp.ne.s32.totalorder %s378, %s381
    %p387 = scmp.eq.s32.totalorder %s24, 0
    %p388 = por %p386, %p387
    %p389 = scmp.ne.s32.totalorder %s378, %s381
    %p390 = scmp.eq.s32.totalorder %s29, 1
    %p391 = por %p389, %p390
    %p392 = scmp.ne.s32.totalorder %s381, %s382
    %p393 = scmp.eq.s32.totalorder %s29, 0
    %p394 = por %p392, %p393
    %p395 = scmp.ne.s32.totalorder %s381, %s382
    %p396 = scmp.eq.s32.totalorder %s30, 1
    %p397 = por %p395, %p396
    %p399 = scmp.ne.s32.totalorder %s382, %s398
    %p400 = scmp.eq.s32.totalorder %s30, 0
    %p401 = por %p399, %p400
    %s402 = ssub.s32 %s24, %s31
    %p403 = scmp.eq.s32.totalorder %s402, 0
    %s405 = sadd.s32 %s404, 1
    %s406 = scalar_select %p403, %s404, %s405
    %p409 = pneg %p403
    %p410 = scmp.eq.s32.totalorder %s24, 1
    %p411 = por %p409, %p410
    %p412 = scmp.ne.s32.totalorder %s404, %s407
    %p413 = scmp.eq.s32.totalorder %s24, 0
    %p414 = por %p412, %p413
    %p415 = scmp.ne.s32.totalorder %s404, %s407
    %p416 = scmp.eq.s32.totalorder %s29, 1
    %p417 = por %p415, %p416
    %p418 = scmp.ne.s32.totalorder %s407, %s408
    %p419 = scmp.eq.s32.totalorder %s29, 0
    %p420 = por %p418, %p419
    %p421 = scmp.ne.s32.totalorder %s407, %s408
    %p422 = scmp.eq.s32.totalorder %s30, 1
    %p423 = por %p421, %p422
    %p425 = scmp.ne.s32.totalorder %s408, %s424
    %p426 = scmp.eq.s32.totalorder %s30, 0
    %p427 = por %p425, %p426
    %s428 = ssub.s32 %s24, %s31
    %p429 = scmp.eq.s32.totalorder %s428, 0
    %s431 = sadd.s32 %s430, 1
    %s432 = scalar_select %p429, %s430, %s431
    %p435 = pneg %p429
    %p436 = scmp.eq.s32.totalorder %s24, 1
    %p437 = por %p435, %p436
    %p438 = scmp.ne.s32.totalorder %s430, %s433
    %p439 = scmp.eq.s32.totalorder %s24, 0
    %p440 = por %p438, %p439
    %p441 = scmp.ne.s32.totalorder %s430, %s433
    %p442 = scmp.eq.s32.totalorder %s29, 1
    %p443 = por %p441, %p442
    %p444 = scmp.ne.s32.totalorder %s433, %s434
    %p445 = scmp.eq.s32.totalorder %s29, 0
    %p446 = por %p444, %p445
    %p447 = scmp.ne.s32.totalorder %s433, %s434
    %p448 = scmp.eq.s32.totalorder %s30, 1
    %p449 = por %p447, %p448
    %p451 = scmp.ne.s32.totalorder %s434, %s450
    %p452 = scmp.eq.s32.totalorder %s30, 0
    %p453 = por %p451, %p452
    %s454 = ssub.s32 %s24, %s31
    %p455 = scmp.eq.s32.totalorder %s454, 0
    %s457 = sadd.s32 %s456, 1
    %s458 = scalar_select %p455, %s456, %s457
    %p461 = pneg %p455
    %p462 = scmp.eq.s32.totalorder %s24, 1
    %p463 = por %p461, %p462
    %p464 = scmp.ne.s32.totalorder %s456, %s459
    %p465 = scmp.eq.s32.totalorder %s24, 0
    %p466 = por %p464, %p465
    %p467 = scmp.ne.s32.totalorder %s456, %s459
    %p468 = scmp.eq.s32.totalorder %s29, 1
    %p469 = por %p467, %p468
    %p470 = scmp.ne.s32.totalorder %s459, %s460
    %p471 = scmp.eq.s32.totalorder %s29, 0
    %p472 = por %p470, %p471
    %p473 = scmp.ne.s32.totalorder %s459, %s460
    %p474 = scmp.eq.s32.totalorder %s30, 1
    %p475 = por %p473, %p474
    %p477 = scmp.ne.s32.totalorder %s460, %s476
    %p478 = scmp.eq.s32.totalorder %s30, 0
    %p479 = por %p477, %p478
    %s480 = ssub.s32 %s24, %s31
    %p481 = scmp.eq.s32.totalorder %s480, 0
    %s483 = sadd.s32 %s482, 1
    %s484 = scalar_select %p481, %s482, %s483
    %p487 = pneg %p481
    %p488 = scmp.eq.s32.totalorder %s24, 1
    %p489 = por %p487, %p488
    %p490 = scmp.ne.s32.totalorder %s482, %s485
    %p491 = scmp.eq.s32.totalorder %s24, 0
    %p492 = por %p490, %p491
    %p493 = scmp.ne.s32.totalorder %s482, %s485
    %p494 = scmp.eq.s32.totalorder %s29, 1
    %p495 = por %p493, %p494
    %p496 = scmp.ne.s32.totalorder %s485, %s486
    %p497 = scmp.eq.s32.totalorder %s29, 0
    %p498 = por %p496, %p497
    %p499 = scmp.ne.s32.totalorder %s485, %s486
    %p500 = scmp.eq.s32.totalorder %s30, 1
    %p501 = por %p499, %p500
    %p503 = scmp.ne.s32.totalorder %s486, %s502
    %p504 = scmp.eq.s32.totalorder %s30, 0
    %p505 = por %p503, %p504
    %p506 = scmp.le.s32.totalorder 1, %s24
    %p507 = scmp.lt.s32.totalorder %s24, 3
    %p508 = pnand %p506, %p507
    %p509 = pneg %p508
    // Predicated region
    $region9: #{corner_predictor_forward.1} parent=5 // pred_check
      _
    $region10: #{corner_predictor_forward.1} parent=5 // pred_check_branch
      %511 = sbr.rel (%p508) target = $region12
    $region11: #{corner_predictor_forward.1} parent=5 // pred_region
      %s512 = ssub.s32 %s24, 1
      // Predicated region
      $region13: #{corner_predictor_forward.1} parent=11 // pred_check
        %p513 = pneg %p45
      $region14: #{corner_predictor_forward.1} parent=11 // pred_check_branch
        %515 = sbr.rel (%p513) target = $region16
      $region15: #{corner_predictor_forward.1} parent=11 // pred_region
        _
      $region16: #{corner_predictor_forward.1} parent=11 // pred_fallthru
        _
      // Predicated region
      $region17: #{corner_predictor_forward.1} parent=11 // pred_check
        %p516 = pneg %p66
      $region18: #{corner_predictor_forward.1} parent=11 // pred_check_branch
        %518 = sbr.rel (%p516) target = $region20
      $region19: #{corner_predictor_forward.1} parent=11 // pred_region
        _
      $region20: #{corner_predictor_forward.1} parent=11 // pred_fallthru
        _
      // Predicated region
      $region21: #{corner_predictor_forward.1} parent=11 // pred_check
        %p519 = pneg %p87
      $region22: #{corner_predictor_forward.1} parent=11 // pred_check_branch
        %521 = sbr.rel (%p519) target = $region24
      $region23: #{corner_predictor_forward.1} parent=11 // pred_region
        _
      $region24: #{corner_predictor_forward.1} parent=11 // pred_fallthru
        _
      // Predicated region
      $region25: #{corner_predictor_forward.1} parent=11 // pred_check
        %p522 = pneg %p108
      $region26: #{corner_predictor_forward.1} parent=11 // pred_check_branch
        %524 = sbr.rel (%p522) target = $region28
      $region27: #{corner_predictor_forward.1} parent=11 // pred_region
        _
      $region28: #{corner_predictor_forward.1} parent=11 // pred_fallthru
        _
    $region12: #{corner_predictor_forward.1} parent=5 // pred_fallthru
      _
    %p525 = scmp.lt.s32.totalorder %s24, 2
    // Predicated region
    $region29: #{corner_predictor_forward.1} parent=5 // pred_check
      %p526 = pneg %p525
    $region30: #{corner_predictor_forward.1} parent=5 // pred_check_branch
      %528 = sbr.rel (%p526) target = $region32
    $region31: #{corner_predictor_forward.1} parent=5 // pred_region
      // Predicated region
      $region33: #{corner_predictor_forward.1} parent=31 // pred_check
        %p529 = pneg %p128
      $region34: #{corner_predictor_forward.1} parent=31 // pred_check_branch
        %531 = sbr.rel (%p529) target = $region36
      $region35: #{corner_predictor_forward.1} parent=31 // pred_region
        %p532 = scmp.lt.s32.totalorder %s24, 1
        %s533 = scalar_select %p532, %s24, 1
        %s534 = smul.addr %s533, 18
        %s535 = smul.addr %s534, 4
        %s536 = scalar_lea.vmem %s4, %s535
      $region36: #{corner_predictor_forward.1} parent=31 // pred_fallthru
        _
      // Predicated region
      $region37: #{corner_predictor_forward.1} parent=31 // pred_check
        %p537 = pneg %p154
      $region38: #{corner_predictor_forward.1} parent=31 // pred_check_branch
        %539 = sbr.rel (%p537) target = $region40
      $region39: #{corner_predictor_forward.1} parent=31 // pred_region
        %p540 = scmp.lt.s32.totalorder %s24, 1
        %s541 = scalar_select %p540, %s24, 1
        %s542 = scalar_lea.vmem %s5, %s541
      $region40: #{corner_predictor_forward.1} parent=31 // pred_fallthru
        _
      // Predicated region
      $region41: #{corner_predictor_forward.1} parent=31 // pred_check
        %p543 = pneg %p180
      $region42: #{corner_predictor_forward.1} parent=31 // pred_check_branch
        %545 = sbr.rel (%p543) target = $region44
      $region43: #{corner_predictor_forward.1} parent=31 // pred_region
        %p546 = scmp.lt.s32.totalorder %s24, 1
        %s547 = scalar_select %p546, %s24, 1
        %s548 = scalar_lea.vmem %s6, %s547
      $region44: #{corner_predictor_forward.1} parent=31 // pred_fallthru
        _
      // Predicated region
      $region45: #{corner_predictor_forward.1} parent=31 // pred_check
        %p549 = pneg %p206
      $region46: #{corner_predictor_forward.1} parent=31 // pred_check_branch
        %551 = sbr.rel (%p549) target = $region48
      $region47: #{corner_predictor_forward.1} parent=31 // pred_region
        %p552 = scmp.lt.s32.totalorder %s24, 1
        %s553 = scalar_select %p552, %s24, 1
        %s554 = smul.addr %s553, 18
        %s555 = smul.addr %s554, 4
        %s556 = scalar_lea.vmem %s7, %s555
      $region48: #{corner_predictor_forward.1} parent=31 // pred_fallthru
        _
      // Predicated region
      $region49: #{corner_predictor_forward.1} parent=31 // pred_check
        %p557 = pneg %p232
      $region50: #{corner_predictor_forward.1} parent=31 // pred_check_branch
        %559 = sbr.rel (%p557) target = $region52
      $region51: #{corner_predictor_forward.1} parent=31 // pred_region
        %p560 = scmp.lt.s32.totalorder %s24, 1
        %s561 = scalar_select %p560, %s24, 1
        %s562 = scalar_lea.vmem %s8, %s561
      $region52: #{corner_predictor_forward.1} parent=31 // pred_fallthru
        _
      // Predicated region
      $region53: #{corner_predictor_forward.1} parent=31 // pred_check
        %p563 = pneg %p258
      $region54: #{corner_predictor_forward.1} parent=31 // pred_check_branch
        %565 = sbr.rel (%p563) target = $region56
      $region55: #{corner_predictor_forward.1} parent=31 // pred_region
        %p566 = scmp.lt.s32.totalorder %s24, 1
        %s567 = scalar_select %p566, %s24, 1
        %s568 = scalar_lea.vmem %s9, %s567
      $region56: #{corner_predictor_forward.1} parent=31 // pred_fallthru
        _
      // Predicated region
      $region57: #{corner_predictor_forward.1} parent=31 // pred_check
        %p569 = pneg %p284
      $region58: #{corner_predictor_forward.1} parent=31 // pred_check_branch
        %571 = sbr.rel (%p569) target = $region60
      $region59: #{corner_predictor_forward.1} parent=31 // pred_region
        %p572 = scmp.lt.s32.totalorder %s24, 1
        %s573 = scalar_select %p572, %s24, 1
        %s574 = smul.addr %s573, 9
        %s575 = smul.addr %s574, 4
        %s576 = scalar_lea.vmem %s10, %s575
      $region60: #{corner_predictor_forward.1} parent=31 // pred_fallthru
        _
      // Predicated region
      $region61: #{corner_predictor_forward.1} parent=31 // pred_check
        %p577 = pneg %p310
      $region62: #{corner_predictor_forward.1} parent=31 // pred_check_branch
        %579 = sbr.rel (%p577) target = $region64
      $region63: #{corner_predictor_forward.1} parent=31 // pred_region
        %p580 = scmp.lt.s32.totalorder %s24, 1
        %s581 = scalar_select %p580, %s24, 1
        %s582 = scalar_lea.vmem %s11, %s581
      $region64: #{corner_predictor_forward.1} parent=31 // pred_fallthru
        _
      // Predicated region
      $region65: #{corner_predictor_forward.1} parent=31 // pred_check
        %p583 = pneg %p336
      $region66: #{corner_predictor_forward.1} parent=31 // pred_check_branch
        %585 = sbr.rel (%p583) target = $region68
      $region67: #{corner_predictor_forward.1} parent=31 // pred_region
        %p586 = scmp.lt.s32.totalorder %s24, 1
        %s587 = scalar_select %p586, %s24, 1
        %s588 = scalar_lea.vmem %s12, %s587
      $region68: #{corner_predictor_forward.1} parent=31 // pred_fallthru
        _
      // Predicated region
      $region69: #{corner_predictor_forward.1} parent=31 // pred_check
        %p589 = pneg %p362
      $region70: #{corner_predictor_forward.1} parent=31 // pred_check_branch
        %591 = sbr.rel (%p589) target = $region72
      $region71: #{corner_predictor_forward.1} parent=31 // pred_region
        %p592 = scmp.lt.s32.totalorder %s24, 1
        %s593 = scalar_select %p592, %s24, 1
        %s594 = smul.addr %s593, 5
        %s595 = smul.addr %s594, 4
        %s596 = scalar_lea.vmem %s13, %s595
      $region72: #{corner_predictor_forward.1} parent=31 // pred_fallthru
        _
      // Predicated region
      $region73: #{corner_predictor_forward.1} parent=31 // pred_check
        %p597 = pneg %p388
      $region74: #{corner_predictor_forward.1} parent=31 // pred_check_branch
        %599 = sbr.rel (%p597) target = $region76
      $region75: #{corner_predictor_forward.1} parent=31 // pred_region
        %p600 = scmp.lt.s32.totalorder %s24, 1
        %s601 = scalar_select %p600, %s24, 1
        %s602 = scalar_lea.vmem %s14, %s601
      $region76: #{corner_predictor_forward.1} parent=31 // pred_fallthru
        _
      // Predicated region
      $region77: #{corner_predictor_forward.1} parent=31 // pred_check
        %p603 = pneg %p414
      $region78: #{corner_predictor_forward.1} parent=31 // pred_check_branch
        %605 = sbr.rel (%p603) target = $region80
      $region79: #{corner_predictor_forward.1} parent=31 // pred_region
        %p606 = scmp.lt.s32.totalorder %s24, 1
        %s607 = scalar_select %p606, %s24, 1
        %s608 = scalar_lea.vmem %s15, %s607
      $region80: #{corner_predictor_forward.1} parent=31 // pred_fallthru
        _
      // Predicated region
      $region81: #{corner_predictor_forward.1} parent=31 // pred_check
        %p609 = pneg %p440
      $region82: #{corner_predictor_forward.1} parent=31 // pred_check_branch
        %611 = sbr.rel (%p609) target = $region84
      $region83: #{corner_predictor_forward.1} parent=31 // pred_region
        %p612 = scmp.lt.s32.totalorder %s24, 1
        %s613 = scalar_select %p612, %s24, 1
        %s614 = scalar_lea.vmem %s16, %s613
      $region84: #{corner_predictor_forward.1} parent=31 // pred_fallthru
        _
      // Predicated region
      $region85: #{corner_predictor_forward.1} parent=31 // pred_check
        %p615 = pneg %p466
      $region86: #{corner_predictor_forward.1} parent=31 // pred_check_branch
        %617 = sbr.rel (%p615) target = $region88
      $region87: #{corner_predictor_forward.1} parent=31 // pred_region
        %p618 = scmp.lt.s32.totalorder %s24, 1
        %s619 = scalar_select %p618, %s24, 1
        %s620 = scalar_lea.vmem %s17, %s619
      $region88: #{corner_predictor_forward.1} parent=31 // pred_fallthru
        _
    $region32: #{corner_predictor_forward.1} parent=5 // pred_fallthru
      _
    %p621 = scmp.le.s32.totalorder 1, %s24
    %p622 = scmp.lt.s32.totalorder %s24, 3
    %p623 = pnand %p621, %p622
    %p624 = pneg %p623
    // Predicated region
    $region89: #{corner_predictor_forward.1} parent=5 // pred_check
      _
    $region90: #{corner_predictor_forward.1} parent=5 // pred_check_branch
      %626 = sbr.rel (%p623) target = $region92
    $region91: #{corner_predictor_forward.1} parent=5 // pred_region
      %s627 = ssub.s32 %s24, 1
      %p628 = pneg %p45
      %p629 = pneg %p42
      %p630 = pneg %p66
      %p631 = pneg %p63
      %p632 = pneg %p87
      %p633 = pneg %p84
      %p634 = pneg %p108
      %p635 = pneg %p105
      %p636 = scmp.lt.s32.totalorder %s29, 1
      %s637 = scalar_select %p636, %s29, 1
      %s638 = smul.addr %s637, 18
      %s639 = smul.addr %s638, 4
      %s640 = scalar_lea.vmem %s4, %s639
      %p641 = pneg %p134
      %p642 = pneg %p131
      %p643 = scmp.lt.s32.totalorder %s29, 1
      %s644 = scalar_select %p643, %s29, 1
      %s645 = scalar_lea.vmem %s5, %s644
      %p646 = pneg %p160
      %p647 = pneg %p157
      %p648 = scmp.lt.s32.totalorder %s29, 1
      %s649 = scalar_select %p648, %s29, 1
      %s650 = scalar_lea.vmem %s6, %s649
      %p651 = pneg %p186
      %p652 = pneg %p183
      %p653 = scmp.lt.s32.totalorder %s29, 1
      %s654 = scalar_select %p653, %s29, 1
      %s655 = smul.addr %s654, 18
      %s656 = smul.addr %s655, 4
      %s657 = scalar_lea.vmem %s7, %s656
      %p658 = pneg %p212
      %p659 = pneg %p209
      %p660 = scmp.lt.s32.totalorder %s29, 1
      %s661 = scalar_select %p660, %s29, 1
      %s662 = scalar_lea.vmem %s8, %s661
      %p663 = pneg %p238
      %p664 = pneg %p235
      %p665 = scmp.lt.s32.totalorder %s29, 1
      %s666 = scalar_select %p665, %s29, 1
      %s667 = scalar_lea.vmem %s9, %s666
      %p668 = pneg %p264
      %p669 = pneg %p261
      %p670 = scmp.lt.s32.totalorder %s29, 1
      %s671 = scalar_select %p670, %s29, 1
      %s672 = smul.addr %s671, 9
      %s673 = smul.addr %s672, 4
      %s674 = scalar_lea.vmem %s10, %s673
      %p675 = pneg %p290
      %p676 = pneg %p287
      %p677 = scmp.lt.s32.totalorder %s29, 1
      %s678 = scalar_select %p677, %s29, 1
      %s679 = scalar_lea.vmem %s11, %s678
      %p680 = pneg %p316
      %p681 = pneg %p313
      %p682 = scmp.lt.s32.totalorder %s29, 1
      %s683 = scalar_select %p682, %s29, 1
      %s684 = scalar_lea.vmem %s12, %s683
      %p685 = pneg %p342
      %p686 = pneg %p339
      %p687 = scmp.lt.s32.totalorder %s29, 1
      %s688 = scalar_select %p687, %s29, 1
      %s689 = smul.addr %s688, 5
      %s690 = smul.addr %s689, 4
      %s691 = scalar_lea.vmem %s13, %s690
      %p692 = pneg %p368
      %p693 = pneg %p365
      %p694 = scmp.lt.s32.totalorder %s29, 1
      %s695 = scalar_select %p694, %s29, 1
      %s696 = scalar_lea.vmem %s14, %s695
      %p697 = pneg %p394
      %p698 = pneg %p391
      %p699 = scmp.lt.s32.totalorder %s29, 1
      %s700 = scalar_select %p699, %s29, 1
      %s701 = scalar_lea.vmem %s15, %s700
      %p702 = pneg %p420
      %p703 = pneg %p417
      %p704 = scmp.lt.s32.totalorder %s29, 1
      %s705 = scalar_select %p704, %s29, 1
      %s706 = scalar_lea.vmem %s16, %s705
      %p707 = pneg %p446
      %p708 = pneg %p443
      %p709 = scmp.lt.s32.totalorder %s29, 1
      %s710 = scalar_select %p709, %s29, 1
      %s711 = scalar_lea.vmem %s17, %s710
      %p712 = pneg %p472
      %p713 = pneg %p469
      %p714 = pneg %p498
      %p715 = pneg %p495
      %p716 = scmp.lt.s32.totalorder %s29, 1
      %s717 = scalar_select %p716, %s29, 1
      %s718 = smul.addr %s717, 2
      %s719 = scalar_lea.vmem %s18, %s718
      %p720 = scmp.lt.s32.totalorder %s29, 1
      %s721 = scalar_select %p720, %s29, 1
      %s722 = smul.addr %s721, 18
      %s723 = smul.addr %s722, 4
      %s724 = scalar_lea.vmem %s4, %s723
      %p725 = scmp.lt.s32.totalorder %s29, 1
      %s726 = scalar_select %p725, %s29, 1
      %s727 = scalar_lea.vmem %s5, %s726
      %p728 = scmp.lt.s32.totalorder %s29, 1
      %s729 = scalar_select %p728, %s29, 1
      %s730 = scalar_lea.vmem %s6, %s729
      %p731 = scmp.lt.s32.totalorder %s29, 1
      %s732 = scalar_select %p731, %s29, 1
      %s733 = smul.addr %s732, 18
      %s734 = smul.addr %s733, 4
      %s735 = scalar_lea.vmem %s7, %s734
      %p736 = scmp.lt.s32.totalorder %s29, 1
      %s737 = scalar_select %p736, %s29, 1
      %s738 = scalar_lea.vmem %s8, %s737
      %p739 = scmp.lt.s32.totalorder %s29, 1
      %s740 = scalar_select %p739, %s29, 1
      %s741 = scalar_lea.vmem %s9, %s740
      %p742 = scmp.lt.s32.totalorder %s29, 1
      %s743 = scalar_select %p742, %s29, 1
      %s744 = smul.addr %s743, 9
      %s745 = smul.addr %s744, 4
      %s746 = scalar_lea.vmem %s10, %s745
      %p747 = scmp.lt.s32.totalorder %s29, 1
      %s748 = scalar_select %p747, %s29, 1
      %s749 = scalar_lea.vmem %s11, %s748
      %p750 = scmp.lt.s32.totalorder %s29, 1
      %s751 = scalar_select %p750, %s29, 1
      %s752 = scalar_lea.vmem %s12, %s751
      %p753 = scmp.lt.s32.totalorder %s29, 1
      %s754 = scalar_select %p753, %s29, 1
      %s755 = smul.addr %s754, 5
      %s756 = smul.addr %s755, 4
      %s757 = scalar_lea.vmem %s13, %s756
      %p758 = scmp.lt.s32.totalorder %s29, 1
      %s759 = scalar_select %p758, %s29, 1
      %s760 = scalar_lea.vmem %s14, %s759
      %p761 = scmp.lt.s32.totalorder %s29, 1
      %s762 = scalar_select %p761, %s29, 1
      %s763 = scalar_lea.vmem %s15, %s762
      %p764 = scmp.lt.s32.totalorder %s29, 1
      %s765 = scalar_select %p764, %s29, 1
      %s766 = scalar_lea.vmem %s16, %s765
      %p767 = scmp.lt.s32.totalorder %s29, 1
      %s768 = scalar_select %p767, %s29, 1
      %s769 = scalar_lea.vmem %s17, %s768
      %p770 = scmp.lt.s32.totalorder %s29, 1
      %s771 = scalar_select %p770, %s29, 1
      %s772 = smul.addr %s771, 2
      %s773 = scalar_lea.vmem %s18, %s772
      %v775 = vld [vmem:[%s0] sm:$0xff]
      %v776 = vld [vmem:[%s0 + $0x8] sm:$0xff]
      %v777 = vld [vmem:[%s0 + $0x10] sm:$0xff]
      %v778 = vld [vmem:[%s0 + $0x18] sm:$0xff]
      %v779 = vld [vmem:[%s0 + $0x20] sm:$0xff]
      %v780 = vld [vmem:[%s0 + $0x28] sm:$0xff]
      %v781 = vld [vmem:[%s0 + $0x30] sm:$0xff]
      %v782 = vld [vmem:[%s0 + $0x38] sm:$0xff]
      %v783 = vld [vmem:[%s0 + $0x40] sm:$0xff]
      %v784 = vld [vmem:[%s0 + $0x48] sm:$0xff]
      %v785 = vld [vmem:[%s0 + $0x50] sm:$0xff]
      %v786 = vld [vmem:[%s0 + $0x58] sm:$0xff]
      %v787 = vld [vmem:[%s0 + $0x60] sm:$0xff]
      %v788 = vld [vmem:[%s0 + $0x68] sm:$0xff]
      %v789 = vld [vmem:[%s0 + $0x70] sm:$0xff]
      %v790 = vld [vmem:[%s0 + $0x78] sm:$0xff]
      %v791 = vld [vmem:[%s0 + $0x80] sm:$0xff]
      %v792 = vld [vmem:[%s0 + $0x88] sm:$0xff]
      %v793 = vld [vmem:[%s0 + $0x90] sm:$0xff]
      %v794 = vld [vmem:[%s0 + $0x98] sm:$0xff]
      %v795 = vld [vmem:[%s0 + $0xa0] sm:$0xff]
      %v796 = vld [vmem:[%s0 + $0xa8] sm:$0xff]
      %v797 = vld [vmem:[%s0 + $0xb0] sm:$0xff]
      %v798 = vld [vmem:[%s0 + $0xb8] sm:$0xff]
      %v799 = vld [vmem:[%s0 + $0xc0] sm:$0xff]
      %v800 = vld [vmem:[%s3] sm:$0xff]
      %v801 = vld [vmem:[%s3 + $0x8] sm:$0xff]
      %v802 = vld [vmem:[%s3 + $0x10] sm:$0xff]
      %v803 = vld [vmem:[%s3 + $0x18] sm:$0xff]
      %v804 = vld [vmem:[%s3 + $0x20] sm:$0xff]
      %v805 = vld [vmem:[%s3 + $0x28] sm:$0xff]
      %v806 = vld [vmem:[%s3 + $0x30] sm:$0xff]
      %v807 = vld [vmem:[%s3 + $0x38] sm:$0xff]
      %v808 = vld [vmem:[%s3 + $0x40] sm:$0xff]
      %v809 = vld [vmem:[%s3 + $0x48] sm:$0xff]
      %v810 = vld [vmem:[%s3 + $0x50] sm:$0xff]
      %v811 = vld [vmem:[%s3 + $0x58] sm:$0xff]
      %v812 = vld [vmem:[%s3 + $0x60] sm:$0xff]
      %v813 = vld [vmem:[%s3 + $0x68] sm:$0xff]
      %v814 = vld [vmem:[%s3 + $0x70] sm:$0xff]
      %v815 = vld [vmem:[%s3 + $0x78] sm:$0xff]
      %v816 = vld [vmem:[%s3 + $0x80] sm:$0xff]
      %v817 = vld [vmem:[%s3 + $0x88] sm:$0xff]
      %v818 = vld [vmem:[%s3 + $0x90] sm:$0xff]
      %v819 = vld [vmem:[%s3 + $0x98] sm:$0xff]
      %v820 = vld [vmem:[%s3 + $0xa0] sm:$0xff]
      %v821 = vld [vmem:[%s3 + $0xa8] sm:$0xff]
      %v822 = vld [vmem:[%s3 + $0xb0] sm:$0xff]
      %v823 = vld [vmem:[%s3 + $0xb8] sm:$0xff]
      %v824 = vld [vmem:[%s3 + $0xc0] sm:$0xff]
      %vm849 = vcmask 1042432
      %v850 = vrot.slane %v800, 5
      %v851 = vrot.slane %v801, 5
      %v852 = vsel %vm849, %v850, %v851
      %v853 = vrot.slane %v802, 5
      %v854 = vsel %vm849, %v851, %v853
      %v855 = vrot.slane %v803, 5
      %v856 = vsel %vm849, %v853, %v855
      %v857 = vrot.slane %v804, 5
      %v858 = vsel %vm849, %v855, %v857
      %v859 = vrot.slane %v805, 5
      %v860 = vsel %vm849, %v857, %v859
      %v861 = vrot.slane %v806, 5
      %v862 = vsel %vm849, %v859, %v861
      %v863 = vrot.slane %v807, 5
      %v864 = vsel %vm849, %v861, %v863
      %v865 = vrot.slane %v808, 5
      %v866 = vsel %vm849, %v863, %v865
      %v867 = vrot.slane %v809, 5
      %v868 = vsel %vm849, %v865, %v867
      %v869 = vrot.slane %v810, 5
      %v870 = vsel %vm849, %v867, %v869
      %v871 = vrot.slane %v811, 5
      %v872 = vsel %vm849, %v869, %v871
      %v873 = vrot.slane %v812, 5
      %v874 = vsel %vm849, %v871, %v873
      %v875 = vrot.slane %v813, 5
      %v876 = vsel %vm849, %v873, %v875
      %v877 = vrot.slane %v814, 5
      %v878 = vsel %vm849, %v875, %v877
      %v879 = vrot.slane %v815, 5
      %v880 = vsel %vm849, %v877, %v879
      %v881 = vrot.slane %v816, 5
      %v882 = vsel %vm849, %v879, %v881
      %v883 = vrot.slane %v817, 5
      %v884 = vsel %vm849, %v881, %v883
      %v885 = vrot.slane %v818, 5
      %v886 = vsel %vm849, %v883, %v885
      %v887 = vrot.slane %v819, 5
      %v888 = vsel %vm849, %v885, %v887
      %v889 = vrot.slane %v820, 5
      %v890 = vsel %vm849, %v887, %v889
      %v891 = vrot.slane %v821, 5
      %v892 = vsel %vm849, %v889, %v891
      %v893 = vrot.slane %v822, 5
      %v894 = vsel %vm849, %v891, %v893
      %v895 = vrot.slane %v823, 5
      %v896 = vsel %vm849, %v893, %v895
      %v921 = vsel %vm849, 0.0, %v850
      %vm922 = vcmask 1041408
      %v923 = vrot.slane %v800, 6
      %v924 = vrot.slane %v801, 6
      %v925 = vsel %vm922, %v923, %v924
      %v926 = vrot.slane %v802, 6
      %v927 = vsel %vm922, %v924, %v926
      %v928 = vrot.slane %v803, 6
      %v929 = vsel %vm922, %v926, %v928
      %v930 = vrot.slane %v804, 6
      %v931 = vsel %vm922, %v928, %v930
      %v932 = vrot.slane %v805, 6
      %v933 = vsel %vm922, %v930, %v932
      %v934 = vrot.slane %v806, 6
      %v935 = vsel %vm922, %v932, %v934
      %v936 = vrot.slane %v807, 6
      %v937 = vsel %vm922, %v934, %v936
      %v938 = vrot.slane %v808, 6
      %v939 = vsel %vm922, %v936, %v938
      %v940 = vrot.slane %v809, 6
      %v941 = vsel %vm922, %v938, %v940
      %v942 = vrot.slane %v810, 6
      %v943 = vsel %vm922, %v940, %v942
      %v944 = vrot.slane %v811, 6
      %v945 = vsel %vm922, %v942, %v944
      %v946 = vrot.slane %v812, 6
      %v947 = vsel %vm922, %v944, %v946
      %v948 = vrot.slane %v813, 6
      %v949 = vsel %vm922, %v946, %v948
      %v950 = vrot.slane %v814, 6
      %v951 = vsel %vm922, %v948, %v950
      %v952 = vrot.slane %v815, 6
      %v953 = vsel %vm922, %v950, %v952
      %v954 = vrot.slane %v816, 6
      %v955 = vsel %vm922, %v952, %v954
      %v956 = vrot.slane %v817, 6
      %v957 = vsel %vm922, %v954, %v956
      %v958 = vrot.slane %v818, 6
      %v959 = vsel %vm922, %v956, %v958
      %v960 = vrot.slane %v819, 6
      %v961 = vsel %vm922, %v958, %v960
      %v962 = vrot.slane %v820, 6
      %v963 = vsel %vm922, %v960, %v962
      %v964 = vrot.slane %v821, 6
      %v965 = vsel %vm922, %v962, %v964
      %v966 = vrot.slane %v822, 6
      %v967 = vsel %vm922, %v964, %v966
      %v968 = vrot.slane %v823, 6
      %v969 = vsel %vm922, %v966, %v968
      %v971 = vsel %vm922, 0.0, %v923
      %vm972 = vcmask 1040384
      %v973 = vrot.slane %v800, 7
      %v974 = vrot.slane %v801, 7
      %v975 = vsel %vm972, %v973, %v974
      %v976 = vrot.slane %v802, 7
      %v977 = vsel %vm972, %v974, %v976
      %v978 = vrot.slane %v803, 7
      %v979 = vsel %vm972, %v976, %v978
      %v980 = vrot.slane %v804, 7
      %v981 = vsel %vm972, %v978, %v980
      %v982 = vrot.slane %v805, 7
      %v983 = vsel %vm972, %v980, %v982
      %v984 = vrot.slane %v806, 7
      %v985 = vsel %vm972, %v982, %v984
      %v986 = vrot.slane %v807, 7
      %v987 = vsel %vm972, %v984, %v986
      %v988 = vrot.slane %v808, 7
      %v989 = vsel %vm972, %v986, %v988
      %v990 = vrot.slane %v809, 7
      %v991 = vsel %vm972, %v988, %v990
      %v992 = vrot.slane %v810, 7
      %v993 = vsel %vm972, %v990, %v992
      %v994 = vrot.slane %v811, 7
      %v995 = vsel %vm972, %v992, %v994
      %v996 = vrot.slane %v812, 7
      %v997 = vsel %vm972, %v994, %v996
      %v998 = vrot.slane %v813, 7
      %v999 = vsel %vm972, %v996, %v998
      %v1000 = vrot.slane %v814, 7
      %v1001 = vsel %vm972, %v998, %v1000
      %v1002 = vrot.slane %v815, 7
      %v1003 = vsel %vm972, %v1000, %v1002
      %v1004 = vrot.slane %v816, 7
      %v1005 = vsel %vm972, %v1002, %v1004
      %v1006 = vrot.slane %v817, 7
      %v1007 = vsel %vm972, %v1004, %v1006
      %v1008 = vrot.slane %v818, 7
      %v1009 = vsel %vm972, %v1006, %v1008
      %v1010 = vrot.slane %v819, 7
      %v1011 = vsel %vm972, %v1008, %v1010
      %v1012 = vrot.slane %v820, 7
      %v1013 = vsel %vm972, %v1010, %v1012
      %v1014 = vrot.slane %v821, 7
      %v1015 = vsel %vm972, %v1012, %v1014
      %v1016 = vrot.slane %v822, 7
      %v1017 = vsel %vm972, %v1014, %v1016
      %v1018 = vrot.slane %v823, 7
      %v1019 = vsel %vm972, %v1016, %v1018
      %v1021 = vsel %vm972, 0.0, %v973
      %v1023 = vrot.slane %v824, 7
      %v1024 = vsel %vm972, %v1018, %v1023
      %vm1025 = vcmask 1046528
      %v1026 = vrot.slane %v800, 1
      %v1027 = vrot.slane %v801, 1
      %v1028 = vsel %vm1025, %v1026, %v1027
      %v1029 = vrot.slane %v802, 1
      %v1030 = vsel %vm1025, %v1027, %v1029
      %v1031 = vrot.slane %v803, 1
      %v1032 = vsel %vm1025, %v1029, %v1031
      %v1033 = vrot.slane %v804, 1
      %v1034 = vsel %vm1025, %v1031, %v1033
      %v1035 = vrot.slane %v805, 1
      %v1036 = vsel %vm1025, %v1033, %v1035
      %v1037 = vrot.slane %v806, 1
      %v1038 = vsel %vm1025, %v1035, %v1037
      %v1039 = vrot.slane %v807, 1
      %v1040 = vsel %vm1025, %v1037, %v1039
      %v1041 = vrot.slane %v808, 1
      %v1042 = vsel %vm1025, %v1039, %v1041
      %v1043 = vrot.slane %v809, 1
      %v1044 = vsel %vm1025, %v1041, %v1043
      %v1045 = vrot.slane %v810, 1
      %v1046 = vsel %vm1025, %v1043, %v1045
      %v1047 = vrot.slane %v811, 1
      %v1048 = vsel %vm1025, %v1045, %v1047
      %v1049 = vrot.slane %v812, 1
      %v1050 = vsel %vm1025, %v1047, %v1049
      %v1051 = vrot.slane %v813, 1
      %v1052 = vsel %vm1025, %v1049, %v1051
      %v1053 = vrot.slane %v814, 1
      %v1054 = vsel %vm1025, %v1051, %v1053
      %v1055 = vrot.slane %v815, 1
      %v1056 = vsel %vm1025, %v1053, %v1055
      %v1057 = vrot.slane %v816, 1
      %v1058 = vsel %vm1025, %v1055, %v1057
      %v1059 = vrot.slane %v817, 1
      %v1060 = vsel %vm1025, %v1057, %v1059
      %v1061 = vrot.slane %v818, 1
      %v1062 = vsel %vm1025, %v1059, %v1061
      %v1063 = vrot.slane %v819, 1
      %v1064 = vsel %vm1025, %v1061, %v1063
      %v1065 = vrot.slane %v820, 1
      %v1066 = vsel %vm1025, %v1063, %v1065
      %v1067 = vrot.slane %v821, 1
      %v1068 = vsel %vm1025, %v1065, %v1067
      %v1069 = vrot.slane %v822, 1
      %v1070 = vsel %vm1025, %v1067, %v1069
      %v1071 = vrot.slane %v823, 1
      %v1072 = vsel %vm1025, %v1069, %v1071
      %v1073 = vrot.slane %v824, 1
      %v1074 = vsel %vm1025, %v1071, %v1073
      %v1076 = vsel %vm1025, %v1073, 0.0
      %vm1077 = vcmask 1045504
      %v1078 = vrot.slane %v801, 2
      %v1079 = vrot.slane %v802, 2
      %v1080 = vsel %vm1077, %v1078, %v1079
      %v1081 = vrot.slane %v803, 2
      %v1082 = vsel %vm1077, %v1079, %v1081
      %v1083 = vrot.slane %v804, 2
      %v1084 = vsel %vm1077, %v1081, %v1083
      %v1085 = vrot.slane %v805, 2
      %v1086 = vsel %vm1077, %v1083, %v1085
      %v1087 = vrot.slane %v806, 2
      %v1088 = vsel %vm1077, %v1085, %v1087
      %v1089 = vrot.slane %v807, 2
      %v1090 = vsel %vm1077, %v1087, %v1089
      %v1091 = vrot.slane %v808, 2
      %v1092 = vsel %vm1077, %v1089, %v1091
      %v1093 = vrot.slane %v809, 2
      %v1094 = vsel %vm1077, %v1091, %v1093
      %v1095 = vrot.slane %v810, 2
      %v1096 = vsel %vm1077, %v1093, %v1095
      %v1097 = vrot.slane %v811, 2
      %v1098 = vsel %vm1077, %v1095, %v1097
      %v1099 = vrot.slane %v812, 2
      %v1100 = vsel %vm1077, %v1097, %v1099
      %v1101 = vrot.slane %v813, 2
      %v1102 = vsel %vm1077, %v1099, %v1101
      %v1103 = vrot.slane %v814, 2
      %v1104 = vsel %vm1077, %v1101, %v1103
      %v1105 = vrot.slane %v815, 2
      %v1106 = vsel %vm1077, %v1103, %v1105
      %v1107 = vrot.slane %v816, 2
      %v1108 = vsel %vm1077, %v1105, %v1107
      %v1109 = vrot.slane %v817, 2
      %v1110 = vsel %vm1077, %v1107, %v1109
      %v1111 = vrot.slane %v818, 2
      %v1112 = vsel %vm1077, %v1109, %v1111
      %v1113 = vrot.slane %v819, 2
      %v1114 = vsel %vm1077, %v1111, %v1113
      %v1115 = vrot.slane %v820, 2
      %v1116 = vsel %vm1077, %v1113, %v1115
      %v1117 = vrot.slane %v821, 2
      %v1118 = vsel %vm1077, %v1115, %v1117
      %v1119 = vrot.slane %v822, 2
      %v1120 = vsel %vm1077, %v1117, %v1119
      %v1121 = vrot.slane %v823, 2
      %v1122 = vsel %vm1077, %v1119, %v1121
      %v1123 = vrot.slane %v824, 2
      %v1124 = vsel %vm1077, %v1121, %v1123
      %v1126 = vsel %vm1077, %v1123, 0.0
      %vm1127 = vcmask 1044480
      %v1128 = vrot.slane %v801, 3
      %v1129 = vrot.slane %v802, 3
      %v1130 = vsel %vm1127, %v1128, %v1129
      %v1131 = vrot.slane %v803, 3
      %v1132 = vsel %vm1127, %v1129, %v1131
      %v1133 = vrot.slane %v804, 3
      %v1134 = vsel %vm1127, %v1131, %v1133
      %v1135 = vrot.slane %v805, 3
      %v1136 = vsel %vm1127, %v1133, %v1135
      %v1137 = vrot.slane %v806, 3
      %v1138 = vsel %vm1127, %v1135, %v1137
      %v1139 = vrot.slane %v807, 3
      %v1140 = vsel %vm1127, %v1137, %v1139
      %v1141 = vrot.slane %v808, 3
      %v1142 = vsel %vm1127, %v1139, %v1141
      %v1143 = vrot.slane %v809, 3
      %v1144 = vsel %vm1127, %v1141, %v1143
      %v1145 = vrot.slane %v810, 3
      %v1146 = vsel %vm1127, %v1143, %v1145
      %v1147 = vrot.slane %v811, 3
      %v1148 = vsel %vm1127, %v1145, %v1147
      %v1149 = vrot.slane %v812, 3
      %v1150 = vsel %vm1127, %v1147, %v1149
      %v1151 = vrot.slane %v813, 3
      %v1152 = vsel %vm1127, %v1149, %v1151
      %v1153 = vrot.slane %v814, 3
      %v1154 = vsel %vm1127, %v1151, %v1153
      %v1155 = vrot.slane %v815, 3
      %v1156 = vsel %vm1127, %v1153, %v1155
      %v1157 = vrot.slane %v816, 3
      %v1158 = vsel %vm1127, %v1155, %v1157
      %v1159 = vrot.slane %v817, 3
      %v1160 = vsel %vm1127, %v1157, %v1159
      %v1161 = vrot.slane %v818, 3
      %v1162 = vsel %vm1127, %v1159, %v1161
      %v1163 = vrot.slane %v819, 3
      %v1164 = vsel %vm1127, %v1161, %v1163
      %v1165 = vrot.slane %v820, 3
      %v1166 = vsel %vm1127, %v1163, %v1165
      %v1167 = vrot.slane %v821, 3
      %v1168 = vsel %vm1127, %v1165, %v1167
      %v1169 = vrot.slane %v822, 3
      %v1170 = vsel %vm1127, %v1167, %v1169
      %v1171 = vrot.slane %v823, 3
      %v1172 = vsel %vm1127, %v1169, %v1171
      %v1173 = vrot.slane %v824, 3
      %v1174 = vsel %vm1127, %v1171, %v1173
      %v1199 = vsel %vm1127, %v1173, 0.0
      %1202 = vrot.lane.b32.xlu0 0.0, 16
      %v1203 = vpop.permute.xlu0 %1202
      %1204 = vrot.lane.b32.xlu0 %v971, 16
      %v1205 = vpop.permute.xlu0 %1204
      %1206 = vrot.lane.b32.xlu0 %v925, 16
      %v1207 = vpop.permute.xlu0 %1206
      %1208 = vrot.lane.b32.xlu0 %v927, 16
      %v1209 = vpop.permute.xlu0 %1208
      %1210 = vrot.lane.b32.xlu0 %v929, 16
      %v1211 = vpop.permute.xlu0 %1210
      %1212 = vrot.lane.b32.xlu0 %v931, 16
      %v1213 = vpop.permute.xlu0 %1212
      %1214 = vrot.lane.b32.xlu0 %v933, 16
      %v1215 = vpop.permute.xlu0 %1214
      %1216 = vrot.lane.b32.xlu0 %v935, 16
      %v1217 = vpop.permute.xlu0 %1216
      %1218 = vrot.lane.b32.xlu0 %v937, 16
      %v1219 = vpop.permute.xlu0 %1218
      %1220 = vrot.lane.b32.xlu0 %v939, 16
      %v1221 = vpop.permute.xlu0 %1220
      %1222 = vrot.lane.b32.xlu0 %v941, 16
      %v1223 = vpop.permute.xlu0 %1222
      %1224 = vrot.lane.b32.xlu0 %v943, 16
      %v1225 = vpop.permute.xlu0 %1224
      %1226 = vrot.lane.b32.xlu0 %v945, 16
      %v1227 = vpop.permute.xlu0 %1226
      %1228 = vrot.lane.b32.xlu0 %v947, 16
      %v1229 = vpop.permute.xlu0 %1228
      %1230 = vrot.lane.b32.xlu0 %v949, 16
      %v1231 = vpop.permute.xlu0 %1230
      %1232 = vrot.lane.b32.xlu0 %v951, 16
      %v1233 = vpop.permute.xlu0 %1232
      %1234 = vrot.lane.b32.xlu0 %v953, 16
      %v1235 = vpop.permute.xlu0 %1234
      %1236 = vrot.lane.b32.xlu0 %v955, 16
      %v1237 = vpop.permute.xlu0 %1236
      %1238 = vrot.lane.b32.xlu0 %v957, 16
      %v1239 = vpop.permute.xlu0 %1238
      %1240 = vrot.lane.b32.xlu0 %v959, 16
      %v1241 = vpop.permute.xlu0 %1240
      %1242 = vrot.lane.b32.xlu0 %v961, 16
      %v1243 = vpop.permute.xlu0 %1242
      %1244 = vrot.lane.b32.xlu0 %v963, 16
      %v1245 = vpop.permute.xlu0 %1244
      %1246 = vrot.lane.b32.xlu0 %v965, 16
      %v1247 = vpop.permute.xlu0 %1246
      %1248 = vrot.lane.b32.xlu0 %v967, 16
      %v1249 = vpop.permute.xlu0 %1248
      %1250 = vrot.lane.b32.xlu0 %v969, 16
      %v1251 = vpop.permute.xlu0 %1250
      %1278 = vrot.lane.b32.xlu0 0.0, 32
      %v1279 = vpop.permute.xlu0 %1278
      %1280 = vrot.lane.b32.xlu0 %v1021, 32
      %v1281 = vpop.permute.xlu0 %1280
      %1282 = vrot.lane.b32.xlu0 %v975, 32
      %v1283 = vpop.permute.xlu0 %1282
      %1284 = vrot.lane.b32.xlu0 %v977, 32
      %v1285 = vpop.permute.xlu0 %1284
      %1286 = vrot.lane.b32.xlu0 %v979, 32
      %v1287 = vpop.permute.xlu0 %1286
      %1288 = vrot.lane.b32.xlu0 %v981, 32
      %v1289 = vpop.permute.xlu0 %1288
      %1290 = vrot.lane.b32.xlu0 %v983, 32
      %v1291 = vpop.permute.xlu0 %1290
      %1292 = vrot.lane.b32.xlu0 %v985, 32
      %v1293 = vpop.permute.xlu0 %1292
      %1294 = vrot.lane.b32.xlu0 %v987, 32
      %v1295 = vpop.permute.xlu0 %1294
      %1296 = vrot.lane.b32.xlu0 %v989, 32
      %v1297 = vpop.permute.xlu0 %1296
      %1298 = vrot.lane.b32.xlu0 %v991, 32
      %v1299 = vpop.permute.xlu0 %1298
      %1300 = vrot.lane.b32.xlu0 %v993, 32
      %v1301 = vpop.permute.xlu0 %1300
      %1302 = vrot.lane.b32.xlu0 %v995, 32
      %v1303 = vpop.permute.xlu0 %1302
      %1304 = vrot.lane.b32.xlu0 %v997, 32
      %v1305 = vpop.permute.xlu0 %1304
      %1306 = vrot.lane.b32.xlu0 %v999, 32
      %v1307 = vpop.permute.xlu0 %1306
      %1308 = vrot.lane.b32.xlu0 %v1001, 32
      %v1309 = vpop.permute.xlu0 %1308
      %1310 = vrot.lane.b32.xlu0 %v1003, 32
      %v1311 = vpop.permute.xlu0 %1310
      %1312 = vrot.lane.b32.xlu0 %v1005, 32
      %v1313 = vpop.permute.xlu0 %1312
      %1314 = vrot.lane.b32.xlu0 %v1007, 32
      %v1315 = vpop.permute.xlu0 %1314
      %1316 = vrot.lane.b32.xlu0 %v1009, 32
      %v1317 = vpop.permute.xlu0 %1316
      %1318 = vrot.lane.b32.xlu0 %v1011, 32
      %v1319 = vpop.permute.xlu0 %1318
      %1320 = vrot.lane.b32.xlu0 %v1013, 32
      %v1321 = vpop.permute.xlu0 %1320
      %1322 = vrot.lane.b32.xlu0 %v1015, 32
      %v1323 = vpop.permute.xlu0 %1322
      %1324 = vrot.lane.b32.xlu0 %v1017, 32
      %v1325 = vpop.permute.xlu0 %1324
      %1326 = vrot.lane.b32.xlu0 %v1019, 32
      %v1327 = vpop.permute.xlu0 %1326
      %1353 = vrot.lane.b32.xlu0 %v1021, 48
      %v1354 = vpop.permute.xlu0 %1353
      %1355 = vrot.lane.b32.xlu0 %v975, 48
      %v1356 = vpop.permute.xlu0 %1355
      %1357 = vrot.lane.b32.xlu0 %v977, 48
      %v1358 = vpop.permute.xlu0 %1357
      %1359 = vrot.lane.b32.xlu0 %v979, 48
      %v1360 = vpop.permute.xlu0 %1359
      %1361 = vrot.lane.b32.xlu0 %v981, 48
      %v1362 = vpop.permute.xlu0 %1361
      %1363 = vrot.lane.b32.xlu0 %v983, 48
      %v1364 = vpop.permute.xlu0 %1363
      %1365 = vrot.lane.b32.xlu0 %v985, 48
      %v1366 = vpop.permute.xlu0 %1365
      %1367 = vrot.lane.b32.xlu0 %v987, 48
      %v1368 = vpop.permute.xlu0 %1367
      %1369 = vrot.lane.b32.xlu0 %v989, 48
      %v1370 = vpop.permute.xlu0 %1369
      %1371 = vrot.lane.b32.xlu0 %v991, 48
      %v1372 = vpop.permute.xlu0 %1371
      %1373 = vrot.lane.b32.xlu0 %v993, 48
      %v1374 = vpop.permute.xlu0 %1373
      %1375 = vrot.lane.b32.xlu0 %v995, 48
      %v1376 = vpop.permute.xlu0 %1375
      %1377 = vrot.lane.b32.xlu0 %v997, 48
      %v1378 = vpop.permute.xlu0 %1377
      %1379 = vrot.lane.b32.xlu0 %v999, 48
      %v1380 = vpop.permute.xlu0 %1379
      %1381 = vrot.lane.b32.xlu0 %v1001, 48
      %v1382 = vpop.permute.xlu0 %1381
      %1383 = vrot.lane.b32.xlu0 %v1003, 48
      %v1384 = vpop.permute.xlu0 %1383
      %1385 = vrot.lane.b32.xlu0 %v1005, 48
      %v1386 = vpop.permute.xlu0 %1385
      %1387 = vrot.lane.b32.xlu0 %v1007, 48
      %v1388 = vpop.permute.xlu0 %1387
      %1389 = vrot.lane.b32.xlu0 %v1009, 48
      %v1390 = vpop.permute.xlu0 %1389
      %1391 = vrot.lane.b32.xlu0 %v1011, 48
      %v1392 = vpop.permute.xlu0 %1391
      %1393 = vrot.lane.b32.xlu0 %v1013, 48
      %v1394 = vpop.permute.xlu0 %1393
      %1395 = vrot.lane.b32.xlu0 %v1015, 48
      %v1396 = vpop.permute.xlu0 %1395
      %1397 = vrot.lane.b32.xlu0 %v1017, 48
      %v1398 = vpop.permute.xlu0 %1397
      %1399 = vrot.lane.b32.xlu0 %v1019, 48
      %v1400 = vpop.permute.xlu0 %1399
      %1401 = vrot.lane.b32.xlu0 %v1024, 48
      %v1402 = vpop.permute.xlu0 %1401
      %1428 = vrot.lane.b32.xlu0 %v800, 64
      %v1429 = vpop.permute.xlu0 %1428
      %1430 = vrot.lane.b32.xlu0 %v801, 64
      %v1431 = vpop.permute.xlu0 %1430
      %1432 = vrot.lane.b32.xlu0 %v802, 64
      %v1433 = vpop.permute.xlu0 %1432
      %1434 = vrot.lane.b32.xlu0 %v803, 64
      %v1435 = vpop.permute.xlu0 %1434
      %1436 = vrot.lane.b32.xlu0 %v804, 64
      %v1437 = vpop.permute.xlu0 %1436
      %1438 = vrot.lane.b32.xlu0 %v805, 64
      %v1439 = vpop.permute.xlu0 %1438
      %1440 = vrot.lane.b32.xlu0 %v806, 64
      %v1441 = vpop.permute.xlu0 %1440
      %1442 = vrot.lane.b32.xlu0 %v807, 64
      %v1443 = vpop.permute.xlu0 %1442
      %1444 = vrot.lane.b32.xlu0 %v808, 64
      %v1445 = vpop.permute.xlu0 %1444
      %1446 = vrot.lane.b32.xlu0 %v809, 64
      %v1447 = vpop.permute.xlu0 %1446
      %1448 = vrot.lane.b32.xlu0 %v810, 64
      %v1449 = vpop.permute.xlu0 %1448
      %1450 = vrot.lane.b32.xlu0 %v811, 64
      %v1451 = vpop.permute.xlu0 %1450
      %1452 = vrot.lane.b32.xlu0 %v812, 64
      %v1453 = vpop.permute.xlu0 %1452
      %1454 = vrot.lane.b32.xlu0 %v813, 64
      %v1455 = vpop.permute.xlu0 %1454
      %1456 = vrot.lane.b32.xlu0 %v814, 64
      %v1457 = vpop.permute.xlu0 %1456
      %1458 = vrot.lane.b32.xlu0 %v815, 64
      %v1459 = vpop.permute.xlu0 %1458
      %1460 = vrot.lane.b32.xlu0 %v816, 64
      %v1461 = vpop.permute.xlu0 %1460
      %1462 = vrot.lane.b32.xlu0 %v817, 64
      %v1463 = vpop.permute.xlu0 %1462
      %1464 = vrot.lane.b32.xlu0 %v818, 64
      %v1465 = vpop.permute.xlu0 %1464
      %1466 = vrot.lane.b32.xlu0 %v819, 64
      %v1467 = vpop.permute.xlu0 %1466
      %1468 = vrot.lane.b32.xlu0 %v820, 64
      %v1469 = vpop.permute.xlu0 %1468
      %1470 = vrot.lane.b32.xlu0 %v821, 64
      %v1471 = vpop.permute.xlu0 %1470
      %1472 = vrot.lane.b32.xlu0 %v822, 64
      %v1473 = vpop.permute.xlu0 %1472
      %1474 = vrot.lane.b32.xlu0 %v823, 64
      %v1475 = vpop.permute.xlu0 %1474
      %1476 = vrot.lane.b32.xlu0 %v824, 64
      %v1477 = vpop.permute.xlu0 %1476
      %1504 = vrot.lane.b32.xlu0 %v1028, 80
      %v1505 = vpop.permute.xlu0 %1504
      %1506 = vrot.lane.b32.xlu0 %v1030, 80
      %v1507 = vpop.permute.xlu0 %1506
      %1508 = vrot.lane.b32.xlu0 %v1032, 80
      %v1509 = vpop.permute.xlu0 %1508
      %1510 = vrot.lane.b32.xlu0 %v1034, 80
      %v1511 = vpop.permute.xlu0 %1510
      %1512 = vrot.lane.b32.xlu0 %v1036, 80
      %v1513 = vpop.permute.xlu0 %1512
      %1514 = vrot.lane.b32.xlu0 %v1038, 80
      %v1515 = vpop.permute.xlu0 %1514
      %1516 = vrot.lane.b32.xlu0 %v1040, 80
      %v1517 = vpop.permute.xlu0 %1516
      %1518 = vrot.lane.b32.xlu0 %v1042, 80
      %v1519 = vpop.permute.xlu0 %1518
      %1520 = vrot.lane.b32.xlu0 %v1044, 80
      %v1521 = vpop.permute.xlu0 %1520
      %1522 = vrot.lane.b32.xlu0 %v1046, 80
      %v1523 = vpop.permute.xlu0 %1522
      %1524 = vrot.lane.b32.xlu0 %v1048, 80
      %v1525 = vpop.permute.xlu0 %1524
      %1526 = vrot.lane.b32.xlu0 %v1050, 80
      %v1527 = vpop.permute.xlu0 %1526
      %1528 = vrot.lane.b32.xlu0 %v1052, 80
      %v1529 = vpop.permute.xlu0 %1528
      %1530 = vrot.lane.b32.xlu0 %v1054, 80
      %v1531 = vpop.permute.xlu0 %1530
      %1532 = vrot.lane.b32.xlu0 %v1056, 80
      %v1533 = vpop.permute.xlu0 %1532
      %1534 = vrot.lane.b32.xlu0 %v1058, 80
      %v1535 = vpop.permute.xlu0 %1534
      %1536 = vrot.lane.b32.xlu0 %v1060, 80
      %v1537 = vpop.permute.xlu0 %1536
      %1538 = vrot.lane.b32.xlu0 %v1062, 80
      %v1539 = vpop.permute.xlu0 %1538
      %1540 = vrot.lane.b32.xlu0 %v1064, 80
      %v1541 = vpop.permute.xlu0 %1540
      %1542 = vrot.lane.b32.xlu0 %v1066, 80
      %v1543 = vpop.permute.xlu0 %1542
      %1544 = vrot.lane.b32.xlu0 %v1068, 80
      %v1545 = vpop.permute.xlu0 %1544
      %1546 = vrot.lane.b32.xlu0 %v1070, 80
      %v1547 = vpop.permute.xlu0 %1546
      %1548 = vrot.lane.b32.xlu0 %v1072, 80
      %v1549 = vpop.permute.xlu0 %1548
      %1550 = vrot.lane.b32.xlu0 %v1074, 80
      %v1551 = vpop.permute.xlu0 %1550
      %1552 = vrot.lane.b32.xlu0 %v1076, 80
      %v1553 = vpop.permute.xlu0 %1552
      %1579 = vrot.lane.b32.xlu0 %v1030, 96
      %v1580 = vpop.permute.xlu0 %1579
      %1581 = vrot.lane.b32.xlu0 %v1032, 96
      %v1582 = vpop.permute.xlu0 %1581
      %1583 = vrot.lane.b32.xlu0 %v1034, 96
      %v1584 = vpop.permute.xlu0 %1583
      %1585 = vrot.lane.b32.xlu0 %v1036, 96
      %v1586 = vpop.permute.xlu0 %1585
      %1587 = vrot.lane.b32.xlu0 %v1038, 96
      %v1588 = vpop.permute.xlu0 %1587
      %1589 = vrot.lane.b32.xlu0 %v1040, 96
      %v1590 = vpop.permute.xlu0 %1589
      %1591 = vrot.lane.b32.xlu0 %v1042, 96
      %v1592 = vpop.permute.xlu0 %1591
      %1593 = vrot.lane.b32.xlu0 %v1044, 96
      %v1594 = vpop.permute.xlu0 %1593
      %1595 = vrot.lane.b32.xlu0 %v1046, 96
      %v1596 = vpop.permute.xlu0 %1595
      %1597 = vrot.lane.b32.xlu0 %v1048, 96
      %v1598 = vpop.permute.xlu0 %1597
      %1599 = vrot.lane.b32.xlu0 %v1050, 96
      %v1600 = vpop.permute.xlu0 %1599
      %1601 = vrot.lane.b32.xlu0 %v1052, 96
      %v1602 = vpop.permute.xlu0 %1601
      %1603 = vrot.lane.b32.xlu0 %v1054, 96
      %v1604 = vpop.permute.xlu0 %1603
      %1605 = vrot.lane.b32.xlu0 %v1056, 96
      %v1606 = vpop.permute.xlu0 %1605
      %1607 = vrot.lane.b32.xlu0 %v1058, 96
      %v1608 = vpop.permute.xlu0 %1607
      %1609 = vrot.lane.b32.xlu0 %v1060, 96
      %v1610 = vpop.permute.xlu0 %1609
      %1611 = vrot.lane.b32.xlu0 %v1062, 96
      %v1612 = vpop.permute.xlu0 %1611
      %1613 = vrot.lane.b32.xlu0 %v1064, 96
      %v1614 = vpop.permute.xlu0 %1613
      %1615 = vrot.lane.b32.xlu0 %v1066, 96
      %v1616 = vpop.permute.xlu0 %1615
      %1617 = vrot.lane.b32.xlu0 %v1068, 96
      %v1618 = vpop.permute.xlu0 %1617
      %1619 = vrot.lane.b32.xlu0 %v1070, 96
      %v1620 = vpop.permute.xlu0 %1619
      %1621 = vrot.lane.b32.xlu0 %v1072, 96
      %v1622 = vpop.permute.xlu0 %1621
      %1623 = vrot.lane.b32.xlu0 %v1074, 96
      %v1624 = vpop.permute.xlu0 %1623
      %1625 = vrot.lane.b32.xlu0 %v1076, 96
      %v1626 = vpop.permute.xlu0 %1625
      %1627 = vrot.lane.b32.xlu0 0.0, 96
      %v1628 = vpop.permute.xlu0 %1627
      %1655 = vrot.lane.b32.xlu0 %v1080, 112
      %v1656 = vpop.permute.xlu0 %1655
      %1657 = vrot.lane.b32.xlu0 %v1082, 112
      %v1658 = vpop.permute.xlu0 %1657
      %1659 = vrot.lane.b32.xlu0 %v1084, 112
      %v1660 = vpop.permute.xlu0 %1659
      %1661 = vrot.lane.b32.xlu0 %v1086, 112
      %v1662 = vpop.permute.xlu0 %1661
      %1663 = vrot.lane.b32.xlu0 %v1088, 112
      %v1664 = vpop.permute.xlu0 %1663
      %1665 = vrot.lane.b32.xlu0 %v1090, 112
      %v1666 = vpop.permute.xlu0 %1665
      %1667 = vrot.lane.b32.xlu0 %v1092, 112
      %v1668 = vpop.permute.xlu0 %1667
      %1669 = vrot.lane.b32.xlu0 %v1094, 112
      %v1670 = vpop.permute.xlu0 %1669
      %1671 = vrot.lane.b32.xlu0 %v1096, 112
      %v1672 = vpop.permute.xlu0 %1671
      %1673 = vrot.lane.b32.xlu0 %v1098, 112
      %v1674 = vpop.permute.xlu0 %1673
      %1675 = vrot.lane.b32.xlu0 %v1100, 112
      %v1676 = vpop.permute.xlu0 %1675
      %1677 = vrot.lane.b32.xlu0 %v1102, 112
      %v1678 = vpop.permute.xlu0 %1677
      %1679 = vrot.lane.b32.xlu0 %v1104, 112
      %v1680 = vpop.permute.xlu0 %1679
      %1681 = vrot.lane.b32.xlu0 %v1106, 112
      %v1682 = vpop.permute.xlu0 %1681
      %1683 = vrot.lane.b32.xlu0 %v1108, 112
      %v1684 = vpop.permute.xlu0 %1683
      %1685 = vrot.lane.b32.xlu0 %v1110, 112
      %v1686 = vpop.permute.xlu0 %1685
      %1687 = vrot.lane.b32.xlu0 %v1112, 112
      %v1688 = vpop.permute.xlu0 %1687
      %1689 = vrot.lane.b32.xlu0 %v1114, 112
      %v1690 = vpop.permute.xlu0 %1689
      %1691 = vrot.lane.b32.xlu0 %v1116, 112
      %v1692 = vpop.permute.xlu0 %1691
      %1693 = vrot.lane.b32.xlu0 %v1118, 112
      %v1694 = vpop.permute.xlu0 %1693
      %1695 = vrot.lane.b32.xlu0 %v1120, 112
      %v1696 = vpop.permute.xlu0 %1695
      %1697 = vrot.lane.b32.xlu0 %v1122, 112
      %v1698 = vpop.permute.xlu0 %1697
      %1699 = vrot.lane.b32.xlu0 %v1124, 112
      %v1700 = vpop.permute.xlu0 %1699
      %1701 = vrot.lane.b32.xlu0 %v1126, 112
      %v1702 = vpop.permute.xlu0 %1701
      %1703 = vrot.lane.b32.xlu0 0.0, 112
      %v1704 = vpop.permute.xlu0 %1703
      %vm1730 = vcmask 130048
      %v1731 = vsel %vm1730, 0.0, %v1203
      %v1732 = vsel %vm1730, %v921, %v1205
      %v1733 = vsel %vm1730, %v852, %v1207
      %v1734 = vsel %vm1730, %v854, %v1209
      %v1735 = vsel %vm1730, %v856, %v1211
      %v1736 = vsel %vm1730, %v858, %v1213
      %v1737 = vsel %vm1730, %v860, %v1215
      %v1738 = vsel %vm1730, %v862, %v1217
      %v1739 = vsel %vm1730, %v864, %v1219
      %v1740 = vsel %vm1730, %v866, %v1221
      %v1741 = vsel %vm1730, %v868, %v1223
      %v1742 = vsel %vm1730, %v870, %v1225
      %v1743 = vsel %vm1730, %v872, %v1227
      %v1744 = vsel %vm1730, %v874, %v1229
      %v1745 = vsel %vm1730, %v876, %v1231
      %v1746 = vsel %vm1730, %v878, %v1233
      %v1747 = vsel %vm1730, %v880, %v1235
      %v1748 = vsel %vm1730, %v882, %v1237
      %v1749 = vsel %vm1730, %v884, %v1239
      %v1750 = vsel %vm1730, %v886, %v1241
      %v1751 = vsel %vm1730, %v888, %v1243
      %v1752 = vsel %vm1730, %v890, %v1245
      %v1753 = vsel %vm1730, %v892, %v1247
      %v1754 = vsel %vm1730, %v894, %v1249
      %v1755 = vsel %vm1730, %v896, %v1251
      %vm1756 = vcmask 261120
      %v1757 = vsel %vm1756, %v1731, %v1279
      %v1758 = vsel %vm1756, %v1732, %v1281
      %v1759 = vsel %vm1756, %v1733, %v1283
      %v1760 = vsel %vm1756, %v1734, %v1285
      %v1761 = vsel %vm1756, %v1735, %v1287
      %v1762 = vsel %vm1756, %v1736, %v1289
      %v1763 = vsel %vm1756, %v1737, %v1291
      %v1764 = vsel %vm1756, %v1738, %v1293
      %v1765 = vsel %vm1756, %v1739, %v1295
      %v1766 = vsel %vm1756, %v1740, %v1297
      %v1767 = vsel %vm1756, %v1741, %v1299
      %v1768 = vsel %vm1756, %v1742, %v1301
      %v1769 = vsel %vm1756, %v1743, %v1303
      %v1770 = vsel %vm1756, %v1744, %v1305
      %v1771 = vsel %vm1756, %v1745, %v1307
      %v1772 = vsel %vm1756, %v1746, %v1309
      %v1773 = vsel %vm1756, %v1747, %v1311
      %v1774 = vsel %vm1756, %v1748, %v1313
      %v1775 = vsel %vm1756, %v1749, %v1315
      %v1776 = vsel %vm1756, %v1750, %v1317
      %v1777 = vsel %vm1756, %v1751, %v1319
      %v1778 = vsel %vm1756, %v1752, %v1321
      %v1779 = vsel %vm1756, %v1753, %v1323
      %v1780 = vsel %vm1756, %v1754, %v1325
      %v1781 = vsel %vm1756, %v1755, %v1327
      %vm1782 = vcmask 392192
      %v1783 = vsel %vm1782, %v1757, %v1354
      %v1784 = vsel %vm1782, %v1758, %v1356
      %v1785 = vsel %vm1782, %v1759, %v1358
      %v1786 = vsel %vm1782, %v1760, %v1360
      %v1787 = vsel %vm1782, %v1761, %v1362
      %v1788 = vsel %vm1782, %v1762, %v1364
      %v1789 = vsel %vm1782, %v1763, %v1366
      %v1790 = vsel %vm1782, %v1764, %v1368
      %v1791 = vsel %vm1782, %v1765, %v1370
      %v1792 = vsel %vm1782, %v1766, %v1372
      %v1793 = vsel %vm1782, %v1767, %v1374
      %v1794 = vsel %vm1782, %v1768, %v1376
      %v1795 = vsel %vm1782, %v1769, %v1378
      %v1796 = vsel %vm1782, %v1770, %v1380
      %v1797 = vsel %vm1782, %v1771, %v1382
      %v1798 = vsel %vm1782, %v1772, %v1384
      %v1799 = vsel %vm1782, %v1773, %v1386
      %v1800 = vsel %vm1782, %v1774, %v1388
      %v1801 = vsel %vm1782, %v1775, %v1390
      %v1802 = vsel %vm1782, %v1776, %v1392
      %v1803 = vsel %vm1782, %v1777, %v1394
      %v1804 = vsel %vm1782, %v1778, %v1396
      %v1805 = vsel %vm1782, %v1779, %v1398
      %v1806 = vsel %vm1782, %v1780, %v1400
      %v1807 = vsel %vm1782, %v1781, %v1402
      %vm1808 = vcmask 523264
      %v1809 = vsel %vm1808, %v1783, %v1429
      %v1810 = vsel %vm1808, %v1784, %v1431
      %v1811 = vsel %vm1808, %v1785, %v1433
      %v1812 = vsel %vm1808, %v1786, %v1435
      %v1813 = vsel %vm1808, %v1787, %v1437
      %v1814 = vsel %vm1808, %v1788, %v1439
      %v1815 = vsel %vm1808, %v1789, %v1441
      %v1816 = vsel %vm1808, %v1790, %v1443
      %v1817 = vsel %vm1808, %v1791, %v1445
      %v1818 = vsel %vm1808, %v1792, %v1447
      %v1819 = vsel %vm1808, %v1793, %v1449
      %v1820 = vsel %vm1808, %v1794, %v1451
      %v1821 = vsel %vm1808, %v1795, %v1453
      %v1822 = vsel %vm1808, %v1796, %v1455
      %v1823 = vsel %vm1808, %v1797, %v1457
      %v1824 = vsel %vm1808, %v1798, %v1459
      %v1825 = vsel %vm1808, %v1799, %v1461
      %v1826 = vsel %vm1808, %v1800, %v1463
      %v1827 = vsel %vm1808, %v1801, %v1465
      %v1828 = vsel %vm1808, %v1802, %v1467
      %v1829 = vsel %vm1808, %v1803, %v1469
      %v1830 = vsel %vm1808, %v1804, %v1471
      %v1831 = vsel %vm1808, %v1805, %v1473
      %v1832 = vsel %vm1808, %v1806, %v1475
      %v1833 = vsel %vm1808, %v1807, %v1477
      %vm1834 = vcmask 654336
      %v1835 = vsel %vm1834, %v1809, %v1505
      %v1836 = vsel %vm1834, %v1810, %v1507
      %v1837 = vsel %vm1834, %v1811, %v1509
      %v1838 = vsel %vm1834, %v1812, %v1511
      %v1839 = vsel %vm1834, %v1813, %v1513
      %v1840 = vsel %vm1834, %v1814, %v1515
      %v1841 = vsel %vm1834, %v1815, %v1517
      %v1842 = vsel %vm1834, %v1816, %v1519
      %v1843 = vsel %vm1834, %v1817, %v1521
      %v1844 = vsel %vm1834, %v1818, %v1523
      %v1845 = vsel %vm1834, %v1819, %v1525
      %v1846 = vsel %vm1834, %v1820, %v1527
      %v1847 = vsel %vm1834, %v1821, %v1529
      %v1848 = vsel %vm1834, %v1822, %v1531
      %v1849 = vsel %vm1834, %v1823, %v1533
      %v1850 = vsel %vm1834, %v1824, %v1535
      %v1851 = vsel %vm1834, %v1825, %v1537
      %v1852 = vsel %vm1834, %v1826, %v1539
      %v1853 = vsel %vm1834, %v1827, %v1541
      %v1854 = vsel %vm1834, %v1828, %v1543
      %v1855 = vsel %vm1834, %v1829, %v1545
      %v1856 = vsel %vm1834, %v1830, %v1547
      %v1857 = vsel %vm1834, %v1831, %v1549
      %v1858 = vsel %vm1834, %v1832, %v1551
      %v1859 = vsel %vm1834, %v1833, %v1553
      %vm1860 = vcmask 785408
      %v1861 = vsel %vm1860, %v1835, %v1580
      %v1862 = vsel %vm1860, %v1836, %v1582
      %v1863 = vsel %vm1860, %v1837, %v1584
      %v1864 = vsel %vm1860, %v1838, %v1586
      %v1865 = vsel %vm1860, %v1839, %v1588
      %v1866 = vsel %vm1860, %v1840, %v1590
      %v1867 = vsel %vm1860, %v1841, %v1592
      %v1868 = vsel %vm1860, %v1842, %v1594
      %v1869 = vsel %vm1860, %v1843, %v1596
      %v1870 = vsel %vm1860, %v1844, %v1598
      %v1871 = vsel %vm1860, %v1845, %v1600
      %v1872 = vsel %vm1860, %v1846, %v1602
      %v1873 = vsel %vm1860, %v1847, %v1604
      %v1874 = vsel %vm1860, %v1848, %v1606
      %v1875 = vsel %vm1860, %v1849, %v1608
      %v1876 = vsel %vm1860, %v1850, %v1610
      %v1877 = vsel %vm1860, %v1851, %v1612
      %v1878 = vsel %vm1860, %v1852, %v1614
      %v1879 = vsel %vm1860, %v1853, %v1616
      %v1880 = vsel %vm1860, %v1854, %v1618
      %v1881 = vsel %vm1860, %v1855, %v1620
      %v1882 = vsel %vm1860, %v1856, %v1622
      %v1883 = vsel %vm1860, %v1857, %v1624
      %v1884 = vsel %vm1860, %v1858, %v1626
      %v1885 = vsel %vm1860, %v1859, %v1628
      %vm1886 = vcmask 916480
      %v1887 = vsel %vm1886, %v1861, %v1656
      %v1888 = vsel %vm1886, %v1862, %v1658
      %v1889 = vsel %vm1886, %v1863, %v1660
      %v1890 = vsel %vm1886, %v1864, %v1662
      %v1891 = vsel %vm1886, %v1865, %v1664
      %v1892 = vsel %vm1886, %v1866, %v1666
      %v1893 = vsel %vm1886, %v1867, %v1668
      %v1894 = vsel %vm1886, %v1868, %v1670
      %v1895 = vsel %vm1886, %v1869, %v1672
      %v1896 = vsel %vm1886, %v1870, %v1674
      %v1897 = vsel %vm1886, %v1871, %v1676
      %v1898 = vsel %vm1886, %v1872, %v1678
      %v1899 = vsel %vm1886, %v1873, %v1680
      %v1900 = vsel %vm1886, %v1874, %v1682
      %v1901 = vsel %vm1886, %v1875, %v1684
      %v1902 = vsel %vm1886, %v1876, %v1686
      %v1903 = vsel %vm1886, %v1877, %v1688
      %v1904 = vsel %vm1886, %v1878, %v1690
      %v1905 = vsel %vm1886, %v1879, %v1692
      %v1906 = vsel %vm1886, %v1880, %v1694
      %v1907 = vsel %vm1886, %v1881, %v1696
      %v1908 = vsel %vm1886, %v1882, %v1698
      %v1909 = vsel %vm1886, %v1883, %v1700
      %v1910 = vsel %vm1886, %v1884, %v1702
      %v1911 = vsel %vm1886, %v1885, %v1704
      %v1912 = vpack.c.bf16 %v1888, %v1887
      %v1913 = vpack.c.bf16 %v1132, %v1130
      %v1914 = vpack.c.bf16 %v1890, %v1889
      %v1915 = vpack.c.bf16 %v1136, %v1134
      %v1916 = vpack.c.bf16 %v1892, %v1891
      %v1917 = vpack.c.bf16 %v1140, %v1138
      %v1918 = vpack.c.bf16 %v1894, %v1893
      %v1919 = vpack.c.bf16 %v1144, %v1142
      %v1920 = vpack.c.bf16 %v1896, %v1895
      %v1921 = vpack.c.bf16 %v1148, %v1146
      %v1922 = vpack.c.bf16 %v1898, %v1897
      %v1923 = vpack.c.bf16 %v1152, %v1150
      %v1924 = vpack.c.bf16 %v1900, %v1899
      %v1925 = vpack.c.bf16 %v1156, %v1154
      %v1926 = vpack.c.bf16 %v1902, %v1901
      %v1927 = vpack.c.bf16 %v1160, %v1158
      %v1928 = vpack.c.bf16 %v1904, %v1903
      %v1929 = vpack.c.bf16 %v1164, %v1162
      %v1930 = vpack.c.bf16 %v1906, %v1905
      %v1931 = vpack.c.bf16 %v1168, %v1166
      %v1932 = vpack.c.bf16 %v1908, %v1907
      %v1933 = vpack.c.bf16 %v1172, %v1170
      %v1934 = vpack.c.bf16 %v1910, %v1909
      %v1935 = vpack.c.bf16 %v1199, %v1174
      %v1936 = vpack.c.bf16 %v1911, %v1911
      %v1937 = vpack.c.bf16 0.0, 0.0
      %v1938 = vld [vmem:[%s724] sm:$0xf]
      %v1939 = vld [vmem:[%s724 + $0x4] sm:$0xf]
      %v1940 = vld [vmem:[%s724 + $0x8] sm:$0xf]
      %v1941 = vld [vmem:[%s724 + $0xc] sm:$0xf]
      %v1942 = vld [vmem:[%s724 + $0x10] sm:$0xf]
      %v1943 = vld [vmem:[%s724 + $0x14] sm:$0xf]
      %v1944 = vld [vmem:[%s724 + $0x18] sm:$0xf]
      %v1945 = vld [vmem:[%s724 + $0x1c] sm:$0xf]
      %v1946 = vld [vmem:[%s724 + $0x20] sm:$0xf]
      %v1947 = vld [vmem:[%s724 + $0x24] sm:$0xf]
      %v1948 = vld [vmem:[%s724 + $0x28] sm:$0xf]
      %v1949 = vld [vmem:[%s724 + $0x2c] sm:$0xf]
      %v1950 = vld [vmem:[%s724 + $0x30] sm:$0xf]
      %v1951 = vld [vmem:[%s724 + $0x34] sm:$0xf]
      %v1952 = vld [vmem:[%s724 + $0x38] sm:$0xf]
      %v1953 = vld [vmem:[%s724 + $0x3c] sm:$0xf]
      %v1954 = vld [vmem:[%s724 + $0x40] sm:$0xf]
      %v1955 = vld [vmem:[%s724 + $0x44] sm:$0xf]
      %v1974 = vunpack.c.l.b16 %v1938
      %v1975 = vunpack.c.l.b16 %v1939
      %v1976 = vunpack.c.l.b16 %v1940
      %v1977 = vunpack.c.l.b16 %v1941
      %v1978 = vunpack.c.l.b16 %v1942
      %v1979 = vunpack.c.l.b16 %v1943
      %v1980 = vunpack.c.l.b16 %v1944
      %v1981 = vunpack.c.l.b16 %v1945
      %v1982 = vunpack.c.l.b16 %v1946
      %v1983 = vunpack.c.l.b16 %v1947
      %v1984 = vunpack.c.l.b16 %v1948
      %v1985 = vunpack.c.l.b16 %v1949
      %v1986 = vunpack.c.l.b16 %v1950
      %v1987 = vunpack.c.l.b16 %v1951
      %v1988 = vunpack.c.l.b16 %v1952
      %v1989 = vunpack.c.l.b16 %v1953
      %v1990 = vunpack.c.l.b16 %v1954
      %v1991 = vunpack.c.l.b16 %v1955
      %v1992 = vpack.c.b16 %v1975, %v1974
      %v1993 = vpack.c.b16 %v1977, %v1976
      %v1994 = vpack.c.b16 %v1979, %v1978
      %v1995 = vpack.c.b16 %v1981, %v1980
      %v1996 = vpack.c.b16 %v1983, %v1982
      %v1997 = vpack.c.b16 %v1985, %v1984
      %v1998 = vpack.c.b16 %v1987, %v1986
      %v1999 = vpack.c.b16 %v1989, %v1988
      %v2000 = vpack.c.b16 %v1991, %v1990
      %v2011 = vsel %vm1730, %v1913, 0
      %v2014 = vsel %vm1730, %v1915, 0
      %v2017 = vsel %vm1730, %v1917, 0
      %v2020 = vsel %vm1730, %v1919, 0
      %v2023 = vsel %vm1730, %v1921, 0
      %v2026 = vsel %vm1730, %v1923, 0
      %v2029 = vsel %vm1730, %v1925, 0
      %v2032 = vsel %vm1730, %v1927, 0
      %v2035 = vsel %vm1730, %v1929, 0
      %v2038 = vsel %vm1730, %v1931, 0
      %v2041 = vsel %vm1730, %v1933, 0
      %v2044 = vsel %vm1730, %v1935, 0
      %v2047 = vsel %vm1730, %v1937, 0
      %2049 = vmatprep.subr.bf16.mxu0 0
      %2050 = vmatpush1.bf16.msra.mxu0 %v1992
      %2051 = vmatprep.subr.bf16.mxu0 0
      %2052 = vmatpush1.bf16.msra.mxu0 %v1993
      %2053 = vmatprep.subr.bf16.mxu0 0
      %2054 = vmatpush1.bf16.msra.mxu0 %v1994
      %2055 = vmatprep.subr.bf16.mxu0 0
      %2056 = vmatpush1.bf16.msra.mxu0 %v1995
      %2057 = vmatprep.subr.bf16.mxu0 0
      %2058 = vmatpush1.bf16.msra.mxu0 %v1996
      %2059 = vmatprep.subr.bf16.mxu0 0
      %2060 = vmatpush1.bf16.msra.mxu0 %v1997
      %2061 = vmatprep.subr.bf16.mxu0 0
      %2062 = vmatpush1.bf16.msra.mxu0 %v1998
      %2063 = vmatprep.subr.bf16.mxu0 0
      %2064 = vmatpush1.bf16.msra.mxu0 %v1999
      %2065 = vmatprep.subr.bf16.mxu0 0
      %2066 = vmatpush1.bf16.msra.mxu0 %v2000
      %2067 = vmatprep.subr.bf16.mxu0 0
      %2068 = vmatpush1.bf16.msra.mxu0 0
      %2069 = vmatprep.subr.bf16.mxu0 0
      %2070 = vmatpush1.bf16.msra.mxu0 0
      %2071 = vmatprep.subr.bf16.mxu0 0
      %2072 = vmatpush1.bf16.msra.mxu0 0
      %2073 = vmatprep.subr.bf16.mxu0 0
      %2074 = vmatpush1.bf16.msra.mxu0 0
      %2075 = vmatprep.subr.bf16.mxu0 0
      %2076 = vmatpush1.bf16.msra.mxu0 0
      %2077 = vmatprep.subr.bf16.mxu0 0
      %2078 = vmatpush1.bf16.msra.mxu0 0
      %2079 = vmatprep.subr.bf16.mxu0 0
      %2080 = vmatpush1.bf16.msra.mxu0 0
      %2081 = vmatprep.mubr.bf16.mxu0 %v2011
      %2082 = vmatmul.mubr.bf16.gmra.mrb[0].mxu0 %v1912
      %v2083 = vpop.f32.mrb[0].mxu0
      %v2084 = vadd.f32 0.0, %v2083
      %v2085 = vpop.f32.mrb[0].mxu0
      %v2086 = vpop.f32.mrb[0].mxu0
      %v2087 = vadd.f32 0.0, %v2086
      %v2088 = vpop.f32.mrb[0].mxu0
      %2089 = vmatprep.mubr.bf16.mxu0 %v2014
      %2090 = vmatmul.mubr.bf16.gmra.mrb[0].mxu0 %v1914
      %v2091 = vpop.f32.mrb[0].mxu0
      %v2092 = vadd.f32 0.0, %v2091
      %v2093 = vpop.f32.mrb[0].mxu0
      %v2094 = vpop.f32.mrb[0].mxu0
      %v2095 = vadd.f32 0.0, %v2094
      %v2096 = vpop.f32.mrb[0].mxu0
      %2097 = vmatprep.mubr.bf16.mxu0 %v2017
      %2098 = vmatmul.mubr.bf16.gmra.mrb[0].mxu0 %v1916
      %v2099 = vpop.f32.mrb[0].mxu0
      %v2100 = vadd.f32 0.0, %v2099
      %v2101 = vpop.f32.mrb[0].mxu0
      %v2102 = vpop.f32.mrb[0].mxu0
      %v2103 = vadd.f32 0.0, %v2102
      %v2104 = vpop.f32.mrb[0].mxu0
      %2105 = vmatprep.mubr.bf16.mxu0 %v2020
      %2106 = vmatmul.mubr.bf16.gmra.mrb[0].mxu0 %v1918
      %v2107 = vpop.f32.mrb[0].mxu0
      %v2108 = vadd.f32 0.0, %v2107
      %v2109 = vpop.f32.mrb[0].mxu0
      %v2110 = vpop.f32.mrb[0].mxu0
      %v2111 = vadd.f32 0.0, %v2110
      %v2112 = vpop.f32.mrb[0].mxu0
      %2113 = vmatprep.mubr.bf16.mxu0 %v2023
      %2114 = vmatmul.mubr.bf16.gmra.mrb[0].mxu0 %v1920
      %v2115 = vpop.f32.mrb[0].mxu0
      %v2116 = vadd.f32 0.0, %v2115
      %v2117 = vpop.f32.mrb[0].mxu0
      %v2118 = vpop.f32.mrb[0].mxu0
      %v2119 = vadd.f32 0.0, %v2118
      %v2120 = vpop.f32.mrb[0].mxu0
      %2121 = vmatprep.mubr.bf16.mxu0 %v2026
      %2122 = vmatmul.mubr.bf16.gmra.mrb[0].mxu0 %v1922
      %v2123 = vpop.f32.mrb[0].mxu0
      %v2124 = vadd.f32 0.0, %v2123
      %v2125 = vpop.f32.mrb[0].mxu0
      %v2126 = vpop.f32.mrb[0].mxu0
      %v2127 = vadd.f32 0.0, %v2126
      %v2128 = vpop.f32.mrb[0].mxu0
      %2129 = vmatprep.mubr.bf16.mxu0 %v2029
      %2130 = vmatmul.mubr.bf16.gmra.mrb[0].mxu0 %v1924
      %v2131 = vpop.f32.mrb[0].mxu0
      %v2132 = vadd.f32 0.0, %v2131
      %v2133 = vpop.f32.mrb[0].mxu0
      %v2134 = vpop.f32.mrb[0].mxu0
      %v2135 = vadd.f32 0.0, %v2134
      %v2136 = vpop.f32.mrb[0].mxu0
      %2137 = vmatprep.mubr.bf16.mxu0 %v2032
      %2138 = vmatmul.mubr.bf16.gmra.mrb[0].mxu0 %v1926
      %v2139 = vpop.f32.mrb[0].mxu0
      %v2140 = vadd.f32 0.0, %v2139
      %v2141 = vpop.f32.mrb[0].mxu0
      %v2142 = vpop.f32.mrb[0].mxu0
      %v2143 = vadd.f32 0.0, %v2142
      %v2144 = vpop.f32.mrb[0].mxu0
      %2145 = vmatprep.mubr.bf16.mxu0 %v2035
      %2146 = vmatmul.mubr.bf16.gmra.mrb[0].mxu0 %v1928
      %v2147 = vpop.f32.mrb[0].mxu0
      %v2148 = vadd.f32 0.0, %v2147
      %v2149 = vpop.f32.mrb[0].mxu0
      %v2150 = vpop.f32.mrb[0].mxu0
      %v2151 = vadd.f32 0.0, %v2150
      %v2152 = vpop.f32.mrb[0].mxu0
      %2153 = vmatprep.mubr.bf16.mxu0 %v2038
      %2154 = vmatmul.mubr.bf16.gmra.mrb[0].mxu0 %v1930
      %v2155 = vpop.f32.mrb[0].mxu0
      %v2156 = vadd.f32 0.0, %v2155
      %v2157 = vpop.f32.mrb[0].mxu0
      %v2158 = vpop.f32.mrb[0].mxu0
      %v2159 = vadd.f32 0.0, %v2158
      %v2160 = vpop.f32.mrb[0].mxu0
      %2161 = vmatprep.mubr.bf16.mxu0 %v2041
      %2162 = vmatmul.mubr.bf16.gmra.mrb[0].mxu0 %v1932
      %v2163 = vpop.f32.mrb[0].mxu0
      %v2164 = vadd.f32 0.0, %v2163
      %v2165 = vpop.f32.mrb[0].mxu0
      %v2166 = vpop.f32.mrb[0].mxu0
      %v2167 = vadd.f32 0.0, %v2166
      %v2168 = vpop.f32.mrb[0].mxu0
      %2169 = vmatprep.mubr.bf16.mxu0 %v2044
      %2170 = vmatmul.mubr.bf16.gmra.mrb[0].mxu0 %v1934
      %v2171 = vpop.f32.mrb[0].mxu0
      %v2172 = vadd.f32 0.0, %v2171
      %v2173 = vpop.f32.mrb[0].mxu0
      %v2174 = vpop.f32.mrb[0].mxu0
      %v2175 = vadd.f32 0.0, %v2174
      %v2176 = vpop.f32.mrb[0].mxu0
      %2177 = vmatprep.mubr.bf16.mxu0 %v2047
      %2178 = vmatmul.mubr.bf16.gmra.mrb[0].mxu0 %v1936
      %v2179 = vpop.f32.mrb[0].mxu0
      %v2180 = vadd.f32 0.0, %v2179
      %v2181 = vpop.f32.mrb[0].mxu0
      %v2182 = vpop.f32.mrb[0].mxu0
      %v2183 = vpop.f32.mrb[0].mxu0
      %2184 = vdwg.mxu0
      %v2185 = vld [vmem:[%s727] sm:$0x1]
      %v2187 = vlaneseq
      %v2188 = vshrl.u32 %v2187, 7
      %v2189 = vsub.s32 0, %v2188
      %v2190 = vrot.slane %v2185, %v2189
      %v2192 = vmul.f32 %v2084, %v2190
      %v2193 = vmul.f32 %v2087, %v2190
      %v2194 = vmul.f32 %v2092, %v2190
      %v2195 = vmul.f32 %v2095, %v2190
      %v2196 = vmul.f32 %v2100, %v2190
      %v2197 = vmul.f32 %v2103, %v2190
      %v2198 = vmul.f32 %v2108, %v2190
      %v2199 = vmul.f32 %v2111, %v2190
      %v2200 = vmul.f32 %v2116, %v2190
      %v2201 = vmul.f32 %v2119, %v2190
      %v2202 = vmul.f32 %v2124, %v2190
      %v2203 = vmul.f32 %v2127, %v2190
      %v2204 = vmul.f32 %v2132, %v2190
      %v2205 = vmul.f32 %v2135, %v2190
      %v2206 = vmul.f32 %v2140, %v2190
      %v2207 = vmul.f32 %v2143, %v2190
      %v2208 = vmul.f32 %v2148, %v2190
      %v2209 = vmul.f32 %v2151, %v2190
      %v2210 = vmul.f32 %v2156, %v2190
      %v2211 = vmul.f32 %v2159, %v2190
      %v2212 = vmul.f32 %v2164, %v2190
      %v2213 = vmul.f32 %v2167, %v2190
      %v2214 = vmul.f32 %v2172, %v2190
      %v2215 = vmul.f32 %v2175, %v2190
      %v2216 = vmul.f32 %v2180, %v2190
      %v2217 = vld [vmem:[%s730] sm:$0x1]
      %v2219 = vlaneseq
      %v2220 = vshrl.u32 %v2219, 7
      %v2221 = vsub.s32 0, %v2220
      %v2222 = vrot.slane %v2217, %v2221
      %v2224 = vadd.f32 %v2192, %v2222
      %v2225 = vadd.f32 %v2193, %v2222
      %v2226 = vadd.f32 %v2194, %v2222
      %v2227 = vadd.f32 %v2195, %v2222
      %v2228 = vadd.f32 %v2196, %v2222
      %v2229 = vadd.f32 %v2197, %v2222
      %v2230 = vadd.f32 %v2198, %v2222
      %v2231 = vadd.f32 %v2199, %v2222
      %v2232 = vadd.f32 %v2200, %v2222
      %v2233 = vadd.f32 %v2201, %v2222
      %v2234 = vadd.f32 %v2202, %v2222
      %v2235 = vadd.f32 %v2203, %v2222
      %v2236 = vadd.f32 %v2204, %v2222
      %v2237 = vadd.f32 %v2205, %v2222
      %v2238 = vadd.f32 %v2206, %v2222
      %v2239 = vadd.f32 %v2207, %v2222
      %v2240 = vadd.f32 %v2208, %v2222
      %v2241 = vadd.f32 %v2209, %v2222
      %v2242 = vadd.f32 %v2210, %v2222
      %v2243 = vadd.f32 %v2211, %v2222
      %v2244 = vadd.f32 %v2212, %v2222
      %v2245 = vadd.f32 %v2213, %v2222
      %v2246 = vadd.f32 %v2214, %v2222
      %v2247 = vadd.f32 %v2215, %v2222
      %v2248 = vadd.f32 %v2216, %v2222
      %v2249 = vmax.f32 %v2224, 0.0
      %v2250 = vmax.f32 %v2225, 0.0
      %v2251 = vmax.f32 %v2226, 0.0
      %v2252 = vmax.f32 %v2227, 0.0
      %v2253 = vmax.f32 %v2228, 0.0
      %v2254 = vmax.f32 %v2229, 0.0
      %v2255 = vmax.f32 %v2230, 0.0
      %v2256 = vmax.f32 %v2231, 0.0
      %v2257 = vmax.f32 %v2232, 0.0
      %v2258 = vmax.f32 %v2233, 0.0
      %v2259 = vmax.f32 %v2234, 0.0
      %v2260 = vmax.f32 %v2235, 0.0
      %v2261 = vmax.f32 %v2236, 0.0
      %v2262 = vmax.f32 %v2237, 0.0
      %v2263 = vmax.f32 %v2238, 0.0
      %v2264 = vmax.f32 %v2239, 0.0
      %v2265 = vmax.f32 %v2240, 0.0
      %v2266 = vmax.f32 %v2241, 0.0
      %v2267 = vmax.f32 %v2242, 0.0
      %v2268 = vmax.f32 %v2243, 0.0
      %v2269 = vmax.f32 %v2244, 0.0
      %v2270 = vmax.f32 %v2245, 0.0
      %v2271 = vmax.f32 %v2246, 0.0
      %v2272 = vmax.f32 %v2247, 0.0
      %v2273 = vmax.f32 %v2248, 0.0
      %2275 = vset.pattern.permute.xlu0 0
      %2276 = vperm.xlu0 %2275, %v775
      %v2277 = vpop.permute.xlu0 %2276
      %2280 = vset.pattern.permute.xlu0 0
      %2281 = vperm.xlu0 %2280, %v776
      %v2282 = vpop.permute.xlu0 %2281
      %2285 = vset.pattern.permute.xlu0 0
      %2286 = vperm.xlu0 %2285, %v777
      %v2287 = vpop.permute.xlu0 %2286
      %2290 = vset.pattern.permute.xlu0 0
      %2291 = vperm.xlu0 %2290, %v778
      %v2292 = vpop.permute.xlu0 %2291
      %2295 = vset.pattern.permute.xlu0 0
      %2296 = vperm.xlu0 %2295, %v779
      %v2297 = vpop.permute.xlu0 %2296
      %2300 = vset.pattern.permute.xlu0 0
      %2301 = vperm.xlu0 %2300, %v780
      %v2302 = vpop.permute.xlu0 %2301
      %2305 = vset.pattern.permute.xlu0 0
      %2306 = vperm.xlu0 %2305, %v781
      %v2307 = vpop.permute.xlu0 %2306
      %2310 = vset.pattern.permute.xlu0 0
      %2311 = vperm.xlu0 %2310, %v782
      %v2312 = vpop.permute.xlu0 %2311
      %2315 = vset.pattern.permute.xlu0 0
      %2316 = vperm.xlu0 %2315, %v783
      %v2317 = vpop.permute.xlu0 %2316
      %2320 = vset.pattern.permute.xlu0 0
      %2321 = vperm.xlu0 %2320, %v784
      %v2322 = vpop.permute.xlu0 %2321
      %2325 = vset.pattern.permute.xlu0 0
      %2326 = vperm.xlu0 %2325, %v785
      %v2327 = vpop.permute.xlu0 %2326
      %2330 = vset.pattern.permute.xlu0 0
      %2331 = vperm.xlu0 %2330, %v786
      %v2332 = vpop.permute.xlu0 %2331
      %2335 = vset.pattern.permute.xlu0 0
      %2336 = vperm.xlu0 %2335, %v787
      %v2337 = vpop.permute.xlu0 %2336
      %2340 = vset.pattern.permute.xlu0 0
      %2341 = vperm.xlu0 %2340, %v788
      %v2342 = vpop.permute.xlu0 %2341
      %2345 = vset.pattern.permute.xlu0 0
      %2346 = vperm.xlu0 %2345, %v789
      %v2347 = vpop.permute.xlu0 %2346
      %2350 = vset.pattern.permute.xlu0 0
      %2351 = vperm.xlu0 %2350, %v790
      %v2352 = vpop.permute.xlu0 %2351
      %2355 = vset.pattern.permute.xlu0 0
      %2356 = vperm.xlu0 %2355, %v791
      %v2357 = vpop.permute.xlu0 %2356
      %2360 = vset.pattern.permute.xlu0 0
      %2361 = vperm.xlu0 %2360, %v792
      %v2362 = vpop.permute.xlu0 %2361
      %2365 = vset.pattern.permute.xlu0 0
      %2366 = vperm.xlu0 %2365, %v793
      %v2367 = vpop.permute.xlu0 %2366
      %2370 = vset.pattern.permute.xlu0 0
      %2371 = vperm.xlu0 %2370, %v794
      %v2372 = vpop.permute.xlu0 %2371
      %2375 = vset.pattern.permute.xlu0 0
      %2376 = vperm.xlu0 %2375, %v795
      %v2377 = vpop.permute.xlu0 %2376
      %2380 = vset.pattern.permute.xlu0 0
      %2381 = vperm.xlu0 %2380, %v796
      %v2382 = vpop.permute.xlu0 %2381
      %2385 = vset.pattern.permute.xlu0 0
      %2386 = vperm.xlu0 %2385, %v797
      %v2387 = vpop.permute.xlu0 %2386
      %2390 = vset.pattern.permute.xlu0 0
      %2391 = vperm.xlu0 %2390, %v798
      %v2392 = vpop.permute.xlu0 %2391
      %2395 = vset.pattern.permute.xlu0 0
      %2396 = vperm.xlu0 %2395, %v799
      %v2397 = vpop.permute.xlu0 %2396
      %v2399 = vmul.f32 %v2249, %v2277
      %v2400 = vmul.f32 %v2250, %v2282
      %v2401 = vmul.f32 %v2251, %v2287
      %v2402 = vmul.f32 %v2252, %v2292
      %v2403 = vmul.f32 %v2253, %v2297
      %v2404 = vmul.f32 %v2254, %v2302
      %v2405 = vmul.f32 %v2255, %v2307
      %v2406 = vmul.f32 %v2256, %v2312
      %v2407 = vmul.f32 %v2257, %v2317
      %v2408 = vmul.f32 %v2258, %v2322
      %v2409 = vmul.f32 %v2259, %v2327
      %v2410 = vmul.f32 %v2260, %v2332
      %v2411 = vmul.f32 %v2261, %v2337
      %v2412 = vmul.f32 %v2262, %v2342
      %v2413 = vmul.f32 %v2263, %v2347
      %v2414 = vmul.f32 %v2264, %v2352
      %v2415 = vmul.f32 %v2265, %v2357
      %v2416 = vmul.f32 %v2266, %v2362
      %v2417 = vmul.f32 %v2267, %v2367
      %v2418 = vmul.f32 %v2268, %v2372
      %v2419 = vmul.f32 %v2269, %v2377
      %v2420 = vmul.f32 %v2270, %v2382
      %v2421 = vmul.f32 %v2271, %v2387
      %v2422 = vmul.f32 %v2272, %v2392
      %v2423 = vmul.f32 %v2273, %v2397
      %v2448 = vrot.slane %v2399, 5
      %v2449 = vrot.slane %v2400, 5
      %v2450 = vsel %vm849, %v2448, %v2449
      %v2451 = vrot.slane %v2401, 5
      %v2452 = vsel %vm849, %v2449, %v2451
      %v2453 = vrot.slane %v2402, 5
      %v2454 = vsel %vm849, %v2451, %v2453
      %v2455 = vrot.slane %v2403, 5
      %v2456 = vsel %vm849, %v2453, %v2455
      %v2457 = vrot.slane %v2404, 5
      %v2458 = vsel %vm849, %v2455, %v2457
      %v2459 = vrot.slane %v2405, 5
      %v2460 = vsel %vm849, %v2457, %v2459
      %v2461 = vrot.slane %v2406, 5
      %v2462 = vsel %vm849, %v2459, %v2461
      %v2463 = vrot.slane %v2407, 5
      %v2464 = vsel %vm849, %v2461, %v2463
      %v2465 = vrot.slane %v2408, 5
      %v2466 = vsel %vm849, %v2463, %v2465
      %v2467 = vrot.slane %v2409, 5
      %v2468 = vsel %vm849, %v2465, %v2467
      %v2469 = vrot.slane %v2410, 5
      %v2470 = vsel %vm849, %v2467, %v2469
      %v2471 = vrot.slane %v2411, 5
      %v2472 = vsel %vm849, %v2469, %v2471
      %v2473 = vrot.slane %v2412, 5
      %v2474 = vsel %vm849, %v2471, %v2473
      %v2475 = vrot.slane %v2413, 5
      %v2476 = vsel %vm849, %v2473, %v2475
      %v2477 = vrot.slane %v2414, 5
      %v2478 = vsel %vm849, %v2475, %v2477
      %v2479 = vrot.slane %v2415, 5
      %v2480 = vsel %vm849, %v2477, %v2479
      %v2481 = vrot.slane %v2416, 5
      %v2482 = vsel %vm849, %v2479, %v2481
      %v2483 = vrot.slane %v2417, 5
      %v2484 = vsel %vm849, %v2481, %v2483
      %v2485 = vrot.slane %v2418, 5
      %v2486 = vsel %vm849, %v2483, %v2485
      %v2487 = vrot.slane %v2419, 5
      %v2488 = vsel %vm849, %v2485, %v2487
      %v2489 = vrot.slane %v2420, 5
      %v2490 = vsel %vm849, %v2487, %v2489
      %v2491 = vrot.slane %v2421, 5
      %v2492 = vsel %vm849, %v2489, %v2491
      %v2493 = vrot.slane %v2422, 5
      %v2494 = vsel %vm849, %v2491, %v2493
      %v2519 = vsel %vm849, 0.0, %v2448
      %v2520 = vrot.slane %v2399, 6
      %v2521 = vrot.slane %v2400, 6
      %v2522 = vsel %vm922, %v2520, %v2521
      %v2523 = vrot.slane %v2401, 6
      %v2524 = vsel %vm922, %v2521, %v2523
      %v2525 = vrot.slane %v2402, 6
      %v2526 = vsel %vm922, %v2523, %v2525
      %v2527 = vrot.slane %v2403, 6
      %v2528 = vsel %vm922, %v2525, %v2527
      %v2529 = vrot.slane %v2404, 6
      %v2530 = vsel %vm922, %v2527, %v2529
      %v2531 = vrot.slane %v2405, 6
      %v2532 = vsel %vm922, %v2529, %v2531
      %v2533 = vrot.slane %v2406, 6
      %v2534 = vsel %vm922, %v2531, %v2533
      %v2535 = vrot.slane %v2407, 6
      %v2536 = vsel %vm922, %v2533, %v2535
      %v2537 = vrot.slane %v2408, 6
      %v2538 = vsel %vm922, %v2535, %v2537
      %v2539 = vrot.slane %v2409, 6
      %v2540 = vsel %vm922, %v2537, %v2539
      %v2541 = vrot.slane %v2410, 6
      %v2542 = vsel %vm922, %v2539, %v2541
      %v2543 = vrot.slane %v2411, 6
      %v2544 = vsel %vm922, %v2541, %v2543
      %v2545 = vrot.slane %v2412, 6
      %v2546 = vsel %vm922, %v2543, %v2545
      %v2547 = vrot.slane %v2413, 6
      %v2548 = vsel %vm922, %v2545, %v2547
      %v2549 = vrot.slane %v2414, 6
      %v2550 = vsel %vm922, %v2547, %v2549
      %v2551 = vrot.slane %v2415, 6
      %v2552 = vsel %vm922, %v2549, %v2551
      %v2553 = vrot.slane %v2416, 6
      %v2554 = vsel %vm922, %v2551, %v2553
      %v2555 = vrot.slane %v2417, 6
      %v2556 = vsel %vm922, %v2553, %v2555
      %v2557 = vrot.slane %v2418, 6
      %v2558 = vsel %vm922, %v2555, %v2557
      %v2559 = vrot.slane %v2419, 6
      %v2560 = vsel %vm922, %v2557, %v2559
      %v2561 = vrot.slane %v2420, 6
      %v2562 = vsel %vm922, %v2559, %v2561
      %v2563 = vrot.slane %v2421, 6
      %v2564 = vsel %vm922, %v2561, %v2563
      %v2565 = vrot.slane %v2422, 6
      %v2566 = vsel %vm922, %v2563, %v2565
      %v2568 = vsel %vm922, 0.0, %v2520
      %v2569 = vrot.slane %v2399, 7
      %v2570 = vrot.slane %v2400, 7
      %v2571 = vsel %vm972, %v2569, %v2570
      %v2572 = vrot.slane %v2401, 7
      %v2573 = vsel %vm972, %v2570, %v2572
      %v2574 = vrot.slane %v2402, 7
      %v2575 = vsel %vm972, %v2572, %v2574
      %v2576 = vrot.slane %v2403, 7
      %v2577 = vsel %vm972, %v2574, %v2576
      %v2578 = vrot.slane %v2404, 7
      %v2579 = vsel %vm972, %v2576, %v2578
      %v2580 = vrot.slane %v2405, 7
      %v2581 = vsel %vm972, %v2578, %v2580
      %v2582 = vrot.slane %v2406, 7
      %v2583 = vsel %vm972, %v2580, %v2582
      %v2584 = vrot.slane %v2407, 7
      %v2585 = vsel %vm972, %v2582, %v2584
      %v2586 = vrot.slane %v2408, 7
      %v2587 = vsel %vm972, %v2584, %v2586
      %v2588 = vrot.slane %v2409, 7
      %v2589 = vsel %vm972, %v2586, %v2588
      %v2590 = vrot.slane %v2410, 7
      %v2591 = vsel %vm972, %v2588, %v2590
      %v2592 = vrot.slane %v2411, 7
      %v2593 = vsel %vm972, %v2590, %v2592
      %v2594 = vrot.slane %v2412, 7
      %v2595 = vsel %vm972, %v2592, %v2594
      %v2596 = vrot.slane %v2413, 7
      %v2597 = vsel %vm972, %v2594, %v2596
      %v2598 = vrot.slane %v2414, 7
      %v2599 = vsel %vm972, %v2596, %v2598
      %v2600 = vrot.slane %v2415, 7
      %v2601 = vsel %vm972, %v2598, %v2600
      %v2602 = vrot.slane %v2416, 7
      %v2603 = vsel %vm972, %v2600, %v2602
      %v2604 = vrot.slane %v2417, 7
      %v2605 = vsel %vm972, %v2602, %v2604
      %v2606 = vrot.slane %v2418, 7
      %v2607 = vsel %vm972, %v2604, %v2606
      %v2608 = vrot.slane %v2419, 7
      %v2609 = vsel %vm972, %v2606, %v2608
      %v2610 = vrot.slane %v2420, 7
      %v2611 = vsel %vm972, %v2608, %v2610
      %v2612 = vrot.slane %v2421, 7
      %v2613 = vsel %vm972, %v2610, %v2612
      %v2614 = vrot.slane %v2422, 7
      %v2615 = vsel %vm972, %v2612, %v2614
      %v2617 = vsel %vm972, 0.0, %v2569
      %v2619 = vrot.slane %v2423, 7
      %v2620 = vsel %vm972, %v2614, %v2619
      %v2621 = vrot.slane %v2399, 1
      %v2622 = vrot.slane %v2400, 1
      %v2623 = vsel %vm1025, %v2621, %v2622
      %v2624 = vrot.slane %v2401, 1
      %v2625 = vsel %vm1025, %v2622, %v2624
      %v2626 = vrot.slane %v2402, 1
      %v2627 = vsel %vm1025, %v2624, %v2626
      %v2628 = vrot.slane %v2403, 1
      %v2629 = vsel %vm1025, %v2626, %v2628
      %v2630 = vrot.slane %v2404, 1
      %v2631 = vsel %vm1025, %v2628, %v2630
      %v2632 = vrot.slane %v2405, 1
      %v2633 = vsel %vm1025, %v2630, %v2632
      %v2634 = vrot.slane %v2406, 1
      %v2635 = vsel %vm1025, %v2632, %v2634
      %v2636 = vrot.slane %v2407, 1
      %v2637 = vsel %vm1025, %v2634, %v2636
      %v2638 = vrot.slane %v2408, 1
      %v2639 = vsel %vm1025, %v2636, %v2638
      %v2640 = vrot.slane %v2409, 1
      %v2641 = vsel %vm1025, %v2638, %v2640
      %v2642 = vrot.slane %v2410, 1
      %v2643 = vsel %vm1025, %v2640, %v2642
      %v2644 = vrot.slane %v2411, 1
      %v2645 = vsel %vm1025, %v2642, %v2644
      %v2646 = vrot.slane %v2412, 1
      %v2647 = vsel %vm1025, %v2644, %v2646
      %v2648 = vrot.slane %v2413, 1
      %v2649 = vsel %vm1025, %v2646, %v2648
      %v2650 = vrot.slane %v2414, 1
      %v2651 = vsel %vm1025, %v2648, %v2650
      %v2652 = vrot.slane %v2415, 1
      %v2653 = vsel %vm1025, %v2650, %v2652
      %v2654 = vrot.slane %v2416, 1
      %v2655 = vsel %vm1025, %v2652, %v2654
      %v2656 = vrot.slane %v2417, 1
      %v2657 = vsel %vm1025, %v2654, %v2656
      %v2658 = vrot.slane %v2418, 1
      %v2659 = vsel %vm1025, %v2656, %v2658
      %v2660 = vrot.slane %v2419, 1
      %v2661 = vsel %vm1025, %v2658, %v2660
      %v2662 = vrot.slane %v2420, 1
      %v2663 = vsel %vm1025, %v2660, %v2662
      %v2664 = vrot.slane %v2421, 1
      %v2665 = vsel %vm1025, %v2662, %v2664
      %v2666 = vrot.slane %v2422, 1
      %v2667 = vsel %vm1025, %v2664, %v2666
      %v2668 = vrot.slane %v2423, 1
      %v2669 = vsel %vm1025, %v2666, %v2668
      %v2671 = vsel %vm1025, %v2668, 0.0
      %v2672 = vrot.slane %v2400, 2
      %v2673 = vrot.slane %v2401, 2
      %v2674 = vsel %vm1077, %v2672, %v2673
      %v2675 = vrot.slane %v2402, 2
      %v2676 = vsel %vm1077, %v2673, %v2675
      %v2677 = vrot.slane %v2403, 2
      %v2678 = vsel %vm1077, %v2675, %v2677
      %v2679 = vrot.slane %v2404, 2
      %v2680 = vsel %vm1077, %v2677, %v2679
      %v2681 = vrot.slane %v2405, 2
      %v2682 = vsel %vm1077, %v2679, %v2681
      %v2683 = vrot.slane %v2406, 2
      %v2684 = vsel %vm1077, %v2681, %v2683
      %v2685 = vrot.slane %v2407, 2
      %v2686 = vsel %vm1077, %v2683, %v2685
      %v2687 = vrot.slane %v2408, 2
      %v2688 = vsel %vm1077, %v2685, %v2687
      %v2689 = vrot.slane %v2409, 2
      %v2690 = vsel %vm1077, %v2687, %v2689
      %v2691 = vrot.slane %v2410, 2
      %v2692 = vsel %vm1077, %v2689, %v2691
      %v2693 = vrot.slane %v2411, 2
      %v2694 = vsel %vm1077, %v2691, %v2693
      %v2695 = vrot.slane %v2412, 2
      %v2696 = vsel %vm1077, %v2693, %v2695
      %v2697 = vrot.slane %v2413, 2
      %v2698 = vsel %vm1077, %v2695, %v2697
      %v2699 = vrot.slane %v2414, 2
      %v2700 = vsel %vm1077, %v2697, %v2699
      %v2701 = vrot.slane %v2415, 2
      %v2702 = vsel %vm1077, %v2699, %v2701
      %v2703 = vrot.slane %v2416, 2
      %v2704 = vsel %vm1077, %v2701, %v2703
      %v2705 = vrot.slane %v2417, 2
      %v2706 = vsel %vm1077, %v2703, %v2705
      %v2707 = vrot.slane %v2418, 2
      %v2708 = vsel %vm1077, %v2705, %v2707
      %v2709 = vrot.slane %v2419, 2
      %v2710 = vsel %vm1077, %v2707, %v2709
      %v2711 = vrot.slane %v2420, 2
      %v2712 = vsel %vm1077, %v2709, %v2711
      %v2713 = vrot.slane %v2421, 2
      %v2714 = vsel %vm1077, %v2711, %v2713
      %v2715 = vrot.slane %v2422, 2
      %v2716 = vsel %vm1077, %v2713, %v2715
      %v2717 = vrot.slane %v2423, 2
      %v2718 = vsel %vm1077, %v2715, %v2717
      %v2720 = vsel %vm1077, %v2717, 0.0
      %v2721 = vrot.slane %v2400, 3
      %v2722 = vrot.slane %v2401, 3
      %v2723 = vsel %vm1127, %v2721, %v2722
      %v2724 = vrot.slane %v2402, 3
      %v2725 = vsel %vm1127, %v2722, %v2724
      %v2726 = vrot.slane %v2403, 3
      %v2727 = vsel %vm1127, %v2724, %v2726
      %v2728 = vrot.slane %v2404, 3
      %v2729 = vsel %vm1127, %v2726, %v2728
      %v2730 = vrot.slane %v2405, 3
      %v2731 = vsel %vm1127, %v2728, %v2730
      %v2732 = vrot.slane %v2406, 3
      %v2733 = vsel %vm1127, %v2730, %v2732
      %v2734 = vrot.slane %v2407, 3
      %v2735 = vsel %vm1127, %v2732, %v2734
      %v2736 = vrot.slane %v2408, 3
      %v2737 = vsel %vm1127, %v2734, %v2736
      %v2738 = vrot.slane %v2409, 3
      %v2739 = vsel %vm1127, %v2736, %v2738
      %v2740 = vrot.slane %v2410, 3
      %v2741 = vsel %vm1127, %v2738, %v2740
      %v2742 = vrot.slane %v2411, 3
      %v2743 = vsel %vm1127, %v2740, %v2742
      %v2744 = vrot.slane %v2412, 3
      %v2745 = vsel %vm1127, %v2742, %v2744
      %v2746 = vrot.slane %v2413, 3
      %v2747 = vsel %vm1127, %v2744, %v2746
      %v2748 = vrot.slane %v2414, 3
      %v2749 = vsel %vm1127, %v2746, %v2748
      %v2750 = vrot.slane %v2415, 3
      %v2751 = vsel %vm1127, %v2748, %v2750
      %v2752 = vrot.slane %v2416, 3
      %v2753 = vsel %vm1127, %v2750, %v2752
      %v2754 = vrot.slane %v2417, 3
      %v2755 = vsel %vm1127, %v2752, %v2754
      %v2756 = vrot.slane %v2418, 3
      %v2757 = vsel %vm1127, %v2754, %v2756
      %v2758 = vrot.slane %v2419, 3
      %v2759 = vsel %vm1127, %v2756, %v2758
      %v2760 = vrot.slane %v2420, 3
      %v2761 = vsel %vm1127, %v2758, %v2760
      %v2762 = vrot.slane %v2421, 3
      %v2763 = vsel %vm1127, %v2760, %v2762
      %v2764 = vrot.slane %v2422, 3
      %v2765 = vsel %vm1127, %v2762, %v2764
      %v2766 = vrot.slane %v2423, 3
      %v2767 = vsel %vm1127, %v2764, %v2766
      %v2792 = vsel %vm1127, %v2766, 0.0
      %2794 = vrot.lane.b32.xlu0 %v2568, 16
      %v2795 = vpop.permute.xlu0 %2794
      %2796 = vrot.lane.b32.xlu0 %v2522, 16
      %v2797 = vpop.permute.xlu0 %2796
      %2798 = vrot.lane.b32.xlu0 %v2524, 16
      %v2799 = vpop.permute.xlu0 %2798
      %2800 = vrot.lane.b32.xlu0 %v2526, 16
      %v2801 = vpop.permute.xlu0 %2800
      %2802 = vrot.lane.b32.xlu0 %v2528, 16
      %v2803 = vpop.permute.xlu0 %2802
      %2804 = vrot.lane.b32.xlu0 %v2530, 16
      %v2805 = vpop.permute.xlu0 %2804
      %2806 = vrot.lane.b32.xlu0 %v2532, 16
      %v2807 = vpop.permute.xlu0 %2806
      %2808 = vrot.lane.b32.xlu0 %v2534, 16
      %v2809 = vpop.permute.xlu0 %2808
      %2810 = vrot.lane.b32.xlu0 %v2536, 16
      %v2811 = vpop.permute.xlu0 %2810
      %2812 = vrot.lane.b32.xlu0 %v2538, 16
      %v2813 = vpop.permute.xlu0 %2812
      %2814 = vrot.lane.b32.xlu0 %v2540, 16
      %v2815 = vpop.permute.xlu0 %2814
      %2816 = vrot.lane.b32.xlu0 %v2542, 16
      %v2817 = vpop.permute.xlu0 %2816
      %2818 = vrot.lane.b32.xlu0 %v2544, 16
      %v2819 = vpop.permute.xlu0 %2818
      %2820 = vrot.lane.b32.xlu0 %v2546, 16
      %v2821 = vpop.permute.xlu0 %2820
      %2822 = vrot.lane.b32.xlu0 %v2548, 16
      %v2823 = vpop.permute.xlu0 %2822
      %2824 = vrot.lane.b32.xlu0 %v2550, 16
      %v2825 = vpop.permute.xlu0 %2824
      %2826 = vrot.lane.b32.xlu0 %v2552, 16
      %v2827 = vpop.permute.xlu0 %2826
      %2828 = vrot.lane.b32.xlu0 %v2554, 16
      %v2829 = vpop.permute.xlu0 %2828
      %2830 = vrot.lane.b32.xlu0 %v2556, 16
      %v2831 = vpop.permute.xlu0 %2830
      %2832 = vrot.lane.b32.xlu0 %v2558, 16
      %v2833 = vpop.permute.xlu0 %2832
      %2834 = vrot.lane.b32.xlu0 %v2560, 16
      %v2835 = vpop.permute.xlu0 %2834
      %2836 = vrot.lane.b32.xlu0 %v2562, 16
      %v2837 = vpop.permute.xlu0 %2836
      %2838 = vrot.lane.b32.xlu0 %v2564, 16
      %v2839 = vpop.permute.xlu0 %2838
      %2840 = vrot.lane.b32.xlu0 %v2566, 16
      %v2841 = vpop.permute.xlu0 %2840
      %2867 = vrot.lane.b32.xlu0 %v2617, 32
      %v2868 = vpop.permute.xlu0 %2867
      %2869 = vrot.lane.b32.xlu0 %v2571, 32
      %v2870 = vpop.permute.xlu0 %2869
      %2871 = vrot.lane.b32.xlu0 %v2573, 32
      %v2872 = vpop.permute.xlu0 %2871
      %2873 = vrot.lane.b32.xlu0 %v2575, 32
      %v2874 = vpop.permute.xlu0 %2873
      %2875 = vrot.lane.b32.xlu0 %v2577, 32
      %v2876 = vpop.permute.xlu0 %2875
      %2877 = vrot.lane.b32.xlu0 %v2579, 32
      %v2878 = vpop.permute.xlu0 %2877
      %2879 = vrot.lane.b32.xlu0 %v2581, 32
      %v2880 = vpop.permute.xlu0 %2879
      %2881 = vrot.lane.b32.xlu0 %v2583, 32
      %v2882 = vpop.permute.xlu0 %2881
      %2883 = vrot.lane.b32.xlu0 %v2585, 32
      %v2884 = vpop.permute.xlu0 %2883
      %2885 = vrot.lane.b32.xlu0 %v2587, 32
      %v2886 = vpop.permute.xlu0 %2885
      %2887 = vrot.lane.b32.xlu0 %v2589, 32
      %v2888 = vpop.permute.xlu0 %2887
      %2889 = vrot.lane.b32.xlu0 %v2591, 32
      %v2890 = vpop.permute.xlu0 %2889
      %2891 = vrot.lane.b32.xlu0 %v2593, 32
      %v2892 = vpop.permute.xlu0 %2891
      %2893 = vrot.lane.b32.xlu0 %v2595, 32
      %v2894 = vpop.permute.xlu0 %2893
      %2895 = vrot.lane.b32.xlu0 %v2597, 32
      %v2896 = vpop.permute.xlu0 %2895
      %2897 = vrot.lane.b32.xlu0 %v2599, 32
      %v2898 = vpop.permute.xlu0 %2897
      %2899 = vrot.lane.b32.xlu0 %v2601, 32
      %v2900 = vpop.permute.xlu0 %2899
      %2901 = vrot.lane.b32.xlu0 %v2603, 32
      %v2902 = vpop.permute.xlu0 %2901
      %2903 = vrot.lane.b32.xlu0 %v2605, 32
      %v2904 = vpop.permute.xlu0 %2903
      %2905 = vrot.lane.b32.xlu0 %v2607, 32
      %v2906 = vpop.permute.xlu0 %2905
      %2907 = vrot.lane.b32.xlu0 %v2609, 32
      %v2908 = vpop.permute.xlu0 %2907
      %2909 = vrot.lane.b32.xlu0 %v2611, 32
      %v2910 = vpop.permute.xlu0 %2909
      %2911 = vrot.lane.b32.xlu0 %v2613, 32
      %v2912 = vpop.permute.xlu0 %2911
      %2913 = vrot.lane.b32.xlu0 %v2615, 32
      %v2914 = vpop.permute.xlu0 %2913
      %2939 = vrot.lane.b32.xlu0 %v2617, 48
      %v2940 = vpop.permute.xlu0 %2939
      %2941 = vrot.lane.b32.xlu0 %v2571, 48
      %v2942 = vpop.permute.xlu0 %2941
      %2943 = vrot.lane.b32.xlu0 %v2573, 48
      %v2944 = vpop.permute.xlu0 %2943
      %2945 = vrot.lane.b32.xlu0 %v2575, 48
      %v2946 = vpop.permute.xlu0 %2945
      %2947 = vrot.lane.b32.xlu0 %v2577, 48
      %v2948 = vpop.permute.xlu0 %2947
      %2949 = vrot.lane.b32.xlu0 %v2579, 48
      %v2950 = vpop.permute.xlu0 %2949
      %2951 = vrot.lane.b32.xlu0 %v2581, 48
      %v2952 = vpop.permute.xlu0 %2951
      %2953 = vrot.lane.b32.xlu0 %v2583, 48
      %v2954 = vpop.permute.xlu0 %2953
      %2955 = vrot.lane.b32.xlu0 %v2585, 48
      %v2956 = vpop.permute.xlu0 %2955
      %2957 = vrot.lane.b32.xlu0 %v2587, 48
      %v2958 = vpop.permute.xlu0 %2957
      %2959 = vrot.lane.b32.xlu0 %v2589, 48
      %v2960 = vpop.permute.xlu0 %2959
      %2961 = vrot.lane.b32.xlu0 %v2591, 48
      %v2962 = vpop.permute.xlu0 %2961
      %2963 = vrot.lane.b32.xlu0 %v2593, 48
      %v2964 = vpop.permute.xlu0 %2963
      %2965 = vrot.lane.b32.xlu0 %v2595, 48
      %v2966 = vpop.permute.xlu0 %2965
      %2967 = vrot.lane.b32.xlu0 %v2597, 48
      %v2968 = vpop.permute.xlu0 %2967
      %2969 = vrot.lane.b32.xlu0 %v2599, 48
      %v2970 = vpop.permute.xlu0 %2969
      %2971 = vrot.lane.b32.xlu0 %v2601, 48
      %v2972 = vpop.permute.xlu0 %2971
      %2973 = vrot.lane.b32.xlu0 %v2603, 48
      %v2974 = vpop.permute.xlu0 %2973
      %2975 = vrot.lane.b32.xlu0 %v2605, 48
      %v2976 = vpop.permute.xlu0 %2975
      %2977 = vrot.lane.b32.xlu0 %v2607, 48
      %v2978 = vpop.permute.xlu0 %2977
      %2979 = vrot.lane.b32.xlu0 %v2609, 48
      %v2980 = vpop.permute.xlu0 %2979
      %2981 = vrot.lane.b32.xlu0 %v2611, 48
      %v2982 = vpop.permute.xlu0 %2981
      %2983 = vrot.lane.b32.xlu0 %v2613, 48
      %v2984 = vpop.permute.xlu0 %2983
      %2985 = vrot.lane.b32.xlu0 %v2615, 48
      %v2986 = vpop.permute.xlu0 %2985
      %2987 = vrot.lane.b32.xlu0 %v2620, 48
      %v2988 = vpop.permute.xlu0 %2987
      %3014 = vrot.lane.b32.xlu0 %v2399, 64
      %v3015 = vpop.permute.xlu0 %3014
      %3016 = vrot.lane.b32.xlu0 %v2400, 64
      %v3017 = vpop.permute.xlu0 %3016
      %3018 = vrot.lane.b32.xlu0 %v2401, 64
      %v3019 = vpop.permute.xlu0 %3018
      %3020 = vrot.lane.b32.xlu0 %v2402, 64
      %v3021 = vpop.permute.xlu0 %3020
      %3022 = vrot.lane.b32.xlu0 %v2403, 64
      %v3023 = vpop.permute.xlu0 %3022
      %3024 = vrot.lane.b32.xlu0 %v2404, 64
      %v3025 = vpop.permute.xlu0 %3024
      %3026 = vrot.lane.b32.xlu0 %v2405, 64
      %v3027 = vpop.permute.xlu0 %3026
      %3028 = vrot.lane.b32.xlu0 %v2406, 64
      %v3029 = vpop.permute.xlu0 %3028
      %3030 = vrot.lane.b32.xlu0 %v2407, 64
      %v3031 = vpop.permute.xlu0 %3030
      %3032 = vrot.lane.b32.xlu0 %v2408, 64
      %v3033 = vpop.permute.xlu0 %3032
      %3034 = vrot.lane.b32.xlu0 %v2409, 64
      %v3035 = vpop.permute.xlu0 %3034
      %3036 = vrot.lane.b32.xlu0 %v2410, 64
      %v3037 = vpop.permute.xlu0 %3036
      %3038 = vrot.lane.b32.xlu0 %v2411, 64
      %v3039 = vpop.permute.xlu0 %3038
      %3040 = vrot.lane.b32.xlu0 %v2412, 64
      %v3041 = vpop.permute.xlu0 %3040
      %3042 = vrot.lane.b32.xlu0 %v2413, 64
      %v3043 = vpop.permute.xlu0 %3042
      %3044 = vrot.lane.b32.xlu0 %v2414, 64
      %v3045 = vpop.permute.xlu0 %3044
      %3046 = vrot.lane.b32.xlu0 %v2415, 64
      %v3047 = vpop.permute.xlu0 %3046
      %3048 = vrot.lane.b32.xlu0 %v2416, 64
      %v3049 = vpop.permute.xlu0 %3048
      %3050 = vrot.lane.b32.xlu0 %v2417, 64
      %v3051 = vpop.permute.xlu0 %3050
      %3052 = vrot.lane.b32.xlu0 %v2418, 64
      %v3053 = vpop.permute.xlu0 %3052
      %3054 = vrot.lane.b32.xlu0 %v2419, 64
      %v3055 = vpop.permute.xlu0 %3054
      %3056 = vrot.lane.b32.xlu0 %v2420, 64
      %v3057 = vpop.permute.xlu0 %3056
      %3058 = vrot.lane.b32.xlu0 %v2421, 64
      %v3059 = vpop.permute.xlu0 %3058
      %3060 = vrot.lane.b32.xlu0 %v2422, 64
      %v3061 = vpop.permute.xlu0 %3060
      %3062 = vrot.lane.b32.xlu0 %v2423, 64
      %v3063 = vpop.permute.xlu0 %3062
      %3090 = vrot.lane.b32.xlu0 %v2623, 80
      %v3091 = vpop.permute.xlu0 %3090
      %3092 = vrot.lane.b32.xlu0 %v2625, 80
      %v3093 = vpop.permute.xlu0 %3092
      %3094 = vrot.lane.b32.xlu0 %v2627, 80
      %v3095 = vpop.permute.xlu0 %3094
      %3096 = vrot.lane.b32.xlu0 %v2629, 80
      %v3097 = vpop.permute.xlu0 %3096
      %3098 = vrot.lane.b32.xlu0 %v2631, 80
      %v3099 = vpop.permute.xlu0 %3098
      %3100 = vrot.lane.b32.xlu0 %v2633, 80
      %v3101 = vpop.permute.xlu0 %3100
      %3102 = vrot.lane.b32.xlu0 %v2635, 80
      %v3103 = vpop.permute.xlu0 %3102
      %3104 = vrot.lane.b32.xlu0 %v2637, 80
      %v3105 = vpop.permute.xlu0 %3104
      %3106 = vrot.lane.b32.xlu0 %v2639, 80
      %v3107 = vpop.permute.xlu0 %3106
      %3108 = vrot.lane.b32.xlu0 %v2641, 80
      %v3109 = vpop.permute.xlu0 %3108
      %3110 = vrot.lane.b32.xlu0 %v2643, 80
      %v3111 = vpop.permute.xlu0 %3110
      %3112 = vrot.lane.b32.xlu0 %v2645, 80
      %v3113 = vpop.permute.xlu0 %3112
      %3114 = vrot.lane.b32.xlu0 %v2647, 80
      %v3115 = vpop.permute.xlu0 %3114
      %3116 = vrot.lane.b32.xlu0 %v2649, 80
      %v3117 = vpop.permute.xlu0 %3116
      %3118 = vrot.lane.b32.xlu0 %v2651, 80
      %v3119 = vpop.permute.xlu0 %3118
      %3120 = vrot.lane.b32.xlu0 %v2653, 80
      %v3121 = vpop.permute.xlu0 %3120
      %3122 = vrot.lane.b32.xlu0 %v2655, 80
      %v3123 = vpop.permute.xlu0 %3122
      %3124 = vrot.lane.b32.xlu0 %v2657, 80
      %v3125 = vpop.permute.xlu0 %3124
      %3126 = vrot.lane.b32.xlu0 %v2659, 80
      %v3127 = vpop.permute.xlu0 %3126
      %3128 = vrot.lane.b32.xlu0 %v2661, 80
      %v3129 = vpop.permute.xlu0 %3128
      %3130 = vrot.lane.b32.xlu0 %v2663, 80
      %v3131 = vpop.permute.xlu0 %3130
      %3132 = vrot.lane.b32.xlu0 %v2665, 80
      %v3133 = vpop.permute.xlu0 %3132
      %3134 = vrot.lane.b32.xlu0 %v2667, 80
      %v3135 = vpop.permute.xlu0 %3134
      %3136 = vrot.lane.b32.xlu0 %v2669, 80
      %v3137 = vpop.permute.xlu0 %3136
      %3138 = vrot.lane.b32.xlu0 %v2671, 80
      %v3139 = vpop.permute.xlu0 %3138
      %3165 = vrot.lane.b32.xlu0 %v2625, 96
      %v3166 = vpop.permute.xlu0 %3165
      %3167 = vrot.lane.b32.xlu0 %v2627, 96
      %v3168 = vpop.permute.xlu0 %3167
      %3169 = vrot.lane.b32.xlu0 %v2629, 96
      %v3170 = vpop.permute.xlu0 %3169
      %3171 = vrot.lane.b32.xlu0 %v2631, 96
      %v3172 = vpop.permute.xlu0 %3171
      %3173 = vrot.lane.b32.xlu0 %v2633, 96
      %v3174 = vpop.permute.xlu0 %3173
      %3175 = vrot.lane.b32.xlu0 %v2635, 96
      %v3176 = vpop.permute.xlu0 %3175
      %3177 = vrot.lane.b32.xlu0 %v2637, 96
      %v3178 = vpop.permute.xlu0 %3177
      %3179 = vrot.lane.b32.xlu0 %v2639, 96
      %v3180 = vpop.permute.xlu0 %3179
      %3181 = vrot.lane.b32.xlu0 %v2641, 96
      %v3182 = vpop.permute.xlu0 %3181
      %3183 = vrot.lane.b32.xlu0 %v2643, 96
      %v3184 = vpop.permute.xlu0 %3183
      %3185 = vrot.lane.b32.xlu0 %v2645, 96
      %v3186 = vpop.permute.xlu0 %3185
      %3187 = vrot.lane.b32.xlu0 %v2647, 96
      %v3188 = vpop.permute.xlu0 %3187
      %3189 = vrot.lane.b32.xlu0 %v2649, 96
      %v3190 = vpop.permute.xlu0 %3189
      %3191 = vrot.lane.b32.xlu0 %v2651, 96
      %v3192 = vpop.permute.xlu0 %3191
      %3193 = vrot.lane.b32.xlu0 %v2653, 96
      %v3194 = vpop.permute.xlu0 %3193
      %3195 = vrot.lane.b32.xlu0 %v2655, 96
      %v3196 = vpop.permute.xlu0 %3195
      %3197 = vrot.lane.b32.xlu0 %v2657, 96
      %v3198 = vpop.permute.xlu0 %3197
      %3199 = vrot.lane.b32.xlu0 %v2659, 96
      %v3200 = vpop.permute.xlu0 %3199
      %3201 = vrot.lane.b32.xlu0 %v2661, 96
      %v3202 = vpop.permute.xlu0 %3201
      %3203 = vrot.lane.b32.xlu0 %v2663, 96
      %v3204 = vpop.permute.xlu0 %3203
      %3205 = vrot.lane.b32.xlu0 %v2665, 96
      %v3206 = vpop.permute.xlu0 %3205
      %3207 = vrot.lane.b32.xlu0 %v2667, 96
      %v3208 = vpop.permute.xlu0 %3207
      %3209 = vrot.lane.b32.xlu0 %v2669, 96
      %v3210 = vpop.permute.xlu0 %3209
      %3211 = vrot.lane.b32.xlu0 %v2671, 96
      %v3212 = vpop.permute.xlu0 %3211
      %3238 = vrot.lane.b32.xlu0 %v2674, 112
      %v3239 = vpop.permute.xlu0 %3238
      %3240 = vrot.lane.b32.xlu0 %v2676, 112
      %v3241 = vpop.permute.xlu0 %3240
      %3242 = vrot.lane.b32.xlu0 %v2678, 112
      %v3243 = vpop.permute.xlu0 %3242
      %3244 = vrot.lane.b32.xlu0 %v2680, 112
      %v3245 = vpop.permute.xlu0 %3244
      %3246 = vrot.lane.b32.xlu0 %v2682, 112
      %v3247 = vpop.permute.xlu0 %3246
      %3248 = vrot.lane.b32.xlu0 %v2684, 112
      %v3249 = vpop.permute.xlu0 %3248
      %3250 = vrot.lane.b32.xlu0 %v2686, 112
      %v3251 = vpop.permute.xlu0 %3250
      %3252 = vrot.lane.b32.xlu0 %v2688, 112
      %v3253 = vpop.permute.xlu0 %3252
      %3254 = vrot.lane.b32.xlu0 %v2690, 112
      %v3255 = vpop.permute.xlu0 %3254
      %3256 = vrot.lane.b32.xlu0 %v2692, 112
      %v3257 = vpop.permute.xlu0 %3256
      %3258 = vrot.lane.b32.xlu0 %v2694, 112
      %v3259 = vpop.permute.xlu0 %3258
      %3260 = vrot.lane.b32.xlu0 %v2696, 112
      %v3261 = vpop.permute.xlu0 %3260
      %3262 = vrot.lane.b32.xlu0 %v2698, 112
      %v3263 = vpop.permute.xlu0 %3262
      %3264 = vrot.lane.b32.xlu0 %v2700, 112
      %v3265 = vpop.permute.xlu0 %3264
      %3266 = vrot.lane.b32.xlu0 %v2702, 112
      %v3267 = vpop.permute.xlu0 %3266
      %3268 = vrot.lane.b32.xlu0 %v2704, 112
      %v3269 = vpop.permute.xlu0 %3268
      %3270 = vrot.lane.b32.xlu0 %v2706, 112
      %v3271 = vpop.permute.xlu0 %3270
      %3272 = vrot.lane.b32.xlu0 %v2708, 112
      %v3273 = vpop.permute.xlu0 %3272
      %3274 = vrot.lane.b32.xlu0 %v2710, 112
      %v3275 = vpop.permute.xlu0 %3274
      %3276 = vrot.lane.b32.xlu0 %v2712, 112
      %v3277 = vpop.permute.xlu0 %3276
      %3278 = vrot.lane.b32.xlu0 %v2714, 112
      %v3279 = vpop.permute.xlu0 %3278
      %3280 = vrot.lane.b32.xlu0 %v2716, 112
      %v3281 = vpop.permute.xlu0 %3280
      %3282 = vrot.lane.b32.xlu0 %v2718, 112
      %v3283 = vpop.permute.xlu0 %3282
      %3284 = vrot.lane.b32.xlu0 %v2720, 112
      %v3285 = vpop.permute.xlu0 %3284
      %v3310 = vsel %vm1730, %v2519, %v2795
      %v3311 = vsel %vm1730, %v2450, %v2797
      %v3312 = vsel %vm1730, %v2452, %v2799
      %v3313 = vsel %vm1730, %v2454, %v2801
      %v3314 = vsel %vm1730, %v2456, %v2803
      %v3315 = vsel %vm1730, %v2458, %v2805
      %v3316 = vsel %vm1730, %v2460, %v2807
      %v3317 = vsel %vm1730, %v2462, %v2809
      %v3318 = vsel %vm1730, %v2464, %v2811
      %v3319 = vsel %vm1730, %v2466, %v2813
      %v3320 = vsel %vm1730, %v2468, %v2815
      %v3321 = vsel %vm1730, %v2470, %v2817
      %v3322 = vsel %vm1730, %v2472, %v2819
      %v3323 = vsel %vm1730, %v2474, %v2821
      %v3324 = vsel %vm1730, %v2476, %v2823
      %v3325 = vsel %vm1730, %v2478, %v2825
      %v3326 = vsel %vm1730, %v2480, %v2827
      %v3327 = vsel %vm1730, %v2482, %v2829
      %v3328 = vsel %vm1730, %v2484, %v2831
      %v3329 = vsel %vm1730, %v2486, %v2833
      %v3330 = vsel %vm1730, %v2488, %v2835
      %v3331 = vsel %vm1730, %v2490, %v2837
      %v3332 = vsel %vm1730, %v2492, %v2839
      %v3333 = vsel %vm1730, %v2494, %v2841
      %v3334 = vsel %vm1756, %v3310, %v2868
      %v3335 = vsel %vm1756, %v3311, %v2870
      %v3336 = vsel %vm1756, %v3312, %v2872
      %v3337 = vsel %vm1756, %v3313, %v2874
      %v3338 = vsel %vm1756, %v3314, %v2876
      %v3339 = vsel %vm1756, %v3315, %v2878
      %v3340 = vsel %vm1756, %v3316, %v2880
      %v3341 = vsel %vm1756, %v3317, %v2882
      %v3342 = vsel %vm1756, %v3318, %v2884
      %v3343 = vsel %vm1756, %v3319, %v2886
      %v3344 = vsel %vm1756, %v3320, %v2888
      %v3345 = vsel %vm1756, %v3321, %v2890
      %v3346 = vsel %vm1756, %v3322, %v2892
      %v3347 = vsel %vm1756, %v3323, %v2894
      %v3348 = vsel %vm1756, %v3324, %v2896
      %v3349 = vsel %vm1756, %v3325, %v2898
      %v3350 = vsel %vm1756, %v3326, %v2900
      %v3351 = vsel %vm1756, %v3327, %v2902
      %v3352 = vsel %vm1756, %v3328, %v2904
      %v3353 = vsel %vm1756, %v3329, %v2906
      %v3354 = vsel %vm1756, %v3330, %v2908
      %v3355 = vsel %vm1756, %v3331, %v2910
      %v3356 = vsel %vm1756, %v3332, %v2912
      %v3357 = vsel %vm1756, %v3333, %v2914
      %v3358 = vsel %vm1782, %v1757, %v2940
      %v3359 = vsel %vm1782, %v3334, %v2942
      %v3360 = vsel %vm1782, %v3335, %v2944
      %v3361 = vsel %vm1782, %v3336, %v2946
      %v3362 = vsel %vm1782, %v3337, %v2948
      %v3363 = vsel %vm1782, %v3338, %v2950
      %v3364 = vsel %vm1782, %v3339, %v2952
      %v3365 = vsel %vm1782, %v3340, %v2954
      %v3366 = vsel %vm1782, %v3341, %v2956
      %v3367 = vsel %vm1782, %v3342, %v2958
      %v3368 = vsel %vm1782, %v3343, %v2960
      %v3369 = vsel %vm1782, %v3344, %v2962
      %v3370 = vsel %vm1782, %v3345, %v2964
      %v3371 = vsel %vm1782, %v3346, %v2966
      %v3372 = vsel %vm1782, %v3347, %v2968
      %v3373 = vsel %vm1782, %v3348, %v2970
      %v3374 = vsel %vm1782, %v3349, %v2972
      %v3375 = vsel %vm1782, %v3350, %v2974
      %v3376 = vsel %vm1782, %v3351, %v2976
      %v3377 = vsel %vm1782, %v3352, %v2978
      %v3378 = vsel %vm1782, %v3353, %v2980
      %v3379 = vsel %vm1782, %v3354, %v2982
      %v3380 = vsel %vm1782, %v3355, %v2984
      %v3381 = vsel %vm1782, %v3356, %v2986
      %v3382 = vsel %vm1782, %v3357, %v2988
      %v3383 = vsel %vm1808, %v3358, %v3015
      %v3384 = vsel %vm1808, %v3359, %v3017
      %v3385 = vsel %vm1808, %v3360, %v3019
      %v3386 = vsel %vm1808, %v3361, %v3021
      %v3387 = vsel %vm1808, %v3362, %v3023
      %v3388 = vsel %vm1808, %v3363, %v3025
      %v3389 = vsel %vm1808, %v3364, %v3027
      %v3390 = vsel %vm1808, %v3365, %v3029
      %v3391 = vsel %vm1808, %v3366, %v3031
      %v3392 = vsel %vm1808, %v3367, %v3033
      %v3393 = vsel %vm1808, %v3368, %v3035
      %v3394 = vsel %vm1808, %v3369, %v3037
      %v3395 = vsel %vm1808, %v3370, %v3039
      %v3396 = vsel %vm1808, %v3371, %v3041
      %v3397 = vsel %vm1808, %v3372, %v3043
      %v3398 = vsel %vm1808, %v3373, %v3045
      %v3399 = vsel %vm1808, %v3374, %v3047
      %v3400 = vsel %vm1808, %v3375, %v3049
      %v3401 = vsel %vm1808, %v3376, %v3051
      %v3402 = vsel %vm1808, %v3377, %v3053
      %v3403 = vsel %vm1808, %v3378, %v3055
      %v3404 = vsel %vm1808, %v3379, %v3057
      %v3405 = vsel %vm1808, %v3380, %v3059
      %v3406 = vsel %vm1808, %v3381, %v3061
      %v3407 = vsel %vm1808, %v3382, %v3063
      %v3408 = vsel %vm1834, %v3383, %v3091
      %v3409 = vsel %vm1834, %v3384, %v3093
      %v3410 = vsel %vm1834, %v3385, %v3095
      %v3411 = vsel %vm1834, %v3386, %v3097
      %v3412 = vsel %vm1834, %v3387, %v3099
      %v3413 = vsel %vm1834, %v3388, %v3101
      %v3414 = vsel %vm1834, %v3389, %v3103
      %v3415 = vsel %vm1834, %v3390, %v3105
      %v3416 = vsel %vm1834, %v3391, %v3107
      %v3417 = vsel %vm1834, %v3392, %v3109
      %v3418 = vsel %vm1834, %v3393, %v3111
      %v3419 = vsel %vm1834, %v3394, %v3113
      %v3420 = vsel %vm1834, %v3395, %v3115
      %v3421 = vsel %vm1834, %v3396, %v3117
      %v3422 = vsel %vm1834, %v3397, %v3119
      %v3423 = vsel %vm1834, %v3398, %v3121
      %v3424 = vsel %vm1834, %v3399, %v3123
      %v3425 = vsel %vm1834, %v3400, %v3125
      %v3426 = vsel %vm1834, %v3401, %v3127
      %v3427 = vsel %vm1834, %v3402, %v3129
      %v3428 = vsel %vm1834, %v3403, %v3131
      %v3429 = vsel %vm1834, %v3404, %v3133
      %v3430 = vsel %vm1834, %v3405, %v3135
      %v3431 = vsel %vm1834, %v3406, %v3137
      %v3432 = vsel %vm1834, %v3407, %v3139
      %v3433 = vsel %vm1860, %v3408, %v3166
      %v3434 = vsel %vm1860, %v3409, %v3168
      %v3435 = vsel %vm1860, %v3410, %v3170
      %v3436 = vsel %vm1860, %v3411, %v3172
      %v3437 = vsel %vm1860, %v3412, %v3174
      %v3438 = vsel %vm1860, %v3413, %v3176
      %v3439 = vsel %vm1860, %v3414, %v3178
      %v3440 = vsel %vm1860, %v3415, %v3180
      %v3441 = vsel %vm1860, %v3416, %v3182
      %v3442 = vsel %vm1860, %v3417, %v3184
      %v3443 = vsel %vm1860, %v3418, %v3186
      %v3444 = vsel %vm1860, %v3419, %v3188
      %v3445 = vsel %vm1860, %v3420, %v3190
      %v3446 = vsel %vm1860, %v3421, %v3192
      %v3447 = vsel %vm1860, %v3422, %v3194
      %v3448 = vsel %vm1860, %v3423, %v3196
      %v3449 = vsel %vm1860, %v3424, %v3198
      %v3450 = vsel %vm1860, %v3425, %v3200
      %v3451 = vsel %vm1860, %v3426, %v3202
      %v3452 = vsel %vm1860, %v3427, %v3204
      %v3453 = vsel %vm1860, %v3428, %v3206
      %v3454 = vsel %vm1860, %v3429, %v3208
      %v3455 = vsel %vm1860, %v3430, %v3210
      %v3456 = vsel %vm1860, %v3431, %v3212
      %v3457 = vsel %vm1860, %v3432, %v1628
      %v3458 = vsel %vm1886, %v3433, %v3239
      %v3459 = vsel %vm1886, %v3434, %v3241
      %v3460 = vsel %vm1886, %v3435, %v3243
      %v3461 = vsel %vm1886, %v3436, %v3245
      %v3462 = vsel %vm1886, %v3437, %v3247
      %v3463 = vsel %vm1886, %v3438, %v3249
      %v3464 = vsel %vm1886, %v3439, %v3251
      %v3465 = vsel %vm1886, %v3440, %v3253
      %v3466 = vsel %vm1886, %v3441, %v3255
      %v3467 = vsel %vm1886, %v3442, %v3257
      %v3468 = vsel %vm1886, %v3443, %v3259
      %v3469 = vsel %vm1886, %v3444, %v3261
      %v3470 = vsel %vm1886, %v3445, %v3263
      %v3471 = vsel %vm1886, %v3446, %v3265
      %v3472 = vsel %vm1886, %v3447, %v3267
      %v3473 = vsel %vm1886, %v3448, %v3269
      %v3474 = vsel %vm1886, %v3449, %v3271
      %v3475 = vsel %vm1886, %v3450, %v3273
      %v3476 = vsel %vm1886, %v3451, %v3275
      %v3477 = vsel %vm1886, %v3452, %v3277
      %v3478 = vsel %vm1886, %v3453, %v3279
      %v3479 = vsel %vm1886, %v3454, %v3281
      %v3480 = vsel %vm1886, %v3455, %v3283
      %v3481 = vsel %vm1886, %v3456, %v3285
      %v3482 = vsel %vm1886, %v3457, %v1704
      %v3483 = vpack.c.bf16 %v3459, %v3458
      %v3484 = vpack.c.bf16 %v2725, %v2723
      %v3485 = vpack.c.bf16 %v3461, %v3460
      %v3486 = vpack.c.bf16 %v2729, %v2727
      %v3487 = vpack.c.bf16 %v3463, %v3462
      %v3488 = vpack.c.bf16 %v2733, %v2731
      %v3489 = vpack.c.bf16 %v3465, %v3464
      %v3490 = vpack.c.bf16 %v2737, %v2735
      %v3491 = vpack.c.bf16 %v3467, %v3466
      %v3492 = vpack.c.bf16 %v2741, %v2739
      %v3493 = vpack.c.bf16 %v3469, %v3468
      %v3494 = vpack.c.bf16 %v2745, %v2743
      %v3495 = vpack.c.bf16 %v3471, %v3470
      %v3496 = vpack.c.bf16 %v2749, %v2747
      %v3497 = vpack.c.bf16 %v3473, %v3472
      %v3498 = vpack.c.bf16 %v2753, %v2751
      %v3499 = vpack.c.bf16 %v3475, %v3474
      %v3500 = vpack.c.bf16 %v2757, %v2755
      %v3501 = vpack.c.bf16 %v3477, %v3476
      %v3502 = vpack.c.bf16 %v2761, %v2759
      %v3503 = vpack.c.bf16 %v3479, %v3478
      %v3504 = vpack.c.bf16 %v2765, %v2763
      %v3505 = vpack.c.bf16 %v3481, %v3480
      %v3506 = vpack.c.bf16 %v2792, %v2767
      %v3507 = vpack.c.bf16 %v3482, %v3482
      %v3508 = vld [vmem:[%s735] sm:$0xf]
      %v3509 = vld [vmem:[%s735 + $0x4] sm:$0xf]
      %v3510 = vld [vmem:[%s735 + $0x8] sm:$0xf]
      %v3511 = vld [vmem:[%s735 + $0xc] sm:$0xf]
      %v3512 = vld [vmem:[%s735 + $0x10] sm:$0xf]
      %v3513 = vld [vmem:[%s735 + $0x14] sm:$0xf]
      %v3514 = vld [vmem:[%s735 + $0x18] sm:$0xf]
      %v3515 = vld [vmem:[%s735 + $0x1c] sm:$0xf]
      %v3516 = vld [vmem:[%s735 + $0x20] sm:$0xf]
      %v3517 = vld [vmem:[%s735 + $0x24] sm:$0xf]
      %v3518 = vld [vmem:[%s735 + $0x28] sm:$0xf]
      %v3519 = vld [vmem:[%s735 + $0x2c] sm:$0xf]
      %v3520 = vld [vmem:[%s735 + $0x30] sm:$0xf]
      %v3521 = vld [vmem:[%s735 + $0x34] sm:$0xf]
      %v3522 = vld [vmem:[%s735 + $0x38] sm:$0xf]
      %v3523 = vld [vmem:[%s735 + $0x3c] sm:$0xf]
      %v3524 = vld [vmem:[%s735 + $0x40] sm:$0xf]
      %v3525 = vld [vmem:[%s735 + $0x44] sm:$0xf]
      %v3544 = vunpack.c.l.b16 %v3508
      %v3545 = vunpack.c.l.b16 %v3509
      %v3546 = vunpack.c.l.b16 %v3510
      %v3547 = vunpack.c.l.b16 %v3511
      %v3548 = vunpack.c.l.b16 %v3512
      %v3549 = vunpack.c.l.b16 %v3513
      %v3550 = vunpack.c.l.b16 %v3514
      %v3551 = vunpack.c.l.b16 %v3515
      %v3552 = vunpack.c.l.b16 %v3516
      %v3553 = vunpack.c.l.b16 %v3517
      %v3554 = vunpack.c.l.b16 %v3518
      %v3555 = vunpack.c.l.b16 %v3519
      %v3556 = vunpack.c.l.b16 %v3520
      %v3557 = vunpack.c.l.b16 %v3521
      %v3558 = vunpack.c.l.b16 %v3522
      %v3559 = vunpack.c.l.b16 %v3523
      %v3560 = vunpack.c.l.b16 %v3524
      %v3561 = vunpack.c.l.b16 %v3525
      %v3562 = vpack.c.b16 %v3545, %v3544
      %v3563 = vpack.c.b16 %v3547, %v3546
      %v3564 = vpack.c.b16 %v3549, %v3548
      %v3565 = vpack.c.b16 %v3551, %v3550
      %v3566 = vpack.c.b16 %v3553, %v3552
      %v3567 = vpack.c.b16 %v3555, %v3554
      %v3568 = vpack.c.b16 %v3557, %v3556
      %v3569 = vpack.c.b16 %v3559, %v3558
      %v3570 = vpack.c.b16 %v3561, %v3560
      %v3581 = vsel %vm1730, %v3484, 0
      %v3584 = vsel %vm1730, %v3486, 0
      %v3587 = vsel %vm1730, %v3488, 0
      %v3590 = vsel %vm1730, %v3490, 0
      %v3593 = vsel %vm1730, %v3492, 0
      %v3596 = vsel %vm1730, %v3494, 0
      %v3599 = vsel %vm1730, %v3496, 0
      %v3602 = vsel %vm1730, %v3498, 0
      %v3605 = vsel %vm1730, %v3500, 0
      %v3608 = vsel %vm1730, %v3502, 0
      %v3611 = vsel %vm1730, %v3504, 0
      %v3614 = vsel %vm1730, %v3506, 0
      %3616 = vmatprep.subr.bf16.mxu0 0
      %3617 = vmatpush1.bf16.msra.mxu0 %v3562
      %3618 = vmatprep.subr.bf16.mxu0 0
      %3619 = vmatpush1.bf16.msra.mxu0 %v3563
      %3620 = vmatprep.subr.bf16.mxu0 0
      %3621 = vmatpush1.bf16.msra.mxu0 %v3564
      %3622 = vmatprep.subr.bf16.mxu0 0
      %3623 = vmatpush1.bf16.msra.mxu0 %v3565
      %3624 = vmatprep.subr.bf16.mxu0 0
      %3625 = vmatpush1.bf16.msra.mxu0 %v3566
      %3626 = vmatprep.subr.bf16.mxu0 0
      %3627 = vmatpush1.bf16.msra.mxu0 %v3567
      %3628 = vmatprep.subr.bf16.mxu0 0
      %3629 = vmatpush1.bf16.msra.mxu0 %v3568
      %3630 = vmatprep.subr.bf16.mxu0 0
      %3631 = vmatpush1.bf16.msra.mxu0 %v3569
      %3632 = vmatprep.subr.bf16.mxu0 0
      %3633 = vmatpush1.bf16.msra.mxu0 %v3570
      %3634 = vmatprep.subr.bf16.mxu0 0
      %3635 = vmatpush1.bf16.msra.mxu0 0
      %3636 = vmatprep.subr.bf16.mxu0 0
      %3637 = vmatpush1.bf16.msra.mxu0 0
      %3638 = vmatprep.subr.bf16.mxu0 0
      %3639 = vmatpush1.bf16.msra.mxu0 0
      %3640 = vmatprep.subr.bf16.mxu0 0
      %3641 = vmatpush1.bf16.msra.mxu0 0
      %3642 = vmatprep.subr.bf16.mxu0 0
      %3643 = vmatpush1.bf16.msra.mxu0 0
      %3644 = vmatprep.subr.bf16.mxu0 0
      %3645 = vmatpush1.bf16.msra.mxu0 0
      %3646 = vmatprep.subr.bf16.mxu0 0
      %3647 = vmatpush1.bf16.msra.mxu0 0
      %3648 = vmatprep.mubr.bf16.mxu0 %v3581
      %3649 = vmatmul.mubr.bf16.gmra.mrb[0].mxu0 %v3483
      %v3650 = vpop.f32.mrb[0].mxu0
      %v3651 = vadd.f32 0.0, %v3650
      %v3652 = vpop.f32.mrb[0].mxu0
      %v3653 = vpop.f32.mrb[0].mxu0
      %v3654 = vadd.f32 0.0, %v3653
      %v3655 = vpop.f32.mrb[0].mxu0
      %3656 = vmatprep.mubr.bf16.mxu0 %v3584
      %3657 = vmatmul.mubr.bf16.gmra.mrb[0].mxu0 %v3485
      %v3658 = vpop.f32.mrb[0].mxu0
      %v3659 = vadd.f32 0.0, %v3658
      %v3660 = vpop.f32.mrb[0].mxu0
      %v3661 = vpop.f32.mrb[0].mxu0
      %v3662 = vadd.f32 0.0, %v3661
      %v3663 = vpop.f32.mrb[0].mxu0
      %3664 = vmatprep.mubr.bf16.mxu0 %v3587
      %3665 = vmatmul.mubr.bf16.gmra.mrb[0].mxu0 %v3487
      %v3666 = vpop.f32.mrb[0].mxu0
      %v3667 = vadd.f32 0.0, %v3666
      %v3668 = vpop.f32.mrb[0].mxu0
      %v3669 = vpop.f32.mrb[0].mxu0
      %v3670 = vadd.f32 0.0, %v3669
      %v3671 = vpop.f32.mrb[0].mxu0
      %3672 = vmatprep.mubr.bf16.mxu0 %v3590
      %3673 = vmatmul.mubr.bf16.gmra.mrb[0].mxu0 %v3489
      %v3674 = vpop.f32.mrb[0].mxu0
      %v3675 = vadd.f32 0.0, %v3674
      %v3676 = vpop.f32.mrb[0].mxu0
      %v3677 = vpop.f32.mrb[0].mxu0
      %v3678 = vadd.f32 0.0, %v3677
      %v3679 = vpop.f32.mrb[0].mxu0
      %3680 = vmatprep.mubr.bf16.mxu0 %v3593
      %3681 = vmatmul.mubr.bf16.gmra.mrb[0].mxu0 %v3491
      %v3682 = vpop.f32.mrb[0].mxu0
      %v3683 = vadd.f32 0.0, %v3682
      %v3684 = vpop.f32.mrb[0].mxu0
      %v3685 = vpop.f32.mrb[0].mxu0
      %v3686 = vadd.f32 0.0, %v3685
      %v3687 = vpop.f32.mrb[0].mxu0
      %3688 = vmatprep.mubr.bf16.mxu0 %v3596
      %3689 = vmatmul.mubr.bf16.gmra.mrb[0].mxu0 %v3493
      %v3690 = vpop.f32.mrb[0].mxu0
      %v3691 = vadd.f32 0.0, %v3690
      %v3692 = vpop.f32.mrb[0].mxu0
      %v3693 = vpop.f32.mrb[0].mxu0
      %v3694 = vadd.f32 0.0, %v3693
      %v3695 = vpop.f32.mrb[0].mxu0
      %3696 = vmatprep.mubr.bf16.mxu0 %v3599
      %3697 = vmatmul.mubr.bf16.gmra.mrb[0].mxu0 %v3495
      %v3698 = vpop.f32.mrb[0].mxu0
      %v3699 = vadd.f32 0.0, %v3698
      %v3700 = vpop.f32.mrb[0].mxu0
      %v3701 = vpop.f32.mrb[0].mxu0
      %v3702 = vadd.f32 0.0, %v3701
      %v3703 = vpop.f32.mrb[0].mxu0
      %3704 = vmatprep.mubr.bf16.mxu0 %v3602
      %3705 = vmatmul.mubr.bf16.gmra.mrb[0].mxu0 %v3497
      %v3706 = vpop.f32.mrb[0].mxu0
      %v3707 = vadd.f32 0.0, %v3706
      %v3708 = vpop.f32.mrb[0].mxu0
      %v3709 = vpop.f32.mrb[0].mxu0
      %v3710 = vadd.f32 0.0, %v3709
      %v3711 = vpop.f32.mrb[0].mxu0
      %3712 = vmatprep.mubr.bf16.mxu0 %v3605
      %3713 = vmatmul.mubr.bf16.gmra.mrb[0].mxu0 %v3499
      %v3714 = vpop.f32.mrb[0].mxu0
      %v3715 = vadd.f32 0.0, %v3714
      %v3716 = vpop.f32.mrb[0].mxu0
      %v3717 = vpop.f32.mrb[0].mxu0
      %v3718 = vadd.f32 0.0, %v3717
      %v3719 = vpop.f32.mrb[0].mxu0
      %3720 = vmatprep.mubr.bf16.mxu0 %v3608
      %3721 = vmatmul.mubr.bf16.gmra.mrb[0].mxu0 %v3501
      %v3722 = vpop.f32.mrb[0].mxu0
      %v3723 = vadd.f32 0.0, %v3722
      %v3724 = vpop.f32.mrb[0].mxu0
      %v3725 = vpop.f32.mrb[0].mxu0
      %v3726 = vadd.f32 0.0, %v3725
      %v3727 = vpop.f32.mrb[0].mxu0
      %3728 = vmatprep.mubr.bf16.mxu0 %v3611
      %3729 = vmatmul.mubr.bf16.gmra.mrb[0].mxu0 %v3503
      %v3730 = vpop.f32.mrb[0].mxu0
      %v3731 = vadd.f32 0.0, %v3730
      %v3732 = vpop.f32.mrb[0].mxu0
      %v3733 = vpop.f32.mrb[0].mxu0
      %v3734 = vadd.f32 0.0, %v3733
      %v3735 = vpop.f32.mrb[0].mxu0
      %3736 = vmatprep.mubr.bf16.mxu0 %v3614
      %3737 = vmatmul.mubr.bf16.gmra.mrb[0].mxu0 %v3505
      %v3738 = vpop.f32.mrb[0].mxu0
      %v3739 = vadd.f32 0.0, %v3738
      %v3740 = vpop.f32.mrb[0].mxu0
      %v3741 = vpop.f32.mrb[0].mxu0
      %v3742 = vadd.f32 0.0, %v3741
      %v3743 = vpop.f32.mrb[0].mxu0
      %3744 = vmatprep.mubr.bf16.mxu0 %v2047
      %3745 = vmatmul.mubr.bf16.gmra.mrb[0].mxu0 %v3507
      %v3746 = vpop.f32.mrb[0].mxu0
      %v3747 = vadd.f32 0.0, %v3746
      %v3748 = vpop.f32.mrb[0].mxu0
      %v3749 = vpop.f32.mrb[0].mxu0
      %v3750 = vpop.f32.mrb[0].mxu0
      %3751 = vdwg.mxu0
      %v3752 = vld [vmem:[%s738] sm:$0x1]
      %v3754 = vlaneseq
      %v3755 = vshrl.u32 %v3754, 7
      %v3756 = vsub.s32 0, %v3755
      %v3757 = vrot.slane %v3752, %v3756
      %v3759 = vmul.f32 %v3651, %v3757
      %v3760 = vmul.f32 %v3654, %v3757
      %v3761 = vmul.f32 %v3659, %v3757
      %v3762 = vmul.f32 %v3662, %v3757
      %v3763 = vmul.f32 %v3667, %v3757
      %v3764 = vmul.f32 %v3670, %v3757
      %v3765 = vmul.f32 %v3675, %v3757
      %v3766 = vmul.f32 %v3678, %v3757
      %v3767 = vmul.f32 %v3683, %v3757
      %v3768 = vmul.f32 %v3686, %v3757
      %v3769 = vmul.f32 %v3691, %v3757
      %v3770 = vmul.f32 %v3694, %v3757
      %v3771 = vmul.f32 %v3699, %v3757
      %v3772 = vmul.f32 %v3702, %v3757
      %v3773 = vmul.f32 %v3707, %v3757
      %v3774 = vmul.f32 %v3710, %v3757
      %v3775 = vmul.f32 %v3715, %v3757
      %v3776 = vmul.f32 %v3718, %v3757
      %v3777 = vmul.f32 %v3723, %v3757
      %v3778 = vmul.f32 %v3726, %v3757
      %v3779 = vmul.f32 %v3731, %v3757
      %v3780 = vmul.f32 %v3734, %v3757
      %v3781 = vmul.f32 %v3739, %v3757
      %v3782 = vmul.f32 %v3742, %v3757
      %v3783 = vmul.f32 %v3747, %v3757
      %v3784 = vld [vmem:[%s741] sm:$0x1]
      %v3786 = vlaneseq
      %v3787 = vshrl.u32 %v3786, 7
      %v3788 = vsub.s32 0, %v3787
      %v3789 = vrot.slane %v3784, %v3788
      %v3791 = vadd.f32 %v3759, %v3789
      %v3792 = vadd.f32 %v3760, %v3789
      %v3793 = vadd.f32 %v3761, %v3789
      %v3794 = vadd.f32 %v3762, %v3789
      %v3795 = vadd.f32 %v3763, %v3789
      %v3796 = vadd.f32 %v3764, %v3789
      %v3797 = vadd.f32 %v3765, %v3789
      %v3798 = vadd.f32 %v3766, %v3789
      %v3799 = vadd.f32 %v3767, %v3789
      %v3800 = vadd.f32 %v3768, %v3789
      %v3801 = vadd.f32 %v3769, %v3789
      %v3802 = vadd.f32 %v3770, %v3789
      %v3803 = vadd.f32 %v3771, %v3789
      %v3804 = vadd.f32 %v3772, %v3789
      %v3805 = vadd.f32 %v3773, %v3789
      %v3806 = vadd.f32 %v3774, %v3789
      %v3807 = vadd.f32 %v3775, %v3789
      %v3808 = vadd.f32 %v3776, %v3789
      %v3809 = vadd.f32 %v3777, %v3789
      %v3810 = vadd.f32 %v3778, %v3789
      %v3811 = vadd.f32 %v3779, %v3789
      %v3812 = vadd.f32 %v3780, %v3789
      %v3813 = vadd.f32 %v3781, %v3789
      %v3814 = vadd.f32 %v3782, %v3789
      %v3815 = vadd.f32 %v3783, %v3789
      %v3816 = vmax.f32 %v3791, 0.0
      %v3817 = vmax.f32 %v3792, 0.0
      %v3818 = vmax.f32 %v3793, 0.0
      %v3819 = vmax.f32 %v3794, 0.0
      %v3820 = vmax.f32 %v3795, 0.0
      %v3821 = vmax.f32 %v3796, 0.0
      %v3822 = vmax.f32 %v3797, 0.0
      %v3823 = vmax.f32 %v3798, 0.0
      %v3824 = vmax.f32 %v3799, 0.0
      %v3825 = vmax.f32 %v3800, 0.0
      %v3826 = vmax.f32 %v3801, 0.0
      %v3827 = vmax.f32 %v3802, 0.0
      %v3828 = vmax.f32 %v3803, 0.0
      %v3829 = vmax.f32 %v3804, 0.0
      %v3830 = vmax.f32 %v3805, 0.0
      %v3831 = vmax.f32 %v3806, 0.0
      %v3832 = vmax.f32 %v3807, 0.0
      %v3833 = vmax.f32 %v3808, 0.0
      %v3834 = vmax.f32 %v3809, 0.0
      %v3835 = vmax.f32 %v3810, 0.0
      %v3836 = vmax.f32 %v3811, 0.0
      %v3837 = vmax.f32 %v3812, 0.0
      %v3838 = vmax.f32 %v3813, 0.0
      %v3839 = vmax.f32 %v3814, 0.0
      %v3840 = vmax.f32 %v3815, 0.0
      %v3841 = vmul.f32 %v3816, %v2277
      %v3842 = vmul.f32 %v3817, %v2282
      %v3843 = vmul.f32 %v3818, %v2287
      %v3844 = vmul.f32 %v3819, %v2292
      %v3845 = vmul.f32 %v3820, %v2297
      %v3846 = vmul.f32 %v3821, %v2302
      %v3847 = vmul.f32 %v3822, %v2307
      %v3848 = vmul.f32 %v3823, %v2312
      %v3849 = vmul.f32 %v3824, %v2317
      %v3850 = vmul.f32 %v3825, %v2322
      %v3851 = vmul.f32 %v3826, %v2327
      %v3852 = vmul.f32 %v3827, %v2332
      %v3853 = vmul.f32 %v3828, %v2337
      %v3854 = vmul.f32 %v3829, %v2342
      %v3855 = vmul.f32 %v3830, %v2347
      %v3856 = vmul.f32 %v3831, %v2352
      %v3857 = vmul.f32 %v3832, %v2357
      %v3858 = vmul.f32 %v3833, %v2362
      %v3859 = vmul.f32 %v3834, %v2367
      %v3860 = vmul.f32 %v3835, %v2372
      %v3861 = vmul.f32 %v3836, %v2377
      %v3862 = vmul.f32 %v3837, %v2382
      %v3863 = vmul.f32 %v3838, %v2387
      %v3864 = vmul.f32 %v3839, %v2392
      %v3865 = vmul.f32 %v3840, %v2397
      %v3890 = vrot.slane %v3841, 5
      %v3891 = vrot.slane %v3842, 5
      %v3892 = vsel %vm849, %v3890, %v3891
      %v3893 = vrot.slane %v3843, 5
      %v3894 = vsel %vm849, %v3891, %v3893
      %v3895 = vrot.slane %v3844, 5
      %v3896 = vsel %vm849, %v3893, %v3895
      %v3897 = vrot.slane %v3845, 5
      %v3898 = vsel %vm849, %v3895, %v3897
      %v3899 = vrot.slane %v3846, 5
      %v3900 = vsel %vm849, %v3897, %v3899
      %v3901 = vrot.slane %v3847, 5
      %v3902 = vsel %vm849, %v3899, %v3901
      %v3903 = vrot.slane %v3848, 5
      %v3904 = vsel %vm849, %v3901, %v3903
      %v3905 = vrot.slane %v3849, 5
      %v3906 = vsel %vm849, %v3903, %v3905
      %v3907 = vrot.slane %v3850, 5
      %v3908 = vsel %vm849, %v3905, %v3907
      %v3909 = vrot.slane %v3851, 5
      %v3910 = vsel %vm849, %v3907, %v3909
      %v3911 = vrot.slane %v3852, 5
      %v3912 = vsel %vm849, %v3909, %v3911
      %v3913 = vrot.slane %v3853, 5
      %v3914 = vsel %vm849, %v3911, %v3913
      %v3915 = vrot.slane %v3854, 5
      %v3916 = vsel %vm849, %v3913, %v3915
      %v3917 = vrot.slane %v3855, 5
      %v3918 = vsel %vm849, %v3915, %v3917
      %v3919 = vrot.slane %v3856, 5
      %v3920 = vsel %vm849, %v3917, %v3919
      %v3921 = vrot.slane %v3857, 5
      %v3922 = vsel %vm849, %v3919, %v3921
      %v3923 = vrot.slane %v3858, 5
      %v3924 = vsel %vm849, %v3921, %v3923
      %v3925 = vrot.slane %v3859, 5
      %v3926 = vsel %vm849, %v3923, %v3925
      %v3927 = vrot.slane %v3860, 5
      %v3928 = vsel %vm849, %v3925, %v3927
      %v3929 = vrot.slane %v3861, 5
      %v3930 = vsel %vm849, %v3927, %v3929
      %v3931 = vrot.slane %v3862, 5
      %v3932 = vsel %vm849, %v3929, %v3931
      %v3933 = vrot.slane %v3863, 5
      %v3934 = vsel %vm849, %v3931, %v3933
      %v3935 = vrot.slane %v3864, 5
      %v3936 = vsel %vm849, %v3933, %v3935
      %v3961 = vsel %vm849, 0.0, %v3890
      %v3962 = vrot.slane %v3841, 6
      %v3963 = vrot.slane %v3842, 6
      %v3964 = vsel %vm922, %v3962, %v3963
      %v3965 = vrot.slane %v3843, 6
      %v3966 = vsel %vm922, %v3963, %v3965
      %v3967 = vrot.slane %v3844, 6
      %v3968 = vsel %vm922, %v3965, %v3967
      %v3969 = vrot.slane %v3845, 6
      %v3970 = vsel %vm922, %v3967, %v3969
      %v3971 = vrot.slane %v3846, 6
      %v3972 = vsel %vm922, %v3969, %v3971
      %v3973 = vrot.slane %v3847, 6
      %v3974 = vsel %vm922, %v3971, %v3973
      %v3975 = vrot.slane %v3848, 6
      %v3976 = vsel %vm922, %v3973, %v3975
      %v3977 = vrot.slane %v3849, 6
      %v3978 = vsel %vm922, %v3975, %v3977
      %v3979 = vrot.slane %v3850, 6
      %v3980 = vsel %vm922, %v3977, %v3979
      %v3981 = vrot.slane %v3851, 6
      %v3982 = vsel %vm922, %v3979, %v3981
      %v3983 = vrot.slane %v3852, 6
      %v3984 = vsel %vm922, %v3981, %v3983
      %v3985 = vrot.slane %v3853, 6
      %v3986 = vsel %vm922, %v3983, %v3985
      %v3987 = vrot.slane %v3854, 6
      %v3988 = vsel %vm922, %v3985, %v3987
      %v3989 = vrot.slane %v3855, 6
      %v3990 = vsel %vm922, %v3987, %v3989
      %v3991 = vrot.slane %v3856, 6
      %v3992 = vsel %vm922, %v3989, %v3991
      %v3993 = vrot.slane %v3857, 6
      %v3994 = vsel %vm922, %v3991, %v3993
      %v3995 = vrot.slane %v3858, 6
      %v3996 = vsel %vm922, %v3993, %v3995
      %v3997 = vrot.slane %v3859, 6
      %v3998 = vsel %vm922, %v3995, %v3997
      %v3999 = vrot.slane %v3860, 6
      %v4000 = vsel %vm922, %v3997, %v3999
      %v4001 = vrot.slane %v3861, 6
      %v4002 = vsel %vm922, %v3999, %v4001
      %v4003 = vrot.slane %v3862, 6
      %v4004 = vsel %vm922, %v4001, %v4003
      %v4005 = vrot.slane %v3863, 6
      %v4006 = vsel %vm922, %v4003, %v4005
      %v4007 = vrot.slane %v3864, 6
      %v4008 = vsel %vm922, %v4005, %v4007
      %v4010 = vsel %vm922, 0.0, %v3962
      %v4011 = vrot.slane %v3841, 7
      %v4012 = vrot.slane %v3842, 7
      %v4013 = vsel %vm972, %v4011, %v4012
      %v4014 = vrot.slane %v3843, 7
      %v4015 = vsel %vm972, %v4012, %v4014
      %v4016 = vrot.slane %v3844, 7
      %v4017 = vsel %vm972, %v4014, %v4016
      %v4018 = vrot.slane %v3845, 7
      %v4019 = vsel %vm972, %v4016, %v4018
      %v4020 = vrot.slane %v3846, 7
      %v4021 = vsel %vm972, %v4018, %v4020
      %v4022 = vrot.slane %v3847, 7
      %v4023 = vsel %vm972, %v4020, %v4022
      %v4024 = vrot.slane %v3848, 7
      %v4025 = vsel %vm972, %v4022, %v4024
      %v4026 = vrot.slane %v3849, 7
      %v4027 = vsel %vm972, %v4024, %v4026
      %v4028 = vrot.slane %v3850, 7
      %v4029 = vsel %vm972, %v4026, %v4028
      %v4030 = vrot.slane %v3851, 7
      %v4031 = vsel %vm972, %v4028, %v4030
      %v4032 = vrot.slane %v3852, 7
      %v4033 = vsel %vm972, %v4030, %v4032
      %v4034 = vrot.slane %v3853, 7
      %v4035 = vsel %vm972, %v4032, %v4034
      %v4036 = vrot.slane %v3854, 7
      %v4037 = vsel %vm972, %v4034, %v4036
      %v4038 = vrot.slane %v3855, 7
      %v4039 = vsel %vm972, %v4036, %v4038
      %v4040 = vrot.slane %v3856, 7
      %v4041 = vsel %vm972, %v4038, %v4040
      %v4042 = vrot.slane %v3857, 7
      %v4043 = vsel %vm972, %v4040, %v4042
      %v4044 = vrot.slane %v3858, 7
      %v4045 = vsel %vm972, %v4042, %v4044
      %v4046 = vrot.slane %v3859, 7
      %v4047 = vsel %vm972, %v4044, %v4046
      %v4048 = vrot.slane %v3860, 7
      %v4049 = vsel %vm972, %v4046, %v4048
      %v4050 = vrot.slane %v3861, 7
      %v4051 = vsel %vm972, %v4048, %v4050
      %v4052 = vrot.slane %v3862, 7
      %v4053 = vsel %vm972, %v4050, %v4052
      %v4054 = vrot.slane %v3863, 7
      %v4055 = vsel %vm972, %v4052, %v4054
      %v4056 = vrot.slane %v3864, 7
      %v4057 = vsel %vm972, %v4054, %v4056
      %v4059 = vsel %vm972, 0.0, %v4011
      %v4061 = vrot.slane %v3865, 7
      %v4062 = vsel %vm972, %v4056, %v4061
      %v4063 = vrot.slane %v3841, 1
      %v4064 = vrot.slane %v3842, 1
      %v4065 = vsel %vm1025, %v4063, %v4064
      %v4066 = vrot.slane %v3843, 1
      %v4067 = vsel %vm1025, %v4064, %v4066
      %v4068 = vrot.slane %v3844, 1
      %v4069 = vsel %vm1025, %v4066, %v4068
      %v4070 = vrot.slane %v3845, 1
      %v4071 = vsel %vm1025, %v4068, %v4070
      %v4072 = vrot.slane %v3846, 1
      %v4073 = vsel %vm1025, %v4070, %v4072
      %v4074 = vrot.slane %v3847, 1
      %v4075 = vsel %vm1025, %v4072, %v4074
      %v4076 = vrot.slane %v3848, 1
      %v4077 = vsel %vm1025, %v4074, %v4076
      %v4078 = vrot.slane %v3849, 1
      %v4079 = vsel %vm1025, %v4076, %v4078
      %v4080 = vrot.slane %v3850, 1
      %v4081 = vsel %vm1025, %v4078, %v4080
      %v4082 = vrot.slane %v3851, 1
      %v4083 = vsel %vm1025, %v4080, %v4082
      %v4084 = vrot.slane %v3852, 1
      %v4085 = vsel %vm1025, %v4082, %v4084
      %v4086 = vrot.slane %v3853, 1
      %v4087 = vsel %vm1025, %v4084, %v4086
      %v4088 = vrot.slane %v3854, 1
      %v4089 = vsel %vm1025, %v4086, %v4088
      %v4090 = vrot.slane %v3855, 1
      %v4091 = vsel %vm1025, %v4088, %v4090
      %v4092 = vrot.slane %v3856, 1
      %v4093 = vsel %vm1025, %v4090, %v4092
      %v4094 = vrot.slane %v3857, 1
      %v4095 = vsel %vm1025, %v4092, %v4094
      %v4096 = vrot.slane %v3858, 1
      %v4097 = vsel %vm1025, %v4094, %v4096
      %v4098 = vrot.slane %v3859, 1
      %v4099 = vsel %vm1025, %v4096, %v4098
      %v4100 = vrot.slane %v3860, 1
      %v4101 = vsel %vm1025, %v4098, %v4100
      %v4102 = vrot.slane %v3861, 1
      %v4103 = vsel %vm1025, %v4100, %v4102
      %v4104 = vrot.slane %v3862, 1
      %v4105 = vsel %vm1025, %v4102, %v4104
      %v4106 = vrot.slane %v3863, 1
      %v4107 = vsel %vm1025, %v4104, %v4106
      %v4108 = vrot.slane %v3864, 1
      %v4109 = vsel %vm1025, %v4106, %v4108
      %v4110 = vrot.slane %v3865, 1
      %v4111 = vsel %vm1025, %v4108, %v4110
      %v4113 = vsel %vm1025, %v4110, 0.0
      %v4114 = vrot.slane %v3842, 2
      %v4115 = vrot.slane %v3843, 2
      %v4116 = vsel %vm1077, %v4114, %v4115
      %v4117 = vrot.slane %v3844, 2
      %v4118 = vsel %vm1077, %v4115, %v4117
      %v4119 = vrot.slane %v3845, 2
      %v4120 = vsel %vm1077, %v4117, %v4119
      %v4121 = vrot.slane %v3846, 2
      %v4122 = vsel %vm1077, %v4119, %v4121
      %v4123 = vrot.slane %v3847, 2
      %v4124 = vsel %vm1077, %v4121, %v4123
      %v4125 = vrot.slane %v3848, 2
      %v4126 = vsel %vm1077, %v4123, %v4125
      %v4127 = vrot.slane %v3849, 2
      %v4128 = vsel %vm1077, %v4125, %v4127
      %v4129 = vrot.slane %v3850, 2
      %v4130 = vsel %vm1077, %v4127, %v4129
      %v4131 = vrot.slane %v3851, 2
      %v4132 = vsel %vm1077, %v4129, %v4131
      %v4133 = vrot.slane %v3852, 2
      %v4134 = vsel %vm1077, %v4131, %v4133
      %v4135 = vrot.slane %v3853, 2
      %v4136 = vsel %vm1077, %v4133, %v4135
      %v4137 = vrot.slane %v3854, 2
      %v4138 = vsel %vm1077, %v4135, %v4137
      %v4139 = vrot.slane %v3855, 2
      %v4140 = vsel %vm1077, %v4137, %v4139
      %v4141 = vrot.slane %v3856, 2
      %v4142 = vsel %vm1077, %v4139, %v4141
      %v4143 = vrot.slane %v3857, 2
      %v4144 = vsel %vm1077, %v4141, %v4143
      %v4145 = vrot.slane %v3858, 2
      %v4146 = vsel %vm1077, %v4143, %v4145
      %v4147 = vrot.slane %v3859, 2
      %v4148 = vsel %vm1077, %v4145, %v4147
      %v4149 = vrot.slane %v3860, 2
      %v4150 = vsel %vm1077, %v4147, %v4149
      %v4151 = vrot.slane %v3861, 2
      %v4152 = vsel %vm1077, %v4149, %v4151
      %v4153 = vrot.slane %v3862, 2
      %v4154 = vsel %vm1077, %v4151, %v4153
      %v4155 = vrot.slane %v3863, 2
      %v4156 = vsel %vm1077, %v4153, %v4155
      %v4157 = vrot.slane %v3864, 2
      %v4158 = vsel %vm1077, %v4155, %v4157
      %v4159 = vrot.slane %v3865, 2
      %v4160 = vsel %vm1077, %v4157, %v4159
      %v4162 = vsel %vm1077, %v4159, 0.0
      %v4163 = vrot.slane %v3842, 3
      %v4164 = vrot.slane %v3843, 3
      %v4165 = vsel %vm1127, %v4163, %v4164
      %v4166 = vrot.slane %v3844, 3
      %v4167 = vsel %vm1127, %v4164, %v4166
      %v4168 = vrot.slane %v3845, 3
      %v4169 = vsel %vm1127, %v4166, %v4168
      %v4170 = vrot.slane %v3846, 3
      %v4171 = vsel %vm1127, %v4168, %v4170
      %v4172 = vrot.slane %v3847, 3
      %v4173 = vsel %vm1127, %v4170, %v4172
      %v4174 = vrot.slane %v3848, 3
      %v4175 = vsel %vm1127, %v4172, %v4174
      %v4176 = vrot.slane %v3849, 3
      %v4177 = vsel %vm1127, %v4174, %v4176
      %v4178 = vrot.slane %v3850, 3
      %v4179 = vsel %vm1127, %v4176, %v4178
      %v4180 = vrot.slane %v3851, 3
      %v4181 = vsel %vm1127, %v4178, %v4180
      %v4182 = vrot.slane %v3852, 3
      %v4183 = vsel %vm1127, %v4180, %v4182
      %v4184 = vrot.slane %v3853, 3
      %v4185 = vsel %vm1127, %v4182, %v4184
      %v4186 = vrot.slane %v3854, 3
      %v4187 = vsel %vm1127, %v4184, %v4186
      %v4188 = vrot.slane %v3855, 3
      %v4189 = vsel %vm1127, %v4186, %v4188
      %v4190 = vrot.slane %v3856, 3
      %v4191 = vsel %vm1127, %v4188, %v4190
      %v4192 = vrot.slane %v3857, 3
      %v4193 = vsel %vm1127, %v4190, %v4192
      %v4194 = vrot.slane %v3858, 3
      %v4195 = vsel %vm1127, %v4192, %v4194
      %v4196 = vrot.slane %v3859, 3
      %v4197 = vsel %vm1127, %v4194, %v4196
      %v4198 = vrot.slane %v3860, 3
      %v4199 = vsel %vm1127, %v4196, %v4198
      %v4200 = vrot.slane %v3861, 3
      %v4201 = vsel %vm1127, %v4198, %v4200
      %v4202 = vrot.slane %v3862, 3
      %v4203 = vsel %vm1127, %v4200, %v4202
      %v4204 = vrot.slane %v3863, 3
      %v4205 = vsel %vm1127, %v4202, %v4204
      %v4206 = vrot.slane %v3864, 3
      %v4207 = vsel %vm1127, %v4204, %v4206
      %v4208 = vrot.slane %v3865, 3
      %v4209 = vsel %vm1127, %v4206, %v4208
      %v4211 = vsel %vm1127, %v4208, 0.0
      %4213 = vrot.lane.b32.xlu0 0.0, 8
      %v4214 = vpop.permute.xlu0 %4213
      %4215 = vrot.lane.b32.xlu0 %v4010, 8
      %v4216 = vpop.permute.xlu0 %4215
      %4217 = vrot.lane.b32.xlu0 %v3964, 8
      %v4218 = vpop.permute.xlu0 %4217
      %4219 = vrot.lane.b32.xlu0 %v3966, 8
      %v4220 = vpop.permute.xlu0 %4219
      %4221 = vrot.lane.b32.xlu0 %v3968, 8
      %v4222 = vpop.permute.xlu0 %4221
      %4223 = vrot.lane.b32.xlu0 %v3970, 8
      %v4224 = vpop.permute.xlu0 %4223
      %4225 = vrot.lane.b32.xlu0 %v3972, 8
      %v4226 = vpop.permute.xlu0 %4225
      %4227 = vrot.lane.b32.xlu0 %v3974, 8
      %v4228 = vpop.permute.xlu0 %4227
      %4229 = vrot.lane.b32.xlu0 %v3976, 8
      %v4230 = vpop.permute.xlu0 %4229
      %4231 = vrot.lane.b32.xlu0 %v3978, 8
      %v4232 = vpop.permute.xlu0 %4231
      %4233 = vrot.lane.b32.xlu0 %v3980, 8
      %v4234 = vpop.permute.xlu0 %4233
      %4235 = vrot.lane.b32.xlu0 %v3982, 8
      %v4236 = vpop.permute.xlu0 %4235
      %4237 = vrot.lane.b32.xlu0 %v3984, 8
      %v4238 = vpop.permute.xlu0 %4237
      %4239 = vrot.lane.b32.xlu0 %v3986, 8
      %v4240 = vpop.permute.xlu0 %4239
      %4241 = vrot.lane.b32.xlu0 %v3988, 8
      %v4242 = vpop.permute.xlu0 %4241
      %4243 = vrot.lane.b32.xlu0 %v3990, 8
      %v4244 = vpop.permute.xlu0 %4243
      %4245 = vrot.lane.b32.xlu0 %v3992, 8
      %v4246 = vpop.permute.xlu0 %4245
      %4247 = vrot.lane.b32.xlu0 %v3994, 8
      %v4248 = vpop.permute.xlu0 %4247
      %4249 = vrot.lane.b32.xlu0 %v3996, 8
      %v4250 = vpop.permute.xlu0 %4249
      %4251 = vrot.lane.b32.xlu0 %v3998, 8
      %v4252 = vpop.permute.xlu0 %4251
      %4253 = vrot.lane.b32.xlu0 %v4000, 8
      %v4254 = vpop.permute.xlu0 %4253
      %4255 = vrot.lane.b32.xlu0 %v4002, 8
      %v4256 = vpop.permute.xlu0 %4255
      %4257 = vrot.lane.b32.xlu0 %v4004, 8
      %v4258 = vpop.permute.xlu0 %4257
      %4259 = vrot.lane.b32.xlu0 %v4006, 8
      %v4260 = vpop.permute.xlu0 %4259
      %4261 = vrot.lane.b32.xlu0 %v4008, 8
      %v4262 = vpop.permute.xlu0 %4261
      %4289 = vrot.lane.b32.xlu0 %v4059, 16
      %v4290 = vpop.permute.xlu0 %4289
      %4291 = vrot.lane.b32.xlu0 %v4013, 16
      %v4292 = vpop.permute.xlu0 %4291
      %4293 = vrot.lane.b32.xlu0 %v4015, 16
      %v4294 = vpop.permute.xlu0 %4293
      %4295 = vrot.lane.b32.xlu0 %v4017, 16
      %v4296 = vpop.permute.xlu0 %4295
      %4297 = vrot.lane.b32.xlu0 %v4019, 16
      %v4298 = vpop.permute.xlu0 %4297
      %4299 = vrot.lane.b32.xlu0 %v4021, 16
      %v4300 = vpop.permute.xlu0 %4299
      %4301 = vrot.lane.b32.xlu0 %v4023, 16
      %v4302 = vpop.permute.xlu0 %4301
      %4303 = vrot.lane.b32.xlu0 %v4025, 16
      %v4304 = vpop.permute.xlu0 %4303
      %4305 = vrot.lane.b32.xlu0 %v4027, 16
      %v4306 = vpop.permute.xlu0 %4305
      %4307 = vrot.lane.b32.xlu0 %v4029, 16
      %v4308 = vpop.permute.xlu0 %4307
      %4309 = vrot.lane.b32.xlu0 %v4031, 16
      %v4310 = vpop.permute.xlu0 %4309
      %4311 = vrot.lane.b32.xlu0 %v4033, 16
      %v4312 = vpop.permute.xlu0 %4311
      %4313 = vrot.lane.b32.xlu0 %v4035, 16
      %v4314 = vpop.permute.xlu0 %4313
      %4315 = vrot.lane.b32.xlu0 %v4037, 16
      %v4316 = vpop.permute.xlu0 %4315
      %4317 = vrot.lane.b32.xlu0 %v4039, 16
      %v4318 = vpop.permute.xlu0 %4317
      %4319 = vrot.lane.b32.xlu0 %v4041, 16
      %v4320 = vpop.permute.xlu0 %4319
      %4321 = vrot.lane.b32.xlu0 %v4043, 16
      %v4322 = vpop.permute.xlu0 %4321
      %4323 = vrot.lane.b32.xlu0 %v4045, 16
      %v4324 = vpop.permute.xlu0 %4323
      %4325 = vrot.lane.b32.xlu0 %v4047, 16
      %v4326 = vpop.permute.xlu0 %4325
      %4327 = vrot.lane.b32.xlu0 %v4049, 16
      %v4328 = vpop.permute.xlu0 %4327
      %4329 = vrot.lane.b32.xlu0 %v4051, 16
      %v4330 = vpop.permute.xlu0 %4329
      %4331 = vrot.lane.b32.xlu0 %v4053, 16
      %v4332 = vpop.permute.xlu0 %4331
      %4333 = vrot.lane.b32.xlu0 %v4055, 16
      %v4334 = vpop.permute.xlu0 %4333
      %4335 = vrot.lane.b32.xlu0 %v4057, 16
      %v4336 = vpop.permute.xlu0 %4335
      %4361 = vrot.lane.b32.xlu0 %v4059, 24
      %v4362 = vpop.permute.xlu0 %4361
      %4363 = vrot.lane.b32.xlu0 %v4013, 24
      %v4364 = vpop.permute.xlu0 %4363
      %4365 = vrot.lane.b32.xlu0 %v4015, 24
      %v4366 = vpop.permute.xlu0 %4365
      %4367 = vrot.lane.b32.xlu0 %v4017, 24
      %v4368 = vpop.permute.xlu0 %4367
      %4369 = vrot.lane.b32.xlu0 %v4019, 24
      %v4370 = vpop.permute.xlu0 %4369
      %4371 = vrot.lane.b32.xlu0 %v4021, 24
      %v4372 = vpop.permute.xlu0 %4371
      %4373 = vrot.lane.b32.xlu0 %v4023, 24
      %v4374 = vpop.permute.xlu0 %4373
      %4375 = vrot.lane.b32.xlu0 %v4025, 24
      %v4376 = vpop.permute.xlu0 %4375
      %4377 = vrot.lane.b32.xlu0 %v4027, 24
      %v4378 = vpop.permute.xlu0 %4377
      %4379 = vrot.lane.b32.xlu0 %v4029, 24
      %v4380 = vpop.permute.xlu0 %4379
      %4381 = vrot.lane.b32.xlu0 %v4031, 24
      %v4382 = vpop.permute.xlu0 %4381
      %4383 = vrot.lane.b32.xlu0 %v4033, 24
      %v4384 = vpop.permute.xlu0 %4383
      %4385 = vrot.lane.b32.xlu0 %v4035, 24
      %v4386 = vpop.permute.xlu0 %4385
      %4387 = vrot.lane.b32.xlu0 %v4037, 24
      %v4388 = vpop.permute.xlu0 %4387
      %4389 = vrot.lane.b32.xlu0 %v4039, 24
      %v4390 = vpop.permute.xlu0 %4389
      %4391 = vrot.lane.b32.xlu0 %v4041, 24
      %v4392 = vpop.permute.xlu0 %4391
      %4393 = vrot.lane.b32.xlu0 %v4043, 24
      %v4394 = vpop.permute.xlu0 %4393
      %4395 = vrot.lane.b32.xlu0 %v4045, 24
      %v4396 = vpop.permute.xlu0 %4395
      %4397 = vrot.lane.b32.xlu0 %v4047, 24
      %v4398 = vpop.permute.xlu0 %4397
      %4399 = vrot.lane.b32.xlu0 %v4049, 24
      %v4400 = vpop.permute.xlu0 %4399
      %4401 = vrot.lane.b32.xlu0 %v4051, 24
      %v4402 = vpop.permute.xlu0 %4401
      %4403 = vrot.lane.b32.xlu0 %v4053, 24
      %v4404 = vpop.permute.xlu0 %4403
      %4405 = vrot.lane.b32.xlu0 %v4055, 24
      %v4406 = vpop.permute.xlu0 %4405
      %4407 = vrot.lane.b32.xlu0 %v4057, 24
      %v4408 = vpop.permute.xlu0 %4407
      %4409 = vrot.lane.b32.xlu0 %v4062, 24
      %v4410 = vpop.permute.xlu0 %4409
      %4436 = vrot.lane.b32.xlu0 %v3841, 32
      %v4437 = vpop.permute.xlu0 %4436
      %4438 = vrot.lane.b32.xlu0 %v3842, 32
      %v4439 = vpop.permute.xlu0 %4438
      %4440 = vrot.lane.b32.xlu0 %v3843, 32
      %v4441 = vpop.permute.xlu0 %4440
      %4442 = vrot.lane.b32.xlu0 %v3844, 32
      %v4443 = vpop.permute.xlu0 %4442
      %4444 = vrot.lane.b32.xlu0 %v3845, 32
      %v4445 = vpop.permute.xlu0 %4444
      %4446 = vrot.lane.b32.xlu0 %v3846, 32
      %v4447 = vpop.permute.xlu0 %4446
      %4448 = vrot.lane.b32.xlu0 %v3847, 32
      %v4449 = vpop.permute.xlu0 %4448
      %4450 = vrot.lane.b32.xlu0 %v3848, 32
      %v4451 = vpop.permute.xlu0 %4450
      %4452 = vrot.lane.b32.xlu0 %v3849, 32
      %v4453 = vpop.permute.xlu0 %4452
      %4454 = vrot.lane.b32.xlu0 %v3850, 32
      %v4455 = vpop.permute.xlu0 %4454
      %4456 = vrot.lane.b32.xlu0 %v3851, 32
      %v4457 = vpop.permute.xlu0 %4456
      %4458 = vrot.lane.b32.xlu0 %v3852, 32
      %v4459 = vpop.permute.xlu0 %4458
      %4460 = vrot.lane.b32.xlu0 %v3853, 32
      %v4461 = vpop.permute.xlu0 %4460
      %4462 = vrot.lane.b32.xlu0 %v3854, 32
      %v4463 = vpop.permute.xlu0 %4462
      %4464 = vrot.lane.b32.xlu0 %v3855, 32
      %v4465 = vpop.permute.xlu0 %4464
      %4466 = vrot.lane.b32.xlu0 %v3856, 32
      %v4467 = vpop.permute.xlu0 %4466
      %4468 = vrot.lane.b32.xlu0 %v3857, 32
      %v4469 = vpop.permute.xlu0 %4468
      %4470 = vrot.lane.b32.xlu0 %v3858, 32
      %v4471 = vpop.permute.xlu0 %4470
      %4472 = vrot.lane.b32.xlu0 %v3859, 32
      %v4473 = vpop.permute.xlu0 %4472
      %4474 = vrot.lane.b32.xlu0 %v3860, 32
      %v4475 = vpop.permute.xlu0 %4474
      %4476 = vrot.lane.b32.xlu0 %v3861, 32
      %v4477 = vpop.permute.xlu0 %4476
      %4478 = vrot.lane.b32.xlu0 %v3862, 32
      %v4479 = vpop.permute.xlu0 %4478
      %4480 = vrot.lane.b32.xlu0 %v3863, 32
      %v4481 = vpop.permute.xlu0 %4480
      %4482 = vrot.lane.b32.xlu0 %v3864, 32
      %v4483 = vpop.permute.xlu0 %4482
      %4484 = vrot.lane.b32.xlu0 %v3865, 32
      %v4485 = vpop.permute.xlu0 %4484
      %4512 = vrot.lane.b32.xlu0 %v4065, 40
      %v4513 = vpop.permute.xlu0 %4512
      %4514 = vrot.lane.b32.xlu0 %v4067, 40
      %v4515 = vpop.permute.xlu0 %4514
      %4516 = vrot.lane.b32.xlu0 %v4069, 40
      %v4517 = vpop.permute.xlu0 %4516
      %4518 = vrot.lane.b32.xlu0 %v4071, 40
      %v4519 = vpop.permute.xlu0 %4518
      %4520 = vrot.lane.b32.xlu0 %v4073, 40
      %v4521 = vpop.permute.xlu0 %4520
      %4522 = vrot.lane.b32.xlu0 %v4075, 40
      %v4523 = vpop.permute.xlu0 %4522
      %4524 = vrot.lane.b32.xlu0 %v4077, 40
      %v4525 = vpop.permute.xlu0 %4524
      %4526 = vrot.lane.b32.xlu0 %v4079, 40
      %v4527 = vpop.permute.xlu0 %4526
      %4528 = vrot.lane.b32.xlu0 %v4081, 40
      %v4529 = vpop.permute.xlu0 %4528
      %4530 = vrot.lane.b32.xlu0 %v4083, 40
      %v4531 = vpop.permute.xlu0 %4530
      %4532 = vrot.lane.b32.xlu0 %v4085, 40
      %v4533 = vpop.permute.xlu0 %4532
      %4534 = vrot.lane.b32.xlu0 %v4087, 40
      %v4535 = vpop.permute.xlu0 %4534
      %4536 = vrot.lane.b32.xlu0 %v4089, 40
      %v4537 = vpop.permute.xlu0 %4536
      %4538 = vrot.lane.b32.xlu0 %v4091, 40
      %v4539 = vpop.permute.xlu0 %4538
      %4540 = vrot.lane.b32.xlu0 %v4093, 40
      %v4541 = vpop.permute.xlu0 %4540
      %4542 = vrot.lane.b32.xlu0 %v4095, 40
      %v4543 = vpop.permute.xlu0 %4542
      %4544 = vrot.lane.b32.xlu0 %v4097, 40
      %v4545 = vpop.permute.xlu0 %4544
      %4546 = vrot.lane.b32.xlu0 %v4099, 40
      %v4547 = vpop.permute.xlu0 %4546
      %4548 = vrot.lane.b32.xlu0 %v4101, 40
      %v4549 = vpop.permute.xlu0 %4548
      %4550 = vrot.lane.b32.xlu0 %v4103, 40
      %v4551 = vpop.permute.xlu0 %4550
      %4552 = vrot.lane.b32.xlu0 %v4105, 40
      %v4553 = vpop.permute.xlu0 %4552
      %4554 = vrot.lane.b32.xlu0 %v4107, 40
      %v4555 = vpop.permute.xlu0 %4554
      %4556 = vrot.lane.b32.xlu0 %v4109, 40
      %v4557 = vpop.permute.xlu0 %4556
      %4558 = vrot.lane.b32.xlu0 %v4111, 40
      %v4559 = vpop.permute.xlu0 %4558
      %4560 = vrot.lane.b32.xlu0 %v4113, 40
      %v4561 = vpop.permute.xlu0 %4560
      %4587 = vrot.lane.b32.xlu0 %v4067, 48
      %v4588 = vpop.permute.xlu0 %4587
      %4589 = vrot.lane.b32.xlu0 %v4069, 48
      %v4590 = vpop.permute.xlu0 %4589
      %4591 = vrot.lane.b32.xlu0 %v4071, 48
      %v4592 = vpop.permute.xlu0 %4591
      %4593 = vrot.lane.b32.xlu0 %v4073, 48
      %v4594 = vpop.permute.xlu0 %4593
      %4595 = vrot.lane.b32.xlu0 %v4075, 48
      %v4596 = vpop.permute.xlu0 %4595
      %4597 = vrot.lane.b32.xlu0 %v4077, 48
      %v4598 = vpop.permute.xlu0 %4597
      %4599 = vrot.lane.b32.xlu0 %v4079, 48
      %v4600 = vpop.permute.xlu0 %4599
      %4601 = vrot.lane.b32.xlu0 %v4081, 48
      %v4602 = vpop.permute.xlu0 %4601
      %4603 = vrot.lane.b32.xlu0 %v4083, 48
      %v4604 = vpop.permute.xlu0 %4603
      %4605 = vrot.lane.b32.xlu0 %v4085, 48
      %v4606 = vpop.permute.xlu0 %4605
      %4607 = vrot.lane.b32.xlu0 %v4087, 48
      %v4608 = vpop.permute.xlu0 %4607
      %4609 = vrot.lane.b32.xlu0 %v4089, 48
      %v4610 = vpop.permute.xlu0 %4609
      %4611 = vrot.lane.b32.xlu0 %v4091, 48
      %v4612 = vpop.permute.xlu0 %4611
      %4613 = vrot.lane.b32.xlu0 %v4093, 48
      %v4614 = vpop.permute.xlu0 %4613
      %4615 = vrot.lane.b32.xlu0 %v4095, 48
      %v4616 = vpop.permute.xlu0 %4615
      %4617 = vrot.lane.b32.xlu0 %v4097, 48
      %v4618 = vpop.permute.xlu0 %4617
      %4619 = vrot.lane.b32.xlu0 %v4099, 48
      %v4620 = vpop.permute.xlu0 %4619
      %4621 = vrot.lane.b32.xlu0 %v4101, 48
      %v4622 = vpop.permute.xlu0 %4621
      %4623 = vrot.lane.b32.xlu0 %v4103, 48
      %v4624 = vpop.permute.xlu0 %4623
      %4625 = vrot.lane.b32.xlu0 %v4105, 48
      %v4626 = vpop.permute.xlu0 %4625
      %4627 = vrot.lane.b32.xlu0 %v4107, 48
      %v4628 = vpop.permute.xlu0 %4627
      %4629 = vrot.lane.b32.xlu0 %v4109, 48
      %v4630 = vpop.permute.xlu0 %4629
      %4631 = vrot.lane.b32.xlu0 %v4111, 48
      %v4632 = vpop.permute.xlu0 %4631
      %4633 = vrot.lane.b32.xlu0 %v4113, 48
      %v4634 = vpop.permute.xlu0 %4633
      %4635 = vrot.lane.b32.xlu0 0.0, 48
      %v4636 = vpop.permute.xlu0 %4635
      %4663 = vrot.lane.b32.xlu0 %v4116, 56
      %v4664 = vpop.permute.xlu0 %4663
      %4665 = vrot.lane.b32.xlu0 %v4118, 56
      %v4666 = vpop.permute.xlu0 %4665
      %4667 = vrot.lane.b32.xlu0 %v4120, 56
      %v4668 = vpop.permute.xlu0 %4667
      %4669 = vrot.lane.b32.xlu0 %v4122, 56
      %v4670 = vpop.permute.xlu0 %4669
      %4671 = vrot.lane.b32.xlu0 %v4124, 56
      %v4672 = vpop.permute.xlu0 %4671
      %4673 = vrot.lane.b32.xlu0 %v4126, 56
      %v4674 = vpop.permute.xlu0 %4673
      %4675 = vrot.lane.b32.xlu0 %v4128, 56
      %v4676 = vpop.permute.xlu0 %4675
      %4677 = vrot.lane.b32.xlu0 %v4130, 56
      %v4678 = vpop.permute.xlu0 %4677
      %4679 = vrot.lane.b32.xlu0 %v4132, 56
      %v4680 = vpop.permute.xlu0 %4679
      %4681 = vrot.lane.b32.xlu0 %v4134, 56
      %v4682 = vpop.permute.xlu0 %4681
      %4683 = vrot.lane.b32.xlu0 %v4136, 56
      %v4684 = vpop.permute.xlu0 %4683
      %4685 = vrot.lane.b32.xlu0 %v4138, 56
      %v4686 = vpop.permute.xlu0 %4685
      %4687 = vrot.lane.b32.xlu0 %v4140, 56
      %v4688 = vpop.permute.xlu0 %4687
      %4689 = vrot.lane.b32.xlu0 %v4142, 56
      %v4690 = vpop.permute.xlu0 %4689
      %4691 = vrot.lane.b32.xlu0 %v4144, 56
      %v4692 = vpop.permute.xlu0 %4691
      %4693 = vrot.lane.b32.xlu0 %v4146, 56
      %v4694 = vpop.permute.xlu0 %4693
      %4695 = vrot.lane.b32.xlu0 %v4148, 56
      %v4696 = vpop.permute.xlu0 %4695
      %4697 = vrot.lane.b32.xlu0 %v4150, 56
      %v4698 = vpop.permute.xlu0 %4697
      %4699 = vrot.lane.b32.xlu0 %v4152, 56
      %v4700 = vpop.permute.xlu0 %4699
      %4701 = vrot.lane.b32.xlu0 %v4154, 56
      %v4702 = vpop.permute.xlu0 %4701
      %4703 = vrot.lane.b32.xlu0 %v4156, 56
      %v4704 = vpop.permute.xlu0 %4703
      %4705 = vrot.lane.b32.xlu0 %v4158, 56
      %v4706 = vpop.permute.xlu0 %4705
      %4707 = vrot.lane.b32.xlu0 %v4160, 56
      %v4708 = vpop.permute.xlu0 %4707
      %4709 = vrot.lane.b32.xlu0 %v4162, 56
      %v4710 = vpop.permute.xlu0 %4709
      %4711 = vrot.lane.b32.xlu0 0.0, 56
      %v4712 = vpop.permute.xlu0 %4711
      %4739 = vrot.lane.b32.xlu0 %v4165, 64
      %v4740 = vpop.permute.xlu0 %4739
      %4741 = vrot.lane.b32.xlu0 %v4167, 64
      %v4742 = vpop.permute.xlu0 %4741
      %4743 = vrot.lane.b32.xlu0 %v4169, 64
      %v4744 = vpop.permute.xlu0 %4743
      %4745 = vrot.lane.b32.xlu0 %v4171, 64
      %v4746 = vpop.permute.xlu0 %4745
      %4747 = vrot.lane.b32.xlu0 %v4173, 64
      %v4748 = vpop.permute.xlu0 %4747
      %4749 = vrot.lane.b32.xlu0 %v4175, 64
      %v4750 = vpop.permute.xlu0 %4749
      %4751 = vrot.lane.b32.xlu0 %v4177, 64
      %v4752 = vpop.permute.xlu0 %4751
      %4753 = vrot.lane.b32.xlu0 %v4179, 64
      %v4754 = vpop.permute.xlu0 %4753
      %4755 = vrot.lane.b32.xlu0 %v4181, 64
      %v4756 = vpop.permute.xlu0 %4755
      %4757 = vrot.lane.b32.xlu0 %v4183, 64
      %v4758 = vpop.permute.xlu0 %4757
      %4759 = vrot.lane.b32.xlu0 %v4185, 64
      %v4760 = vpop.permute.xlu0 %4759
      %4761 = vrot.lane.b32.xlu0 %v4187, 64
      %v4762 = vpop.permute.xlu0 %4761
      %4763 = vrot.lane.b32.xlu0 %v4189, 64
      %v4764 = vpop.permute.xlu0 %4763
      %4765 = vrot.lane.b32.xlu0 %v4191, 64
      %v4766 = vpop.permute.xlu0 %4765
      %4767 = vrot.lane.b32.xlu0 %v4193, 64
      %v4768 = vpop.permute.xlu0 %4767
      %4769 = vrot.lane.b32.xlu0 %v4195, 64
      %v4770 = vpop.permute.xlu0 %4769
      %4771 = vrot.lane.b32.xlu0 %v4197, 64
      %v4772 = vpop.permute.xlu0 %4771
      %4773 = vrot.lane.b32.xlu0 %v4199, 64
      %v4774 = vpop.permute.xlu0 %4773
      %4775 = vrot.lane.b32.xlu0 %v4201, 64
      %v4776 = vpop.permute.xlu0 %4775
      %4777 = vrot.lane.b32.xlu0 %v4203, 64
      %v4778 = vpop.permute.xlu0 %4777
      %4779 = vrot.lane.b32.xlu0 %v4205, 64
      %v4780 = vpop.permute.xlu0 %4779
      %4781 = vrot.lane.b32.xlu0 %v4207, 64
      %v4782 = vpop.permute.xlu0 %4781
      %4783 = vrot.lane.b32.xlu0 %v4209, 64
      %v4784 = vpop.permute.xlu0 %4783
      %4785 = vrot.lane.b32.xlu0 %v4211, 64
      %v4786 = vpop.permute.xlu0 %4785
      %4787 = vrot.lane.b32.xlu0 0.0, 64
      %v4788 = vpop.permute.xlu0 %4787
      %vm4814 = vcmask 64512
      %v4815 = vsel %vm4814, 0.0, %v4214
      %v4816 = vsel %vm4814, %v3961, %v4216
      %v4817 = vsel %vm4814, %v3892, %v4218
      %v4818 = vsel %vm4814, %v3894, %v4220
      %v4819 = vsel %vm4814, %v3896, %v4222
      %v4820 = vsel %vm4814, %v3898, %v4224
      %v4821 = vsel %vm4814, %v3900, %v4226
      %v4822 = vsel %vm4814, %v3902, %v4228
      %v4823 = vsel %vm4814, %v3904, %v4230
      %v4824 = vsel %vm4814, %v3906, %v4232
      %v4825 = vsel %vm4814, %v3908, %v4234
      %v4826 = vsel %vm4814, %v3910, %v4236
      %v4827 = vsel %vm4814, %v3912, %v4238
      %v4828 = vsel %vm4814, %v3914, %v4240
      %v4829 = vsel %vm4814, %v3916, %v4242
      %v4830 = vsel %vm4814, %v3918, %v4244
      %v4831 = vsel %vm4814, %v3920, %v4246
      %v4832 = vsel %vm4814, %v3922, %v4248
      %v4833 = vsel %vm4814, %v3924, %v4250
      %v4834 = vsel %vm4814, %v3926, %v4252
      %v4835 = vsel %vm4814, %v3928, %v4254
      %v4836 = vsel %vm4814, %v3930, %v4256
      %v4837 = vsel %vm4814, %v3932, %v4258
      %v4838 = vsel %vm4814, %v3934, %v4260
      %v4839 = vsel %vm4814, %v3936, %v4262
      %v4840 = vsel %vm1730, %v4815, %v1203
      %v4841 = vsel %vm1730, %v4816, %v4290
      %v4842 = vsel %vm1730, %v4817, %v4292
      %v4843 = vsel %vm1730, %v4818, %v4294
      %v4844 = vsel %vm1730, %v4819, %v4296
      %v4845 = vsel %vm1730, %v4820, %v4298
      %v4846 = vsel %vm1730, %v4821, %v4300
      %v4847 = vsel %vm1730, %v4822, %v4302
      %v4848 = vsel %vm1730, %v4823, %v4304
      %v4849 = vsel %vm1730, %v4824, %v4306
      %v4850 = vsel %vm1730, %v4825, %v4308
      %v4851 = vsel %vm1730, %v4826, %v4310
      %v4852 = vsel %vm1730, %v4827, %v4312
      %v4853 = vsel %vm1730, %v4828, %v4314
      %v4854 = vsel %vm1730, %v4829, %v4316
      %v4855 = vsel %vm1730, %v4830, %v4318
      %v4856 = vsel %vm1730, %v4831, %v4320
      %v4857 = vsel %vm1730, %v4832, %v4322
      %v4858 = vsel %vm1730, %v4833, %v4324
      %v4859 = vsel %vm1730, %v4834, %v4326
      %v4860 = vsel %vm1730, %v4835, %v4328
      %v4861 = vsel %vm1730, %v4836, %v4330
      %v4862 = vsel %vm1730, %v4837, %v4332
      %v4863 = vsel %vm1730, %v4838, %v4334
      %v4864 = vsel %vm1730, %v4839, %v4336
      %vm4865 = vcmask 195584
      %v4866 = vsel %vm4865, %v4840, %v4362
      %v4867 = vsel %vm4865, %v4841, %v4364
      %v4868 = vsel %vm4865, %v4842, %v4366
      %v4869 = vsel %vm4865, %v4843, %v4368
      %v4870 = vsel %vm4865, %v4844, %v4370
      %v4871 = vsel %vm4865, %v4845, %v4372
      %v4872 = vsel %vm4865, %v4846, %v4374
      %v4873 = vsel %vm4865, %v4847, %v4376
      %v4874 = vsel %vm4865, %v4848, %v4378
      %v4875 = vsel %vm4865, %v4849, %v4380
      %v4876 = vsel %vm4865, %v4850, %v4382
      %v4877 = vsel %vm4865, %v4851, %v4384
      %v4878 = vsel %vm4865, %v4852, %v4386
      %v4879 = vsel %vm4865, %v4853, %v4388
      %v4880 = vsel %vm4865, %v4854, %v4390
      %v4881 = vsel %vm4865, %v4855, %v4392
      %v4882 = vsel %vm4865, %v4856, %v4394
      %v4883 = vsel %vm4865, %v4857, %v4396
      %v4884 = vsel %vm4865, %v4858, %v4398
      %v4885 = vsel %vm4865, %v4859, %v4400
      %v4886 = vsel %vm4865, %v4860, %v4402
      %v4887 = vsel %vm4865, %v4861, %v4404
      %v4888 = vsel %vm4865, %v4862, %v4406
      %v4889 = vsel %vm4865, %v4863, %v4408
      %v4890 = vsel %vm4865, %v4864, %v4410
      %v4891 = vsel %vm1756, %v4866, %v4437
      %v4892 = vsel %vm1756, %v4867, %v4439
      %v4893 = vsel %vm1756, %v4868, %v4441
      %v4894 = vsel %vm1756, %v4869, %v4443
      %v4895 = vsel %vm1756, %v4870, %v4445
      %v4896 = vsel %vm1756, %v4871, %v4447
      %v4897 = vsel %vm1756, %v4872, %v4449
      %v4898 = vsel %vm1756, %v4873, %v4451
      %v4899 = vsel %vm1756, %v4874, %v4453
      %v4900 = vsel %vm1756, %v4875, %v4455
      %v4901 = vsel %vm1756, %v4876, %v4457
      %v4902 = vsel %vm1756, %v4877, %v4459
      %v4903 = vsel %vm1756, %v4878, %v4461
      %v4904 = vsel %vm1756, %v4879, %v4463
      %v4905 = vsel %vm1756, %v4880, %v4465
      %v4906 = vsel %vm1756, %v4881, %v4467
      %v4907 = vsel %vm1756, %v4882, %v4469
      %v4908 = vsel %vm1756, %v4883, %v4471
      %v4909 = vsel %vm1756, %v4884, %v4473
      %v4910 = vsel %vm1756, %v4885, %v4475
      %v4911 = vsel %vm1756, %v4886, %v4477
      %v4912 = vsel %vm1756, %v4887, %v4479
      %v4913 = vsel %vm1756, %v4888, %v4481
      %v4914 = vsel %vm1756, %v4889, %v4483
      %v4915 = vsel %vm1756, %v4890, %v4485
      %vm4916 = vcmask 326656
      %v4917 = vsel %vm4916, %v4891, %v4513
      %v4918 = vsel %vm4916, %v4892, %v4515
      %v4919 = vsel %vm4916, %v4893, %v4517
      %v4920 = vsel %vm4916, %v4894, %v4519
      %v4921 = vsel %vm4916, %v4895, %v4521
      %v4922 = vsel %vm4916, %v4896, %v4523
      %v4923 = vsel %vm4916, %v4897, %v4525
      %v4924 = vsel %vm4916, %v4898, %v4527
      %v4925 = vsel %vm4916, %v4899, %v4529
      %v4926 = vsel %vm4916, %v4900, %v4531
      %v4927 = vsel %vm4916, %v4901, %v4533
      %v4928 = vsel %vm4916, %v4902, %v4535
      %v4929 = vsel %vm4916, %v4903, %v4537
      %v4930 = vsel %vm4916, %v4904, %v4539
      %v4931 = vsel %vm4916, %v4905, %v4541
      %v4932 = vsel %vm4916, %v4906, %v4543
      %v4933 = vsel %vm4916, %v4907, %v4545
      %v4934 = vsel %vm4916, %v4908, %v4547
      %v4935 = vsel %vm4916, %v4909, %v4549
      %v4936 = vsel %vm4916, %v4910, %v4551
      %v4937 = vsel %vm4916, %v4911, %v4553
      %v4938 = vsel %vm4916, %v4912, %v4555
      %v4939 = vsel %vm4916, %v4913, %v4557
      %v4940 = vsel %vm4916, %v4914, %v4559
      %v4941 = vsel %vm4916, %v4915, %v4561
      %v4942 = vsel %vm1782, %v4917, %v4588
      %v4943 = vsel %vm1782, %v4918, %v4590
      %v4944 = vsel %vm1782, %v4919, %v4592
      %v4945 = vsel %vm1782, %v4920, %v4594
      %v4946 = vsel %vm1782, %v4921, %v4596
      %v4947 = vsel %vm1782, %v4922, %v4598
      %v4948 = vsel %vm1782, %v4923, %v4600
      %v4949 = vsel %vm1782, %v4924, %v4602
      %v4950 = vsel %vm1782, %v4925, %v4604
      %v4951 = vsel %vm1782, %v4926, %v4606
      %v4952 = vsel %vm1782, %v4927, %v4608
      %v4953 = vsel %vm1782, %v4928, %v4610
      %v4954 = vsel %vm1782, %v4929, %v4612
      %v4955 = vsel %vm1782, %v4930, %v4614
      %v4956 = vsel %vm1782, %v4931, %v4616
      %v4957 = vsel %vm1782, %v4932, %v4618
      %v4958 = vsel %vm1782, %v4933, %v4620
      %v4959 = vsel %vm1782, %v4934, %v4622
      %v4960 = vsel %vm1782, %v4935, %v4624
      %v4961 = vsel %vm1782, %v4936, %v4626
      %v4962 = vsel %vm1782, %v4937, %v4628
      %v4963 = vsel %vm1782, %v4938, %v4630
      %v4964 = vsel %vm1782, %v4939, %v4632
      %v4965 = vsel %vm1782, %v4940, %v4634
      %v4966 = vsel %vm1782, %v4941, %v4636
      %vm4967 = vcmask 457728
      %v4968 = vsel %vm4967, %v4942, %v4664
      %v4969 = vsel %vm4967, %v4943, %v4666
      %v4970 = vsel %vm4967, %v4944, %v4668
      %v4971 = vsel %vm4967, %v4945, %v4670
      %v4972 = vsel %vm4967, %v4946, %v4672
      %v4973 = vsel %vm4967, %v4947, %v4674
      %v4974 = vsel %vm4967, %v4948, %v4676
      %v4975 = vsel %vm4967, %v4949, %v4678
      %v4976 = vsel %vm4967, %v4950, %v4680
      %v4977 = vsel %vm4967, %v4951, %v4682
      %v4978 = vsel %vm4967, %v4952, %v4684
      %v4979 = vsel %vm4967, %v4953, %v4686
      %v4980 = vsel %vm4967, %v4954, %v4688
      %v4981 = vsel %vm4967, %v4955, %v4690
      %v4982 = vsel %vm4967, %v4956, %v4692
      %v4983 = vsel %vm4967, %v4957, %v4694
      %v4984 = vsel %vm4967, %v4958, %v4696
      %v4985 = vsel %vm4967, %v4959, %v4698
      %v4986 = vsel %vm4967, %v4960, %v4700
      %v4987 = vsel %vm4967, %v4961, %v4702
      %v4988 = vsel %vm4967, %v4962, %v4704
      %v4989 = vsel %vm4967, %v4963, %v4706
      %v4990 = vsel %vm4967, %v4964, %v4708
      %v4991 = vsel %vm4967, %v4965, %v4710
      %v4992 = vsel %vm4967, %v4966, %v4712
      %v4993 = vsel %vm1808, %v4968, %v4740
      %v4994 = vsel %vm1808, %v4969, %v4742
      %v4995 = vsel %vm1808, %v4970, %v4744
      %v4996 = vsel %vm1808, %v4971, %v4746
      %v4997 = vsel %vm1808, %v4972, %v4748
      %v4998 = vsel %vm1808, %v4973, %v4750
      %v4999 = vsel %vm1808, %v4974, %v4752
      %v5000 = vsel %vm1808, %v4975, %v4754
      %v5001 = vsel %vm1808, %v4976, %v4756
      %v5002 = vsel %vm1808, %v4977, %v4758
      %v5003 = vsel %vm1808, %v4978, %v4760
      %v5004 = vsel %vm1808, %v4979, %v4762
      %v5005 = vsel %vm1808, %v4980, %v4764
      %v5006 = vsel %vm1808, %v4981, %v4766
      %v5007 = vsel %vm1808, %v4982, %v4768
      %v5008 = vsel %vm1808, %v4983, %v4770
      %v5009 = vsel %vm1808, %v4984, %v4772
      %v5010 = vsel %vm1808, %v4985, %v4774
      %v5011 = vsel %vm1808, %v4986, %v4776
      %v5012 = vsel %vm1808, %v4987, %v4778
      %v5013 = vsel %vm1808, %v4988, %v4780
      %v5014 = vsel %vm1808, %v4989, %v4782
      %v5015 = vsel %vm1808, %v4990, %v4784
      %v5016 = vsel %vm1808, %v4991, %v4786
      %v5017 = vsel %vm1808, %v4992, %v4788
      %v5018 = vpack.c.bf16 %v4994, %v4993
      %v5019 = vpack.c.bf16 %v4996, %v4995
      %v5020 = vpack.c.bf16 %v4998, %v4997
      %v5021 = vpack.c.bf16 %v5000, %v4999
      %v5022 = vpack.c.bf16 %v5002, %v5001
      %v5023 = vpack.c.bf16 %v5004, %v5003
      %v5024 = vpack.c.bf16 %v5006, %v5005
      %v5025 = vpack.c.bf16 %v5008, %v5007
      %v5026 = vpack.c.bf16 %v5010, %v5009
      %v5027 = vpack.c.bf16 %v5012, %v5011
      %v5028 = vpack.c.bf16 %v5014, %v5013
      %v5029 = vpack.c.bf16 %v5016, %v5015
      %v5030 = vpack.c.bf16 %v5017, %v5017
      %v5031 = vld [vmem:[%s746] sm:$0xf]
      %v5032 = vld [vmem:[%s746 + $0x4] sm:$0xf]
      %v5033 = vld [vmem:[%s746 + $0x8] sm:$0xf]
      %v5034 = vld [vmem:[%s746 + $0xc] sm:$0xf]
      %v5035 = vld [vmem:[%s746 + $0x10] sm:$0xf]
      %v5036 = vld [vmem:[%s746 + $0x14] sm:$0xf]
      %v5037 = vld [vmem:[%s746 + $0x18] sm:$0xf]
      %v5038 = vld [vmem:[%s746 + $0x1c] sm:$0xf]
      %v5039 = vld [vmem:[%s746 + $0x20] sm:$0xf]
      %v5049 = vunpack.c.l.b16 %v5031
      %v5050 = vunpack.c.l.b16 %v5032
      %v5051 = vunpack.c.l.b16 %v5033
      %v5052 = vunpack.c.l.b16 %v5034
      %v5053 = vunpack.c.l.b16 %v5035
      %v5054 = vunpack.c.l.b16 %v5036
      %v5055 = vunpack.c.l.b16 %v5037
      %v5056 = vunpack.c.l.b16 %v5038
      %v5057 = vunpack.c.l.b16 %v5039
      %v5058 = vpack.c.b16 %v5050, %v5049
      %v5059 = vpack.c.b16 %v5052, %v5051
      %v5060 = vpack.c.b16 %v5054, %v5053
      %v5061 = vpack.c.b16 %v5056, %v5055
      %v5062 = vpack.c.b16 %v5057, %v5057
      %vm5067 = vcmask 588800
      %v5069 = vsel %vm5067, %v5018, 0
      %v5072 = vsel %vm5067, %v5019, 0
      %v5075 = vsel %vm5067, %v5020, 0
      %v5078 = vsel %vm5067, %v5021, 0
      %v5081 = vsel %vm5067, %v5022, 0
      %v5084 = vsel %vm5067, %v5023, 0
      %v5087 = vsel %vm5067, %v5024, 0
      %v5090 = vsel %vm5067, %v5025, 0
      %v5093 = vsel %vm5067, %v5026, 0
      %v5096 = vsel %vm5067, %v5027, 0
      %v5099 = vsel %vm5067, %v5028, 0
      %v5102 = vsel %vm5067, %v5029, 0
      %v5105 = vsel %vm5067, %v5030, 0
      %vm5107 = vcmask 1043456
      %v5109 = vsel %vm5107, %v5062, 0
      %5111 = vmatprep.subr.bf16.mxu0 0
      %5112 = vmatpush1.bf16.msra.mxu0 %v5058
      %5113 = vmatprep.subr.bf16.mxu0 0
      %5114 = vmatpush1.bf16.msra.mxu0 %v5059
      %5115 = vmatprep.subr.bf16.mxu0 0
      %5116 = vmatpush1.bf16.msra.mxu0 %v5060
      %5117 = vmatprep.subr.bf16.mxu0 0
      %5118 = vmatpush1.bf16.msra.mxu0 %v5061
      %5119 = vmatprep.subr.bf16.mxu0 0
      %5120 = vmatpush1.bf16.msra.mxu0 %v5109
      %5121 = vmatprep.subr.bf16.mxu0 0
      %5122 = vmatpush1.bf16.msra.mxu0 0
      %5123 = vmatprep.subr.bf16.mxu0 0
      %5124 = vmatpush1.bf16.msra.mxu0 0
      %5125 = vmatprep.subr.bf16.mxu0 0
      %5126 = vmatpush1.bf16.msra.mxu0 0
      %5127 = vmatprep.subr.bf16.mxu0 0
      %5128 = vmatpush1.bf16.msra.mxu0 0
      %5129 = vmatprep.subr.bf16.mxu0 0
      %5130 = vmatpush1.bf16.msra.mxu0 0
      %5131 = vmatprep.subr.bf16.mxu0 0
      %5132 = vmatpush1.bf16.msra.mxu0 0
      %5133 = vmatprep.subr.bf16.mxu0 0
      %5134 = vmatpush1.bf16.msra.mxu0 0
      %5135 = vmatprep.subr.bf16.mxu0 0
      %5136 = vmatpush1.bf16.msra.mxu0 0
      %5137 = vmatprep.subr.bf16.mxu0 0
      %5138 = vmatpush1.bf16.msra.mxu0 0
      %5139 = vmatprep.subr.bf16.mxu0 0
      %5140 = vmatpush1.bf16.msra.mxu0 0
      %5141 = vmatprep.subr.bf16.mxu0 0
      %5142 = vmatpush1.bf16.msra.mxu0 0
      %5143 = vmatprep.mubr.bf16.mxu0 0
      %5144 = vmatmul.mubr.bf16.gmra.mrb[0].mxu0 %v5069
      %v5145 = vpop.f32.mrb[0].mxu0
      %v5146 = vadd.f32 0.0, %v5145
      %v5147 = vpop.f32.mrb[0].mxu0
      %v5148 = vpop.f32.mrb[0].mxu0
      %v5149 = vadd.f32 0.0, %v5148
      %v5150 = vpop.f32.mrb[0].mxu0
      %5151 = vmatprep.mubr.bf16.mxu0 0
      %5152 = vmatmul.mubr.bf16.gmra.mrb[0].mxu0 %v5072
      %v5153 = vpop.f32.mrb[0].mxu0
      %v5154 = vadd.f32 0.0, %v5153
      %v5155 = vpop.f32.mrb[0].mxu0
      %v5156 = vpop.f32.mrb[0].mxu0
      %v5157 = vadd.f32 0.0, %v5156
      %v5158 = vpop.f32.mrb[0].mxu0
      %5159 = vmatprep.mubr.bf16.mxu0 0
      %5160 = vmatmul.mubr.bf16.gmra.mrb[0].mxu0 %v5075
      %v5161 = vpop.f32.mrb[0].mxu0
      %v5162 = vadd.f32 0.0, %v5161
      %v5163 = vpop.f32.mrb[0].mxu0
      %v5164 = vpop.f32.mrb[0].mxu0
      %v5165 = vadd.f32 0.0, %v5164
      %v5166 = vpop.f32.mrb[0].mxu0
      %5167 = vmatprep.mubr.bf16.mxu0 0
      %5168 = vmatmul.mubr.bf16.gmra.mrb[0].mxu0 %v5078
      %v5169 = vpop.f32.mrb[0].mxu0
      %v5170 = vadd.f32 0.0, %v5169
      %v5171 = vpop.f32.mrb[0].mxu0
      %v5172 = vpop.f32.mrb[0].mxu0
      %v5173 = vadd.f32 0.0, %v5172
      %v5174 = vpop.f32.mrb[0].mxu0
      %5175 = vmatprep.mubr.bf16.mxu0 0
      %5176 = vmatmul.mubr.bf16.gmra.mrb[0].mxu0 %v5081
      %v5177 = vpop.f32.mrb[0].mxu0
      %v5178 = vadd.f32 0.0, %v5177
      %v5179 = vpop.f32.mrb[0].mxu0
      %v5180 = vpop.f32.mrb[0].mxu0
      %v5181 = vadd.f32 0.0, %v5180
      %v5182 = vpop.f32.mrb[0].mxu0
      %5183 = vmatprep.mubr.bf16.mxu0 0
      %5184 = vmatmul.mubr.bf16.gmra.mrb[0].mxu0 %v5084
      %v5185 = vpop.f32.mrb[0].mxu0
      %v5186 = vadd.f32 0.0, %v5185
      %v5187 = vpop.f32.mrb[0].mxu0
      %v5188 = vpop.f32.mrb[0].mxu0
      %v5189 = vadd.f32 0.0, %v5188
      %v5190 = vpop.f32.mrb[0].mxu0
      %5191 = vmatprep.mubr.bf16.mxu0 0
      %5192 = vmatmul.mubr.bf16.gmra.mrb[0].mxu0 %v5087
      %v5193 = vpop.f32.mrb[0].mxu0
      %v5194 = vadd.f32 0.0, %v5193
      %v5195 = vpop.f32.mrb[0].mxu0
      %v5196 = vpop.f32.mrb[0].mxu0
      %v5197 = vadd.f32 0.0, %v5196
      %v5198 = vpop.f32.mrb[0].mxu0
      %5199 = vmatprep.mubr.bf16.mxu0 0
      %5200 = vmatmul.mubr.bf16.gmra.mrb[0].mxu0 %v5090
      %v5201 = vpop.f32.mrb[0].mxu0
      %v5202 = vadd.f32 0.0, %v5201
      %v5203 = vpop.f32.mrb[0].mxu0
      %v5204 = vpop.f32.mrb[0].mxu0
      %v5205 = vadd.f32 0.0, %v5204
      %v5206 = vpop.f32.mrb[0].mxu0
      %5207 = vmatprep.mubr.bf16.mxu0 0
      %5208 = vmatmul.mubr.bf16.gmra.mrb[0].mxu0 %v5093
      %v5209 = vpop.f32.mrb[0].mxu0
      %v5210 = vadd.f32 0.0, %v5209
      %v5211 = vpop.f32.mrb[0].mxu0
      %v5212 = vpop.f32.mrb[0].mxu0
      %v5213 = vadd.f32 0.0, %v5212
      %v5214 = vpop.f32.mrb[0].mxu0
      %5215 = vmatprep.mubr.bf16.mxu0 0
      %5216 = vmatmul.mubr.bf16.gmra.mrb[0].mxu0 %v5096
      %v5217 = vpop.f32.mrb[0].mxu0
      %v5218 = vadd.f32 0.0, %v5217
      %v5219 = vpop.f32.mrb[0].mxu0
      %v5220 = vpop.f32.mrb[0].mxu0
      %v5221 = vadd.f32 0.0, %v5220
      %v5222 = vpop.f32.mrb[0].mxu0
      %5223 = vmatprep.mubr.bf16.mxu0 0
      %5224 = vmatmul.mubr.bf16.gmra.mrb[0].mxu0 %v5099
      %v5225 = vpop.f32.mrb[0].mxu0
      %v5226 = vadd.f32 0.0, %v5225
      %v5227 = vpop.f32.mrb[0].mxu0
      %v5228 = vpop.f32.mrb[0].mxu0
      %v5229 = vadd.f32 0.0, %v5228
      %v5230 = vpop.f32.mrb[0].mxu0
      %5231 = vmatprep.mubr.bf16.mxu0 0
      %5232 = vmatmul.mubr.bf16.gmra.mrb[0].mxu0 %v5102
      %v5233 = vpop.f32.mrb[0].mxu0
      %v5234 = vadd.f32 0.0, %v5233
      %v5235 = vpop.f32.mrb[0].mxu0
      %v5236 = vpop.f32.mrb[0].mxu0
      %v5237 = vadd.f32 0.0, %v5236
      %v5238 = vpop.f32.mrb[0].mxu0
      %5239 = vmatprep.mubr.bf16.mxu0 0
      %5240 = vmatmul.mubr.bf16.gmra.mrb[0].mxu0 %v5105
      %v5241 = vpop.f32.mrb[0].mxu0
      %v5242 = vadd.f32 0.0, %v5241
      %v5243 = vpop.f32.mrb[0].mxu0
      %v5244 = vpop.f32.mrb[0].mxu0
      %v5245 = vpop.f32.mrb[0].mxu0
      %5246 = vdwg.mxu0
      %v5247 = vld [vmem:[%s749] sm:$0x1]
      %v5249 = vlaneseq
      %v5250 = vshrl.u32 %v5249, 7
      %v5251 = vsub.s32 0, %v5250
      %v5252 = vrot.slane %v5247, %v5251
      %v5254 = vmul.f32 %v5146, %v5252
      %v5255 = vmul.f32 %v5149, %v5252
      %v5256 = vmul.f32 %v5154, %v5252
      %v5257 = vmul.f32 %v5157, %v5252
      %v5258 = vmul.f32 %v5162, %v5252
      %v5259 = vmul.f32 %v5165, %v5252
      %v5260 = vmul.f32 %v5170, %v5252
      %v5261 = vmul.f32 %v5173, %v5252
      %v5262 = vmul.f32 %v5178, %v5252
      %v5263 = vmul.f32 %v5181, %v5252
      %v5264 = vmul.f32 %v5186, %v5252
      %v5265 = vmul.f32 %v5189, %v5252
      %v5266 = vmul.f32 %v5194, %v5252
      %v5267 = vmul.f32 %v5197, %v5252
      %v5268 = vmul.f32 %v5202, %v5252
      %v5269 = vmul.f32 %v5205, %v5252
      %v5270 = vmul.f32 %v5210, %v5252
      %v5271 = vmul.f32 %v5213, %v5252
      %v5272 = vmul.f32 %v5218, %v5252
      %v5273 = vmul.f32 %v5221, %v5252
      %v5274 = vmul.f32 %v5226, %v5252
      %v5275 = vmul.f32 %v5229, %v5252
      %v5276 = vmul.f32 %v5234, %v5252
      %v5277 = vmul.f32 %v5237, %v5252
      %v5278 = vmul.f32 %v5242, %v5252
      %v5279 = vld [vmem:[%s752] sm:$0x1]
      %v5281 = vlaneseq
      %v5282 = vshrl.u32 %v5281, 7
      %v5283 = vsub.s32 0, %v5282
      %v5284 = vrot.slane %v5279, %v5283
      %v5286 = vadd.f32 %v5254, %v5284
      %v5287 = vadd.f32 %v5255, %v5284
      %v5288 = vadd.f32 %v5256, %v5284
      %v5289 = vadd.f32 %v5257, %v5284
      %v5290 = vadd.f32 %v5258, %v5284
      %v5291 = vadd.f32 %v5259, %v5284
      %v5292 = vadd.f32 %v5260, %v5284
      %v5293 = vadd.f32 %v5261, %v5284
      %v5294 = vadd.f32 %v5262, %v5284
      %v5295 = vadd.f32 %v5263, %v5284
      %v5296 = vadd.f32 %v5264, %v5284
      %v5297 = vadd.f32 %v5265, %v5284
      %v5298 = vadd.f32 %v5266, %v5284
      %v5299 = vadd.f32 %v5267, %v5284
      %v5300 = vadd.f32 %v5268, %v5284
      %v5301 = vadd.f32 %v5269, %v5284
      %v5302 = vadd.f32 %v5270, %v5284
      %v5303 = vadd.f32 %v5271, %v5284
      %v5304 = vadd.f32 %v5272, %v5284
      %v5305 = vadd.f32 %v5273, %v5284
      %v5306 = vadd.f32 %v5274, %v5284
      %v5307 = vadd.f32 %v5275, %v5284
      %v5308 = vadd.f32 %v5276, %v5284
      %v5309 = vadd.f32 %v5277, %v5284
      %v5310 = vadd.f32 %v5278, %v5284
      %v5311 = vmax.f32 %v5286, 0.0
      %v5312 = vmax.f32 %v5287, 0.0
      %v5313 = vmax.f32 %v5288, 0.0
      %v5314 = vmax.f32 %v5289, 0.0
      %v5315 = vmax.f32 %v5290, 0.0
      %v5316 = vmax.f32 %v5291, 0.0
      %v5317 = vmax.f32 %v5292, 0.0
      %v5318 = vmax.f32 %v5293, 0.0
      %v5319 = vmax.f32 %v5294, 0.0
      %v5320 = vmax.f32 %v5295, 0.0
      %v5321 = vmax.f32 %v5296, 0.0
      %v5322 = vmax.f32 %v5297, 0.0
      %v5323 = vmax.f32 %v5298, 0.0
      %v5324 = vmax.f32 %v5299, 0.0
      %v5325 = vmax.f32 %v5300, 0.0
      %v5326 = vmax.f32 %v5301, 0.0
      %v5327 = vmax.f32 %v5302, 0.0
      %v5328 = vmax.f32 %v5303, 0.0
      %v5329 = vmax.f32 %v5304, 0.0
      %v5330 = vmax.f32 %v5305, 0.0
      %v5331 = vmax.f32 %v5306, 0.0
      %v5332 = vmax.f32 %v5307, 0.0
      %v5333 = vmax.f32 %v5308, 0.0
      %v5334 = vmax.f32 %v5309, 0.0
      %v5335 = vmax.f32 %v5310, 0.0
      %v5336 = vmul.f32 %v5311, %v2277
      %v5337 = vmul.f32 %v5312, %v2282
      %v5338 = vmul.f32 %v5313, %v2287
      %v5339 = vmul.f32 %v5314, %v2292
      %v5340 = vmul.f32 %v5315, %v2297
      %v5341 = vmul.f32 %v5316, %v2302
      %v5342 = vmul.f32 %v5317, %v2307
      %v5343 = vmul.f32 %v5318, %v2312
      %v5344 = vmul.f32 %v5319, %v2317
      %v5345 = vmul.f32 %v5320, %v2322
      %v5346 = vmul.f32 %v5321, %v2327
      %v5347 = vmul.f32 %v5322, %v2332
      %v5348 = vmul.f32 %v5323, %v2337
      %v5349 = vmul.f32 %v5324, %v2342
      %v5350 = vmul.f32 %v5325, %v2347
      %v5351 = vmul.f32 %v5326, %v2352
      %v5352 = vmul.f32 %v5327, %v2357
      %v5353 = vmul.f32 %v5328, %v2362
      %v5354 = vmul.f32 %v5329, %v2367
      %v5355 = vmul.f32 %v5330, %v2372
      %v5356 = vmul.f32 %v5331, %v2377
      %v5357 = vmul.f32 %v5332, %v2382
      %v5358 = vmul.f32 %v5333, %v2387
      %v5359 = vmul.f32 %v5334, %v2392
      %v5360 = vmul.f32 %v5335, %v2397
      %v5385 = vrot.slane %v5336, 5
      %v5386 = vrot.slane %v5337, 5
      %v5387 = vsel %vm849, %v5385, %v5386
      %v5388 = vrot.slane %v5338, 5
      %v5389 = vsel %vm849, %v5386, %v5388
      %v5390 = vrot.slane %v5339, 5
      %v5391 = vsel %vm849, %v5388, %v5390
      %v5392 = vrot.slane %v5340, 5
      %v5393 = vsel %vm849, %v5390, %v5392
      %v5394 = vrot.slane %v5341, 5
      %v5395 = vsel %vm849, %v5392, %v5394
      %v5396 = vrot.slane %v5342, 5
      %v5397 = vsel %vm849, %v5394, %v5396
      %v5398 = vrot.slane %v5343, 5
      %v5399 = vsel %vm849, %v5396, %v5398
      %v5400 = vrot.slane %v5344, 5
      %v5401 = vsel %vm849, %v5398, %v5400
      %v5402 = vrot.slane %v5345, 5
      %v5403 = vsel %vm849, %v5400, %v5402
      %v5404 = vrot.slane %v5346, 5
      %v5405 = vsel %vm849, %v5402, %v5404
      %v5406 = vrot.slane %v5347, 5
      %v5407 = vsel %vm849, %v5404, %v5406
      %v5408 = vrot.slane %v5348, 5
      %v5409 = vsel %vm849, %v5406, %v5408
      %v5410 = vrot.slane %v5349, 5
      %v5411 = vsel %vm849, %v5408, %v5410
      %v5412 = vrot.slane %v5350, 5
      %v5413 = vsel %vm849, %v5410, %v5412
      %v5414 = vrot.slane %v5351, 5
      %v5415 = vsel %vm849, %v5412, %v5414
      %v5416 = vrot.slane %v5352, 5
      %v5417 = vsel %vm849, %v5414, %v5416
      %v5418 = vrot.slane %v5353, 5
      %v5419 = vsel %vm849, %v5416, %v5418
      %v5420 = vrot.slane %v5354, 5
      %v5421 = vsel %vm849, %v5418, %v5420
      %v5422 = vrot.slane %v5355, 5
      %v5423 = vsel %vm849, %v5420, %v5422
      %v5424 = vrot.slane %v5356, 5
      %v5425 = vsel %vm849, %v5422, %v5424
      %v5426 = vrot.slane %v5357, 5
      %v5427 = vsel %vm849, %v5424, %v5426
      %v5428 = vrot.slane %v5358, 5
      %v5429 = vsel %vm849, %v5426, %v5428
      %v5430 = vrot.slane %v5359, 5
      %v5431 = vsel %vm849, %v5428, %v5430
      %v5456 = vsel %vm849, 0.0, %v5385
      %v5457 = vrot.slane %v5336, 6
      %v5458 = vrot.slane %v5337, 6
      %v5459 = vsel %vm922, %v5457, %v5458
      %v5460 = vrot.slane %v5338, 6
      %v5461 = vsel %vm922, %v5458, %v5460
      %v5462 = vrot.slane %v5339, 6
      %v5463 = vsel %vm922, %v5460, %v5462
      %v5464 = vrot.slane %v5340, 6
      %v5465 = vsel %vm922, %v5462, %v5464
      %v5466 = vrot.slane %v5341, 6
      %v5467 = vsel %vm922, %v5464, %v5466
      %v5468 = vrot.slane %v5342, 6
      %v5469 = vsel %vm922, %v5466, %v5468
      %v5470 = vrot.slane %v5343, 6
      %v5471 = vsel %vm922, %v5468, %v5470
      %v5472 = vrot.slane %v5344, 6
      %v5473 = vsel %vm922, %v5470, %v5472
      %v5474 = vrot.slane %v5345, 6
      %v5475 = vsel %vm922, %v5472, %v5474
      %v5476 = vrot.slane %v5346, 6
      %v5477 = vsel %vm922, %v5474, %v5476
      %v5478 = vrot.slane %v5347, 6
      %v5479 = vsel %vm922, %v5476, %v5478
      %v5480 = vrot.slane %v5348, 6
      %v5481 = vsel %vm922, %v5478, %v5480
      %v5482 = vrot.slane %v5349, 6
      %v5483 = vsel %vm922, %v5480, %v5482
      %v5484 = vrot.slane %v5350, 6
      %v5485 = vsel %vm922, %v5482, %v5484
      %v5486 = vrot.slane %v5351, 6
      %v5487 = vsel %vm922, %v5484, %v5486
      %v5488 = vrot.slane %v5352, 6
      %v5489 = vsel %vm922, %v5486, %v5488
      %v5490 = vrot.slane %v5353, 6
      %v5491 = vsel %vm922, %v5488, %v5490
      %v5492 = vrot.slane %v5354, 6
      %v5493 = vsel %vm922, %v5490, %v5492
      %v5494 = vrot.slane %v5355, 6
      %v5495 = vsel %vm922, %v5492, %v5494
      %v5496 = vrot.slane %v5356, 6
      %v5497 = vsel %vm922, %v5494, %v5496
      %v5498 = vrot.slane %v5357, 6
      %v5499 = vsel %vm922, %v5496, %v5498
      %v5500 = vrot.slane %v5358, 6
      %v5501 = vsel %vm922, %v5498, %v5500
      %v5502 = vrot.slane %v5359, 6
      %v5503 = vsel %vm922, %v5500, %v5502
      %v5505 = vsel %vm922, 0.0, %v5457
      %v5506 = vrot.slane %v5336, 7
      %v5507 = vrot.slane %v5337, 7
      %v5508 = vsel %vm972, %v5506, %v5507
      %v5509 = vrot.slane %v5338, 7
      %v5510 = vsel %vm972, %v5507, %v5509
      %v5511 = vrot.slane %v5339, 7
      %v5512 = vsel %vm972, %v5509, %v5511
      %v5513 = vrot.slane %v5340, 7
      %v5514 = vsel %vm972, %v5511, %v5513
      %v5515 = vrot.slane %v5341, 7
      %v5516 = vsel %vm972, %v5513, %v5515
      %v5517 = vrot.slane %v5342, 7
      %v5518 = vsel %vm972, %v5515, %v5517
      %v5519 = vrot.slane %v5343, 7
      %v5520 = vsel %vm972, %v5517, %v5519
      %v5521 = vrot.slane %v5344, 7
      %v5522 = vsel %vm972, %v5519, %v5521
      %v5523 = vrot.slane %v5345, 7
      %v5524 = vsel %vm972, %v5521, %v5523
      %v5525 = vrot.slane %v5346, 7
      %v5526 = vsel %vm972, %v5523, %v5525
      %v5527 = vrot.slane %v5347, 7
      %v5528 = vsel %vm972, %v5525, %v5527
      %v5529 = vrot.slane %v5348, 7
      %v5530 = vsel %vm972, %v5527, %v5529
      %v5531 = vrot.slane %v5349, 7
      %v5532 = vsel %vm972, %v5529, %v5531
      %v5533 = vrot.slane %v5350, 7
      %v5534 = vsel %vm972, %v5531, %v5533
      %v5535 = vrot.slane %v5351, 7
      %v5536 = vsel %vm972, %v5533, %v5535
      %v5537 = vrot.slane %v5352, 7
      %v5538 = vsel %vm972, %v5535, %v5537
      %v5539 = vrot.slane %v5353, 7
      %v5540 = vsel %vm972, %v5537, %v5539
      %v5541 = vrot.slane %v5354, 7
      %v5542 = vsel %vm972, %v5539, %v5541
      %v5543 = vrot.slane %v5355, 7
      %v5544 = vsel %vm972, %v5541, %v5543
      %v5545 = vrot.slane %v5356, 7
      %v5546 = vsel %vm972, %v5543, %v5545
      %v5547 = vrot.slane %v5357, 7
      %v5548 = vsel %vm972, %v5545, %v5547
      %v5549 = vrot.slane %v5358, 7
      %v5550 = vsel %vm972, %v5547, %v5549
      %v5551 = vrot.slane %v5359, 7
      %v5552 = vsel %vm972, %v5549, %v5551
      %v5554 = vsel %vm972, 0.0, %v5506
      %v5556 = vrot.slane %v5360, 7
      %v5557 = vsel %vm972, %v5551, %v5556
      %v5558 = vrot.slane %v5336, 1
      %v5559 = vrot.slane %v5337, 1
      %v5560 = vsel %vm1025, %v5558, %v5559
      %v5561 = vrot.slane %v5338, 1
      %v5562 = vsel %vm1025, %v5559, %v5561
      %v5563 = vrot.slane %v5339, 1
      %v5564 = vsel %vm1025, %v5561, %v5563
      %v5565 = vrot.slane %v5340, 1
      %v5566 = vsel %vm1025, %v5563, %v5565
      %v5567 = vrot.slane %v5341, 1
      %v5568 = vsel %vm1025, %v5565, %v5567
      %v5569 = vrot.slane %v5342, 1
      %v5570 = vsel %vm1025, %v5567, %v5569
      %v5571 = vrot.slane %v5343, 1
      %v5572 = vsel %vm1025, %v5569, %v5571
      %v5573 = vrot.slane %v5344, 1
      %v5574 = vsel %vm1025, %v5571, %v5573
      %v5575 = vrot.slane %v5345, 1
      %v5576 = vsel %vm1025, %v5573, %v5575
      %v5577 = vrot.slane %v5346, 1
      %v5578 = vsel %vm1025, %v5575, %v5577
      %v5579 = vrot.slane %v5347, 1
      %v5580 = vsel %vm1025, %v5577, %v5579
      %v5581 = vrot.slane %v5348, 1
      %v5582 = vsel %vm1025, %v5579, %v5581
      %v5583 = vrot.slane %v5349, 1
      %v5584 = vsel %vm1025, %v5581, %v5583
      %v5585 = vrot.slane %v5350, 1
      %v5586 = vsel %vm1025, %v5583, %v5585
      %v5587 = vrot.slane %v5351, 1
      %v5588 = vsel %vm1025, %v5585, %v5587
      %v5589 = vrot.slane %v5352, 1
      %v5590 = vsel %vm1025, %v5587, %v5589
      %v5591 = vrot.slane %v5353, 1
      %v5592 = vsel %vm1025, %v5589, %v5591
      %v5593 = vrot.slane %v5354, 1
      %v5594 = vsel %vm1025, %v5591, %v5593
      %v5595 = vrot.slane %v5355, 1
      %v5596 = vsel %vm1025, %v5593, %v5595
      %v5597 = vrot.slane %v5356, 1
      %v5598 = vsel %vm1025, %v5595, %v5597
      %v5599 = vrot.slane %v5357, 1
      %v5600 = vsel %vm1025, %v5597, %v5599
      %v5601 = vrot.slane %v5358, 1
      %v5602 = vsel %vm1025, %v5599, %v5601
      %v5603 = vrot.slane %v5359, 1
      %v5604 = vsel %vm1025, %v5601, %v5603
      %v5605 = vrot.slane %v5360, 1
      %v5606 = vsel %vm1025, %v5603, %v5605
      %v5608 = vsel %vm1025, %v5605, 0.0
      %v5609 = vrot.slane %v5337, 2
      %v5610 = vrot.slane %v5338, 2
      %v5611 = vsel %vm1077, %v5609, %v5610
      %v5612 = vrot.slane %v5339, 2
      %v5613 = vsel %vm1077, %v5610, %v5612
      %v5614 = vrot.slane %v5340, 2
      %v5615 = vsel %vm1077, %v5612, %v5614
      %v5616 = vrot.slane %v5341, 2
      %v5617 = vsel %vm1077, %v5614, %v5616
      %v5618 = vrot.slane %v5342, 2
      %v5619 = vsel %vm1077, %v5616, %v5618
      %v5620 = vrot.slane %v5343, 2
      %v5621 = vsel %vm1077, %v5618, %v5620
      %v5622 = vrot.slane %v5344, 2
      %v5623 = vsel %vm1077, %v5620, %v5622
      %v5624 = vrot.slane %v5345, 2
      %v5625 = vsel %vm1077, %v5622, %v5624
      %v5626 = vrot.slane %v5346, 2
      %v5627 = vsel %vm1077, %v5624, %v5626
      %v5628 = vrot.slane %v5347, 2
      %v5629 = vsel %vm1077, %v5626, %v5628
      %v5630 = vrot.slane %v5348, 2
      %v5631 = vsel %vm1077, %v5628, %v5630
      %v5632 = vrot.slane %v5349, 2
      %v5633 = vsel %vm1077, %v5630, %v5632
      %v5634 = vrot.slane %v5350, 2
      %v5635 = vsel %vm1077, %v5632, %v5634
      %v5636 = vrot.slane %v5351, 2
      %v5637 = vsel %vm1077, %v5634, %v5636
      %v5638 = vrot.slane %v5352, 2
      %v5639 = vsel %vm1077, %v5636, %v5638
      %v5640 = vrot.slane %v5353, 2
      %v5641 = vsel %vm1077, %v5638, %v5640
      %v5642 = vrot.slane %v5354, 2
      %v5643 = vsel %vm1077, %v5640, %v5642
      %v5644 = vrot.slane %v5355, 2
      %v5645 = vsel %vm1077, %v5642, %v5644
      %v5646 = vrot.slane %v5356, 2
      %v5647 = vsel %vm1077, %v5644, %v5646
      %v5648 = vrot.slane %v5357, 2
      %v5649 = vsel %vm1077, %v5646, %v5648
      %v5650 = vrot.slane %v5358, 2
      %v5651 = vsel %vm1077, %v5648, %v5650
      %v5652 = vrot.slane %v5359, 2
      %v5653 = vsel %vm1077, %v5650, %v5652
      %v5654 = vrot.slane %v5360, 2
      %v5655 = vsel %vm1077, %v5652, %v5654
      %v5657 = vsel %vm1077, %v5654, 0.0
      %v5658 = vrot.slane %v5337, 3
      %v5659 = vrot.slane %v5338, 3
      %v5660 = vsel %vm1127, %v5658, %v5659
      %v5661 = vrot.slane %v5339, 3
      %v5662 = vsel %vm1127, %v5659, %v5661
      %v5663 = vrot.slane %v5340, 3
      %v5664 = vsel %vm1127, %v5661, %v5663
      %v5665 = vrot.slane %v5341, 3
      %v5666 = vsel %vm1127, %v5663, %v5665
      %v5667 = vrot.slane %v5342, 3
      %v5668 = vsel %vm1127, %v5665, %v5667
      %v5669 = vrot.slane %v5343, 3
      %v5670 = vsel %vm1127, %v5667, %v5669
      %v5671 = vrot.slane %v5344, 3
      %v5672 = vsel %vm1127, %v5669, %v5671
      %v5673 = vrot.slane %v5345, 3
      %v5674 = vsel %vm1127, %v5671, %v5673
      %v5675 = vrot.slane %v5346, 3
      %v5676 = vsel %vm1127, %v5673, %v5675
      %v5677 = vrot.slane %v5347, 3
      %v5678 = vsel %vm1127, %v5675, %v5677
      %v5679 = vrot.slane %v5348, 3
      %v5680 = vsel %vm1127, %v5677, %v5679
      %v5681 = vrot.slane %v5349, 3
      %v5682 = vsel %vm1127, %v5679, %v5681
      %v5683 = vrot.slane %v5350, 3
      %v5684 = vsel %vm1127, %v5681, %v5683
      %v5685 = vrot.slane %v5351, 3
      %v5686 = vsel %vm1127, %v5683, %v5685
      %v5687 = vrot.slane %v5352, 3
      %v5688 = vsel %vm1127, %v5685, %v5687
      %v5689 = vrot.slane %v5353, 3
      %v5690 = vsel %vm1127, %v5687, %v5689
      %v5691 = vrot.slane %v5354, 3
      %v5692 = vsel %vm1127, %v5689, %v5691
      %v5693 = vrot.slane %v5355, 3
      %v5694 = vsel %vm1127, %v5691, %v5693
      %v5695 = vrot.slane %v5356, 3
      %v5696 = vsel %vm1127, %v5693, %v5695
      %v5697 = vrot.slane %v5357, 3
      %v5698 = vsel %vm1127, %v5695, %v5697
      %v5699 = vrot.slane %v5358, 3
      %v5700 = vsel %vm1127, %v5697, %v5699
      %v5701 = vrot.slane %v5359, 3
      %v5702 = vsel %vm1127, %v5699, %v5701
      %v5703 = vrot.slane %v5360, 3
      %v5704 = vsel %vm1127, %v5701, %v5703
      %v5706 = vsel %vm1127, %v5703, 0.0
      %5708 = vrot.lane.b32.xlu0 0.0, 4
      %v5709 = vpop.permute.xlu0 %5708
      %5710 = vrot.lane.b32.xlu0 %v5505, 4
      %v5711 = vpop.permute.xlu0 %5710
      %5712 = vrot.lane.b32.xlu0 %v5459, 4
      %v5713 = vpop.permute.xlu0 %5712
      %5714 = vrot.lane.b32.xlu0 %v5461, 4
      %v5715 = vpop.permute.xlu0 %5714
      %5716 = vrot.lane.b32.xlu0 %v5463, 4
      %v5717 = vpop.permute.xlu0 %5716
      %5718 = vrot.lane.b32.xlu0 %v5465, 4
      %v5719 = vpop.permute.xlu0 %5718
      %5720 = vrot.lane.b32.xlu0 %v5467, 4
      %v5721 = vpop.permute.xlu0 %5720
      %5722 = vrot.lane.b32.xlu0 %v5469, 4
      %v5723 = vpop.permute.xlu0 %5722
      %5724 = vrot.lane.b32.xlu0 %v5471, 4
      %v5725 = vpop.permute.xlu0 %5724
      %5726 = vrot.lane.b32.xlu0 %v5473, 4
      %v5727 = vpop.permute.xlu0 %5726
      %5728 = vrot.lane.b32.xlu0 %v5475, 4
      %v5729 = vpop.permute.xlu0 %5728
      %5730 = vrot.lane.b32.xlu0 %v5477, 4
      %v5731 = vpop.permute.xlu0 %5730
      %5732 = vrot.lane.b32.xlu0 %v5479, 4
      %v5733 = vpop.permute.xlu0 %5732
      %5734 = vrot.lane.b32.xlu0 %v5481, 4
      %v5735 = vpop.permute.xlu0 %5734
      %5736 = vrot.lane.b32.xlu0 %v5483, 4
      %v5737 = vpop.permute.xlu0 %5736
      %5738 = vrot.lane.b32.xlu0 %v5485, 4
      %v5739 = vpop.permute.xlu0 %5738
      %5740 = vrot.lane.b32.xlu0 %v5487, 4
      %v5741 = vpop.permute.xlu0 %5740
      %5742 = vrot.lane.b32.xlu0 %v5489, 4
      %v5743 = vpop.permute.xlu0 %5742
      %5744 = vrot.lane.b32.xlu0 %v5491, 4
      %v5745 = vpop.permute.xlu0 %5744
      %5746 = vrot.lane.b32.xlu0 %v5493, 4
      %v5747 = vpop.permute.xlu0 %5746
      %5748 = vrot.lane.b32.xlu0 %v5495, 4
      %v5749 = vpop.permute.xlu0 %5748
      %5750 = vrot.lane.b32.xlu0 %v5497, 4
      %v5751 = vpop.permute.xlu0 %5750
      %5752 = vrot.lane.b32.xlu0 %v5499, 4
      %v5753 = vpop.permute.xlu0 %5752
      %5754 = vrot.lane.b32.xlu0 %v5501, 4
      %v5755 = vpop.permute.xlu0 %5754
      %5756 = vrot.lane.b32.xlu0 %v5503, 4
      %v5757 = vpop.permute.xlu0 %5756
      %5784 = vrot.lane.b32.xlu0 %v5554, 8
      %v5785 = vpop.permute.xlu0 %5784
      %5786 = vrot.lane.b32.xlu0 %v5508, 8
      %v5787 = vpop.permute.xlu0 %5786
      %5788 = vrot.lane.b32.xlu0 %v5510, 8
      %v5789 = vpop.permute.xlu0 %5788
      %5790 = vrot.lane.b32.xlu0 %v5512, 8
      %v5791 = vpop.permute.xlu0 %5790
      %5792 = vrot.lane.b32.xlu0 %v5514, 8
      %v5793 = vpop.permute.xlu0 %5792
      %5794 = vrot.lane.b32.xlu0 %v5516, 8
      %v5795 = vpop.permute.xlu0 %5794
      %5796 = vrot.lane.b32.xlu0 %v5518, 8
      %v5797 = vpop.permute.xlu0 %5796
      %5798 = vrot.lane.b32.xlu0 %v5520, 8
      %v5799 = vpop.permute.xlu0 %5798
      %5800 = vrot.lane.b32.xlu0 %v5522, 8
      %v5801 = vpop.permute.xlu0 %5800
      %5802 = vrot.lane.b32.xlu0 %v5524, 8
      %v5803 = vpop.permute.xlu0 %5802
      %5804 = vrot.lane.b32.xlu0 %v5526, 8
      %v5805 = vpop.permute.xlu0 %5804
      %5806 = vrot.lane.b32.xlu0 %v5528, 8
      %v5807 = vpop.permute.xlu0 %5806
      %5808 = vrot.lane.b32.xlu0 %v5530, 8
      %v5809 = vpop.permute.xlu0 %5808
      %5810 = vrot.lane.b32.xlu0 %v5532, 8
      %v5811 = vpop.permute.xlu0 %5810
      %5812 = vrot.lane.b32.xlu0 %v5534, 8
      %v5813 = vpop.permute.xlu0 %5812
      %5814 = vrot.lane.b32.xlu0 %v5536, 8
      %v5815 = vpop.permute.xlu0 %5814
      %5816 = vrot.lane.b32.xlu0 %v5538, 8
      %v5817 = vpop.permute.xlu0 %5816
      %5818 = vrot.lane.b32.xlu0 %v5540, 8
      %v5819 = vpop.permute.xlu0 %5818
      %5820 = vrot.lane.b32.xlu0 %v5542, 8
      %v5821 = vpop.permute.xlu0 %5820
      %5822 = vrot.lane.b32.xlu0 %v5544, 8
      %v5823 = vpop.permute.xlu0 %5822
      %5824 = vrot.lane.b32.xlu0 %v5546, 8
      %v5825 = vpop.permute.xlu0 %5824
      %5826 = vrot.lane.b32.xlu0 %v5548, 8
      %v5827 = vpop.permute.xlu0 %5826
      %5828 = vrot.lane.b32.xlu0 %v5550, 8
      %v5829 = vpop.permute.xlu0 %5828
      %5830 = vrot.lane.b32.xlu0 %v5552, 8
      %v5831 = vpop.permute.xlu0 %5830
      %5856 = vrot.lane.b32.xlu0 %v5554, 12
      %v5857 = vpop.permute.xlu0 %5856
      %5858 = vrot.lane.b32.xlu0 %v5508, 12
      %v5859 = vpop.permute.xlu0 %5858
      %5860 = vrot.lane.b32.xlu0 %v5510, 12
      %v5861 = vpop.permute.xlu0 %5860
      %5862 = vrot.lane.b32.xlu0 %v5512, 12
      %v5863 = vpop.permute.xlu0 %5862
      %5864 = vrot.lane.b32.xlu0 %v5514, 12
      %v5865 = vpop.permute.xlu0 %5864
      %5866 = vrot.lane.b32.xlu0 %v5516, 12
      %v5867 = vpop.permute.xlu0 %5866
      %5868 = vrot.lane.b32.xlu0 %v5518, 12
      %v5869 = vpop.permute.xlu0 %5868
      %5870 = vrot.lane.b32.xlu0 %v5520, 12
      %v5871 = vpop.permute.xlu0 %5870
      %5872 = vrot.lane.b32.xlu0 %v5522, 12
      %v5873 = vpop.permute.xlu0 %5872
      %5874 = vrot.lane.b32.xlu0 %v5524, 12
      %v5875 = vpop.permute.xlu0 %5874
      %5876 = vrot.lane.b32.xlu0 %v5526, 12
      %v5877 = vpop.permute.xlu0 %5876
      %5878 = vrot.lane.b32.xlu0 %v5528, 12
      %v5879 = vpop.permute.xlu0 %5878
      %5880 = vrot.lane.b32.xlu0 %v5530, 12
      %v5881 = vpop.permute.xlu0 %5880
      %5882 = vrot.lane.b32.xlu0 %v5532, 12
      %v5883 = vpop.permute.xlu0 %5882
      %5884 = vrot.lane.b32.xlu0 %v5534, 12
      %v5885 = vpop.permute.xlu0 %5884
      %5886 = vrot.lane.b32.xlu0 %v5536, 12
      %v5887 = vpop.permute.xlu0 %5886
      %5888 = vrot.lane.b32.xlu0 %v5538, 12
      %v5889 = vpop.permute.xlu0 %5888
      %5890 = vrot.lane.b32.xlu0 %v5540, 12
      %v5891 = vpop.permute.xlu0 %5890
      %5892 = vrot.lane.b32.xlu0 %v5542, 12
      %v5893 = vpop.permute.xlu0 %5892
      %5894 = vrot.lane.b32.xlu0 %v5544, 12
      %v5895 = vpop.permute.xlu0 %5894
      %5896 = vrot.lane.b32.xlu0 %v5546, 12
      %v5897 = vpop.permute.xlu0 %5896
      %5898 = vrot.lane.b32.xlu0 %v5548, 12
      %v5899 = vpop.permute.xlu0 %5898
      %5900 = vrot.lane.b32.xlu0 %v5550, 12
      %v5901 = vpop.permute.xlu0 %5900
      %5902 = vrot.lane.b32.xlu0 %v5552, 12
      %v5903 = vpop.permute.xlu0 %5902
      %5904 = vrot.lane.b32.xlu0 %v5557, 12
      %v5905 = vpop.permute.xlu0 %5904
      %5931 = vrot.lane.b32.xlu0 %v5336, 16
      %v5932 = vpop.permute.xlu0 %5931
      %5933 = vrot.lane.b32.xlu0 %v5337, 16
      %v5934 = vpop.permute.xlu0 %5933
      %5935 = vrot.lane.b32.xlu0 %v5338, 16
      %v5936 = vpop.permute.xlu0 %5935
      %5937 = vrot.lane.b32.xlu0 %v5339, 16
      %v5938 = vpop.permute.xlu0 %5937
      %5939 = vrot.lane.b32.xlu0 %v5340, 16
      %v5940 = vpop.permute.xlu0 %5939
      %5941 = vrot.lane.b32.xlu0 %v5341, 16
      %v5942 = vpop.permute.xlu0 %5941
      %5943 = vrot.lane.b32.xlu0 %v5342, 16
      %v5944 = vpop.permute.xlu0 %5943
      %5945 = vrot.lane.b32.xlu0 %v5343, 16
      %v5946 = vpop.permute.xlu0 %5945
      %5947 = vrot.lane.b32.xlu0 %v5344, 16
      %v5948 = vpop.permute.xlu0 %5947
      %5949 = vrot.lane.b32.xlu0 %v5345, 16
      %v5950 = vpop.permute.xlu0 %5949
      %5951 = vrot.lane.b32.xlu0 %v5346, 16
      %v5952 = vpop.permute.xlu0 %5951
      %5953 = vrot.lane.b32.xlu0 %v5347, 16
      %v5954 = vpop.permute.xlu0 %5953
      %5955 = vrot.lane.b32.xlu0 %v5348, 16
      %v5956 = vpop.permute.xlu0 %5955
      %5957 = vrot.lane.b32.xlu0 %v5349, 16
      %v5958 = vpop.permute.xlu0 %5957
      %5959 = vrot.lane.b32.xlu0 %v5350, 16
      %v5960 = vpop.permute.xlu0 %5959
      %5961 = vrot.lane.b32.xlu0 %v5351, 16
      %v5962 = vpop.permute.xlu0 %5961
      %5963 = vrot.lane.b32.xlu0 %v5352, 16
      %v5964 = vpop.permute.xlu0 %5963
      %5965 = vrot.lane.b32.xlu0 %v5353, 16
      %v5966 = vpop.permute.xlu0 %5965
      %5967 = vrot.lane.b32.xlu0 %v5354, 16
      %v5968 = vpop.permute.xlu0 %5967
      %5969 = vrot.lane.b32.xlu0 %v5355, 16
      %v5970 = vpop.permute.xlu0 %5969
      %5971 = vrot.lane.b32.xlu0 %v5356, 16
      %v5972 = vpop.permute.xlu0 %5971
      %5973 = vrot.lane.b32.xlu0 %v5357, 16
      %v5974 = vpop.permute.xlu0 %5973
      %5975 = vrot.lane.b32.xlu0 %v5358, 16
      %v5976 = vpop.permute.xlu0 %5975
      %5977 = vrot.lane.b32.xlu0 %v5359, 16
      %v5978 = vpop.permute.xlu0 %5977
      %5979 = vrot.lane.b32.xlu0 %v5360, 16
      %v5980 = vpop.permute.xlu0 %5979
      %6007 = vrot.lane.b32.xlu0 %v5560, 20
      %v6008 = vpop.permute.xlu0 %6007
      %6009 = vrot.lane.b32.xlu0 %v5562, 20
      %v6010 = vpop.permute.xlu0 %6009
      %6011 = vrot.lane.b32.xlu0 %v5564, 20
      %v6012 = vpop.permute.xlu0 %6011
      %6013 = vrot.lane.b32.xlu0 %v5566, 20
      %v6014 = vpop.permute.xlu0 %6013
      %6015 = vrot.lane.b32.xlu0 %v5568, 20
      %v6016 = vpop.permute.xlu0 %6015
      %6017 = vrot.lane.b32.xlu0 %v5570, 20
      %v6018 = vpop.permute.xlu0 %6017
      %6019 = vrot.lane.b32.xlu0 %v5572, 20
      %v6020 = vpop.permute.xlu0 %6019
      %6021 = vrot.lane.b32.xlu0 %v5574, 20
      %v6022 = vpop.permute.xlu0 %6021
      %6023 = vrot.lane.b32.xlu0 %v5576, 20
      %v6024 = vpop.permute.xlu0 %6023
      %6025 = vrot.lane.b32.xlu0 %v5578, 20
      %v6026 = vpop.permute.xlu0 %6025
      %6027 = vrot.lane.b32.xlu0 %v5580, 20
      %v6028 = vpop.permute.xlu0 %6027
      %6029 = vrot.lane.b32.xlu0 %v5582, 20
      %v6030 = vpop.permute.xlu0 %6029
      %6031 = vrot.lane.b32.xlu0 %v5584, 20
      %v6032 = vpop.permute.xlu0 %6031
      %6033 = vrot.lane.b32.xlu0 %v5586, 20
      %v6034 = vpop.permute.xlu0 %6033
      %6035 = vrot.lane.b32.xlu0 %v5588, 20
      %v6036 = vpop.permute.xlu0 %6035
      %6037 = vrot.lane.b32.xlu0 %v5590, 20
      %v6038 = vpop.permute.xlu0 %6037
      %6039 = vrot.lane.b32.xlu0 %v5592, 20
      %v6040 = vpop.permute.xlu0 %6039
      %6041 = vrot.lane.b32.xlu0 %v5594, 20
      %v6042 = vpop.permute.xlu0 %6041
      %6043 = vrot.lane.b32.xlu0 %v5596, 20
      %v6044 = vpop.permute.xlu0 %6043
      %6045 = vrot.lane.b32.xlu0 %v5598, 20
      %v6046 = vpop.permute.xlu0 %6045
      %6047 = vrot.lane.b32.xlu0 %v5600, 20
      %v6048 = vpop.permute.xlu0 %6047
      %6049 = vrot.lane.b32.xlu0 %v5602, 20
      %v6050 = vpop.permute.xlu0 %6049
      %6051 = vrot.lane.b32.xlu0 %v5604, 20
      %v6052 = vpop.permute.xlu0 %6051
      %6053 = vrot.lane.b32.xlu0 %v5606, 20
      %v6054 = vpop.permute.xlu0 %6053
      %6055 = vrot.lane.b32.xlu0 %v5608, 20
      %v6056 = vpop.permute.xlu0 %6055
      %6082 = vrot.lane.b32.xlu0 %v5562, 24
      %v6083 = vpop.permute.xlu0 %6082
      %6084 = vrot.lane.b32.xlu0 %v5564, 24
      %v6085 = vpop.permute.xlu0 %6084
      %6086 = vrot.lane.b32.xlu0 %v5566, 24
      %v6087 = vpop.permute.xlu0 %6086
      %6088 = vrot.lane.b32.xlu0 %v5568, 24
      %v6089 = vpop.permute.xlu0 %6088
      %6090 = vrot.lane.b32.xlu0 %v5570, 24
      %v6091 = vpop.permute.xlu0 %6090
      %6092 = vrot.lane.b32.xlu0 %v5572, 24
      %v6093 = vpop.permute.xlu0 %6092
      %6094 = vrot.lane.b32.xlu0 %v5574, 24
      %v6095 = vpop.permute.xlu0 %6094
      %6096 = vrot.lane.b32.xlu0 %v5576, 24
      %v6097 = vpop.permute.xlu0 %6096
      %6098 = vrot.lane.b32.xlu0 %v5578, 24
      %v6099 = vpop.permute.xlu0 %6098
      %6100 = vrot.lane.b32.xlu0 %v5580, 24
      %v6101 = vpop.permute.xlu0 %6100
      %6102 = vrot.lane.b32.xlu0 %v5582, 24
      %v6103 = vpop.permute.xlu0 %6102
      %6104 = vrot.lane.b32.xlu0 %v5584, 24
      %v6105 = vpop.permute.xlu0 %6104
      %6106 = vrot.lane.b32.xlu0 %v5586, 24
      %v6107 = vpop.permute.xlu0 %6106
      %6108 = vrot.lane.b32.xlu0 %v5588, 24
      %v6109 = vpop.permute.xlu0 %6108
      %6110 = vrot.lane.b32.xlu0 %v5590, 24
      %v6111 = vpop.permute.xlu0 %6110
      %6112 = vrot.lane.b32.xlu0 %v5592, 24
      %v6113 = vpop.permute.xlu0 %6112
      %6114 = vrot.lane.b32.xlu0 %v5594, 24
      %v6115 = vpop.permute.xlu0 %6114
      %6116 = vrot.lane.b32.xlu0 %v5596, 24
      %v6117 = vpop.permute.xlu0 %6116
      %6118 = vrot.lane.b32.xlu0 %v5598, 24
      %v6119 = vpop.permute.xlu0 %6118
      %6120 = vrot.lane.b32.xlu0 %v5600, 24
      %v6121 = vpop.permute.xlu0 %6120
      %6122 = vrot.lane.b32.xlu0 %v5602, 24
      %v6123 = vpop.permute.xlu0 %6122
      %6124 = vrot.lane.b32.xlu0 %v5604, 24
      %v6125 = vpop.permute.xlu0 %6124
      %6126 = vrot.lane.b32.xlu0 %v5606, 24
      %v6127 = vpop.permute.xlu0 %6126
      %6128 = vrot.lane.b32.xlu0 %v5608, 24
      %v6129 = vpop.permute.xlu0 %6128
      %6130 = vrot.lane.b32.xlu0 0.0, 24
      %v6131 = vpop.permute.xlu0 %6130
      %6158 = vrot.lane.b32.xlu0 %v5611, 28
      %v6159 = vpop.permute.xlu0 %6158
      %6160 = vrot.lane.b32.xlu0 %v5613, 28
      %v6161 = vpop.permute.xlu0 %6160
      %6162 = vrot.lane.b32.xlu0 %v5615, 28
      %v6163 = vpop.permute.xlu0 %6162
      %6164 = vrot.lane.b32.xlu0 %v5617, 28
      %v6165 = vpop.permute.xlu0 %6164
      %6166 = vrot.lane.b32.xlu0 %v5619, 28
      %v6167 = vpop.permute.xlu0 %6166
      %6168 = vrot.lane.b32.xlu0 %v5621, 28
      %v6169 = vpop.permute.xlu0 %6168
      %6170 = vrot.lane.b32.xlu0 %v5623, 28
      %v6171 = vpop.permute.xlu0 %6170
      %6172 = vrot.lane.b32.xlu0 %v5625, 28
      %v6173 = vpop.permute.xlu0 %6172
      %6174 = vrot.lane.b32.xlu0 %v5627, 28
      %v6175 = vpop.permute.xlu0 %6174
      %6176 = vrot.lane.b32.xlu0 %v5629, 28
      %v6177 = vpop.permute.xlu0 %6176
      %6178 = vrot.lane.b32.xlu0 %v5631, 28
      %v6179 = vpop.permute.xlu0 %6178
      %6180 = vrot.lane.b32.xlu0 %v5633, 28
      %v6181 = vpop.permute.xlu0 %6180
      %6182 = vrot.lane.b32.xlu0 %v5635, 28
      %v6183 = vpop.permute.xlu0 %6182
      %6184 = vrot.lane.b32.xlu0 %v5637, 28
      %v6185 = vpop.permute.xlu0 %6184
      %6186 = vrot.lane.b32.xlu0 %v5639, 28
      %v6187 = vpop.permute.xlu0 %6186
      %6188 = vrot.lane.b32.xlu0 %v5641, 28
      %v6189 = vpop.permute.xlu0 %6188
      %6190 = vrot.lane.b32.xlu0 %v5643, 28
      %v6191 = vpop.permute.xlu0 %6190
      %6192 = vrot.lane.b32.xlu0 %v5645, 28
      %v6193 = vpop.permute.xlu0 %6192
      %6194 = vrot.lane.b32.xlu0 %v5647, 28
      %v6195 = vpop.permute.xlu0 %6194
      %6196 = vrot.lane.b32.xlu0 %v5649, 28
      %v6197 = vpop.permute.xlu0 %6196
      %6198 = vrot.lane.b32.xlu0 %v5651, 28
      %v6199 = vpop.permute.xlu0 %6198
      %6200 = vrot.lane.b32.xlu0 %v5653, 28
      %v6201 = vpop.permute.xlu0 %6200
      %6202 = vrot.lane.b32.xlu0 %v5655, 28
      %v6203 = vpop.permute.xlu0 %6202
      %6204 = vrot.lane.b32.xlu0 %v5657, 28
      %v6205 = vpop.permute.xlu0 %6204
      %6206 = vrot.lane.b32.xlu0 0.0, 28
      %v6207 = vpop.permute.xlu0 %6206
      %6234 = vrot.lane.b32.xlu0 %v5660, 32
      %v6235 = vpop.permute.xlu0 %6234
      %6236 = vrot.lane.b32.xlu0 %v5662, 32
      %v6237 = vpop.permute.xlu0 %6236
      %6238 = vrot.lane.b32.xlu0 %v5664, 32
      %v6239 = vpop.permute.xlu0 %6238
      %6240 = vrot.lane.b32.xlu0 %v5666, 32
      %v6241 = vpop.permute.xlu0 %6240
      %6242 = vrot.lane.b32.xlu0 %v5668, 32
      %v6243 = vpop.permute.xlu0 %6242
      %6244 = vrot.lane.b32.xlu0 %v5670, 32
      %v6245 = vpop.permute.xlu0 %6244
      %6246 = vrot.lane.b32.xlu0 %v5672, 32
      %v6247 = vpop.permute.xlu0 %6246
      %6248 = vrot.lane.b32.xlu0 %v5674, 32
      %v6249 = vpop.permute.xlu0 %6248
      %6250 = vrot.lane.b32.xlu0 %v5676, 32
      %v6251 = vpop.permute.xlu0 %6250
      %6252 = vrot.lane.b32.xlu0 %v5678, 32
      %v6253 = vpop.permute.xlu0 %6252
      %6254 = vrot.lane.b32.xlu0 %v5680, 32
      %v6255 = vpop.permute.xlu0 %6254
      %6256 = vrot.lane.b32.xlu0 %v5682, 32
      %v6257 = vpop.permute.xlu0 %6256
      %6258 = vrot.lane.b32.xlu0 %v5684, 32
      %v6259 = vpop.permute.xlu0 %6258
      %6260 = vrot.lane.b32.xlu0 %v5686, 32
      %v6261 = vpop.permute.xlu0 %6260
      %6262 = vrot.lane.b32.xlu0 %v5688, 32
      %v6263 = vpop.permute.xlu0 %6262
      %6264 = vrot.lane.b32.xlu0 %v5690, 32
      %v6265 = vpop.permute.xlu0 %6264
      %6266 = vrot.lane.b32.xlu0 %v5692, 32
      %v6267 = vpop.permute.xlu0 %6266
      %6268 = vrot.lane.b32.xlu0 %v5694, 32
      %v6269 = vpop.permute.xlu0 %6268
      %6270 = vrot.lane.b32.xlu0 %v5696, 32
      %v6271 = vpop.permute.xlu0 %6270
      %6272 = vrot.lane.b32.xlu0 %v5698, 32
      %v6273 = vpop.permute.xlu0 %6272
      %6274 = vrot.lane.b32.xlu0 %v5700, 32
      %v6275 = vpop.permute.xlu0 %6274
      %6276 = vrot.lane.b32.xlu0 %v5702, 32
      %v6277 = vpop.permute.xlu0 %6276
      %6278 = vrot.lane.b32.xlu0 %v5704, 32
      %v6279 = vpop.permute.xlu0 %6278
      %6280 = vrot.lane.b32.xlu0 %v5706, 32
      %v6281 = vpop.permute.xlu0 %6280
      %vm6306 = vcmask 31744
      %v6307 = vsel %vm6306, 0.0, %v5709
      %v6308 = vsel %vm6306, %v5456, %v5711
      %v6309 = vsel %vm6306, %v5387, %v5713
      %v6310 = vsel %vm6306, %v5389, %v5715
      %v6311 = vsel %vm6306, %v5391, %v5717
      %v6312 = vsel %vm6306, %v5393, %v5719
      %v6313 = vsel %vm6306, %v5395, %v5721
      %v6314 = vsel %vm6306, %v5397, %v5723
      %v6315 = vsel %vm6306, %v5399, %v5725
      %v6316 = vsel %vm6306, %v5401, %v5727
      %v6317 = vsel %vm6306, %v5403, %v5729
      %v6318 = vsel %vm6306, %v5405, %v5731
      %v6319 = vsel %vm6306, %v5407, %v5733
      %v6320 = vsel %vm6306, %v5409, %v5735
      %v6321 = vsel %vm6306, %v5411, %v5737
      %v6322 = vsel %vm6306, %v5413, %v5739
      %v6323 = vsel %vm6306, %v5415, %v5741
      %v6324 = vsel %vm6306, %v5417, %v5743
      %v6325 = vsel %vm6306, %v5419, %v5745
      %v6326 = vsel %vm6306, %v5421, %v5747
      %v6327 = vsel %vm6306, %v5423, %v5749
      %v6328 = vsel %vm6306, %v5425, %v5751
      %v6329 = vsel %vm6306, %v5427, %v5753
      %v6330 = vsel %vm6306, %v5429, %v5755
      %v6331 = vsel %vm6306, %v5431, %v5757
      %v6332 = vsel %vm4814, %v6307, %v4214
      %v6333 = vsel %vm4814, %v6308, %v5785
      %v6334 = vsel %vm4814, %v6309, %v5787
      %v6335 = vsel %vm4814, %v6310, %v5789
      %v6336 = vsel %vm4814, %v6311, %v5791
      %v6337 = vsel %vm4814, %v6312, %v5793
      %v6338 = vsel %vm4814, %v6313, %v5795
      %v6339 = vsel %vm4814, %v6314, %v5797
      %v6340 = vsel %vm4814, %v6315, %v5799
      %v6341 = vsel %vm4814, %v6316, %v5801
      %v6342 = vsel %vm4814, %v6317, %v5803
      %v6343 = vsel %vm4814, %v6318, %v5805
      %v6344 = vsel %vm4814, %v6319, %v5807
      %v6345 = vsel %vm4814, %v6320, %v5809
      %v6346 = vsel %vm4814, %v6321, %v5811
      %v6347 = vsel %vm4814, %v6322, %v5813
      %v6348 = vsel %vm4814, %v6323, %v5815
      %v6349 = vsel %vm4814, %v6324, %v5817
      %v6350 = vsel %vm4814, %v6325, %v5819
      %v6351 = vsel %vm4814, %v6326, %v5821
      %v6352 = vsel %vm4814, %v6327, %v5823
      %v6353 = vsel %vm4814, %v6328, %v5825
      %v6354 = vsel %vm4814, %v6329, %v5827
      %v6355 = vsel %vm4814, %v6330, %v5829
      %v6356 = vsel %vm4814, %v6331, %v5831
      %vm6357 = vcmask 97280
      %v6358 = vsel %vm6357, %v6332, %v5857
      %v6359 = vsel %vm6357, %v6333, %v5859
      %v6360 = vsel %vm6357, %v6334, %v5861
      %v6361 = vsel %vm6357, %v6335, %v5863
      %v6362 = vsel %vm6357, %v6336, %v5865
      %v6363 = vsel %vm6357, %v6337, %v5867
      %v6364 = vsel %vm6357, %v6338, %v5869
      %v6365 = vsel %vm6357, %v6339, %v5871
      %v6366 = vsel %vm6357, %v6340, %v5873
      %v6367 = vsel %vm6357, %v6341, %v5875
      %v6368 = vsel %vm6357, %v6342, %v5877
      %v6369 = vsel %vm6357, %v6343, %v5879
      %v6370 = vsel %vm6357, %v6344, %v5881
      %v6371 = vsel %vm6357, %v6345, %v5883
      %v6372 = vsel %vm6357, %v6346, %v5885
      %v6373 = vsel %vm6357, %v6347, %v5887
      %v6374 = vsel %vm6357, %v6348, %v5889
      %v6375 = vsel %vm6357, %v6349, %v5891
      %v6376 = vsel %vm6357, %v6350, %v5893
      %v6377 = vsel %vm6357, %v6351, %v5895
      %v6378 = vsel %vm6357, %v6352, %v5897
      %v6379 = vsel %vm6357, %v6353, %v5899
      %v6380 = vsel %vm6357, %v6354, %v5901
      %v6381 = vsel %vm6357, %v6355, %v5903
      %v6382 = vsel %vm6357, %v6356, %v5905
      %v6383 = vsel %vm1730, %v6358, %v5932
      %v6384 = vsel %vm1730, %v6359, %v5934
      %v6385 = vsel %vm1730, %v6360, %v5936
      %v6386 = vsel %vm1730, %v6361, %v5938
      %v6387 = vsel %vm1730, %v6362, %v5940
      %v6388 = vsel %vm1730, %v6363, %v5942
      %v6389 = vsel %vm1730, %v6364, %v5944
      %v6390 = vsel %vm1730, %v6365, %v5946
      %v6391 = vsel %vm1730, %v6366, %v5948
      %v6392 = vsel %vm1730, %v6367, %v5950
      %v6393 = vsel %vm1730, %v6368, %v5952
      %v6394 = vsel %vm1730, %v6369, %v5954
      %v6395 = vsel %vm1730, %v6370, %v5956
      %v6396 = vsel %vm1730, %v6371, %v5958
      %v6397 = vsel %vm1730, %v6372, %v5960
      %v6398 = vsel %vm1730, %v6373, %v5962
      %v6399 = vsel %vm1730, %v6374, %v5964
      %v6400 = vsel %vm1730, %v6375, %v5966
      %v6401 = vsel %vm1730, %v6376, %v5968
      %v6402 = vsel %vm1730, %v6377, %v5970
      %v6403 = vsel %vm1730, %v6378, %v5972
      %v6404 = vsel %vm1730, %v6379, %v5974
      %v6405 = vsel %vm1730, %v6380, %v5976
      %v6406 = vsel %vm1730, %v6381, %v5978
      %v6407 = vsel %vm1730, %v6382, %v5980
      %vm6408 = vcmask 162816
      %v6409 = vsel %vm6408, %v6383, %v6008
      %v6410 = vsel %vm6408, %v6384, %v6010
      %v6411 = vsel %vm6408, %v6385, %v6012
      %v6412 = vsel %vm6408, %v6386, %v6014
      %v6413 = vsel %vm6408, %v6387, %v6016
      %v6414 = vsel %vm6408, %v6388, %v6018
      %v6415 = vsel %vm6408, %v6389, %v6020
      %v6416 = vsel %vm6408, %v6390, %v6022
      %v6417 = vsel %vm6408, %v6391, %v6024
      %v6418 = vsel %vm6408, %v6392, %v6026
      %v6419 = vsel %vm6408, %v6393, %v6028
      %v6420 = vsel %vm6408, %v6394, %v6030
      %v6421 = vsel %vm6408, %v6395, %v6032
      %v6422 = vsel %vm6408, %v6396, %v6034
      %v6423 = vsel %vm6408, %v6397, %v6036
      %v6424 = vsel %vm6408, %v6398, %v6038
      %v6425 = vsel %vm6408, %v6399, %v6040
      %v6426 = vsel %vm6408, %v6400, %v6042
      %v6427 = vsel %vm6408, %v6401, %v6044
      %v6428 = vsel %vm6408, %v6402, %v6046
      %v6429 = vsel %vm6408, %v6403, %v6048
      %v6430 = vsel %vm6408, %v6404, %v6050
      %v6431 = vsel %vm6408, %v6405, %v6052
      %v6432 = vsel %vm6408, %v6406, %v6054
      %v6433 = vsel %vm6408, %v6407, %v6056
      %v6434 = vsel %vm4865, %v6409, %v6083
      %v6435 = vsel %vm4865, %v6410, %v6085
      %v6436 = vsel %vm4865, %v6411, %v6087
      %v6437 = vsel %vm4865, %v6412, %v6089
      %v6438 = vsel %vm4865, %v6413, %v6091
      %v6439 = vsel %vm4865, %v6414, %v6093
      %v6440 = vsel %vm4865, %v6415, %v6095
      %v6441 = vsel %vm4865, %v6416, %v6097
      %v6442 = vsel %vm4865, %v6417, %v6099
      %v6443 = vsel %vm4865, %v6418, %v6101
      %v6444 = vsel %vm4865, %v6419, %v6103
      %v6445 = vsel %vm4865, %v6420, %v6105
      %v6446 = vsel %vm4865, %v6421, %v6107
      %v6447 = vsel %vm4865, %v6422, %v6109
      %v6448 = vsel %vm4865, %v6423, %v6111
      %v6449 = vsel %vm4865, %v6424, %v6113
      %v6450 = vsel %vm4865, %v6425, %v6115
      %v6451 = vsel %vm4865, %v6426, %v6117
      %v6452 = vsel %vm4865, %v6427, %v6119
      %v6453 = vsel %vm4865, %v6428, %v6121
      %v6454 = vsel %vm4865, %v6429, %v6123
      %v6455 = vsel %vm4865, %v6430, %v6125
      %v6456 = vsel %vm4865, %v6431, %v6127
      %v6457 = vsel %vm4865, %v6432, %v6129
      %v6458 = vsel %vm4865, %v6433, %v6131
      %vm6459 = vcmask 228352
      %v6460 = vsel %vm6459, %v6434, %v6159
      %v6461 = vsel %vm6459, %v6435, %v6161
      %v6462 = vsel %vm6459, %v6436, %v6163
      %v6463 = vsel %vm6459, %v6437, %v6165
      %v6464 = vsel %vm6459, %v6438, %v6167
      %v6465 = vsel %vm6459, %v6439, %v6169
      %v6466 = vsel %vm6459, %v6440, %v6171
      %v6467 = vsel %vm6459, %v6441, %v6173
      %v6468 = vsel %vm6459, %v6442, %v6175
      %v6469 = vsel %vm6459, %v6443, %v6177
      %v6470 = vsel %vm6459, %v6444, %v6179
      %v6471 = vsel %vm6459, %v6445, %v6181
      %v6472 = vsel %vm6459, %v6446, %v6183
      %v6473 = vsel %vm6459, %v6447, %v6185
      %v6474 = vsel %vm6459, %v6448, %v6187
      %v6475 = vsel %vm6459, %v6449, %v6189
      %v6476 = vsel %vm6459, %v6450, %v6191
      %v6477 = vsel %vm6459, %v6451, %v6193
      %v6478 = vsel %vm6459, %v6452, %v6195
      %v6479 = vsel %vm6459, %v6453, %v6197
      %v6480 = vsel %vm6459, %v6454, %v6199
      %v6481 = vsel %vm6459, %v6455, %v6201
      %v6482 = vsel %vm6459, %v6456, %v6203
      %v6483 = vsel %vm6459, %v6457, %v6205
      %v6484 = vsel %vm6459, %v6458, %v6207
      %v6485 = vsel %vm1756, %v6460, %v6235
      %v6486 = vsel %vm1756, %v6461, %v6237
      %v6487 = vsel %vm1756, %v6462, %v6239
      %v6488 = vsel %vm1756, %v6463, %v6241
      %v6489 = vsel %vm1756, %v6464, %v6243
      %v6490 = vsel %vm1756, %v6465, %v6245
      %v6491 = vsel %vm1756, %v6466, %v6247
      %v6492 = vsel %vm1756, %v6467, %v6249
      %v6493 = vsel %vm1756, %v6468, %v6251
      %v6494 = vsel %vm1756, %v6469, %v6253
      %v6495 = vsel %vm1756, %v6470, %v6255
      %v6496 = vsel %vm1756, %v6471, %v6257
      %v6497 = vsel %vm1756, %v6472, %v6259
      %v6498 = vsel %vm1756, %v6473, %v6261
      %v6499 = vsel %vm1756, %v6474, %v6263
      %v6500 = vsel %vm1756, %v6475, %v6265
      %v6501 = vsel %vm1756, %v6476, %v6267
      %v6502 = vsel %vm1756, %v6477, %v6269
      %v6503 = vsel %vm1756, %v6478, %v6271
      %v6504 = vsel %vm1756, %v6479, %v6273
      %v6505 = vsel %vm1756, %v6480, %v6275
      %v6506 = vsel %vm1756, %v6481, %v6277
      %v6507 = vsel %vm1756, %v6482, %v6279
      %v6508 = vsel %vm1756, %v6483, %v6281
      %v6509 = vsel %vm1756, %v6484, %v1279
      %v6510 = vpack.c.bf16 %v6486, %v6485
      %v6511 = vpack.c.bf16 %v6488, %v6487
      %v6512 = vpack.c.bf16 %v6490, %v6489
      %v6513 = vpack.c.bf16 %v6492, %v6491
      %v6514 = vpack.c.bf16 %v6494, %v6493
      %v6515 = vpack.c.bf16 %v6496, %v6495
      %v6516 = vpack.c.bf16 %v6498, %v6497
      %v6517 = vpack.c.bf16 %v6500, %v6499
      %v6518 = vpack.c.bf16 %v6502, %v6501
      %v6519 = vpack.c.bf16 %v6504, %v6503
      %v6520 = vpack.c.bf16 %v6506, %v6505
      %v6521 = vpack.c.bf16 %v6508, %v6507
      %v6522 = vpack.c.bf16 %v6509, %v6509
      %v6523 = vld [vmem:[%s757] sm:$0xf]
      %v6524 = vld [vmem:[%s757 + $0x4] sm:$0xf]
      %v6525 = vld [vmem:[%s757 + $0x8] sm:$0xf]
      %v6526 = vld [vmem:[%s757 + $0xc] sm:$0xf]
      %v6527 = vld [vmem:[%s757 + $0x10] sm:$0x3]
      %v6533 = vunpack.c.l.b16 %v6523
      %v6534 = vunpack.c.l.b16 %v6524
      %v6535 = vunpack.c.l.b16 %v6525
      %v6536 = vunpack.c.l.b16 %v6526
      %v6537 = vunpack.c.l.b16 %v6527
      %v6538 = vpack.c.b16 %v6534, %v6533
      %v6539 = vpack.c.b16 %v6536, %v6535
      %v6540 = vpack.c.b16 %v6537, %v6537
      %vm6543 = vcmask 293888
      %v6545 = vsel %vm6543, %v6510, 0
      %v6548 = vsel %vm6543, %v6511, 0
      %v6551 = vsel %vm6543, %v6512, 0
      %v6554 = vsel %vm6543, %v6513, 0
      %v6557 = vsel %vm6543, %v6514, 0
      %v6560 = vsel %vm6543, %v6515, 0
      %v6563 = vsel %vm6543, %v6516, 0
      %v6566 = vsel %vm6543, %v6517, 0
      %v6569 = vsel %vm6543, %v6518, 0
      %v6572 = vsel %vm6543, %v6519, 0
      %v6575 = vsel %vm6543, %v6520, 0
      %v6578 = vsel %vm6543, %v6521, 0
      %v6581 = vsel %vm6543, %v6522, 0
      %v6584 = vsel %vm922, %v6540, 0
      %6586 = vmatprep.subr.bf16.mxu0 0
      %6587 = vmatpush1.bf16.msra.mxu0 %v6538
      %6588 = vmatprep.subr.bf16.mxu0 0
      %6589 = vmatpush1.bf16.msra.mxu0 %v6539
      %6590 = vmatprep.subr.bf16.mxu0 0
      %6591 = vmatpush1.bf16.msra.mxu0 %v6584
      %6592 = vmatprep.subr.bf16.mxu0 0
      %6593 = vmatpush1.bf16.msra.mxu0 0
      %6594 = vmatprep.subr.bf16.mxu0 0
      %6595 = vmatpush1.bf16.msra.mxu0 0
      %6596 = vmatprep.subr.bf16.mxu0 0
      %6597 = vmatpush1.bf16.msra.mxu0 0
      %6598 = vmatprep.subr.bf16.mxu0 0
      %6599 = vmatpush1.bf16.msra.mxu0 0
      %6600 = vmatprep.subr.bf16.mxu0 0
      %6601 = vmatpush1.bf16.msra.mxu0 0
      %6602 = vmatprep.subr.bf16.mxu0 0
      %6603 = vmatpush1.bf16.msra.mxu0 0
      %6604 = vmatprep.subr.bf16.mxu0 0
      %6605 = vmatpush1.bf16.msra.mxu0 0
      %6606 = vmatprep.subr.bf16.mxu0 0
      %6607 = vmatpush1.bf16.msra.mxu0 0
      %6608 = vmatprep.subr.bf16.mxu0 0
      %6609 = vmatpush1.bf16.msra.mxu0 0
      %6610 = vmatprep.subr.bf16.mxu0 0
      %6611 = vmatpush1.bf16.msra.mxu0 0
      %6612 = vmatprep.subr.bf16.mxu0 0
      %6613 = vmatpush1.bf16.msra.mxu0 0
      %6614 = vmatprep.subr.bf16.mxu0 0
      %6615 = vmatpush1.bf16.msra.mxu0 0
      %6616 = vmatprep.subr.bf16.mxu0 0
      %6617 = vmatpush1.bf16.msra.mxu0 0
      %6618 = vmatprep.mubr.bf16.mxu0 0
      %6619 = vmatmul.mubr.bf16.gmra.mrb[0].mxu0 %v6545
      %v6620 = vpop.f32.mrb[0].mxu0
      %v6621 = vadd.f32 0.0, %v6620
      %v6622 = vpop.f32.mrb[0].mxu0
      %v6623 = vpop.f32.mrb[0].mxu0
      %v6624 = vadd.f32 0.0, %v6623
      %v6625 = vpop.f32.mrb[0].mxu0
      %6626 = vmatprep.mubr.bf16.mxu0 0
      %6627 = vmatmul.mubr.bf16.gmra.mrb[0].mxu0 %v6548
      %v6628 = vpop.f32.mrb[0].mxu0
      %v6629 = vadd.f32 0.0, %v6628
      %v6630 = vpop.f32.mrb[0].mxu0
      %v6631 = vpop.f32.mrb[0].mxu0
      %v6632 = vadd.f32 0.0, %v6631
      %v6633 = vpop.f32.mrb[0].mxu0
      %6634 = vmatprep.mubr.bf16.mxu0 0
      %6635 = vmatmul.mubr.bf16.gmra.mrb[0].mxu0 %v6551
      %v6636 = vpop.f32.mrb[0].mxu0
      %v6637 = vadd.f32 0.0, %v6636
      %v6638 = vpop.f32.mrb[0].mxu0
      %v6639 = vpop.f32.mrb[0].mxu0
      %v6640 = vadd.f32 0.0, %v6639
      %v6641 = vpop.f32.mrb[0].mxu0
      %6642 = vmatprep.mubr.bf16.mxu0 0
      %6643 = vmatmul.mubr.bf16.gmra.mrb[0].mxu0 %v6554
      %v6644 = vpop.f32.mrb[0].mxu0
      %v6645 = vadd.f32 0.0, %v6644
      %v6646 = vpop.f32.mrb[0].mxu0
      %v6647 = vpop.f32.mrb[0].mxu0
      %v6648 = vadd.f32 0.0, %v6647
      %v6649 = vpop.f32.mrb[0].mxu0
      %6650 = vmatprep.mubr.bf16.mxu0 0
      %6651 = vmatmul.mubr.bf16.gmra.mrb[0].mxu0 %v6557
      %v6652 = vpop.f32.mrb[0].mxu0
      %v6653 = vadd.f32 0.0, %v6652
      %v6654 = vpop.f32.mrb[0].mxu0
      %v6655 = vpop.f32.mrb[0].mxu0
      %v6656 = vadd.f32 0.0, %v6655
      %v6657 = vpop.f32.mrb[0].mxu0
      %6658 = vmatprep.mubr.bf16.mxu0 0
      %6659 = vmatmul.mubr.bf16.gmra.mrb[0].mxu0 %v6560
      %v6660 = vpop.f32.mrb[0].mxu0
      %v6661 = vadd.f32 0.0, %v6660
      %v6662 = vpop.f32.mrb[0].mxu0
      %v6663 = vpop.f32.mrb[0].mxu0
      %v6664 = vadd.f32 0.0, %v6663
      %v6665 = vpop.f32.mrb[0].mxu0
      %6666 = vmatprep.mubr.bf16.mxu0 0
      %6667 = vmatmul.mubr.bf16.gmra.mrb[0].mxu0 %v6563
      %v6668 = vpop.f32.mrb[0].mxu0
      %v6669 = vadd.f32 0.0, %v6668
      %v6670 = vpop.f32.mrb[0].mxu0
      %v6671 = vpop.f32.mrb[0].mxu0
      %v6672 = vadd.f32 0.0, %v6671
      %v6673 = vpop.f32.mrb[0].mxu0
      %6674 = vmatprep.mubr.bf16.mxu0 0
      %6675 = vmatmul.mubr.bf16.gmra.mrb[0].mxu0 %v6566
      %v6676 = vpop.f32.mrb[0].mxu0
      %v6677 = vadd.f32 0.0, %v6676
      %v6678 = vpop.f32.mrb[0].mxu0
      %v6679 = vpop.f32.mrb[0].mxu0
      %v6680 = vadd.f32 0.0, %v6679
      %v6681 = vpop.f32.mrb[0].mxu0
      %6682 = vmatprep.mubr.bf16.mxu0 0
      %6683 = vmatmul.mubr.bf16.gmra.mrb[0].mxu0 %v6569
      %v6684 = vpop.f32.mrb[0].mxu0
      %v6685 = vadd.f32 0.0, %v6684
      %v6686 = vpop.f32.mrb[0].mxu0
      %v6687 = vpop.f32.mrb[0].mxu0
      %v6688 = vadd.f32 0.0, %v6687
      %v6689 = vpop.f32.mrb[0].mxu0
      %6690 = vmatprep.mubr.bf16.mxu0 0
      %6691 = vmatmul.mubr.bf16.gmra.mrb[0].mxu0 %v6572
      %v6692 = vpop.f32.mrb[0].mxu0
      %v6693 = vadd.f32 0.0, %v6692
      %v6694 = vpop.f32.mrb[0].mxu0
      %v6695 = vpop.f32.mrb[0].mxu0
      %v6696 = vadd.f32 0.0, %v6695
      %v6697 = vpop.f32.mrb[0].mxu0
      %6698 = vmatprep.mubr.bf16.mxu0 0
      %6699 = vmatmul.mubr.bf16.gmra.mrb[0].mxu0 %v6575
      %v6700 = vpop.f32.mrb[0].mxu0
      %v6701 = vadd.f32 0.0, %v6700
      %v6702 = vpop.f32.mrb[0].mxu0
      %v6703 = vpop.f32.mrb[0].mxu0
      %v6704 = vadd.f32 0.0, %v6703
      %v6705 = vpop.f32.mrb[0].mxu0
      %6706 = vmatprep.mubr.bf16.mxu0 0
      %6707 = vmatmul.mubr.bf16.gmra.mrb[0].mxu0 %v6578
      %v6708 = vpop.f32.mrb[0].mxu0
      %v6709 = vadd.f32 0.0, %v6708
      %v6710 = vpop.f32.mrb[0].mxu0
      %v6711 = vpop.f32.mrb[0].mxu0
      %v6712 = vadd.f32 0.0, %v6711
      %v6713 = vpop.f32.mrb[0].mxu0
      %6714 = vmatprep.mubr.bf16.mxu0 0
      %6715 = vmatmul.mubr.bf16.gmra.mrb[0].mxu0 %v6581
      %v6716 = vpop.f32.mrb[0].mxu0
      %v6717 = vadd.f32 0.0, %v6716
      %v6718 = vpop.f32.mrb[0].mxu0
      %v6719 = vpop.f32.mrb[0].mxu0
      %v6720 = vpop.f32.mrb[0].mxu0
      %6721 = vdwg.mxu0
      %v6722 = vld [vmem:[%s760] sm:$0x1]
      %v6724 = vlaneseq
      %v6725 = vshrl.u32 %v6724, 7
      %v6726 = vsub.s32 0, %v6725
      %v6727 = vrot.slane %v6722, %v6726
      %v6729 = vmul.f32 %v6621, %v6727
      %v6730 = vmul.f32 %v6624, %v6727
      %v6731 = vmul.f32 %v6629, %v6727
      %v6732 = vmul.f32 %v6632, %v6727
      %v6733 = vmul.f32 %v6637, %v6727
      %v6734 = vmul.f32 %v6640, %v6727
      %v6735 = vmul.f32 %v6645, %v6727
      %v6736 = vmul.f32 %v6648, %v6727
      %v6737 = vmul.f32 %v6653, %v6727
      %v6738 = vmul.f32 %v6656, %v6727
      %v6739 = vmul.f32 %v6661, %v6727
      %v6740 = vmul.f32 %v6664, %v6727
      %v6741 = vmul.f32 %v6669, %v6727
      %v6742 = vmul.f32 %v6672, %v6727
      %v6743 = vmul.f32 %v6677, %v6727
      %v6744 = vmul.f32 %v6680, %v6727
      %v6745 = vmul.f32 %v6685, %v6727
      %v6746 = vmul.f32 %v6688, %v6727
      %v6747 = vmul.f32 %v6693, %v6727
      %v6748 = vmul.f32 %v6696, %v6727
      %v6749 = vmul.f32 %v6701, %v6727
      %v6750 = vmul.f32 %v6704, %v6727
      %v6751 = vmul.f32 %v6709, %v6727
      %v6752 = vmul.f32 %v6712, %v6727
      %v6753 = vmul.f32 %v6717, %v6727
      %v6754 = vld [vmem:[%s763] sm:$0x1]
      %v6756 = vlaneseq
      %v6757 = vshrl.u32 %v6756, 7
      %v6758 = vsub.s32 0, %v6757
      %v6759 = vrot.slane %v6754, %v6758
      %v6761 = vadd.f32 %v6729, %v6759
      %v6762 = vadd.f32 %v6730, %v6759
      %v6763 = vadd.f32 %v6731, %v6759
      %v6764 = vadd.f32 %v6732, %v6759
      %v6765 = vadd.f32 %v6733, %v6759
      %v6766 = vadd.f32 %v6734, %v6759
      %v6767 = vadd.f32 %v6735, %v6759
      %v6768 = vadd.f32 %v6736, %v6759
      %v6769 = vadd.f32 %v6737, %v6759
      %v6770 = vadd.f32 %v6738, %v6759
      %v6771 = vadd.f32 %v6739, %v6759
      %v6772 = vadd.f32 %v6740, %v6759
      %v6773 = vadd.f32 %v6741, %v6759
      %v6774 = vadd.f32 %v6742, %v6759
      %v6775 = vadd.f32 %v6743, %v6759
      %v6776 = vadd.f32 %v6744, %v6759
      %v6777 = vadd.f32 %v6745, %v6759
      %v6778 = vadd.f32 %v6746, %v6759
      %v6779 = vadd.f32 %v6747, %v6759
      %v6780 = vadd.f32 %v6748, %v6759
      %v6781 = vadd.f32 %v6749, %v6759
      %v6782 = vadd.f32 %v6750, %v6759
      %v6783 = vadd.f32 %v6751, %v6759
      %v6784 = vadd.f32 %v6752, %v6759
      %v6785 = vadd.f32 %v6753, %v6759
      %v6786 = vmax.f32 %v6761, 0.0
      %v6787 = vmax.f32 %v6762, 0.0
      %v6788 = vmax.f32 %v6763, 0.0
      %v6789 = vmax.f32 %v6764, 0.0
      %v6790 = vmax.f32 %v6765, 0.0
      %v6791 = vmax.f32 %v6766, 0.0
      %v6792 = vmax.f32 %v6767, 0.0
      %v6793 = vmax.f32 %v6768, 0.0
      %v6794 = vmax.f32 %v6769, 0.0
      %v6795 = vmax.f32 %v6770, 0.0
      %v6796 = vmax.f32 %v6771, 0.0
      %v6797 = vmax.f32 %v6772, 0.0
      %v6798 = vmax.f32 %v6773, 0.0
      %v6799 = vmax.f32 %v6774, 0.0
      %v6800 = vmax.f32 %v6775, 0.0
      %v6801 = vmax.f32 %v6776, 0.0
      %v6802 = vmax.f32 %v6777, 0.0
      %v6803 = vmax.f32 %v6778, 0.0
      %v6804 = vmax.f32 %v6779, 0.0
      %v6805 = vmax.f32 %v6780, 0.0
      %v6806 = vmax.f32 %v6781, 0.0
      %v6807 = vmax.f32 %v6782, 0.0
      %v6808 = vmax.f32 %v6783, 0.0
      %v6809 = vmax.f32 %v6784, 0.0
      %v6810 = vmax.f32 %v6785, 0.0
      %v6811 = vmul.f32 %v6786, %v2277
      %v6812 = vmul.f32 %v6787, %v2282
      %v6813 = vmul.f32 %v6788, %v2287
      %v6814 = vmul.f32 %v6789, %v2292
      %v6815 = vmul.f32 %v6790, %v2297
      %v6816 = vmul.f32 %v6791, %v2302
      %v6817 = vmul.f32 %v6792, %v2307
      %v6818 = vmul.f32 %v6793, %v2312
      %v6819 = vmul.f32 %v6794, %v2317
      %v6820 = vmul.f32 %v6795, %v2322
      %v6821 = vmul.f32 %v6796, %v2327
      %v6822 = vmul.f32 %v6797, %v2332
      %v6823 = vmul.f32 %v6798, %v2337
      %v6824 = vmul.f32 %v6799, %v2342
      %v6825 = vmul.f32 %v6800, %v2347
      %v6826 = vmul.f32 %v6801, %v2352
      %v6827 = vmul.f32 %v6802, %v2357
      %v6828 = vmul.f32 %v6803, %v2362
      %v6829 = vmul.f32 %v6804, %v2367
      %v6830 = vmul.f32 %v6805, %v2372
      %v6831 = vmul.f32 %v6806, %v2377
      %v6832 = vmul.f32 %v6807, %v2382
      %v6833 = vmul.f32 %v6808, %v2387
      %v6834 = vmul.f32 %v6809, %v2392
      %v6835 = vmul.f32 %v6810, %v2397
      %v6836 = vld [vmem:[%s766] sm:$0x1]
      %v6838 = vlaneseq
      %v6839 = vshrl.u32 %v6838, 7
      %v6840 = vsub.s32 0, %v6839
      %v6841 = vrot.slane %v6836, %v6840
      %v6843 = vmul.f32 %v6811, %v6841
      %v6844 = vmul.f32 %v6812, %v6841
      %v6845 = vmul.f32 %v6813, %v6841
      %v6846 = vmul.f32 %v6814, %v6841
      %v6847 = vmul.f32 %v6815, %v6841
      %v6848 = vmul.f32 %v6816, %v6841
      %v6849 = vmul.f32 %v6817, %v6841
      %v6850 = vmul.f32 %v6818, %v6841
      %v6851 = vmul.f32 %v6819, %v6841
      %v6852 = vmul.f32 %v6820, %v6841
      %v6853 = vmul.f32 %v6821, %v6841
      %v6854 = vmul.f32 %v6822, %v6841
      %v6855 = vmul.f32 %v6823, %v6841
      %v6856 = vmul.f32 %v6824, %v6841
      %v6857 = vmul.f32 %v6825, %v6841
      %v6858 = vmul.f32 %v6826, %v6841
      %v6859 = vmul.f32 %v6827, %v6841
      %v6860 = vmul.f32 %v6828, %v6841
      %v6861 = vmul.f32 %v6829, %v6841
      %v6862 = vmul.f32 %v6830, %v6841
      %v6863 = vmul.f32 %v6831, %v6841
      %v6864 = vmul.f32 %v6832, %v6841
      %v6865 = vmul.f32 %v6833, %v6841
      %v6866 = vmul.f32 %v6834, %v6841
      %v6867 = vmul.f32 %v6835, %v6841
      %vm6868 = vcmask 15360
      %v6869 = vsel %vm6868, %v6843, 0.0
      %6870 = vadd.xlane.f32.xlu0 %v6869
      %v6871 = vpop.xlane.xlu0 %6870
      %v6872 = vsel %vm6868, %v6844, 0.0
      %6873 = vadd.xlane.f32.xlu0 %v6872
      %v6874 = vpop.xlane.xlu0 %6873
      %v6875 = vsel %vm6868, %v6845, 0.0
      %6876 = vadd.xlane.f32.xlu0 %v6875
      %v6877 = vpop.xlane.xlu0 %6876
      %v6878 = vsel %vm6868, %v6846, 0.0
      %6879 = vadd.xlane.f32.xlu0 %v6878
      %v6880 = vpop.xlane.xlu0 %6879
      %v6881 = vsel %vm6868, %v6847, 0.0
      %6882 = vadd.xlane.f32.xlu0 %v6881
      %v6883 = vpop.xlane.xlu0 %6882
      %v6884 = vsel %vm6868, %v6848, 0.0
      %6885 = vadd.xlane.f32.xlu0 %v6884
      %v6886 = vpop.xlane.xlu0 %6885
      %v6887 = vsel %vm6868, %v6849, 0.0
      %6888 = vadd.xlane.f32.xlu0 %v6887
      %v6889 = vpop.xlane.xlu0 %6888
      %v6890 = vsel %vm6868, %v6850, 0.0
      %6891 = vadd.xlane.f32.xlu0 %v6890
      %v6892 = vpop.xlane.xlu0 %6891
      %v6893 = vsel %vm6868, %v6851, 0.0
      %6894 = vadd.xlane.f32.xlu0 %v6893
      %v6895 = vpop.xlane.xlu0 %6894
      %v6896 = vsel %vm6868, %v6852, 0.0
      %6897 = vadd.xlane.f32.xlu0 %v6896
      %v6898 = vpop.xlane.xlu0 %6897
      %v6899 = vsel %vm6868, %v6853, 0.0
      %6900 = vadd.xlane.f32.xlu0 %v6899
      %v6901 = vpop.xlane.xlu0 %6900
      %v6902 = vsel %vm6868, %v6854, 0.0
      %6903 = vadd.xlane.f32.xlu0 %v6902
      %v6904 = vpop.xlane.xlu0 %6903
      %v6905 = vsel %vm6868, %v6855, 0.0
      %6906 = vadd.xlane.f32.xlu0 %v6905
      %v6907 = vpop.xlane.xlu0 %6906
      %v6908 = vsel %vm6868, %v6856, 0.0
      %6909 = vadd.xlane.f32.xlu0 %v6908
      %v6910 = vpop.xlane.xlu0 %6909
      %v6911 = vsel %vm6868, %v6857, 0.0
      %6912 = vadd.xlane.f32.xlu0 %v6911
      %v6913 = vpop.xlane.xlu0 %6912
      %v6914 = vsel %vm6868, %v6858, 0.0
      %6915 = vadd.xlane.f32.xlu0 %v6914
      %v6916 = vpop.xlane.xlu0 %6915
      %v6917 = vsel %vm6868, %v6859, 0.0
      %6918 = vadd.xlane.f32.xlu0 %v6917
      %v6919 = vpop.xlane.xlu0 %6918
      %v6920 = vsel %vm6868, %v6860, 0.0
      %6921 = vadd.xlane.f32.xlu0 %v6920
      %v6922 = vpop.xlane.xlu0 %6921
      %v6923 = vsel %vm6868, %v6861, 0.0
      %6924 = vadd.xlane.f32.xlu0 %v6923
      %v6925 = vpop.xlane.xlu0 %6924
      %v6926 = vsel %vm6868, %v6862, 0.0
      %6927 = vadd.xlane.f32.xlu0 %v6926
      %v6928 = vpop.xlane.xlu0 %6927
      %v6929 = vsel %vm6868, %v6863, 0.0
      %6930 = vadd.xlane.f32.xlu0 %v6929
      %v6931 = vpop.xlane.xlu0 %6930
      %v6932 = vsel %vm6868, %v6864, 0.0
      %6933 = vadd.xlane.f32.xlu0 %v6932
      %v6934 = vpop.xlane.xlu0 %6933
      %v6935 = vsel %vm6868, %v6865, 0.0
      %6936 = vadd.xlane.f32.xlu0 %v6935
      %v6937 = vpop.xlane.xlu0 %6936
      %v6938 = vsel %vm6868, %v6866, 0.0
      %6939 = vadd.xlane.f32.xlu0 %v6938
      %v6940 = vpop.xlane.xlu0 %6939
      %v6941 = vsel %vm6868, %v6867, 0.0
      %6942 = vadd.xlane.f32.xlu0 %v6941
      %v6943 = vpop.xlane.xlu0 %6942
      %v6944 = vld [vmem:[%s769] sm:$0x1]
      %v6946 = vlaneseq
      %v6947 = vshrl.u32 %v6946, 7
      %v6948 = vsub.s32 0, %v6947
      %v6949 = vrot.slane %v6944, %v6948
      %v6951 = vadd.f32 %v6871, %v6949
      %v6952 = vadd.f32 %v6874, %v6949
      %v6953 = vadd.f32 %v6877, %v6949
      %v6954 = vadd.f32 %v6880, %v6949
      %v6955 = vadd.f32 %v6883, %v6949
      %v6956 = vadd.f32 %v6886, %v6949
      %v6957 = vadd.f32 %v6889, %v6949
      %v6958 = vadd.f32 %v6892, %v6949
      %v6959 = vadd.f32 %v6895, %v6949
      %v6960 = vadd.f32 %v6898, %v6949
      %v6961 = vadd.f32 %v6901, %v6949
      %v6962 = vadd.f32 %v6904, %v6949
      %v6963 = vadd.f32 %v6907, %v6949
      %v6964 = vadd.f32 %v6910, %v6949
      %v6965 = vadd.f32 %v6913, %v6949
      %v6966 = vadd.f32 %v6916, %v6949
      %v6967 = vadd.f32 %v6919, %v6949
      %v6968 = vadd.f32 %v6922, %v6949
      %v6969 = vadd.f32 %v6925, %v6949
      %v6970 = vadd.f32 %v6928, %v6949
      %v6971 = vadd.f32 %v6931, %v6949
      %v6972 = vadd.f32 %v6934, %v6949
      %v6973 = vadd.f32 %v6937, %v6949
      %v6974 = vadd.f32 %v6940, %v6949
      %v6975 = vadd.f32 %v6943, %v6949
      %v6976 = vld [vmem:[%s1] sm:$0xff]
      %v6977 = vld [vmem:[%s1 + $0x8] sm:$0xff]
      %v6978 = vld [vmem:[%s1 + $0x10] sm:$0xff]
      %v6979 = vld [vmem:[%s1 + $0x18] sm:$0xff]
      %v6980 = vld [vmem:[%s1 + $0x20] sm:$0xff]
      %v6981 = vld [vmem:[%s1 + $0x28] sm:$0xff]
      %v6982 = vld [vmem:[%s1 + $0x30] sm:$0xff]
      %v6983 = vld [vmem:[%s1 + $0x38] sm:$0xff]
      %v6984 = vld [vmem:[%s1 + $0x40] sm:$0xff]
      %v6985 = vld [vmem:[%s1 + $0x48] sm:$0xff]
      %v6986 = vld [vmem:[%s1 + $0x50] sm:$0xff]
      %v6987 = vld [vmem:[%s1 + $0x58] sm:$0xff]
      %v6988 = vld [vmem:[%s1 + $0x60] sm:$0xf]
      %v6989 = vld [vmem:[%s2] sm:$0xff]
      %v6990 = vld [vmem:[%s2 + $0x8] sm:$0xff]
      %v6991 = vld [vmem:[%s2 + $0x10] sm:$0xff]
      %v6992 = vld [vmem:[%s2 + $0x18] sm:$0xff]
      %v6993 = vld [vmem:[%s2 + $0x20] sm:$0xff]
      %v6994 = vld [vmem:[%s2 + $0x28] sm:$0xff]
      %v6995 = vld [vmem:[%s2 + $0x30] sm:$0xff]
      %v6996 = vld [vmem:[%s2 + $0x38] sm:$0xff]
      %v6997 = vld [vmem:[%s2 + $0x40] sm:$0xff]
      %v6998 = vld [vmem:[%s2 + $0x48] sm:$0xff]
      %v6999 = vld [vmem:[%s2 + $0x50] sm:$0xff]
      %v7000 = vld [vmem:[%s2 + $0x58] sm:$0xff]
      %v7001 = vld [vmem:[%s2 + $0x60] sm:$0xf]
      %v7002 = vsub.f32 %v775, 1.0
      %v7003 = vsub.f32 %v776, 1.0
      %v7004 = vsub.f32 %v777, 1.0
      %v7005 = vsub.f32 %v778, 1.0
      %v7006 = vsub.f32 %v779, 1.0
      %v7007 = vsub.f32 %v780, 1.0
      %v7008 = vsub.f32 %v781, 1.0
      %v7009 = vsub.f32 %v782, 1.0
      %v7010 = vsub.f32 %v783, 1.0
      %v7011 = vsub.f32 %v784, 1.0
      %v7012 = vsub.f32 %v785, 1.0
      %v7013 = vsub.f32 %v786, 1.0
      %v7014 = vsub.f32 %v787, 1.0
      %v7015 = vmul.f32 %v7002, 1e+09
      %v7016 = vmul.f32 %v7003, 1e+09
      %v7017 = vmul.f32 %v7004, 1e+09
      %v7018 = vmul.f32 %v7005, 1e+09
      %v7019 = vmul.f32 %v7006, 1e+09
      %v7020 = vmul.f32 %v7007, 1e+09
      %v7021 = vmul.f32 %v7008, 1e+09
      %v7022 = vmul.f32 %v7009, 1e+09
      %v7023 = vmul.f32 %v7010, 1e+09
      %v7024 = vmul.f32 %v7011, 1e+09
      %v7025 = vmul.f32 %v7012, 1e+09
      %v7026 = vmul.f32 %v7013, 1e+09
      %v7027 = vmul.f32 %v7014, 1e+09
      %v7028 = vadd.f32 %v6951, %v7015
      %v7029 = vadd.f32 %v6952, %v7016
      %v7030 = vadd.f32 %v6953, %v7017
      %v7031 = vadd.f32 %v6954, %v7018
      %v7032 = vadd.f32 %v6955, %v7019
      %v7033 = vadd.f32 %v6956, %v7020
      %v7034 = vadd.f32 %v6957, %v7021
      %v7035 = vadd.f32 %v6958, %v7022
      %v7036 = vadd.f32 %v6959, %v7023
      %v7037 = vadd.f32 %v6960, %v7024
      %v7038 = vadd.f32 %v6961, %v7025
      %v7039 = vadd.f32 %v6962, %v7026
      %v7040 = vadd.f32 %v6963, %v7027
      %vm7041 = vcmask 7168
      %v7042 = vsel %vm7041, %v7028, -inf
      %v7043 = vsel %vm7041, %v7029, -inf
      %v7044 = vsel %vm7041, %v7030, -inf
      %v7045 = vsel %vm7041, %v7031, -inf
      %v7046 = vsel %vm7041, %v7032, -inf
      %v7047 = vmax.f32 %v7042, %v7046
      %v7048 = vsel %vm7041, %v7033, -inf
      %v7049 = vmax.f32 %v7043, %v7048
      %v7050 = vsel %vm7041, %v7034, -inf
      %v7051 = vmax.f32 %v7044, %v7050
      %v7052 = vsel %vm7041, %v7035, -inf
      %v7053 = vmax.f32 %v7045, %v7052
      %v7054 = vsel %vm7041, %v7036, -inf
      %v7055 = vmax.f32 %v7047, %v7054
      %v7056 = vsel %vm7041, %v7037, -inf
      %v7057 = vmax.f32 %v7049, %v7056
      %v7058 = vsel %vm7041, %v7038, -inf
      %v7059 = vmax.f32 %v7051, %v7058
      %v7060 = vsel %vm7041, %v7039, -inf
      %v7061 = vmax.f32 %v7053, %v7060
      %vm7062 = vcmask 3072
      %v7063 = vsel %vm7062, %v7040, -inf
      %v7064 = vmax.f32 %v7055, %v7063
      %v7065 = vmax.f32 %v7064, %v7057
      %v7066 = vmax.f32 %v7059, %v7061
      %v7067 = vmax.f32 %v7065, %v7066
      %v7068 = vrot.slane %v7067, 4
      %v7069 = vmax.f32 %v7067, %v7068
      %v7070 = vrot.slane %v7069, 2
      %v7071 = vmax.f32 %v7069, %v7070
      %v7072 = vrot.slane %v7071, 1
      %v7073 = vmax.f32 %v7071, %v7072
      %v7074 = vsub.f32 %v7028, %v7073
      %v7075 = vsub.f32 %v7029, %v7073
      %v7076 = vsub.f32 %v7030, %v7073
      %v7077 = vsub.f32 %v7031, %v7073
      %v7078 = vsub.f32 %v7032, %v7073
      %v7079 = vsub.f32 %v7033, %v7073
      %v7080 = vsub.f32 %v7034, %v7073
      %v7081 = vsub.f32 %v7035, %v7073
      %v7082 = vsub.f32 %v7036, %v7073
      %v7083 = vsub.f32 %v7037, %v7073
      %v7084 = vsub.f32 %v7038, %v7073
      %v7085 = vsub.f32 %v7039, %v7073
      %v7086 = vsub.f32 %v7040, %v7073
      %v7087 = vmul.f32 %v7074, 1.442695
      %v7088 = vpow.pop %v7087
      %v7089 = vmul.f32 %v7075, 1.442695
      %v7090 = vpow.pop %v7089
      %v7091 = vmul.f32 %v7076, 1.442695
      %v7092 = vpow.pop %v7091
      %v7093 = vmul.f32 %v7077, 1.442695
      %v7094 = vpow.pop %v7093
      %v7095 = vmul.f32 %v7078, 1.442695
      %v7096 = vpow.pop %v7095
      %v7097 = vmul.f32 %v7079, 1.442695
      %v7098 = vpow.pop %v7097
      %v7099 = vmul.f32 %v7080, 1.442695
      %v7100 = vpow.pop %v7099
      %v7101 = vmul.f32 %v7081, 1.442695
      %v7102 = vpow.pop %v7101
      %v7103 = vmul.f32 %v7082, 1.442695
      %v7104 = vpow.pop %v7103
      %v7105 = vmul.f32 %v7083, 1.442695
      %v7106 = vpow.pop %v7105
      %v7107 = vmul.f32 %v7084, 1.442695
      %v7108 = vpow.pop %v7107
      %v7109 = vmul.f32 %v7085, 1.442695
      %v7110 = vpow.pop %v7109
      %v7111 = vmul.f32 %v7086, 1.442695
      %v7112 = vpow.pop %v7111
      %v7113 = vmul.f32 %v7088, %v775
      %v7114 = vmul.f32 %v7090, %v776
      %v7115 = vmul.f32 %v7092, %v777
      %v7116 = vmul.f32 %v7094, %v778
      %v7117 = vmul.f32 %v7096, %v779
      %v7118 = vmul.f32 %v7098, %v780
      %v7119 = vmul.f32 %v7100, %v781
      %v7120 = vmul.f32 %v7102, %v782
      %v7121 = vmul.f32 %v7104, %v783
      %v7122 = vmul.f32 %v7106, %v784
      %v7123 = vmul.f32 %v7108, %v785
      %v7124 = vmul.f32 %v7110, %v786
      %v7125 = vmul.f32 %v7112, %v787
      %v7126 = vsel %vm7041, %v7113, 0.0
      %v7127 = vsel %vm7041, %v7114, 0.0
      %v7128 = vadd.f32 %v7126, %v7127
      %v7129 = vsel %vm7041, %v7115, 0.0
      %v7130 = vadd.f32 %v7128, %v7129
      %v7131 = vsel %vm7041, %v7116, 0.0
      %v7132 = vadd.f32 %v7130, %v7131
      %v7133 = vsel %vm7041, %v7117, 0.0
      %v7134 = vadd.f32 %v7132, %v7133
      %v7135 = vsel %vm7041, %v7118, 0.0
      %v7136 = vadd.f32 %v7134, %v7135
      %v7137 = vsel %vm7041, %v7119, 0.0
      %v7138 = vadd.f32 %v7136, %v7137
      %v7139 = vsel %vm7041, %v7120, 0.0
      %v7140 = vadd.f32 %v7138, %v7139
      %v7141 = vsel %vm7041, %v7121, 0.0
      %v7142 = vadd.f32 %v7140, %v7141
      %v7143 = vsel %vm7041, %v7122, 0.0
      %v7144 = vadd.f32 %v7142, %v7143
      %v7145 = vsel %vm7041, %v7123, 0.0
      %v7146 = vadd.f32 %v7144, %v7145
      %v7147 = vsel %vm7041, %v7124, 0.0
      %v7148 = vadd.f32 %v7146, %v7147
      %v7149 = vsel %vm7062, %v7125, 0.0
      %v7150 = vadd.f32 %v7148, %v7149
      %v7151 = vrot.slane %v7150, 4
      %v7152 = vadd.f32 %v7150, %v7151
      %v7153 = vrot.slane %v7152, 2
      %v7154 = vadd.f32 %v7152, %v7153
      %v7155 = vrot.slane %v7154, 1
      %v7156 = vadd.f32 %v7154, %v7155
      %v7157 = vrcp.pop %v7156
      %v7158 = vmul.f32 %v6976, %v7113
      %v7159 = vmul.f32 %v6977, %v7114
      %v7160 = vmul.f32 %v6978, %v7115
      %v7161 = vmul.f32 %v6979, %v7116
      %v7162 = vmul.f32 %v6980, %v7117
      %v7163 = vmul.f32 %v6981, %v7118
      %v7164 = vmul.f32 %v6982, %v7119
      %v7165 = vmul.f32 %v6983, %v7120
      %v7166 = vmul.f32 %v6984, %v7121
      %v7167 = vmul.f32 %v6985, %v7122
      %v7168 = vmul.f32 %v6986, %v7123
      %v7169 = vmul.f32 %v6987, %v7124
      %v7170 = vmul.f32 %v6988, %v7125
      %v7171 = vsel %vm7041, %v7158, 0.0
      %v7172 = vsel %vm7041, %v7159, 0.0
      %v7173 = vadd.f32 %v7171, %v7172
      %v7174 = vsel %vm7041, %v7160, 0.0
      %v7175 = vadd.f32 %v7173, %v7174
      %v7176 = vsel %vm7041, %v7161, 0.0
      %v7177 = vadd.f32 %v7175, %v7176
      %v7178 = vsel %vm7041, %v7162, 0.0
      %v7179 = vadd.f32 %v7177, %v7178
      %v7180 = vsel %vm7041, %v7163, 0.0
      %v7181 = vadd.f32 %v7179, %v7180
      %v7182 = vsel %vm7041, %v7164, 0.0
      %v7183 = vadd.f32 %v7181, %v7182
      %v7184 = vsel %vm7041, %v7165, 0.0
      %v7185 = vadd.f32 %v7183, %v7184
      %v7186 = vsel %vm7041, %v7166, 0.0
      %v7187 = vadd.f32 %v7185, %v7186
      %v7188 = vsel %vm7041, %v7167, 0.0
      %v7189 = vadd.f32 %v7187, %v7188
      %v7190 = vsel %vm7041, %v7168, 0.0
      %v7191 = vadd.f32 %v7189, %v7190
      %v7192 = vsel %vm7041, %v7169, 0.0
      %v7193 = vadd.f32 %v7191, %v7192
      %v7194 = vsel %vm7062, %v7170, 0.0
      %v7195 = vadd.f32 %v7193, %v7194
      %v7196 = vrot.slane %v7195, 4
      %v7197 = vadd.f32 %v7195, %v7196
      %v7198 = vrot.slane %v7197, 2
      %v7199 = vadd.f32 %v7197, %v7198
      %v7200 = vrot.slane %v7199, 1
      %v7201 = vadd.f32 %v7199, %v7200
      %v7202 = vmul.f32 %v7201, %v7157
      %v7203 = vmul.f32 %v6989, %v7113
      %v7204 = vmul.f32 %v6990, %v7114
      %v7205 = vmul.f32 %v6991, %v7115
      %v7206 = vmul.f32 %v6992, %v7116
      %v7207 = vmul.f32 %v6993, %v7117
      %v7208 = vmul.f32 %v6994, %v7118
      %v7209 = vmul.f32 %v6995, %v7119
      %v7210 = vmul.f32 %v6996, %v7120
      %v7211 = vmul.f32 %v6997, %v7121
      %v7212 = vmul.f32 %v6998, %v7122
      %v7213 = vmul.f32 %v6999, %v7123
      %v7214 = vmul.f32 %v7000, %v7124
      %v7215 = vmul.f32 %v7001, %v7125
      %v7216 = vsel %vm7041, %v7203, 0.0
      %v7217 = vsel %vm7041, %v7204, 0.0
      %v7218 = vadd.f32 %v7216, %v7217
      %v7219 = vsel %vm7041, %v7205, 0.0
      %v7220 = vadd.f32 %v7218, %v7219
      %v7221 = vsel %vm7041, %v7206, 0.0
      %v7222 = vadd.f32 %v7220, %v7221
      %v7223 = vsel %vm7041, %v7207, 0.0
      %v7224 = vadd.f32 %v7222, %v7223
      %v7225 = vsel %vm7041, %v7208, 0.0
      %v7226 = vadd.f32 %v7224, %v7225
      %v7227 = vsel %vm7041, %v7209, 0.0
      %v7228 = vadd.f32 %v7226, %v7227
      %v7229 = vsel %vm7041, %v7210, 0.0
      %v7230 = vadd.f32 %v7228, %v7229
      %v7231 = vsel %vm7041, %v7211, 0.0
      %v7232 = vadd.f32 %v7230, %v7231
      %v7233 = vsel %vm7041, %v7212, 0.0
      %v7234 = vadd.f32 %v7232, %v7233
      %v7235 = vsel %vm7041, %v7213, 0.0
      %v7236 = vadd.f32 %v7234, %v7235
      %v7237 = vsel %vm7041, %v7214, 0.0
      %v7238 = vadd.f32 %v7236, %v7237
      %v7239 = vsel %vm7062, %v7215, 0.0
      %v7240 = vadd.f32 %v7238, %v7239
      %v7241 = vrot.slane %v7240, 4
      %v7242 = vadd.f32 %v7240, %v7241
      %v7243 = vrot.slane %v7242, 2
      %v7244 = vadd.f32 %v7242, %v7243
      %v7245 = vrot.slane %v7244, 1
      %v7246 = vadd.f32 %v7244, %v7245
      %v7247 = vmul.f32 %v7246, %v7157
      %7249 = vrot.lane.b32.xlu0 %v7247, 1
      %v7250 = vpop.permute.xlu0 %7249
      %v7252 = vsel %vm7041, %v7202, %v7250
      %v7266 = vrot.slane %v7015, 4
      %v7267 = vrot.slane %v7016, 4
      %v7268 = vsel %vm5107, %v7266, %v7267
      %v7269 = vrot.slane %v7017, 4
      %v7270 = vsel %vm5107, %v7267, %v7269
      %v7271 = vrot.slane %v7018, 4
      %v7272 = vsel %vm5107, %v7269, %v7271
      %v7273 = vrot.slane %v7019, 4
      %v7274 = vsel %vm5107, %v7271, %v7273
      %v7275 = vrot.slane %v7020, 4
      %v7276 = vsel %vm5107, %v7273, %v7275
      %v7277 = vrot.slane %v7021, 4
      %v7278 = vsel %vm5107, %v7275, %v7277
      %v7279 = vrot.slane %v7022, 4
      %v7280 = vsel %vm5107, %v7277, %v7279
      %v7281 = vrot.slane %v7023, 4
      %v7282 = vsel %vm5107, %v7279, %v7281
      %v7283 = vrot.slane %v7024, 4
      %v7284 = vsel %vm5107, %v7281, %v7283
      %v7285 = vrot.slane %v7025, 4
      %v7286 = vsel %vm5107, %v7283, %v7285
      %v7287 = vrot.slane %v7026, 4
      %v7288 = vsel %vm5107, %v7285, %v7287
      %v7289 = vrot.slane %v7027, 4
      %v7290 = vsel %vm5107, %v7287, %v7289
      %v7304 = vadd.f32 %v6963, %v7266
      %v7305 = vadd.f32 %v6964, %v7268
      %v7306 = vadd.f32 %v6965, %v7270
      %v7307 = vadd.f32 %v6966, %v7272
      %v7308 = vadd.f32 %v6967, %v7274
      %v7309 = vadd.f32 %v6968, %v7276
      %v7310 = vadd.f32 %v6969, %v7278
      %v7311 = vadd.f32 %v6970, %v7280
      %v7312 = vadd.f32 %v6971, %v7282
      %v7313 = vadd.f32 %v6972, %v7284
      %v7314 = vadd.f32 %v6973, %v7286
      %v7315 = vadd.f32 %v6974, %v7288
      %v7316 = vadd.f32 %v6975, %v7290
      %vm7317 = vcmask 7172
      %v7318 = vsel %vm7317, %v7304, -inf
      %v7319 = vsel %vm7041, %v7305, -inf
      %v7320 = vsel %vm7041, %v7306, -inf
      %v7321 = vsel %vm7041, %v7307, -inf
      %v7322 = vsel %vm7041, %v7308, -inf
      %v7323 = vmax.f32 %v7318, %v7322
      %v7324 = vsel %vm7041, %v7309, -inf
      %v7325 = vmax.f32 %v7319, %v7324
      %v7326 = vsel %vm7041, %v7310, -inf
      %v7327 = vmax.f32 %v7320, %v7326
      %v7328 = vsel %vm7041, %v7311, -inf
      %v7329 = vmax.f32 %v7321, %v7328
      %v7330 = vsel %vm7041, %v7312, -inf
      %v7331 = vmax.f32 %v7323, %v7330
      %v7332 = vsel %vm7041, %v7313, -inf
      %v7333 = vmax.f32 %v7325, %v7332
      %v7334 = vsel %vm7041, %v7314, -inf
      %v7335 = vmax.f32 %v7327, %v7334
      %v7336 = vsel %vm7041, %v7315, -inf
      %v7337 = vmax.f32 %v7329, %v7336
      %v7338 = vsel %vm7041, %v7316, -inf
      %v7339 = vmax.f32 %v7331, %v7338
      %v7340 = vmax.f32 %v7339, %v7333
      %v7341 = vmax.f32 %v7335, %v7337
      %v7342 = vmax.f32 %v7340, %v7341
      %v7343 = vrot.slane %v7342, 4
      %v7344 = vmax.f32 %v7342, %v7343
      %v7345 = vrot.slane %v7344, 2
      %v7346 = vmax.f32 %v7344, %v7345
      %v7347 = vrot.slane %v7346, 1
      %v7348 = vmax.f32 %v7346, %v7347
      %v7349 = vsub.f32 %v7304, %v7348
      %v7350 = vsub.f32 %v7305, %v7348
      %v7351 = vsub.f32 %v7306, %v7348
      %v7352 = vsub.f32 %v7307, %v7348
      %v7353 = vsub.f32 %v7308, %v7348
      %v7354 = vsub.f32 %v7309, %v7348
      %v7355 = vsub.f32 %v7310, %v7348
      %v7356 = vsub.f32 %v7311, %v7348
      %v7357 = vsub.f32 %v7312, %v7348
      %v7358 = vsub.f32 %v7313, %v7348
      %v7359 = vsub.f32 %v7314, %v7348
      %v7360 = vsub.f32 %v7315, %v7348
      %v7361 = vsub.f32 %v7316, %v7348
      %v7362 = vmul.f32 %v7349, 1.442695
      %v7363 = vpow.pop %v7362
      %v7364 = vmul.f32 %v7350, 1.442695
      %v7365 = vpow.pop %v7364
      %v7366 = vmul.f32 %v7351, 1.442695
      %v7367 = vpow.pop %v7366
      %v7368 = vmul.f32 %v7352, 1.442695
      %v7369 = vpow.pop %v7368
      %v7370 = vmul.f32 %v7353, 1.442695
      %v7371 = vpow.pop %v7370
      %v7372 = vmul.f32 %v7354, 1.442695
      %v7373 = vpow.pop %v7372
      %v7374 = vmul.f32 %v7355, 1.442695
      %v7375 = vpow.pop %v7374
      %v7376 = vmul.f32 %v7356, 1.442695
      %v7377 = vpow.pop %v7376
      %v7378 = vmul.f32 %v7357, 1.442695
      %v7379 = vpow.pop %v7378
      %v7380 = vmul.f32 %v7358, 1.442695
      %v7381 = vpow.pop %v7380
      %v7382 = vmul.f32 %v7359, 1.442695
      %v7383 = vpow.pop %v7382
      %v7384 = vmul.f32 %v7360, 1.442695
      %v7385 = vpow.pop %v7384
      %v7386 = vmul.f32 %v7361, 1.442695
      %v7387 = vpow.pop %v7386
      %v7388 = vrot.slane %v775, 4
      %v7389 = vrot.slane %v776, 4
      %v7390 = vsel %vm5107, %v7388, %v7389
      %v7391 = vrot.slane %v777, 4
      %v7392 = vsel %vm5107, %v7389, %v7391
      %v7393 = vrot.slane %v778, 4
      %v7394 = vsel %vm5107, %v7391, %v7393
      %v7395 = vrot.slane %v779, 4
      %v7396 = vsel %vm5107, %v7393, %v7395
      %v7397 = vrot.slane %v780, 4
      %v7398 = vsel %vm5107, %v7395, %v7397
      %v7399 = vrot.slane %v781, 4
      %v7400 = vsel %vm5107, %v7397, %v7399
      %v7401 = vrot.slane %v782, 4
      %v7402 = vsel %vm5107, %v7399, %v7401
      %v7403 = vrot.slane %v783, 4
      %v7404 = vsel %vm5107, %v7401, %v7403
      %v7405 = vrot.slane %v784, 4
      %v7406 = vsel %vm5107, %v7403, %v7405
      %v7407 = vrot.slane %v785, 4
      %v7408 = vsel %vm5107, %v7405, %v7407
      %v7409 = vrot.slane %v786, 4
      %v7410 = vsel %vm5107, %v7407, %v7409
      %v7411 = vrot.slane %v787, 4
      %v7412 = vsel %vm5107, %v7409, %v7411
      %v7426 = vmul.f32 %v7363, %v7388
      %v7427 = vmul.f32 %v7365, %v7390
      %v7428 = vmul.f32 %v7367, %v7392
      %v7429 = vmul.f32 %v7369, %v7394
      %v7430 = vmul.f32 %v7371, %v7396
      %v7431 = vmul.f32 %v7373, %v7398
      %v7432 = vmul.f32 %v7375, %v7400
      %v7433 = vmul.f32 %v7377, %v7402
      %v7434 = vmul.f32 %v7379, %v7404
      %v7435 = vmul.f32 %v7381, %v7406
      %v7436 = vmul.f32 %v7383, %v7408
      %v7437 = vmul.f32 %v7385, %v7410
      %v7438 = vmul.f32 %v7387, %v7412
      %v7452 = vrot.slane %v7426, 4
      %v7453 = vrot.slane %v7427, 4
      %v7454 = vsel %vm5107, %v7452, %v7453
      %v7455 = vrot.slane %v7428, 4
      %v7456 = vsel %vm5107, %v7453, %v7455
      %v7457 = vrot.slane %v7429, 4
      %v7458 = vsel %vm5107, %v7455, %v7457
      %v7459 = vrot.slane %v7430, 4
      %v7460 = vsel %vm5107, %v7457, %v7459
      %v7461 = vrot.slane %v7431, 4
      %v7462 = vsel %vm5107, %v7459, %v7461
      %v7463 = vrot.slane %v7432, 4
      %v7464 = vsel %vm5107, %v7461, %v7463
      %v7465 = vrot.slane %v7433, 4
      %v7466 = vsel %vm5107, %v7463, %v7465
      %v7467 = vrot.slane %v7434, 4
      %v7468 = vsel %vm5107, %v7465, %v7467
      %v7469 = vrot.slane %v7435, 4
      %v7470 = vsel %vm5107, %v7467, %v7469
      %v7471 = vrot.slane %v7436, 4
      %v7472 = vsel %vm5107, %v7469, %v7471
      %v7473 = vrot.slane %v7437, 4
      %v7474 = vsel %vm5107, %v7471, %v7473
      %v7475 = vrot.slane %v7438, 4
      %v7476 = vsel %vm5107, %v7473, %v7475
      %v7490 = vsel %vm7041, %v7454, 0.0
      %v7491 = vsel %vm7041, %v7456, 0.0
      %v7492 = vadd.f32 %v7490, %v7491
      %v7493 = vsel %vm7041, %v7458, 0.0
      %v7494 = vadd.f32 %v7492, %v7493
      %v7495 = vsel %vm7041, %v7460, 0.0
      %v7496 = vadd.f32 %v7494, %v7495
      %v7497 = vsel %vm7041, %v7462, 0.0
      %v7498 = vadd.f32 %v7496, %v7497
      %v7499 = vsel %vm7041, %v7464, 0.0
      %v7500 = vadd.f32 %v7498, %v7499
      %v7501 = vsel %vm7041, %v7466, 0.0
      %v7502 = vadd.f32 %v7500, %v7501
      %v7503 = vsel %vm7041, %v7468, 0.0
      %v7504 = vadd.f32 %v7502, %v7503
      %v7505 = vsel %vm7041, %v7470, 0.0
      %v7506 = vadd.f32 %v7504, %v7505
      %v7507 = vsel %vm7041, %v7472, 0.0
      %v7508 = vadd.f32 %v7506, %v7507
      %v7509 = vsel %vm7041, %v7474, 0.0
      %v7510 = vadd.f32 %v7508, %v7509
      %v7511 = vsel %vm7041, %v7476, 0.0
      %v7512 = vadd.f32 %v7510, %v7511
      %v7513 = vsel %vm7062, %v7475, 0.0
      %v7514 = vadd.f32 %v7512, %v7513
      %v7515 = vrot.slane %v7514, 4
      %v7516 = vadd.f32 %v7514, %v7515
      %v7517 = vrot.slane %v7516, 2
      %v7518 = vadd.f32 %v7516, %v7517
      %v7519 = vrot.slane %v7518, 1
      %v7520 = vadd.f32 %v7518, %v7519
      %v7521 = vrcp.pop %v7520
      %v7522 = vmul.f32 %v6976, %v7454
      %v7523 = vmul.f32 %v6977, %v7456
      %v7524 = vmul.f32 %v6978, %v7458
      %v7525 = vmul.f32 %v6979, %v7460
      %v7526 = vmul.f32 %v6980, %v7462
      %v7527 = vmul.f32 %v6981, %v7464
      %v7528 = vmul.f32 %v6982, %v7466
      %v7529 = vmul.f32 %v6983, %v7468
      %v7530 = vmul.f32 %v6984, %v7470
      %v7531 = vmul.f32 %v6985, %v7472
      %v7532 = vmul.f32 %v6986, %v7474
      %v7533 = vmul.f32 %v6987, %v7476
      %v7534 = vmul.f32 %v6988, %v7475
      %v7535 = vsel %vm7041, %v7522, 0.0
      %v7536 = vsel %vm7041, %v7523, 0.0
      %v7537 = vadd.f32 %v7535, %v7536
      %v7538 = vsel %vm7041, %v7524, 0.0
      %v7539 = vadd.f32 %v7537, %v7538
      %v7540 = vsel %vm7041, %v7525, 0.0
      %v7541 = vadd.f32 %v7539, %v7540
      %v7542 = vsel %vm7041, %v7526, 0.0
      %v7543 = vadd.f32 %v7541, %v7542
      %v7544 = vsel %vm7041, %v7527, 0.0
      %v7545 = vadd.f32 %v7543, %v7544
      %v7546 = vsel %vm7041, %v7528, 0.0
      %v7547 = vadd.f32 %v7545, %v7546
      %v7548 = vsel %vm7041, %v7529, 0.0
      %v7549 = vadd.f32 %v7547, %v7548
      %v7550 = vsel %vm7041, %v7530, 0.0
      %v7551 = vadd.f32 %v7549, %v7550
      %v7552 = vsel %vm7041, %v7531, 0.0
      %v7553 = vadd.f32 %v7551, %v7552
      %v7554 = vsel %vm7041, %v7532, 0.0
      %v7555 = vadd.f32 %v7553, %v7554
      %v7556 = vsel %vm7041, %v7533, 0.0
      %v7557 = vadd.f32 %v7555, %v7556
      %v7558 = vsel %vm7062, %v7534, 0.0
      %v7559 = vadd.f32 %v7557, %v7558
      %v7560 = vrot.slane %v7559, 4
      %v7561 = vadd.f32 %v7559, %v7560
      %v7562 = vrot.slane %v7561, 2
      %v7563 = vadd.f32 %v7561, %v7562
      %v7564 = vrot.slane %v7563, 1
      %v7565 = vadd.f32 %v7563, %v7564
      %v7566 = vmul.f32 %v7565, %v7521
      %v7567 = vmul.f32 %v6989, %v7454
      %v7568 = vmul.f32 %v6990, %v7456
      %v7569 = vmul.f32 %v6991, %v7458
      %v7570 = vmul.f32 %v6992, %v7460
      %v7571 = vmul.f32 %v6993, %v7462
      %v7572 = vmul.f32 %v6994, %v7464
      %v7573 = vmul.f32 %v6995, %v7466
      %v7574 = vmul.f32 %v6996, %v7468
      %v7575 = vmul.f32 %v6997, %v7470
      %v7576 = vmul.f32 %v6998, %v7472
      %v7577 = vmul.f32 %v6999, %v7474
      %v7578 = vmul.f32 %v7000, %v7476
      %v7579 = vmul.f32 %v7001, %v7475
      %v7580 = vsel %vm7041, %v7567, 0.0
      %v7581 = vsel %vm7041, %v7568, 0.0
      %v7582 = vadd.f32 %v7580, %v7581
      %v7583 = vsel %vm7041, %v7569, 0.0
      %v7584 = vadd.f32 %v7582, %v7583
      %v7585 = vsel %vm7041, %v7570, 0.0
      %v7586 = vadd.f32 %v7584, %v7585
      %v7587 = vsel %vm7041, %v7571, 0.0
      %v7588 = vadd.f32 %v7586, %v7587
      %v7589 = vsel %vm7041, %v7572, 0.0
      %v7590 = vadd.f32 %v7588, %v7589
      %v7591 = vsel %vm7041, %v7573, 0.0
      %v7592 = vadd.f32 %v7590, %v7591
      %v7593 = vsel %vm7041, %v7574, 0.0
      %v7594 = vadd.f32 %v7592, %v7593
      %v7595 = vsel %vm7041, %v7575, 0.0
      %v7596 = vadd.f32 %v7594, %v7595
      %v7597 = vsel %vm7041, %v7576, 0.0
      %v7598 = vadd.f32 %v7596, %v7597
      %v7599 = vsel %vm7041, %v7577, 0.0
      %v7600 = vadd.f32 %v7598, %v7599
      %v7601 = vsel %vm7041, %v7578, 0.0
      %v7602 = vadd.f32 %v7600, %v7601
      %v7603 = vsel %vm7062, %v7579, 0.0
      %v7604 = vadd.f32 %v7602, %v7603
      %v7605 = vrot.slane %v7604, 4
      %v7606 = vadd.f32 %v7604, %v7605
      %v7607 = vrot.slane %v7606, 2
      %v7608 = vadd.f32 %v7606, %v7607
      %v7609 = vrot.slane %v7608, 1
      %v7610 = vadd.f32 %v7608, %v7609
      %v7611 = vmul.f32 %v7610, %v7521
      %7613 = vrot.lane.b32.xlu0 %v7611, 1
      %v7614 = vpop.permute.xlu0 %7613
      %v7616 = vsel %vm7041, %v7566, %v7614
      %v7618 = vrot.slane %v7616, 7
      %v7620 = vsel %vm972, %v7252, %v7618
      %vm7621 = vcmask 9216
      %7622 = vst.msk [vmem:[%s773] sm:$0x3] %vm7621, %v7620
      %p7623 = scmp.lt.s32.totalorder %s29, 1
      %s7624 = scalar_select %p7623, %s29, 1
      %s7625 = smul.addr %s7624, 2
      %s7626 = scalar_lea.vmem %s18, %s7625
      // Predicated region
      $region93: #{corner_predictor_forward.1} parent=91 // pred_check
        %p7627 = pneg %p495
      $region94: #{corner_predictor_forward.1} parent=91 // pred_check_branch
        %7629 = sbr.rel (%p7627) target = $region96
      $region95: #{corner_predictor_forward.1} parent=91 // pred_region
        _
      $region96: #{corner_predictor_forward.1} parent=91 // pred_fallthru
        _
    $region92: #{corner_predictor_forward.1} parent=5 // pred_fallthru
      _
    %p7630 = scmp.le.s32.totalorder 2, %s24
    // Predicated region
    $region97: #{corner_predictor_forward.1} parent=5 // pred_check
      %p7631 = pneg %p7630
    $region98: #{corner_predictor_forward.1} parent=5 // pred_check_branch
      %7633 = sbr.rel (%p7631) target = $region100
    $region99: #{corner_predictor_forward.1} parent=5 // pred_region
      %s7634 = ssub.s32 %s24, 2
      // Predicated region
      $region101: #{corner_predictor_forward.1} parent=99 // pred_check
        %p7635 = pneg %p501
      $region102: #{corner_predictor_forward.1} parent=99 // pred_check_branch
        %7637 = sbr.rel (%p7635) target = $region104
      $region103: #{corner_predictor_forward.1} parent=99 // pred_region
        %p7638 = scmp.lt.s32.totalorder %s30, 1
        %s7639 = scalar_select %p7638, %s30, 1
        %s7640 = smul.addr %s7639, 2
        %s7641 = scalar_lea.vmem %s18, %s7640
      $region104: #{corner_predictor_forward.1} parent=99 // pred_fallthru
        _
    $region100: #{corner_predictor_forward.1} parent=5 // pred_fallthru
      _
  $region6: #{corner_predictor_forward.1} parent=0 // loop_footer
    %s28 = sadd.s32 1, %s24
  $region7: #{corner_predictor_forward.1} parent=0 // loop_footer_branch
    %23 = sbr.rel target = $region3
  $region8: #{corner_predictor_forward.1} parent=0 // loop_exit
    _

</llo_original>
